<compile_context>
chip_gen: v5e
topology: v5e:2x2
jax: 0.10.0
libtpu: 0.0.40
codegen_flags: <defaults>
</compile_context>

<pallas_src>
import math

import jax
import jax.numpy as jnp
from jax.experimental import pallas as pl
from jax.experimental.pallas import tpu as pltpu

B = 2                 # batch size == LSTM sequence length in the reference code
IN_LEN = 241          # "scan" part of the state
POS = 2               # "pos" part of the state
OUT_DIM = 2           # sigmoid head + tanh head
CONV_C = 64
T1, T1H, T2 = 120, 60, 59   # conv1 length, half of it (even/odd split), conv2 length
L1_IN = CONV_C * T2   # 3776
H1, H2, H3 = 512, 256, 128
LSTM_H = 128

# packed bias layout (lane offsets, all 128-aligned starts)
_B1_OFF, _B2_OFF, _B3_OFF, _BL_OFF = 0, 512, 768, 896
_B1C_OFF, _B2C_OFF, _BOUT_OFF = 1408, 1536, 1664
_BIAS_LEN = 1792

_VMEM = pl.BlockSpec(memory_space=pltpu.MemorySpace.VMEM)


def _sigmoid_fast(z):
    # exp + approximate reciprocal both issue on the EUP slot (free next to VPU work)
    return pl.reciprocal(1.0 + jnp.exp(-z), approx=True)


# ----------------------------------------------------------------------------
# Fused kernel: conv1 + conv2 + linear1..3 + LSTM + output heads
# ----------------------------------------------------------------------------
def _fused_actor_kernel(p1e_ref, p1o_ref, pos_ref,
                        wconv_ref, w1_ref, w2a_ref, w2b_ref, w3_ref,
                        wlstm_ref, wout_ref, bias_ref,
                        h0_ref, c0_ref,
                        act_ref, hn_ref, cn_ref,
                        xf_scr):
    f32 = jnp.float32

    # packed biases (static, aligned lane slices)
    b1 = bias_ref[:, _B1_OFF:_B1_OFF + H1]
    b2 = bias_ref[:, _B2_OFF:_B2_OFF + H2]
    b3 = bias_ref[:, _B3_OFF:_B3_OFF + H3]
    blstm = bias_ref[:, _BL_OFF:_BL_OFF + 4 * LSTM_H]
    b1c = bias_ref[:, _B1C_OFF:_B1C_OFF + CONV_C]
    b2c = bias_ref[:, _B2C_OFF:_B2C_OFF + CONV_C]
    bout = bias_ref[:, _BOUT_OFF:_BOUT_OFF + OUT_DIM]

    # ---- conv1 (1 input channel, kernel 3): three VPU FMAs, no MXU ----
    w1c = wconv_ref[0:3, :]                         # (3, 64)  [tap, out_ch]

    def conv1(p):                                   # p: (120, 3), rows = (time//2, batch)
        h = (p[:, 0:1] * w1c[0:1, :]
             + p[:, 1:2] * w1c[1:2, :]
             + p[:, 2:3] * w1c[2:3, :] + b1c)
        return jnp.maximum(h, 0.0)

    h1e = conv1(p1e_ref[...])                       # conv1+relu at even time steps
    h1o = conv1(p1o_ref[...])                       # conv1+relu at odd  time steps

    # ---- conv2 (kernel 3, stride 2): taps = contiguous even/odd/shifted-even rows ----
    c2 = (jnp.dot(h1e[0:2 * T2, :], wconv_ref[8:72, :], preferred_element_type=f32)
          + jnp.dot(h1o[0:2 * T2, :], wconv_ref[72:136, :], preferred_element_type=f32)
          + jnp.dot(h1e[2:2 * T2 + 2, :], wconv_ref[136:200, :], preferred_element_type=f32))
    c2 = jnp.maximum(c2 + b2c, 0.0)                 # (118, 64), rows = (t2, batch)

    # ---- flatten: xf[b, t*64 + c] = c2[t*2 + b, c]  (torch's channel-major perm is
    #      folded into w1's rows on the host) ----
    for t in range(T2):
        xf_scr[:, t * CONV_C:(t + 1) * CONV_C] = c2[2 * t:2 * t + 2, :]

    # ---- linear1 (bf16 weight, f32 accumulation) ----
    h = jnp.dot(xf_scr[...].astype(jnp.bfloat16), w1_ref[...],
                preferred_element_type=f32)
    h = jnp.maximum(h + b1, 0.0)                    # (B, 512)

    # ---- cat(pos) + linear2 expressed as split matmuls ----
    h = (jnp.dot(h, w2a_ref[...], preferred_element_type=f32)
         + jnp.dot(pos_ref[...], w2b_ref[...], preferred_element_type=f32))
    h = jnp.maximum(h + b2, 0.0)                    # (B, 256)

    # ---- linear3 ----
    h = jnp.maximum(jnp.dot(h, w3_ref[...], preferred_element_type=f32) + b3, 0.0)  # (B, 128)

    # ---- LSTM over the batch axis (seq=B, batch=1), gate order i,f,g,o,
    #      fused with the per-step output head (no VMEM staging of hidden states) ----
    wih = wlstm_ref[0:LSTM_H, :]
    whh = wlstm_ref[LSTM_H:2 * LSTM_H, :]
    wout = wout_ref[...]
    col = jax.lax.broadcasted_iota(jnp.int32, (1, OUT_DIM), 1)  # hoisted out of the loop
    h_t = h0_ref[...]                               # (1, 128)
    c_t = c0_ref[...]                               # (1, 128)
    for t in range(B):                              # static -> unrolled
        gates = (jnp.dot(h[t:t + 1, :], wih, preferred_element_type=f32)
                 + jnp.dot(h_t, whh, preferred_element_type=f32) + blstm)  # (1, 512)
        i_g = _sigmoid_fast(gates[:, 0:LSTM_H])
        f_g = _sigmoid_fast(gates[:, LSTM_H:2 * LSTM_H])
        g_g = jnp.tanh(gates[:, 2 * LSTM_H:3 * LSTM_H])
        o_g = _sigmoid_fast(gates[:, 3 * LSTM_H:4 * LSTM_H])
        c_t = f_g * c_t + i_g * g_g
        h_t = o_g * jnp.tanh(c_t)
        logits = jnp.dot(h_t, wout, preferred_element_type=f32) + bout      # (1, 2)
        # column 0 -> sigmoid (exact), column 1 -> tanh
        act_ref[t:t + 1, :] = jnp.where(col == 0,
                                        1.0 / (1.0 + jnp.exp(-logits)),
                                        jnp.tanh(logits))
    hn_ref[...] = h_t
    cn_ref[...] = c_t


# ----------------------------------------------------------------------------
# Forward wrapper (tiny XLA glue only for the conv1 stride-2 patch extraction)
# ----------------------------------------------------------------------------
def _actor_forward(params, state, hn, cn):
    x = state[:, :IN_LEN]                           # (B, 241)
    pos = state[:, IN_LEN:IN_LEN + POS]             # (B, 2)

    # conv1 im2col for even/odd output positions; rows ordered (time, batch) so the
    # in-kernel conv2 taps are plain contiguous slices.
    p1e = jnp.stack([x[:, 0:237:4], x[:, 1:238:4], x[:, 2:239:4]], axis=-1)  # (B, 60, 3)
    p1o = jnp.stack([x[:, 2:239:4], x[:, 3:240:4], x[:, 4:241:4]], axis=-1)  # (B, 60, 3)
    p1e = jnp.transpose(p1e, (1, 0, 2)).reshape(B * T1H, 3)
    p1o = jnp.transpose(p1o, (1, 0, 2)).reshape(B * T1H, 3)

    act, h_last, c_last = pl.pallas_call(
        _fused_actor_kernel,
        out_shape=(jax.ShapeDtypeStruct((B, OUT_DIM), jnp.float32),
                   jax.ShapeDtypeStruct((1, LSTM_H), jnp.float32),
                   jax.ShapeDtypeStruct((1, LSTM_H), jnp.float32)),
        in_specs=[_VMEM] * 13,
        out_specs=(_VMEM, _VMEM, _VMEM),
        scratch_shapes=[pltpu.VMEM((B, L1_IN), jnp.float32)],
        compiler_params=pltpu.CompilerParams(vmem_limit_bytes=32 << 20),
    )(p1e, p1o, pos,
      params["wconv"], params["w1"], params["w2a"], params["w2b"], params["w3"],
      params["wlstm"], params["wout"], params["biases"],
      hn.reshape(1, LSTM_H), cn.reshape(1, LSTM_H))

    return act, h_last.reshape(1, 1, LSTM_H), c_last.reshape(1, 1, LSTM_H)


_actor_forward_jit = jax.jit(_actor_forward)


def actor_forward(params, state, hn=None, cn=None):
    if hn is None:
        hn = jnp.zeros((1, 1, LSTM_H), jnp.float32)
        cn = jnp.zeros((1, 1, LSTM_H), jnp.float32)
    return _actor_forward_jit(params, state, hn, cn)


# ----------------------------------------------------------------------------
# Parameters: deterministic PyTorch-style init, then packed / pre-transposed
# into the layouts the fused kernel consumes.
# ----------------------------------------------------------------------------
def init_params(key):
    ks = jax.random.split(key, 16)

    def u(k, shape, fan_in):
        bound = 1.0 / math.sqrt(fan_in)
        return jax.random.uniform(k, shape, jnp.float32, -bound, bound)

    raw = dict(
        w1c=u(ks[0], (CONV_C, 1, 3), 1 * 3),
        b1c=u(ks[1], (CONV_C,), 1 * 3),
        w2c=u(ks[2], (CONV_C, CONV_C, 3), CONV_C * 3),
        b2c=u(ks[3], (CONV_C,), CONV_C * 3),
        w1=u(ks[4], (H1, L1_IN), L1_IN).astype(jnp.bfloat16),   # big weight in bf16
        b1=u(ks[5], (H1,), L1_IN),
        w2=u(ks[6], (H2, H1 + POS), H1 + POS),
        b2=u(ks[7], (H2,), H1 + POS),
        w3=u(ks[8], (H3, H2), H2),
        b3=u(ks[9], (H3,), H2),
        wih=u(ks[10], (4 * LSTM_H, LSTM_H), LSTM_H),
        whh=u(ks[11], (4 * LSTM_H, LSTM_H), LSTM_H),
        bih=u(ks[12], (4 * LSTM_H,), LSTM_H),
        bhh=u(ks[13], (4 * LSTM_H,), LSTM_H),
        wout=u(ks[14], (OUT_DIM, LSTM_H), LSTM_H),
        bout=u(ks[15], (OUT_DIM,), LSTM_H),
    )

    # conv weights packed on the sublane axis: rows 0:8 conv1 (3 used, zero-padded),
    # rows 8:72 / 72:136 / 136:200 the three conv2 taps as (in_ch, out_ch).
    w1c = jnp.transpose(raw["w1c"][:, 0, :], (1, 0))                    # (3, 64)
    w1c = jnp.concatenate([w1c, jnp.zeros((5, CONV_C), jnp.float32)], axis=0)
    w2c = jnp.transpose(raw["w2c"], (2, 1, 0))                          # (3, 64, 64)
    wconv = jnp.concatenate([w1c, w2c[0], w2c[1], w2c[2]], axis=0)      # (200, 64)

    # linear1: fold torch's channel-major flatten (row m = c*59 + t) into the rows so
    # the kernel can use the natural time-major flatten (row t*64 + c).
    w1 = (raw["w1"].T                                                   # (3776, 512)
          .reshape(CONV_C, T2, H1).transpose(1, 0, 2).reshape(L1_IN, H1))

    def pad_lanes(v, n):
        return jnp.concatenate([v, jnp.zeros((n - v.shape[0],), jnp.float32)])

    biases = jnp.concatenate([
        raw["b1"], raw["b2"], raw["b3"], raw["bih"] + raw["bhh"],
        pad_lanes(raw["b1c"], 128), pad_lanes(raw["b2c"], 128),
        pad_lanes(raw["bout"], 128)]).reshape(1, _BIAS_LEN)             # (1, 1792)

    params = dict(
        wconv=wconv,
        w1=w1,                                                          # (3776, 512) bf16
        w2a=raw["w2"][:, :H1].T,                                        # (512, 256)
        w2b=raw["w2"][:, H1:].T,                                        # (2, 256)
        w3=raw["w3"].T,                                                 # (256, 128)
        wlstm=jnp.concatenate([raw["wih"].T, raw["whh"].T], axis=0),    # (256, 512)
        wout=raw["wout"].T,                                             # (128, 2)
        biases=biases,
    )
    return params, raw


# ----------------------------------------------------------------------------
# Pure-JAX/XLA reference (mirrors the PyTorch module) for a correctness check.
# ----------------------------------------------------------------------------
def actor_forward_ref(raw, state, hn, cn):
    hi = jax.lax.Precision.HIGHEST
    x = state[:, :IN_LEN][:, None, :]                                    # (B, 1, 241)
    pos = state[:, IN_LEN:IN_LEN + POS]
    h = jax.lax.conv_general_dilated(x, raw["w1c"], (2,), "VALID",
                                     dimension_numbers=("NCH", "OIH", "NCH"),
                                     precision=hi)
    h = jnp.maximum(h + raw["b1c"][None, :, None], 0.0)                  # (B, 64, 120)
    h = jax.lax.conv_general_dilated(h, raw["w2c"], (2,), "VALID",
                                     dimension_numbers=("NCH", "OIH", "NCH"),
                                     precision=hi)
    h = jnp.maximum(h + raw["b2c"][None, :, None], 0.0)                  # (B, 64, 59)
    xf = h.reshape(B, -1)                                                # channel-major flatten
    h = jnp.dot(xf.astype(jnp.bfloat16), raw["w1"].T,
                preferred_element_type=jnp.float32)
    h = jnp.maximum(h + raw["b1"], 0.0)
    h = jnp.concatenate([h, pos], axis=1)
    h = jnp.maximum(jnp.dot(h, raw["w2"].T, precision=hi) + raw["b2"], 0.0)
    h = jnp.maximum(jnp.dot(h, raw["w3"].T, precision=hi) + raw["b3"], 0.0)
    h_t = hn.reshape(1, LSTM_H)
    c_t = cn.reshape(1, LSTM_H)
    outs = []
    for t in range(B):
        g = (jnp.dot(h[t:t + 1], raw["wih"].T, precision=hi)
             + jnp.dot(h_t, raw["whh"].T, precision=hi) + raw["bih"] + raw["bhh"])
        i_g = jax.nn.sigmoid(g[:, 0:128])
        f_g = jax.nn.sigmoid(g[:, 128:256])
        g_g = jnp.tanh(g[:, 256:384])
        o_g = jax.nn.sigmoid(g[:, 384:512])
        c_t = f_g * c_t + i_g * g_g
        h_t = o_g * jnp.tanh(c_t)
        outs.append(h_t)
    y = jnp.dot(jnp.concatenate(outs, axis=0), raw["wout"].T, precision=hi) + raw["bout"]
    act = jnp.stack([jax.nn.sigmoid(y[:, 0]), jnp.tanh(y[:, 1])], axis=1)
    return act, h_t.reshape(1, 1, LSTM_H), c_t.reshape(1, 1, LSTM_H)


if __name__ == "__main__":
    key = jax.random.PRNGKey(0)
    pkey, skey = jax.random.split(key)
    params, raw = init_params(pkey)
    state = jax.random.normal(skey, (B, IN_LEN + POS), jnp.float32)      # (2, 243)

    action, hn, cn = actor_forward(params, state)
    jax.block_until_ready((action, hn, cn))

    assert action.shape == (B, OUT_DIM)
    assert hn.shape == (1, 1, LSTM_H) and cn.shape == (1, 1, LSTM_H)
    assert bool(jnp.all((action[:, 0] >= 0.0) & (action[:, 0] <= 1.0)))
    assert bool(jnp.all((action[:, 1] >= -1.0) & (action[:, 1] <= 1.0)))

    # cross-check the fused kernel against the pure-JAX reference
    zeros = jnp.zeros((1, 1, LSTM_H), jnp.float32)
    act_r, hn_r, cn_r = actor_forward_ref(raw, state, zeros, zeros)
    assert float(jnp.max(jnp.abs(action - act_r))) < 2e-2
    assert float(jnp.max(jnp.abs(hn - hn_r))) < 2e-2
    assert float(jnp.max(jnp.abs(cn - cn_r))) < 2e-2

    print("KERNEL_OK")
</pallas_src>

<mosaic_0001>
module attributes {stable_mosaic.version = 11 : i64} {
  func.func @_fused_actor_kernel(%arg0: memref<120x3xf32, #tpu.memory_space<vmem>>, %arg1: memref<120x3xf32, #tpu.memory_space<vmem>>, %arg2: memref<2x2xf32, #tpu.memory_space<vmem>>, %arg3: memref<200x64xf32, #tpu.memory_space<vmem>>, %arg4: memref<3776x512xbf16, #tpu.memory_space<vmem>>, %arg5: memref<512x256xf32, #tpu.memory_space<vmem>>, %arg6: memref<2x256xf32, #tpu.memory_space<vmem>>, %arg7: memref<256x128xf32, #tpu.memory_space<vmem>>, %arg8: memref<256x512xf32, #tpu.memory_space<vmem>>, %arg9: memref<128x2xf32, #tpu.memory_space<vmem>>, %arg10: memref<1x1792xf32, #tpu.memory_space<vmem>>, %arg11: memref<1x128xf32, #tpu.memory_space<vmem>>, %arg12: memref<1x128xf32, #tpu.memory_space<vmem>>, %arg13: memref<2x2xf32, #tpu.memory_space<vmem>>, %arg14: memref<1x128xf32, #tpu.memory_space<vmem>>, %arg15: memref<1x128xf32, #tpu.memory_space<vmem>>, %arg16: memref<2x3776xf32, #tpu.memory_space<vmem>>) attributes {dimension_semantics = [], scalar_prefetch = 0 : i64, scratch_operands = 1 : i64, tpu.core_type = #tpu.core_type<tc>} {
    %c0 = arith.constant 0 : index
    %c0_0 = arith.constant 0 : index
    %0 = vector.load %arg10[%c0, %c0_0] : memref<1x1792xf32, #tpu.memory_space<vmem>>, vector<1x512xf32>
    %c0_1 = arith.constant 0 : index
    %c512 = arith.constant 512 : index
    %1 = vector.load %arg10[%c0_1, %c512] : memref<1x1792xf32, #tpu.memory_space<vmem>>, vector<1x256xf32>
    %c0_2 = arith.constant 0 : index
    %c768 = arith.constant 768 : index
    %2 = vector.load %arg10[%c0_2, %c768] : memref<1x1792xf32, #tpu.memory_space<vmem>>, vector<1x128xf32>
    %c0_3 = arith.constant 0 : index
    %c896 = arith.constant 896 : index
    %3 = vector.load %arg10[%c0_3, %c896] : memref<1x1792xf32, #tpu.memory_space<vmem>>, vector<1x512xf32>
    %c0_4 = arith.constant 0 : index
    %c1408 = arith.constant 1408 : index
    %4 = vector.load %arg10[%c0_4, %c1408] : memref<1x1792xf32, #tpu.memory_space<vmem>>, vector<1x64xf32>
    %c0_5 = arith.constant 0 : index
    %c1536 = arith.constant 1536 : index
    %5 = vector.load %arg10[%c0_5, %c1536] : memref<1x1792xf32, #tpu.memory_space<vmem>>, vector<1x64xf32>
    %c0_6 = arith.constant 0 : index
    %c1664 = arith.constant 1664 : index
    %6 = vector.load %arg10[%c0_6, %c1664] : memref<1x1792xf32, #tpu.memory_space<vmem>>, vector<1x2xf32>
    %c0_7 = arith.constant 0 : index
    %c0_8 = arith.constant 0 : index
    %7 = vector.load %arg3[%c0_7, %c0_8] : memref<200x64xf32, #tpu.memory_space<vmem>>, vector<3x64xf32>
    %c0_9 = arith.constant 0 : index
    %c0_10 = arith.constant 0 : index
    %8 = vector.load %arg0[%c0_9, %c0_10] : memref<120x3xf32, #tpu.memory_space<vmem>>, vector<120x3xf32>
    %9 = vector.extract_strided_slice %8 {offsets = [0, 0], sizes = [120, 1], strides = [1, 1]} : vector<120x3xf32> to vector<120x1xf32>
    %10 = vector.extract_strided_slice %7 {offsets = [0, 0], sizes = [1, 64], strides = [1, 1]} : vector<3x64xf32> to vector<1x64xf32>
    %11 = vector.broadcast %9 : vector<120x1xf32> to vector<120x64xf32>
    %12 = vector.broadcast %10 : vector<1x64xf32> to vector<120x64xf32>
    %13 = arith.mulf %11, %12 : vector<120x64xf32>
    %14 = vector.extract_strided_slice %8 {offsets = [0, 1], sizes = [120, 1], strides = [1, 1]} : vector<120x3xf32> to vector<120x1xf32>
    %15 = vector.extract_strided_slice %7 {offsets = [1, 0], sizes = [1, 64], strides = [1, 1]} : vector<3x64xf32> to vector<1x64xf32>
    %16 = vector.broadcast %14 : vector<120x1xf32> to vector<120x64xf32>
    %17 = vector.broadcast %15 : vector<1x64xf32> to vector<120x64xf32>
    %18 = arith.mulf %16, %17 : vector<120x64xf32>
    %19 = arith.addf %13, %18 : vector<120x64xf32>
    %20 = vector.extract_strided_slice %8 {offsets = [0, 2], sizes = [120, 1], strides = [1, 1]} : vector<120x3xf32> to vector<120x1xf32>
    %21 = vector.extract_strided_slice %7 {offsets = [2, 0], sizes = [1, 64], strides = [1, 1]} : vector<3x64xf32> to vector<1x64xf32>
    %22 = vector.broadcast %20 : vector<120x1xf32> to vector<120x64xf32>
    %23 = vector.broadcast %21 : vector<1x64xf32> to vector<120x64xf32>
    %24 = arith.mulf %22, %23 : vector<120x64xf32>
    %25 = arith.addf %19, %24 : vector<120x64xf32>
    %26 = vector.broadcast %4 : vector<1x64xf32> to vector<120x64xf32>
    %27 = arith.addf %25, %26 : vector<120x64xf32>
    %cst = arith.constant 0.000000e+00 : f32
    %28 = vector.broadcast %cst : f32 to vector<120x64xf32>
    %29 = arith.maximumf %27, %28 : vector<120x64xf32>
    %c0_11 = arith.constant 0 : index
    %c0_12 = arith.constant 0 : index
    %30 = vector.load %arg1[%c0_11, %c0_12] : memref<120x3xf32, #tpu.memory_space<vmem>>, vector<120x3xf32>
    %31 = vector.extract_strided_slice %30 {offsets = [0, 0], sizes = [120, 1], strides = [1, 1]} : vector<120x3xf32> to vector<120x1xf32>
    %32 = vector.extract_strided_slice %7 {offsets = [0, 0], sizes = [1, 64], strides = [1, 1]} : vector<3x64xf32> to vector<1x64xf32>
    %33 = vector.broadcast %31 : vector<120x1xf32> to vector<120x64xf32>
    %34 = vector.broadcast %32 : vector<1x64xf32> to vector<120x64xf32>
    %35 = arith.mulf %33, %34 : vector<120x64xf32>
    %36 = vector.extract_strided_slice %30 {offsets = [0, 1], sizes = [120, 1], strides = [1, 1]} : vector<120x3xf32> to vector<120x1xf32>
    %37 = vector.extract_strided_slice %7 {offsets = [1, 0], sizes = [1, 64], strides = [1, 1]} : vector<3x64xf32> to vector<1x64xf32>
    %38 = vector.broadcast %36 : vector<120x1xf32> to vector<120x64xf32>
    %39 = vector.broadcast %37 : vector<1x64xf32> to vector<120x64xf32>
    %40 = arith.mulf %38, %39 : vector<120x64xf32>
    %41 = arith.addf %35, %40 : vector<120x64xf32>
    %42 = vector.extract_strided_slice %30 {offsets = [0, 2], sizes = [120, 1], strides = [1, 1]} : vector<120x3xf32> to vector<120x1xf32>
    %43 = vector.extract_strided_slice %7 {offsets = [2, 0], sizes = [1, 64], strides = [1, 1]} : vector<3x64xf32> to vector<1x64xf32>
    %44 = vector.broadcast %42 : vector<120x1xf32> to vector<120x64xf32>
    %45 = vector.broadcast %43 : vector<1x64xf32> to vector<120x64xf32>
    %46 = arith.mulf %44, %45 : vector<120x64xf32>
    %47 = arith.addf %41, %46 : vector<120x64xf32>
    %48 = vector.broadcast %4 : vector<1x64xf32> to vector<120x64xf32>
    %49 = arith.addf %47, %48 : vector<120x64xf32>
    %cst_13 = arith.constant 0.000000e+00 : f32
    %50 = vector.broadcast %cst_13 : f32 to vector<120x64xf32>
    %51 = arith.maximumf %49, %50 : vector<120x64xf32>
    %52 = vector.extract_strided_slice %29 {offsets = [0, 0], sizes = [118, 64], strides = [1, 1]} : vector<120x64xf32> to vector<118x64xf32>
    %c8 = arith.constant 8 : index
    %c0_14 = arith.constant 0 : index
    %53 = vector.load %arg3[%c8, %c0_14] : memref<200x64xf32, #tpu.memory_space<vmem>>, vector<64x64xf32>
    %cst_15 = arith.constant dense<0.000000e+00> : vector<118x64xf32>
    %54 = tpu.matmul %52, %53, %cst_15 {dimension_numbers = #tpu.dot_dimension_numbers<[1], [0], [0], [1], [0, 0, 1, 1], [], []>} : vector<118x64xf32>, vector<64x64xf32>, vector<118x64xf32> -> vector<118x64xf32>
    %55 = vector.extract_strided_slice %51 {offsets = [0, 0], sizes = [118, 64], strides = [1, 1]} : vector<120x64xf32> to vector<118x64xf32>
    %c72 = arith.constant 72 : index
    %c0_16 = arith.constant 0 : index
    %56 = vector.load %arg3[%c72, %c0_16] : memref<200x64xf32, #tpu.memory_space<vmem>>, vector<64x64xf32>
    %cst_17 = arith.constant dense<0.000000e+00> : vector<118x64xf32>
    %57 = tpu.matmul %55, %56, %cst_17 {dimension_numbers = #tpu.dot_dimension_numbers<[1], [0], [0], [1], [0, 0, 1, 1], [], []>} : vector<118x64xf32>, vector<64x64xf32>, vector<118x64xf32> -> vector<118x64xf32>
    %58 = arith.addf %54, %57 : vector<118x64xf32>
    %59 = vector.extract_strided_slice %29 {offsets = [2, 0], sizes = [118, 64], strides = [1, 1]} : vector<120x64xf32> to vector<118x64xf32>
    %c136 = arith.constant 136 : index
    %c0_18 = arith.constant 0 : index
    %60 = vector.load %arg3[%c136, %c0_18] : memref<200x64xf32, #tpu.memory_space<vmem>>, vector<64x64xf32>
    %cst_19 = arith.constant dense<0.000000e+00> : vector<118x64xf32>
    %61 = tpu.matmul %59, %60, %cst_19 {dimension_numbers = #tpu.dot_dimension_numbers<[1], [0], [0], [1], [0, 0, 1, 1], [], []>} : vector<118x64xf32>, vector<64x64xf32>, vector<118x64xf32> -> vector<118x64xf32>
    %62 = arith.addf %58, %61 : vector<118x64xf32>
    %63 = vector.broadcast %5 : vector<1x64xf32> to vector<118x64xf32>
    %64 = arith.addf %62, %63 : vector<118x64xf32>
    %cst_20 = arith.constant 0.000000e+00 : f32
    %65 = vector.broadcast %cst_20 : f32 to vector<118x64xf32>
    %66 = arith.maximumf %64, %65 : vector<118x64xf32>
    %67 = vector.extract_strided_slice %66 {offsets = [0, 0], sizes = [2, 64], strides = [1, 1]} : vector<118x64xf32> to vector<2x64xf32>
    %c0_21 = arith.constant 0 : index
    %c0_22 = arith.constant 0 : index
    %68 = vector.load %arg16[%c0_21, %c0_22] : memref<2x3776xf32, #tpu.memory_space<vmem>>, vector<2x64xf32>
    tpu.vector_store %arg16[%c0_21, %c0_22], %67 {strides = array<i32>} : memref<2x3776xf32, #tpu.memory_space<vmem>>, vector<2x64xf32>,
    %69 = vector.extract_strided_slice %66 {offsets = [2, 0], sizes = [2, 64], strides = [1, 1]} : vector<118x64xf32> to vector<2x64xf32>
    %c0_23 = arith.constant 0 : index
    %c64 = arith.constant 64 : index
    %70 = vector.load %arg16[%c0_23, %c64] : memref<2x3776xf32, #tpu.memory_space<vmem>>, vector<2x64xf32>
    tpu.vector_store %arg16[%c0_23, %c64], %69 {strides = array<i32>} : memref<2x3776xf32, #tpu.memory_space<vmem>>, vector<2x64xf32>,
    %71 = vector.extract_strided_slice %66 {offsets = [4, 0], sizes = [2, 64], strides = [1, 1]} : vector<118x64xf32> to vector<2x64xf32>
    %c0_24 = arith.constant 0 : index
    %c128 = arith.constant 128 : index
    %72 = vector.load %arg16[%c0_24, %c128] : memref<2x3776xf32, #tpu.memory_space<vmem>>, vector<2x64xf32>
    tpu.vector_store %arg16[%c0_24, %c128], %71 {strides = array<i32>} : memref<2x3776xf32, #tpu.memory_space<vmem>>, vector<2x64xf32>,
    %73 = vector.extract_strided_slice %66 {offsets = [6, 0], sizes = [2, 64], strides = [1, 1]} : vector<118x64xf32> to vector<2x64xf32>
    %c0_25 = arith.constant 0 : index
    %c192 = arith.constant 192 : index
    %74 = vector.load %arg16[%c0_25, %c192] : memref<2x3776xf32, #tpu.memory_space<vmem>>, vector<2x64xf32>
    tpu.vector_store %arg16[%c0_25, %c192], %73 {strides = array<i32>} : memref<2x3776xf32, #tpu.memory_space<vmem>>, vector<2x64xf32>,
    %75 = vector.extract_strided_slice %66 {offsets = [8, 0], sizes = [2, 64], strides = [1, 1]} : vector<118x64xf32> to vector<2x64xf32>
    %c0_26 = arith.constant 0 : index
    %c256 = arith.constant 256 : index
    %76 = vector.load %arg16[%c0_26, %c256] : memref<2x3776xf32, #tpu.memory_space<vmem>>, vector<2x64xf32>
    tpu.vector_store %arg16[%c0_26, %c256], %75 {strides = array<i32>} : memref<2x3776xf32, #tpu.memory_space<vmem>>, vector<2x64xf32>,
    %77 = vector.extract_strided_slice %66 {offsets = [10, 0], sizes = [2, 64], strides = [1, 1]} : vector<118x64xf32> to vector<2x64xf32>
    %c0_27 = arith.constant 0 : index
    %c320 = arith.constant 320 : index
    %78 = vector.load %arg16[%c0_27, %c320] : memref<2x3776xf32, #tpu.memory_space<vmem>>, vector<2x64xf32>
    tpu.vector_store %arg16[%c0_27, %c320], %77 {strides = array<i32>} : memref<2x3776xf32, #tpu.memory_space<vmem>>, vector<2x64xf32>,
    %79 = vector.extract_strided_slice %66 {offsets = [12, 0], sizes = [2, 64], strides = [1, 1]} : vector<118x64xf32> to vector<2x64xf32>
    %c0_28 = arith.constant 0 : index
    %c384 = arith.constant 384 : index
    %80 = vector.load %arg16[%c0_28, %c384] : memref<2x3776xf32, #tpu.memory_space<vmem>>, vector<2x64xf32>
    tpu.vector_store %arg16[%c0_28, %c384], %79 {strides = array<i32>} : memref<2x3776xf32, #tpu.memory_space<vmem>>, vector<2x64xf32>,
    %81 = vector.extract_strided_slice %66 {offsets = [14, 0], sizes = [2, 64], strides = [1, 1]} : vector<118x64xf32> to vector<2x64xf32>
    %c0_29 = arith.constant 0 : index
    %c448 = arith.constant 448 : index
    %82 = vector.load %arg16[%c0_29, %c448] : memref<2x3776xf32, #tpu.memory_space<vmem>>, vector<2x64xf32>
    tpu.vector_store %arg16[%c0_29, %c448], %81 {strides = array<i32>} : memref<2x3776xf32, #tpu.memory_space<vmem>>, vector<2x64xf32>,
    %83 = vector.extract_strided_slice %66 {offsets = [16, 0], sizes = [2, 64], strides = [1, 1]} : vector<118x64xf32> to vector<2x64xf32>
    %c0_30 = arith.constant 0 : index
    %c512_31 = arith.constant 512 : index
    %84 = vector.load %arg16[%c0_30, %c512_31] : memref<2x3776xf32, #tpu.memory_space<vmem>>, vector<2x64xf32>
    tpu.vector_store %arg16[%c0_30, %c512_31], %83 {strides = array<i32>} : memref<2x3776xf32, #tpu.memory_space<vmem>>, vector<2x64xf32>,
    %85 = vector.extract_strided_slice %66 {offsets = [18, 0], sizes = [2, 64], strides = [1, 1]} : vector<118x64xf32> to vector<2x64xf32>
    %c0_32 = arith.constant 0 : index
    %c576 = arith.constant 576 : index
    %86 = vector.load %arg16[%c0_32, %c576] : memref<2x3776xf32, #tpu.memory_space<vmem>>, vector<2x64xf32>
    tpu.vector_store %arg16[%c0_32, %c576], %85 {strides = array<i32>} : memref<2x3776xf32, #tpu.memory_space<vmem>>, vector<2x64xf32>,
    %87 = vector.extract_strided_slice %66 {offsets = [20, 0], sizes = [2, 64], strides = [1, 1]} : vector<118x64xf32> to vector<2x64xf32>
    %c0_33 = arith.constant 0 : index
    %c640 = arith.constant 640 : index
    %88 = vector.load %arg16[%c0_33, %c640] : memref<2x3776xf32, #tpu.memory_space<vmem>>, vector<2x64xf32>
    tpu.vector_store %arg16[%c0_33, %c640], %87 {strides = array<i32>} : memref<2x3776xf32, #tpu.memory_space<vmem>>, vector<2x64xf32>,
    %89 = vector.extract_strided_slice %66 {offsets = [22, 0], sizes = [2, 64], strides = [1, 1]} : vector<118x64xf32> to vector<2x64xf32>
    %c0_34 = arith.constant 0 : index
    %c704 = arith.constant 704 : index
    %90 = vector.load %arg16[%c0_34, %c704] : memref<2x3776xf32, #tpu.memory_space<vmem>>, vector<2x64xf32>
    tpu.vector_store %arg16[%c0_34, %c704], %89 {strides = array<i32>} : memref<2x3776xf32, #tpu.memory_space<vmem>>, vector<2x64xf32>,
    %91 = vector.extract_strided_slice %66 {offsets = [24, 0], sizes = [2, 64], strides = [1, 1]} : vector<118x64xf32> to vector<2x64xf32>
    %c0_35 = arith.constant 0 : index
    %c768_36 = arith.constant 768 : index
    %92 = vector.load %arg16[%c0_35, %c768_36] : memref<2x3776xf32, #tpu.memory_space<vmem>>, vector<2x64xf32>
    tpu.vector_store %arg16[%c0_35, %c768_36], %91 {strides = array<i32>} : memref<2x3776xf32, #tpu.memory_space<vmem>>, vector<2x64xf32>,
    %93 = vector.extract_strided_slice %66 {offsets = [26, 0], sizes = [2, 64], strides = [1, 1]} : vector<118x64xf32> to vector<2x64xf32>
    %c0_37 = arith.constant 0 : index
    %c832 = arith.constant 832 : index
    %94 = vector.load %arg16[%c0_37, %c832] : memref<2x3776xf32, #tpu.memory_space<vmem>>, vector<2x64xf32>
    tpu.vector_store %arg16[%c0_37, %c832], %93 {strides = array<i32>} : memref<2x3776xf32, #tpu.memory_space<vmem>>, vector<2x64xf32>,
    %95 = vector.extract_strided_slice %66 {offsets = [28, 0], sizes = [2, 64], strides = [1, 1]} : vector<118x64xf32> to vector<2x64xf32>
    %c0_38 = arith.constant 0 : index
    %c896_39 = arith.constant 896 : index
    %96 = vector.load %arg16[%c0_38, %c896_39] : memref<2x3776xf32, #tpu.memory_space<vmem>>, vector<2x64xf32>
    tpu.vector_store %arg16[%c0_38, %c896_39], %95 {strides = array<i32>} : memref<2x3776xf32, #tpu.memory_space<vmem>>, vector<2x64xf32>,
    %97 = vector.extract_strided_slice %66 {offsets = [30, 0], sizes = [2, 64], strides = [1, 1]} : vector<118x64xf32> to vector<2x64xf32>
    %c0_40 = arith.constant 0 : index
    %c960 = arith.constant 960 : index
    %98 = vector.load %arg16[%c0_40, %c960] : memref<2x3776xf32, #tpu.memory_space<vmem>>, vector<2x64xf32>
    tpu.vector_store %arg16[%c0_40, %c960], %97 {strides = array<i32>} : memref<2x3776xf32, #tpu.memory_space<vmem>>, vector<2x64xf32>,
    %99 = vector.extract_strided_slice %66 {offsets = [32, 0], sizes = [2, 64], strides = [1, 1]} : vector<118x64xf32> to vector<2x64xf32>
    %c0_41 = arith.constant 0 : index
    %c1024 = arith.constant 1024 : index
    %100 = vector.load %arg16[%c0_41, %c1024] : memref<2x3776xf32, #tpu.memory_space<vmem>>, vector<2x64xf32>
    tpu.vector_store %arg16[%c0_41, %c1024], %99 {strides = array<i32>} : memref<2x3776xf32, #tpu.memory_space<vmem>>, vector<2x64xf32>,
    %101 = vector.extract_strided_slice %66 {offsets = [34, 0], sizes = [2, 64], strides = [1, 1]} : vector<118x64xf32> to vector<2x64xf32>
    %c0_42 = arith.constant 0 : index
    %c1088 = arith.constant 1088 : index
    %102 = vector.load %arg16[%c0_42, %c1088] : memref<2x3776xf32, #tpu.memory_space<vmem>>, vector<2x64xf32>
    tpu.vector_store %arg16[%c0_42, %c1088], %101 {strides = array<i32>} : memref<2x3776xf32, #tpu.memory_space<vmem>>, vector<2x64xf32>,
    %103 = vector.extract_strided_slice %66 {offsets = [36, 0], sizes = [2, 64], strides = [1, 1]} : vector<118x64xf32> to vector<2x64xf32>
    %c0_43 = arith.constant 0 : index
    %c1152 = arith.constant 1152 : index
    %104 = vector.load %arg16[%c0_43, %c1152] : memref<2x3776xf32, #tpu.memory_space<vmem>>, vector<2x64xf32>
    tpu.vector_store %arg16[%c0_43, %c1152], %103 {strides = array<i32>} : memref<2x3776xf32, #tpu.memory_space<vmem>>, vector<2x64xf32>,
    %105 = vector.extract_strided_slice %66 {offsets = [38, 0], sizes = [2, 64], strides = [1, 1]} : vector<118x64xf32> to vector<2x64xf32>
    %c0_44 = arith.constant 0 : index
    %c1216 = arith.constant 1216 : index
    %106 = vector.load %arg16[%c0_44, %c1216] : memref<2x3776xf32, #tpu.memory_space<vmem>>, vector<2x64xf32>
    tpu.vector_store %arg16[%c0_44, %c1216], %105 {strides = array<i32>} : memref<2x3776xf32, #tpu.memory_space<vmem>>, vector<2x64xf32>,
    %107 = vector.extract_strided_slice %66 {offsets = [40, 0], sizes = [2, 64], strides = [1, 1]} : vector<118x64xf32> to vector<2x64xf32>
    %c0_45 = arith.constant 0 : index
    %c1280 = arith.constant 1280 : index
    %108 = vector.load %arg16[%c0_45, %c1280] : memref<2x3776xf32, #tpu.memory_space<vmem>>, vector<2x64xf32>
    tpu.vector_store %arg16[%c0_45, %c1280], %107 {strides = array<i32>} : memref<2x3776xf32, #tpu.memory_space<vmem>>, vector<2x64xf32>,
    %109 = vector.extract_strided_slice %66 {offsets = [42, 0], sizes = [2, 64], strides = [1, 1]} : vector<118x64xf32> to vector<2x64xf32>
    %c0_46 = arith.constant 0 : index
    %c1344 = arith.constant 1344 : index
    %110 = vector.load %arg16[%c0_46, %c1344] : memref<2x3776xf32, #tpu.memory_space<vmem>>, vector<2x64xf32>
    tpu.vector_store %arg16[%c0_46, %c1344], %109 {strides = array<i32>} : memref<2x3776xf32, #tpu.memory_space<vmem>>, vector<2x64xf32>,
    %111 = vector.extract_strided_slice %66 {offsets = [44, 0], sizes = [2, 64], strides = [1, 1]} : vector<118x64xf32> to vector<2x64xf32>
    %c0_47 = arith.constant 0 : index
    %c1408_48 = arith.constant 1408 : index
    %112 = vector.load %arg16[%c0_47, %c1408_48] : memref<2x3776xf32, #tpu.memory_space<vmem>>, vector<2x64xf32>
    tpu.vector_store %arg16[%c0_47, %c1408_48], %111 {strides = array<i32>} : memref<2x3776xf32, #tpu.memory_space<vmem>>, vector<2x64xf32>,
    %113 = vector.extract_strided_slice %66 {offsets = [46, 0], sizes = [2, 64], strides = [1, 1]} : vector<118x64xf32> to vector<2x64xf32>
    %c0_49 = arith.constant 0 : index
    %c1472 = arith.constant 1472 : index
    %114 = vector.load %arg16[%c0_49, %c1472] : memref<2x3776xf32, #tpu.memory_space<vmem>>, vector<2x64xf32>
    tpu.vector_store %arg16[%c0_49, %c1472], %113 {strides = array<i32>} : memref<2x3776xf32, #tpu.memory_space<vmem>>, vector<2x64xf32>,
    %115 = vector.extract_strided_slice %66 {offsets = [48, 0], sizes = [2, 64], strides = [1, 1]} : vector<118x64xf32> to vector<2x64xf32>
    %c0_50 = arith.constant 0 : index
    %c1536_51 = arith.constant 1536 : index
    %116 = vector.load %arg16[%c0_50, %c1536_51] : memref<2x3776xf32, #tpu.memory_space<vmem>>, vector<2x64xf32>
    tpu.vector_store %arg16[%c0_50, %c1536_51], %115 {strides = array<i32>} : memref<2x3776xf32, #tpu.memory_space<vmem>>, vector<2x64xf32>,
    %117 = vector.extract_strided_slice %66 {offsets = [50, 0], sizes = [2, 64], strides = [1, 1]} : vector<118x64xf32> to vector<2x64xf32>
    %c0_52 = arith.constant 0 : index
    %c1600 = arith.constant 1600 : index
    %118 = vector.load %arg16[%c0_52, %c1600] : memref<2x3776xf32, #tpu.memory_space<vmem>>, vector<2x64xf32>
    tpu.vector_store %arg16[%c0_52, %c1600], %117 {strides = array<i32>} : memref<2x3776xf32, #tpu.memory_space<vmem>>, vector<2x64xf32>,
    %119 = vector.extract_strided_slice %66 {offsets = [52, 0], sizes = [2, 64], strides = [1, 1]} : vector<118x64xf32> to vector<2x64xf32>
    %c0_53 = arith.constant 0 : index
    %c1664_54 = arith.constant 1664 : index
    %120 = vector.load %arg16[%c0_53, %c1664_54] : memref<2x3776xf32, #tpu.memory_space<vmem>>, vector<2x64xf32>
    tpu.vector_store %arg16[%c0_53, %c1664_54], %119 {strides = array<i32>} : memref<2x3776xf32, #tpu.memory_space<vmem>>, vector<2x64xf32>,
    %121 = vector.extract_strided_slice %66 {offsets = [54, 0], sizes = [2, 64], strides = [1, 1]} : vector<118x64xf32> to vector<2x64xf32>
    %c0_55 = arith.constant 0 : index
    %c1728 = arith.constant 1728 : index
    %122 = vector.load %arg16[%c0_55, %c1728] : memref<2x3776xf32, #tpu.memory_space<vmem>>, vector<2x64xf32>
    tpu.vector_store %arg16[%c0_55, %c1728], %121 {strides = array<i32>} : memref<2x3776xf32, #tpu.memory_space<vmem>>, vector<2x64xf32>,
    %123 = vector.extract_strided_slice %66 {offsets = [56, 0], sizes = [2, 64], strides = [1, 1]} : vector<118x64xf32> to vector<2x64xf32>
    %c0_56 = arith.constant 0 : index
    %c1792 = arith.constant 1792 : index
    %124 = vector.load %arg16[%c0_56, %c1792] : memref<2x3776xf32, #tpu.memory_space<vmem>>, vector<2x64xf32>
    tpu.vector_store %arg16[%c0_56, %c1792], %123 {strides = array<i32>} : memref<2x3776xf32, #tpu.memory_space<vmem>>, vector<2x64xf32>,
    %125 = vector.extract_strided_slice %66 {offsets = [58, 0], sizes = [2, 64], strides = [1, 1]} : vector<118x64xf32> to vector<2x64xf32>
    %c0_57 = arith.constant 0 : index
    %c1856 = arith.constant 1856 : index
    %126 = vector.load %arg16[%c0_57, %c1856] : memref<2x3776xf32, #tpu.memory_space<vmem>>, vector<2x64xf32>
    tpu.vector_store %arg16[%c0_57, %c1856], %125 {strides = array<i32>} : memref<2x3776xf32, #tpu.memory_space<vmem>>, vector<2x64xf32>,
    %127 = vector.extract_strided_slice %66 {offsets = [60, 0], sizes = [2, 64], strides = [1, 1]} : vector<118x64xf32> to vector<2x64xf32>
    %c0_58 = arith.constant 0 : index
    %c1920 = arith.constant 1920 : index
    %128 = vector.load %arg16[%c0_58, %c1920] : memref<2x3776xf32, #tpu.memory_space<vmem>>, vector<2x64xf32>
    tpu.vector_store %arg16[%c0_58, %c1920], %127 {strides = array<i32>} : memref<2x3776xf32, #tpu.memory_space<vmem>>, vector<2x64xf32>,
    %129 = vector.extract_strided_slice %66 {offsets = [62, 0], sizes = [2, 64], strides = [1, 1]} : vector<118x64xf32> to vector<2x64xf32>
    %c0_59 = arith.constant 0 : index
    %c1984 = arith.constant 1984 : index
    %130 = vector.load %arg16[%c0_59, %c1984] : memref<2x3776xf32, #tpu.memory_space<vmem>>, vector<2x64xf32>
    tpu.vector_store %arg16[%c0_59, %c1984], %129 {strides = array<i32>} : memref<2x3776xf32, #tpu.memory_space<vmem>>, vector<2x64xf32>,
    %131 = vector.extract_strided_slice %66 {offsets = [64, 0], sizes = [2, 64], strides = [1, 1]} : vector<118x64xf32> to vector<2x64xf32>
    %c0_60 = arith.constant 0 : index
    %c2048 = arith.constant 2048 : index
    %132 = vector.load %arg16[%c0_60, %c2048] : memref<2x3776xf32, #tpu.memory_space<vmem>>, vector<2x64xf32>
    tpu.vector_store %arg16[%c0_60, %c2048], %131 {strides = array<i32>} : memref<2x3776xf32, #tpu.memory_space<vmem>>, vector<2x64xf32>,
    %133 = vector.extract_strided_slice %66 {offsets = [66, 0], sizes = [2, 64], strides = [1, 1]} : vector<118x64xf32> to vector<2x64xf32>
    %c0_61 = arith.constant 0 : index
    %c2112 = arith.constant 2112 : index
    %134 = vector.load %arg16[%c0_61, %c2112] : memref<2x3776xf32, #tpu.memory_space<vmem>>, vector<2x64xf32>
    tpu.vector_store %arg16[%c0_61, %c2112], %133 {strides = array<i32>} : memref<2x3776xf32, #tpu.memory_space<vmem>>, vector<2x64xf32>,
    %135 = vector.extract_strided_slice %66 {offsets = [68, 0], sizes = [2, 64], strides = [1, 1]} : vector<118x64xf32> to vector<2x64xf32>
    %c0_62 = arith.constant 0 : index
    %c2176 = arith.constant 2176 : index
    %136 = vector.load %arg16[%c0_62, %c2176] : memref<2x3776xf32, #tpu.memory_space<vmem>>, vector<2x64xf32>
    tpu.vector_store %arg16[%c0_62, %c2176], %135 {strides = array<i32>} : memref<2x3776xf32, #tpu.memory_space<vmem>>, vector<2x64xf32>,
    %137 = vector.extract_strided_slice %66 {offsets = [70, 0], sizes = [2, 64], strides = [1, 1]} : vector<118x64xf32> to vector<2x64xf32>
    %c0_63 = arith.constant 0 : index
    %c2240 = arith.constant 2240 : index
    %138 = vector.load %arg16[%c0_63, %c2240] : memref<2x3776xf32, #tpu.memory_space<vmem>>, vector<2x64xf32>
    tpu.vector_store %arg16[%c0_63, %c2240], %137 {strides = array<i32>} : memref<2x3776xf32, #tpu.memory_space<vmem>>, vector<2x64xf32>,
    %139 = vector.extract_strided_slice %66 {offsets = [72, 0], sizes = [2, 64], strides = [1, 1]} : vector<118x64xf32> to vector<2x64xf32>
    %c0_64 = arith.constant 0 : index
    %c2304 = arith.constant 2304 : index
    %140 = vector.load %arg16[%c0_64, %c2304] : memref<2x3776xf32, #tpu.memory_space<vmem>>, vector<2x64xf32>
    tpu.vector_store %arg16[%c0_64, %c2304], %139 {strides = array<i32>} : memref<2x3776xf32, #tpu.memory_space<vmem>>, vector<2x64xf32>,
    %141 = vector.extract_strided_slice %66 {offsets = [74, 0], sizes = [2, 64], strides = [1, 1]} : vector<118x64xf32> to vector<2x64xf32>
    %c0_65 = arith.constant 0 : index
    %c2368 = arith.constant 2368 : index
    %142 = vector.load %arg16[%c0_65, %c2368] : memref<2x3776xf32, #tpu.memory_space<vmem>>, vector<2x64xf32>
    tpu.vector_store %arg16[%c0_65, %c2368], %141 {strides = array<i32>} : memref<2x3776xf32, #tpu.memory_space<vmem>>, vector<2x64xf32>,
    %143 = vector.extract_strided_slice %66 {offsets = [76, 0], sizes = [2, 64], strides = [1, 1]} : vector<118x64xf32> to vector<2x64xf32>
    %c0_66 = arith.constant 0 : index
    %c2432 = arith.constant 2432 : index
    %144 = vector.load %arg16[%c0_66, %c2432] : memref<2x3776xf32, #tpu.memory_space<vmem>>, vector<2x64xf32>
    tpu.vector_store %arg16[%c0_66, %c2432], %143 {strides = array<i32>} : memref<2x3776xf32, #tpu.memory_space<vmem>>, vector<2x64xf32>,
    %145 = vector.extract_strided_slice %66 {offsets = [78, 0], sizes = [2, 64], strides = [1, 1]} : vector<118x64xf32> to vector<2x64xf32>
    %c0_67 = arith.constant 0 : index
    %c2496 = arith.constant 2496 : index
    %146 = vector.load %arg16[%c0_67, %c2496] : memref<2x3776xf32, #tpu.memory_space<vmem>>, vector<2x64xf32>
    tpu.vector_store %arg16[%c0_67, %c2496], %145 {strides = array<i32>} : memref<2x3776xf32, #tpu.memory_space<vmem>>, vector<2x64xf32>,
    %147 = vector.extract_strided_slice %66 {offsets = [80, 0], sizes = [2, 64], strides = [1, 1]} : vector<118x64xf32> to vector<2x64xf32>
    %c0_68 = arith.constant 0 : index
    %c2560 = arith.constant 2560 : index
    %148 = vector.load %arg16[%c0_68, %c2560] : memref<2x3776xf32, #tpu.memory_space<vmem>>, vector<2x64xf32>
    tpu.vector_store %arg16[%c0_68, %c2560], %147 {strides = array<i32>} : memref<2x3776xf32, #tpu.memory_space<vmem>>, vector<2x64xf32>,
    %149 = vector.extract_strided_slice %66 {offsets = [82, 0], sizes = [2, 64], strides = [1, 1]} : vector<118x64xf32> to vector<2x64xf32>
    %c0_69 = arith.constant 0 : index
    %c2624 = arith.constant 2624 : index
    %150 = vector.load %arg16[%c0_69, %c2624] : memref<2x3776xf32, #tpu.memory_space<vmem>>, vector<2x64xf32>
    tpu.vector_store %arg16[%c0_69, %c2624], %149 {strides = array<i32>} : memref<2x3776xf32, #tpu.memory_space<vmem>>, vector<2x64xf32>,
    %151 = vector.extract_strided_slice %66 {offsets = [84, 0], sizes = [2, 64], strides = [1, 1]} : vector<118x64xf32> to vector<2x64xf32>
    %c0_70 = arith.constant 0 : index
    %c2688 = arith.constant 2688 : index
    %152 = vector.load %arg16[%c0_70, %c2688] : memref<2x3776xf32, #tpu.memory_space<vmem>>, vector<2x64xf32>
    tpu.vector_store %arg16[%c0_70, %c2688], %151 {strides = array<i32>} : memref<2x3776xf32, #tpu.memory_space<vmem>>, vector<2x64xf32>,
    %153 = vector.extract_strided_slice %66 {offsets = [86, 0], sizes = [2, 64], strides = [1, 1]} : vector<118x64xf32> to vector<2x64xf32>
    %c0_71 = arith.constant 0 : index
    %c2752 = arith.constant 2752 : index
    %154 = vector.load %arg16[%c0_71, %c2752] : memref<2x3776xf32, #tpu.memory_space<vmem>>, vector<2x64xf32>
    tpu.vector_store %arg16[%c0_71, %c2752], %153 {strides = array<i32>} : memref<2x3776xf32, #tpu.memory_space<vmem>>, vector<2x64xf32>,
    %155 = vector.extract_strided_slice %66 {offsets = [88, 0], sizes = [2, 64], strides = [1, 1]} : vector<118x64xf32> to vector<2x64xf32>
    %c0_72 = arith.constant 0 : index
    %c2816 = arith.constant 2816 : index
    %156 = vector.load %arg16[%c0_72, %c2816] : memref<2x3776xf32, #tpu.memory_space<vmem>>, vector<2x64xf32>
    tpu.vector_store %arg16[%c0_72, %c2816], %155 {strides = array<i32>} : memref<2x3776xf32, #tpu.memory_space<vmem>>, vector<2x64xf32>,
    %157 = vector.extract_strided_slice %66 {offsets = [90, 0], sizes = [2, 64], strides = [1, 1]} : vector<118x64xf32> to vector<2x64xf32>
    %c0_73 = arith.constant 0 : index
    %c2880 = arith.constant 2880 : index
    %158 = vector.load %arg16[%c0_73, %c2880] : memref<2x3776xf32, #tpu.memory_space<vmem>>, vector<2x64xf32>
    tpu.vector_store %arg16[%c0_73, %c2880], %157 {strides = array<i32>} : memref<2x3776xf32, #tpu.memory_space<vmem>>, vector<2x64xf32>,
    %159 = vector.extract_strided_slice %66 {offsets = [92, 0], sizes = [2, 64], strides = [1, 1]} : vector<118x64xf32> to vector<2x64xf32>
    %c0_74 = arith.constant 0 : index
    %c2944 = arith.constant 2944 : index
    %160 = vector.load %arg16[%c0_74, %c2944] : memref<2x3776xf32, #tpu.memory_space<vmem>>, vector<2x64xf32>
    tpu.vector_store %arg16[%c0_74, %c2944], %159 {strides = array<i32>} : memref<2x3776xf32, #tpu.memory_space<vmem>>, vector<2x64xf32>,
    %161 = vector.extract_strided_slice %66 {offsets = [94, 0], sizes = [2, 64], strides = [1, 1]} : vector<118x64xf32> to vector<2x64xf32>
    %c0_75 = arith.constant 0 : index
    %c3008 = arith.constant 3008 : index
    %162 = vector.load %arg16[%c0_75, %c3008] : memref<2x3776xf32, #tpu.memory_space<vmem>>, vector<2x64xf32>
    tpu.vector_store %arg16[%c0_75, %c3008], %161 {strides = array<i32>} : memref<2x3776xf32, #tpu.memory_space<vmem>>, vector<2x64xf32>,
    %163 = vector.extract_strided_slice %66 {offsets = [96, 0], sizes = [2, 64], strides = [1, 1]} : vector<118x64xf32> to vector<2x64xf32>
    %c0_76 = arith.constant 0 : index
    %c3072 = arith.constant 3072 : index
    %164 = vector.load %arg16[%c0_76, %c3072] : memref<2x3776xf32, #tpu.memory_space<vmem>>, vector<2x64xf32>
    tpu.vector_store %arg16[%c0_76, %c3072], %163 {strides = array<i32>} : memref<2x3776xf32, #tpu.memory_space<vmem>>, vector<2x64xf32>,
    %165 = vector.extract_strided_slice %66 {offsets = [98, 0], sizes = [2, 64], strides = [1, 1]} : vector<118x64xf32> to vector<2x64xf32>
    %c0_77 = arith.constant 0 : index
    %c3136 = arith.constant 3136 : index
    %166 = vector.load %arg16[%c0_77, %c3136] : memref<2x3776xf32, #tpu.memory_space<vmem>>, vector<2x64xf32>
    tpu.vector_store %arg16[%c0_77, %c3136], %165 {strides = array<i32>} : memref<2x3776xf32, #tpu.memory_space<vmem>>, vector<2x64xf32>,
    %167 = vector.extract_strided_slice %66 {offsets = [100, 0], sizes = [2, 64], strides = [1, 1]} : vector<118x64xf32> to vector<2x64xf32>
    %c0_78 = arith.constant 0 : index
    %c3200 = arith.constant 3200 : index
    %168 = vector.load %arg16[%c0_78, %c3200] : memref<2x3776xf32, #tpu.memory_space<vmem>>, vector<2x64xf32>
    tpu.vector_store %arg16[%c0_78, %c3200], %167 {strides = array<i32>} : memref<2x3776xf32, #tpu.memory_space<vmem>>, vector<2x64xf32>,
    %169 = vector.extract_strided_slice %66 {offsets = [102, 0], sizes = [2, 64], strides = [1, 1]} : vector<118x64xf32> to vector<2x64xf32>
    %c0_79 = arith.constant 0 : index
    %c3264 = arith.constant 3264 : index
    %170 = vector.load %arg16[%c0_79, %c3264] : memref<2x3776xf32, #tpu.memory_space<vmem>>, vector<2x64xf32>
    tpu.vector_store %arg16[%c0_79, %c3264], %169 {strides = array<i32>} : memref<2x3776xf32, #tpu.memory_space<vmem>>, vector<2x64xf32>,
    %171 = vector.extract_strided_slice %66 {offsets = [104, 0], sizes = [2, 64], strides = [1, 1]} : vector<118x64xf32> to vector<2x64xf32>
    %c0_80 = arith.constant 0 : index
    %c3328 = arith.constant 3328 : index
    %172 = vector.load %arg16[%c0_80, %c3328] : memref<2x3776xf32, #tpu.memory_space<vmem>>, vector<2x64xf32>
    tpu.vector_store %arg16[%c0_80, %c3328], %171 {strides = array<i32>} : memref<2x3776xf32, #tpu.memory_space<vmem>>, vector<2x64xf32>,
    %173 = vector.extract_strided_slice %66 {offsets = [106, 0], sizes = [2, 64], strides = [1, 1]} : vector<118x64xf32> to vector<2x64xf32>
    %c0_81 = arith.constant 0 : index
    %c3392 = arith.constant 3392 : index
    %174 = vector.load %arg16[%c0_81, %c3392] : memref<2x3776xf32, #tpu.memory_space<vmem>>, vector<2x64xf32>
    tpu.vector_store %arg16[%c0_81, %c3392], %173 {strides = array<i32>} : memref<2x3776xf32, #tpu.memory_space<vmem>>, vector<2x64xf32>,
    %175 = vector.extract_strided_slice %66 {offsets = [108, 0], sizes = [2, 64], strides = [1, 1]} : vector<118x64xf32> to vector<2x64xf32>
    %c0_82 = arith.constant 0 : index
    %c3456 = arith.constant 3456 : index
    %176 = vector.load %arg16[%c0_82, %c3456] : memref<2x3776xf32, #tpu.memory_space<vmem>>, vector<2x64xf32>
    tpu.vector_store %arg16[%c0_82, %c3456], %175 {strides = array<i32>} : memref<2x3776xf32, #tpu.memory_space<vmem>>, vector<2x64xf32>,
    %177 = vector.extract_strided_slice %66 {offsets = [110, 0], sizes = [2, 64], strides = [1, 1]} : vector<118x64xf32> to vector<2x64xf32>
    %c0_83 = arith.constant 0 : index
    %c3520 = arith.constant 3520 : index
    %178 = vector.load %arg16[%c0_83, %c3520] : memref<2x3776xf32, #tpu.memory_space<vmem>>, vector<2x64xf32>
    tpu.vector_store %arg16[%c0_83, %c3520], %177 {strides = array<i32>} : memref<2x3776xf32, #tpu.memory_space<vmem>>, vector<2x64xf32>,
    %179 = vector.extract_strided_slice %66 {offsets = [112, 0], sizes = [2, 64], strides = [1, 1]} : vector<118x64xf32> to vector<2x64xf32>
    %c0_84 = arith.constant 0 : index
    %c3584 = arith.constant 3584 : index
    %180 = vector.load %arg16[%c0_84, %c3584] : memref<2x3776xf32, #tpu.memory_space<vmem>>, vector<2x64xf32>
    tpu.vector_store %arg16[%c0_84, %c3584], %179 {strides = array<i32>} : memref<2x3776xf32, #tpu.memory_space<vmem>>, vector<2x64xf32>,
    %181 = vector.extract_strided_slice %66 {offsets = [114, 0], sizes = [2, 64], strides = [1, 1]} : vector<118x64xf32> to vector<2x64xf32>
    %c0_85 = arith.constant 0 : index
    %c3648 = arith.constant 3648 : index
    %182 = vector.load %arg16[%c0_85, %c3648] : memref<2x3776xf32, #tpu.memory_space<vmem>>, vector<2x64xf32>
    tpu.vector_store %arg16[%c0_85, %c3648], %181 {strides = array<i32>} : memref<2x3776xf32, #tpu.memory_space<vmem>>, vector<2x64xf32>,
    %183 = vector.extract_strided_slice %66 {offsets = [116, 0], sizes = [2, 64], strides = [1, 1]} : vector<118x64xf32> to vector<2x64xf32>
    %c0_86 = arith.constant 0 : index
    %c3712 = arith.constant 3712 : index
    %184 = vector.load %arg16[%c0_86, %c3712] : memref<2x3776xf32, #tpu.memory_space<vmem>>, vector<2x64xf32>
    tpu.vector_store %arg16[%c0_86, %c3712], %183 {strides = array<i32>} : memref<2x3776xf32, #tpu.memory_space<vmem>>, vector<2x64xf32>,
    %c0_87 = arith.constant 0 : index
    %c0_88 = arith.constant 0 : index
    %185 = vector.load %arg16[%c0_87, %c0_88] : memref<2x3776xf32, #tpu.memory_space<vmem>>, vector<2x3776xf32>
    %186 = arith.truncf %185 : vector<2x3776xf32> to vector<2x3776xbf16>
    %c0_89 = arith.constant 0 : index
    %c0_90 = arith.constant 0 : index
    %187 = vector.load %arg4[%c0_89, %c0_90] : memref<3776x512xbf16, #tpu.memory_space<vmem>>, vector<3776x512xbf16>
    %cst_91 = arith.constant dense<0.000000e+00> : vector<2x512xf32>
    %188 = tpu.matmul %186, %187, %cst_91 {dimension_numbers = #tpu.dot_dimension_numbers<[1], [0], [0], [1], [0, 0, 1, 1], [], []>} : vector<2x3776xbf16>, vector<3776x512xbf16>, vector<2x512xf32> -> vector<2x512xf32>
    %189 = vector.broadcast %0 : vector<1x512xf32> to vector<2x512xf32>
    %190 = arith.addf %188, %189 : vector<2x512xf32>
    %cst_92 = arith.constant 0.000000e+00 : f32
    %191 = vector.broadcast %cst_92 : f32 to vector<2x512xf32>
    %192 = arith.maximumf %190, %191 : vector<2x512xf32>
    %c0_93 = arith.constant 0 : index
    %c0_94 = arith.constant 0 : index
    %193 = vector.load %arg5[%c0_93, %c0_94] : memref<512x256xf32, #tpu.memory_space<vmem>>, vector<512x256xf32>
    %cst_95 = arith.constant dense<0.000000e+00> : vector<2x256xf32>
    %194 = tpu.matmul %192, %193, %cst_95 {dimension_numbers = #tpu.dot_dimension_numbers<[1], [0], [0], [1], [0, 0, 1, 1], [], []>} : vector<2x512xf32>, vector<512x256xf32>, vector<2x256xf32> -> vector<2x256xf32>
    %c0_96 = arith.constant 0 : index
    %c0_97 = arith.constant 0 : index
    %195 = vector.load %arg2[%c0_96, %c0_97] : memref<2x2xf32, #tpu.memory_space<vmem>>, vector<2x2xf32>
    %c0_98 = arith.constant 0 : index
    %c0_99 = arith.constant 0 : index
    %196 = vector.load %arg6[%c0_98, %c0_99] : memref<2x256xf32, #tpu.memory_space<vmem>>, vector<2x256xf32>
    %cst_100 = arith.constant dense<0.000000e+00> : vector<2x256xf32>
    %197 = tpu.matmul %195, %196, %cst_100 {dimension_numbers = #tpu.dot_dimension_numbers<[1], [0], [0], [1], [0, 0, 1, 1], [], []>} : vector<2x2xf32>, vector<2x256xf32>, vector<2x256xf32> -> vector<2x256xf32>
    %198 = arith.addf %194, %197 : vector<2x256xf32>
    %199 = vector.broadcast %1 : vector<1x256xf32> to vector<2x256xf32>
    %200 = arith.addf %198, %199 : vector<2x256xf32>
    %cst_101 = arith.constant 0.000000e+00 : f32
    %201 = vector.broadcast %cst_101 : f32 to vector<2x256xf32>
    %202 = arith.maximumf %200, %201 : vector<2x256xf32>
    %c0_102 = arith.constant 0 : index
    %c0_103 = arith.constant 0 : index
    %203 = vector.load %arg7[%c0_102, %c0_103] : memref<256x128xf32, #tpu.memory_space<vmem>>, vector<256x128xf32>
    %cst_104 = arith.constant dense<0.000000e+00> : vector<2x128xf32>
    %204 = tpu.matmul %202, %203, %cst_104 {dimension_numbers = #tpu.dot_dimension_numbers<[1], [0], [0], [1], [0, 0, 1, 1], [], []>} : vector<2x256xf32>, vector<256x128xf32>, vector<2x128xf32> -> vector<2x128xf32>
    %205 = vector.broadcast %2 : vector<1x128xf32> to vector<2x128xf32>
    %206 = arith.addf %204, %205 : vector<2x128xf32>
    %cst_105 = arith.constant 0.000000e+00 : f32
    %207 = vector.broadcast %cst_105 : f32 to vector<2x128xf32>
    %208 = arith.maximumf %206, %207 : vector<2x128xf32>
    %c0_106 = arith.constant 0 : index
    %c0_107 = arith.constant 0 : index
    %209 = vector.load %arg8[%c0_106, %c0_107] : memref<256x512xf32, #tpu.memory_space<vmem>>, vector<128x512xf32>
    %c128_108 = arith.constant 128 : index
    %c0_109 = arith.constant 0 : index
    %210 = vector.load %arg8[%c128_108, %c0_109] : memref<256x512xf32, #tpu.memory_space<vmem>>, vector<128x512xf32>
    %c0_110 = arith.constant 0 : index
    %c0_111 = arith.constant 0 : index
    %211 = vector.load %arg9[%c0_110, %c0_111] : memref<128x2xf32, #tpu.memory_space<vmem>>, vector<128x2xf32>
    %212 = tpu.iota {dimensions = array<i32: 1>} : vector<1x2xi32>
    %c0_112 = arith.constant 0 : index
    %c0_113 = arith.constant 0 : index
    %213 = vector.load %arg11[%c0_112, %c0_113] : memref<1x128xf32, #tpu.memory_space<vmem>>, vector<1x128xf32>
    %c0_114 = arith.constant 0 : index
    %c0_115 = arith.constant 0 : index
    %214 = vector.load %arg12[%c0_114, %c0_115] : memref<1x128xf32, #tpu.memory_space<vmem>>, vector<1x128xf32>
    %215 = vector.extract_strided_slice %208 {offsets = [0, 0], sizes = [1, 128], strides = [1, 1]} : vector<2x128xf32> to vector<1x128xf32>
    %cst_116 = arith.constant dense<0.000000e+00> : vector<1x512xf32>
    %216 = tpu.matmul %215, %209, %cst_116 {dimension_numbers = #tpu.dot_dimension_numbers<[1], [0], [0], [1], [0, 0, 1, 1], [], []>} : vector<1x128xf32>, vector<128x512xf32>, vector<1x512xf32> -> vector<1x512xf32>
    %cst_117 = arith.constant dense<0.000000e+00> : vector<1x512xf32>
    %217 = tpu.matmul %213, %210, %cst_117 {dimension_numbers = #tpu.dot_dimension_numbers<[1], [0], [0], [1], [0, 0, 1, 1], [], []>} : vector<1x128xf32>, vector<128x512xf32>, vector<1x512xf32> -> vector<1x512xf32>
    %218 = arith.addf %216, %217 : vector<1x512xf32>
    %219 = arith.addf %218, %3 : vector<1x512xf32>
    %220 = vector.extract_strided_slice %219 {offsets = [0, 0], sizes = [1, 128], strides = [1, 1]} : vector<1x512xf32> to vector<1x128xf32>
    %cst_118 = arith.constant 0.000000e+00 : f32
    %221 = vector.broadcast %cst_118 : f32 to vector<1x128xf32>
    %222 = arith.subf %221, %220 : vector<1x128xf32>
    %223 = math.exp %222 : vector<1x128xf32>
    %cst_119 = arith.constant 1.000000e+00 : f32
    %224 = vector.broadcast %cst_119 : f32 to vector<1x128xf32>
    %225 = arith.addf %224, %223 : vector<1x128xf32>
    %226 = tpu.reciprocal %225 {approx = true} : vector<1x128xf32> -> vector<1x128xf32>
    %227 = vector.extract_strided_slice %219 {offsets = [0, 128], sizes = [1, 128], strides = [1, 1]} : vector<1x512xf32> to vector<1x128xf32>
    %cst_120 = arith.constant 0.000000e+00 : f32
    %228 = vector.broadcast %cst_120 : f32 to vector<1x128xf32>
    %229 = arith.subf %228, %227 : vector<1x128xf32>
    %230 = math.exp %229 : vector<1x128xf32>
    %cst_121 = arith.constant 1.000000e+00 : f32
    %231 = vector.broadcast %cst_121 : f32 to vector<1x128xf32>
    %232 = arith.addf %231, %230 : vector<1x128xf32>
    %233 = tpu.reciprocal %232 {approx = true} : vector<1x128xf32> -> vector<1x128xf32>
    %234 = vector.extract_strided_slice %219 {offsets = [0, 256], sizes = [1, 128], strides = [1, 1]} : vector<1x512xf32> to vector<1x128xf32>
    %235 = math.tanh %234 : vector<1x128xf32>
    %236 = vector.extract_strided_slice %219 {offsets = [0, 384], sizes = [1, 128], strides = [1, 1]} : vector<1x512xf32> to vector<1x128xf32>
    %cst_122 = arith.constant 0.000000e+00 : f32
    %237 = vector.broadcast %cst_122 : f32 to vector<1x128xf32>
    %238 = arith.subf %237, %236 : vector<1x128xf32>
    %239 = math.exp %238 : vector<1x128xf32>
    %cst_123 = arith.constant 1.000000e+00 : f32
    %240 = vector.broadcast %cst_123 : f32 to vector<1x128xf32>
    %241 = arith.addf %240, %239 : vector<1x128xf32>
    %242 = tpu.reciprocal %241 {approx = true} : vector<1x128xf32> -> vector<1x128xf32>
    %243 = arith.mulf %233, %214 : vector<1x128xf32>
    %244 = arith.mulf %226, %235 : vector<1x128xf32>
    %245 = arith.addf %243, %244 : vector<1x128xf32>
    %246 = math.tanh %245 : vector<1x128xf32>
    %247 = arith.mulf %242, %246 : vector<1x128xf32>
    %cst_124 = arith.constant dense<0.000000e+00> : vector<1x2xf32>
    %248 = tpu.matmul %247, %211, %cst_124 {dimension_numbers = #tpu.dot_dimension_numbers<[1], [0], [0], [1], [0, 0, 1, 1], [], []>} : vector<1x128xf32>, vector<128x2xf32>, vector<1x2xf32> -> vector<1x2xf32>
    %249 = arith.addf %248, %6 : vector<1x2xf32>
    %c0_i32 = arith.constant 0 : i32
    %250 = vector.broadcast %c0_i32 : i32 to vector<1x2xi32>
    %251 = arith.cmpi eq, %212, %250 : vector<1x2xi32>
    %cst_125 = arith.constant 0.000000e+00 : f32
    %252 = vector.broadcast %cst_125 : f32 to vector<1x2xf32>
    %253 = arith.subf %252, %249 : vector<1x2xf32>
    %254 = math.exp %253 : vector<1x2xf32>
    %cst_126 = arith.constant 1.000000e+00 : f32
    %255 = vector.broadcast %cst_126 : f32 to vector<1x2xf32>
    %256 = arith.addf %255, %254 : vector<1x2xf32>
    %cst_127 = arith.constant 1.000000e+00 : f32
    %257 = vector.broadcast %cst_127 : f32 to vector<1x2xf32>
    %258 = arith.divf %257, %256 : vector<1x2xf32>
    %259 = math.tanh %249 : vector<1x2xf32>
    %260 = arith.select %251, %258, %259 : vector<1x2xi1>, vector<1x2xf32>
    %c0_128 = arith.constant 0 : index
    %c0_129 = arith.constant 0 : index
    %261 = vector.load %arg13[%c0_128, %c0_129] : memref<2x2xf32, #tpu.memory_space<vmem>>, vector<1x2xf32>
    tpu.vector_store %arg13[%c0_128, %c0_129], %260 {strides = array<i32>} : memref<2x2xf32, #tpu.memory_space<vmem>>, vector<1x2xf32>,
    %262 = vector.extract_strided_slice %208 {offsets = [1, 0], sizes = [1, 128], strides = [1, 1]} : vector<2x128xf32> to vector<1x128xf32>
    %cst_130 = arith.constant dense<0.000000e+00> : vector<1x512xf32>
    %263 = tpu.matmul %262, %209, %cst_130 {dimension_numbers = #tpu.dot_dimension_numbers<[1], [0], [0], [1], [0, 0, 1, 1], [], []>} : vector<1x128xf32>, vector<128x512xf32>, vector<1x512xf32> -> vector<1x512xf32>
    %cst_131 = arith.constant dense<0.000000e+00> : vector<1x512xf32>
    %264 = tpu.matmul %247, %210, %cst_131 {dimension_numbers = #tpu.dot_dimension_numbers<[1], [0], [0], [1], [0, 0, 1, 1], [], []>} : vector<1x128xf32>, vector<128x512xf32>, vector<1x512xf32> -> vector<1x512xf32>
    %265 = arith.addf %263, %264 : vector<1x512xf32>
    %266 = arith.addf %265, %3 : vector<1x512xf32>
    %267 = vector.extract_strided_slice %266 {offsets = [0, 0], sizes = [1, 128], strides = [1, 1]} : vector<1x512xf32> to vector<1x128xf32>
    %cst_132 = arith.constant 0.000000e+00 : f32
    %268 = vector.broadcast %cst_132 : f32 to vector<1x128xf32>
    %269 = arith.subf %268, %267 : vector<1x128xf32>
    %270 = math.exp %269 : vector<1x128xf32>
    %cst_133 = arith.constant 1.000000e+00 : f32
    %271 = vector.broadcast %cst_133 : f32 to vector<1x128xf32>
    %272 = arith.addf %271, %270 : vector<1x128xf32>
    %273 = tpu.reciprocal %272 {approx = true} : vector<1x128xf32> -> vector<1x128xf32>
    %274 = vector.extract_strided_slice %266 {offsets = [0, 128], sizes = [1, 128], strides = [1, 1]} : vector<1x512xf32> to vector<1x128xf32>
    %cst_134 = arith.constant 0.000000e+00 : f32
    %275 = vector.broadcast %cst_134 : f32 to vector<1x128xf32>
    %276 = arith.subf %275, %274 : vector<1x128xf32>
    %277 = math.exp %276 : vector<1x128xf32>
    %cst_135 = arith.constant 1.000000e+00 : f32
    %278 = vector.broadcast %cst_135 : f32 to vector<1x128xf32>
    %279 = arith.addf %278, %277 : vector<1x128xf32>
    %280 = tpu.reciprocal %279 {approx = true} : vector<1x128xf32> -> vector<1x128xf32>
    %281 = vector.extract_strided_slice %266 {offsets = [0, 256], sizes = [1, 128], strides = [1, 1]} : vector<1x512xf32> to vector<1x128xf32>
    %282 = math.tanh %281 : vector<1x128xf32>
    %283 = vector.extract_strided_slice %266 {offsets = [0, 384], sizes = [1, 128], strides = [1, 1]} : vector<1x512xf32> to vector<1x128xf32>
    %cst_136 = arith.constant 0.000000e+00 : f32
    %284 = vector.broadcast %cst_136 : f32 to vector<1x128xf32>
    %285 = arith.subf %284, %283 : vector<1x128xf32>
    %286 = math.exp %285 : vector<1x128xf32>
    %cst_137 = arith.constant 1.000000e+00 : f32
    %287 = vector.broadcast %cst_137 : f32 to vector<1x128xf32>
    %288 = arith.addf %287, %286 : vector<1x128xf32>
    %289 = tpu.reciprocal %288 {approx = true} : vector<1x128xf32> -> vector<1x128xf32>
    %290 = arith.mulf %280, %245 : vector<1x128xf32>
    %291 = arith.mulf %273, %282 : vector<1x128xf32>
    %292 = arith.addf %290, %291 : vector<1x128xf32>
    %293 = math.tanh %292 : vector<1x128xf32>
    %294 = arith.mulf %289, %293 : vector<1x128xf32>
    %cst_138 = arith.constant dense<0.000000e+00> : vector<1x2xf32>
    %295 = tpu.matmul %294, %211, %cst_138 {dimension_numbers = #tpu.dot_dimension_numbers<[1], [0], [0], [1], [0, 0, 1, 1], [], []>} : vector<1x128xf32>, vector<128x2xf32>, vector<1x2xf32> -> vector<1x2xf32>
    %296 = arith.addf %295, %6 : vector<1x2xf32>
    %c0_i32_139 = arith.constant 0 : i32
    %297 = vector.broadcast %c0_i32_139 : i32 to vector<1x2xi32>
    %298 = arith.cmpi eq, %212, %297 : vector<1x2xi32>
    %cst_140 = arith.constant 0.000000e+00 : f32
    %299 = vector.broadcast %cst_140 : f32 to vector<1x2xf32>
    %300 = arith.subf %299, %296 : vector<1x2xf32>
    %301 = math.exp %300 : vector<1x2xf32>
    %cst_141 = arith.constant 1.000000e+00 : f32
    %302 = vector.broadcast %cst_141 : f32 to vector<1x2xf32>
    %303 = arith.addf %302, %301 : vector<1x2xf32>
    %cst_142 = arith.constant 1.000000e+00 : f32
    %304 = vector.broadcast %cst_142 : f32 to vector<1x2xf32>
    %305 = arith.divf %304, %303 : vector<1x2xf32>
    %306 = math.tanh %296 : vector<1x2xf32>
    %307 = arith.select %298, %305, %306 : vector<1x2xi1>, vector<1x2xf32>
    %c1 = arith.constant 1 : index
    %c0_143 = arith.constant 0 : index
    %308 = vector.load %arg13[%c1, %c0_143] : memref<2x2xf32, #tpu.memory_space<vmem>>, vector<1x2xf32>
    tpu.vector_store %arg13[%c1, %c0_143], %307 {strides = array<i32>} : memref<2x2xf32, #tpu.memory_space<vmem>>, vector<1x2xf32>,
    %c0_144 = arith.constant 0 : index
    %c0_145 = arith.constant 0 : index
    %309 = vector.load %arg14[%c0_144, %c0_145] : memref<1x128xf32, #tpu.memory_space<vmem>>, vector<1x128xf32>
    tpu.vector_store %arg14[%c0_144, %c0_145], %294 {strides = array<i32>} : memref<1x128xf32, #tpu.memory_space<vmem>>, vector<1x128xf32>,
    %c0_146 = arith.constant 0 : index
    %c0_147 = arith.constant 0 : index
    %310 = vector.load %arg15[%c0_146, %c0_147] : memref<1x128xf32, #tpu.memory_space<vmem>>, vector<1x128xf32>
    tpu.vector_store %arg15[%c0_146, %c0_147], %292 {strides = array<i32>} : memref<1x128xf32, #tpu.memory_space<vmem>>, vector<1x128xf32>,
    return
  }
}

</mosaic_0001>

<llo_original>
// kernel: _actor_forward.1
$region0: #{_actor_forward.1}
  #allocation0 [shape = 'u32[]', space=smem, size = 0x4, offset = 0x4, fixed_abs, tag = 'smem constant byte address 0x4 - core index']
  #allocation1 [shape = 'u32[72,128]{1,0:T(1,128)}', space=vmem, size = 0x9000, scoped, tag = 'internal scratch']
  #allocation2 [shape = 'f32[2,3776]{1,0:T(2,128)}', space=vmem, size = 0x7800, scoped, tag = 'scratch operand']
  %s0 = inlined_call_operand.vmem [shape: f32[120,3], index: 0, kind: input, shape index: {}]
  %s1 = inlined_call_operand.vmem [shape: f32[120,3], index: 1, kind: input, shape index: {}]
  %s2 = inlined_call_operand.vmem [shape: f32[2,2], index: 2, kind: input, shape index: {}]
  %s3 = inlined_call_operand.vmem [shape: f32[200,64], index: 3, kind: input, shape index: {}]
  %s4 = inlined_call_operand.hbm [shape: bf16[3776,512], index: 4, kind: input, shape index: {}]
  %s5 = inlined_call_operand.hbm [shape: f32[512,256], index: 5, kind: input, shape index: {}]
  %s6 = inlined_call_operand.hbm [shape: f32[2,256], index: 6, kind: input, shape index: {}]
  %s7 = inlined_call_operand.hbm [shape: f32[256,128], index: 7, kind: input, shape index: {}]
  %s8 = inlined_call_operand.hbm [shape: f32[256,512], index: 8, kind: input, shape index: {}]
  %s9 = inlined_call_operand.vmem [shape: f32[128,2], index: 9, kind: input, shape index: {}]
  %s10 = inlined_call_operand.hbm [shape: f32[1,1792], index: 10, kind: input, shape index: {}]
  %s11 = inlined_call_operand.hbm [shape: f32[1,128], index: 11, kind: input, shape index: {}]
  %s12 = inlined_call_operand.hbm [shape: f32[1,128], index: 12, kind: input, shape index: {}]
  %s13 = inlined_call_operand.hbm [shape: f32[2,2], index: 13, kind: output, shape index: {0}]
  %s14 = inlined_call_operand.hbm [shape: f32[1,128], index: 14, kind: output, shape index: {1}]
  %s15 = inlined_call_operand.hbm [shape: f32[1,128], index: 15, kind: output, shape index: {2}]
  %16 = xla_tuple %s13, %s14, %s15
  %s17 = sld [smem:[#allocation0]]
  $region110: #{_actor_forward.1} parent=0
    _
  %s19 = ssub.s32 1, %s17
  %s20 = scalar_select 0, %s19, %s17
  $region1: #{_actor_forward.1} parent=0
    #allocation3 [shape = 'u8[3866624]{0}', space=vmem, size = 0x3b0000, scoped, tag = 'input window, operand 4, single buffered']
    #allocation4 [shape = 's32[1]{0}', space=sflag, size = 0x4, scoped, tag = 'scoped memory for _actor_forward.1']
    #allocation5 [shape = 's32[1]{0}', space=sflag, size = 0x4, scoped, tag = 'scoped memory for _actor_forward.1']
    #allocation6 [shape = 'u8[524288]{0}', space=vmem, size = 0x80000, scoped, tag = 'input window, operand 5, single buffered']
    #allocation7 [shape = 's32[1]{0}', space=sflag, size = 0x4, scoped, tag = 'scoped memory for _actor_forward.1']
    #allocation8 [shape = 'u8[2048]{0}', space=vmem, size = 0x800, scoped, tag = 'input window, operand 6, single buffered']
    #allocation9 [shape = 'u8[131072]{0}', space=vmem, size = 0x20000, scoped, tag = 'input window, operand 7, single buffered']
    #allocation10 [shape = 's32[1]{0}', space=sflag, size = 0x4, scoped, tag = 'scoped memory for _actor_forward.1']
    #allocation11 [shape = 'u8[524288]{0}', space=vmem, size = 0x80000, scoped, tag = 'input window, operand 8, single buffered']
    #allocation12 [shape = 'u8[7168]{0}', space=vmem, size = 0x1c00, scoped, tag = 'input window, operand 10, single buffered']
    #allocation13 [shape = 's32[1]{0}', space=sflag, size = 0x4, scoped, tag = 'scoped memory for _actor_forward.1']
    #allocation14 [shape = 'u8[512]{0}', space=vmem, size = 0x400, scoped, tag = 'input window, operand 11, single buffered']
    #allocation15 [shape = 'u8[512]{0}', space=vmem, size = 0x400, scoped, tag = 'input window, operand 12, single buffered']
    #allocation16 [shape = 's32[1]{0}', space=sflag, size = 0x4, scoped, tag = 'scoped memory for _actor_forward.1']
    #allocation17 [shape = 'u8[1024]{0}', space=vmem, size = 0x400, scoped, tag = 'output window, operand 0, single buffered']
    #allocation18 [shape = 'u8[512]{0}', space=vmem, size = 0x400, scoped, tag = 'output window, operand 1, single buffered']
    #allocation19 [shape = 's32[1]{0}', space=sflag, size = 0x4, scoped, tag = 'scoped memory for _actor_forward.1']
    #allocation20 [shape = 'u8[512]{0}', space=vmem, size = 0x400, scoped, tag = 'output window, operand 2, single buffered']
    %21 = vsyncpa [#allocation4], 0
    %22 = vsyncpa [#allocation7], 0
    %23 = vsyncpa [#allocation10], 0
    %24 = vsyncpa [#allocation13], 0
    %25 = vsyncpa [#allocation16], 0
    %26 = vsyncpa [#allocation5], 0
    %27 = vsyncpa [#allocation19], 0
    // Predicated region
    $region2: #{_actor_forward.1} parent=1 // pred_check
      _
    $region3: #{_actor_forward.1} parent=1 // pred_check_branch
      %29 = sbr.rel (0) target = $region5
    $region4: #{_actor_forward.1} parent=1 // pred_region
      _
    $region5: #{_actor_forward.1} parent=1 // pred_fallthru
      _
    // Predicated region
    $region6: #{_actor_forward.1} parent=1 // pred_check
      _
    $region7: #{_actor_forward.1} parent=1 // pred_check_branch
      %31 = sbr.rel (0) target = $region9
    $region8: #{_actor_forward.1} parent=1 // pred_region
      _
    $region9: #{_actor_forward.1} parent=1 // pred_fallthru
      _
    // Predicated region
    $region10: #{_actor_forward.1} parent=1 // pred_check
      _
    $region11: #{_actor_forward.1} parent=1 // pred_check_branch
      %33 = sbr.rel (0) target = $region13
    $region12: #{_actor_forward.1} parent=1 // pred_region
      _
    $region13: #{_actor_forward.1} parent=1 // pred_fallthru
      _
    // Predicated region
    $region14: #{_actor_forward.1} parent=1 // pred_check
      _
    $region15: #{_actor_forward.1} parent=1 // pred_check_branch
      %35 = sbr.rel (0) target = $region17
    $region16: #{_actor_forward.1} parent=1 // pred_region
      _
    $region17: #{_actor_forward.1} parent=1 // pred_fallthru
      _
    // Predicated region
    $region18: #{_actor_forward.1} parent=1 // pred_check
      _
    $region19: #{_actor_forward.1} parent=1 // pred_check_branch
      %37 = sbr.rel (0) target = $region21
    $region20: #{_actor_forward.1} parent=1 // pred_region
      %39 = vsyncadd [#allocation4], 0
      %s40 = sshll.u32 %s4, 4
      %s41 = int_to_ptr.hbm [resolvable:$true] %s40
      %s42 = sshll.u32 [#allocation3], 4
      %s43 = int_to_ptr.vmem [resolvable:$true] %s42
      %48 = dma.hbm_to_vmem [thread:$0]  %s41, 120832, %s43, [#allocation4], 256, 256, 16
    $region21: #{_actor_forward.1} parent=1 // pred_fallthru
      _
    // Predicated region
    $region22: #{_actor_forward.1} parent=1 // pred_check
      _
    $region23: #{_actor_forward.1} parent=1 // pred_check_branch
      %50 = sbr.rel (0) target = $region25
    $region24: #{_actor_forward.1} parent=1 // pred_region
      %52 = vsyncadd [#allocation7], 0
      %s53 = sshll.u32 %s5, 4
      %s54 = int_to_ptr.hbm [resolvable:$true] %s53
      %s55 = sshll.u32 [#allocation6], 4
      %s56 = int_to_ptr.vmem [resolvable:$true] %s55
      %61 = dma.hbm_to_vmem [thread:$0]  %s54, 16384, %s56, [#allocation7], 256, 256, 16
    $region25: #{_actor_forward.1} parent=1 // pred_fallthru
      _
    // Predicated region
    $region26: #{_actor_forward.1} parent=1 // pred_check
      _
    $region27: #{_actor_forward.1} parent=1 // pred_check_branch
      %63 = sbr.rel (0) target = $region29
    $region28: #{_actor_forward.1} parent=1 // pred_region
      %65 = vsyncadd [#allocation7], 0
      %s67 = sshll.u32 %s6, 4
      %s68 = int_to_ptr.hbm [resolvable:$true] %s67
      %s69 = sshll.u32 [#allocation8], 4
      %s70 = int_to_ptr.vmem [resolvable:$true] %s69
      %72 = dma.hbm_to_vmem [thread:$0]  %s68, 64, %s70, [#allocation7]
    $region29: #{_actor_forward.1} parent=1 // pred_fallthru
      _
    // Predicated region
    $region30: #{_actor_forward.1} parent=1 // pred_check
      _
    $region31: #{_actor_forward.1} parent=1 // pred_check_branch
      %74 = sbr.rel (0) target = $region33
    $region32: #{_actor_forward.1} parent=1 // pred_region
      %76 = vsyncadd [#allocation10], 0
      %s77 = sshll.u32 %s7, 4
      %s78 = int_to_ptr.hbm [resolvable:$true] %s77
      %s79 = sshll.u32 [#allocation9], 4
      %s80 = int_to_ptr.vmem [resolvable:$true] %s79
      %85 = dma.hbm_to_vmem [thread:$0]  %s78, 4096, %s80, [#allocation10], 128, 128, 8
    $region33: #{_actor_forward.1} parent=1 // pred_fallthru
      _
    // Predicated region
    $region34: #{_actor_forward.1} parent=1 // pred_check
      _
    $region35: #{_actor_forward.1} parent=1 // pred_check_branch
      %87 = sbr.rel (0) target = $region37
    $region36: #{_actor_forward.1} parent=1 // pred_region
      %89 = vsyncadd [#allocation10], 0
      %s90 = sshll.u32 %s8, 4
      %s91 = int_to_ptr.hbm [resolvable:$true] %s90
      %s92 = sshll.u32 [#allocation11], 4
      %s93 = int_to_ptr.vmem [resolvable:$true] %s92
      %98 = dma.hbm_to_vmem [thread:$0]  %s91, 16384, %s93, [#allocation10], 512, 512, 32
    $region37: #{_actor_forward.1} parent=1 // pred_fallthru
      _
    // Predicated region
    $region38: #{_actor_forward.1} parent=1 // pred_check
      _
    $region39: #{_actor_forward.1} parent=1 // pred_check_branch
      %100 = sbr.rel (0) target = $region41
    $region40: #{_actor_forward.1} parent=1 // pred_region
      _
    $region41: #{_actor_forward.1} parent=1 // pred_fallthru
      _
    // Predicated region
    $region42: #{_actor_forward.1} parent=1 // pred_check
      _
    $region43: #{_actor_forward.1} parent=1 // pred_check_branch
      %102 = sbr.rel (0) target = $region45
    $region44: #{_actor_forward.1} parent=1 // pred_region
      %104 = vsyncadd [#allocation13], 0
      %s106 = sshll.u32 %s10, 4
      %s107 = int_to_ptr.hbm [resolvable:$true] %s106
      %s108 = sshll.u32 [#allocation12], 4
      %s109 = int_to_ptr.vmem [resolvable:$true] %s108
      %111 = dma.hbm_to_vmem [thread:$0]  %s107, 224, %s109, [#allocation13]
    $region45: #{_actor_forward.1} parent=1 // pred_fallthru
      _
    // Predicated region
    $region46: #{_actor_forward.1} parent=1 // pred_check
      _
    $region47: #{_actor_forward.1} parent=1 // pred_check_branch
      %113 = sbr.rel (0) target = $region49
    $region48: #{_actor_forward.1} parent=1 // pred_region
      %115 = vsyncadd [#allocation13], 0
      %s117 = sshll.u32 %s11, 4
      %s118 = int_to_ptr.hbm [resolvable:$true] %s117
      %s119 = sshll.u32 [#allocation14], 4
      %s120 = int_to_ptr.vmem [resolvable:$true] %s119
      %122 = dma.hbm_to_vmem [thread:$0]  %s118, 16, %s120, [#allocation13]
    $region49: #{_actor_forward.1} parent=1 // pred_fallthru
      _
    // Predicated region
    $region50: #{_actor_forward.1} parent=1 // pred_check
      _
    $region51: #{_actor_forward.1} parent=1 // pred_check_branch
      %124 = sbr.rel (0) target = $region53
    $region52: #{_actor_forward.1} parent=1 // pred_region
      %126 = vsyncadd [#allocation16], 0
      %s128 = sshll.u32 %s12, 4
      %s129 = int_to_ptr.hbm [resolvable:$true] %s128
      %s130 = sshll.u32 [#allocation15], 4
      %s131 = int_to_ptr.vmem [resolvable:$true] %s130
      %133 = dma.hbm_to_vmem [thread:$0]  %s129, 16, %s131, [#allocation16]
    $region53: #{_actor_forward.1} parent=1 // pred_fallthru
      _
    // Predicated region
    $region54: #{_actor_forward.1} parent=1 // pred_check
      _
    $region55: #{_actor_forward.1} parent=1 // pred_check_branch
      %135 = sbr.rel (0) target = $region57
    $region56: #{_actor_forward.1} parent=1 // pred_region
      %137 = dma.done [#allocation4], 120832
    $region57: #{_actor_forward.1} parent=1 // pred_fallthru
      _
    // Predicated region
    $region58: #{_actor_forward.1} parent=1 // pred_check
      _
    $region59: #{_actor_forward.1} parent=1 // pred_check_branch
      %139 = sbr.rel (0) target = $region61
    $region60: #{_actor_forward.1} parent=1 // pred_region
      %141 = dma.done [#allocation7], 16384
    $region61: #{_actor_forward.1} parent=1 // pred_fallthru
      _
    // Predicated region
    $region62: #{_actor_forward.1} parent=1 // pred_check
      _
    $region63: #{_actor_forward.1} parent=1 // pred_check_branch
      %143 = sbr.rel (0) target = $region65
    $region64: #{_actor_forward.1} parent=1 // pred_region
      %145 = dma.done [#allocation7], 64
    $region65: #{_actor_forward.1} parent=1 // pred_fallthru
      _
    // Predicated region
    $region66: #{_actor_forward.1} parent=1 // pred_check
      _
    $region67: #{_actor_forward.1} parent=1 // pred_check_branch
      %147 = sbr.rel (0) target = $region69
    $region68: #{_actor_forward.1} parent=1 // pred_region
      %149 = dma.done [#allocation10], 4096
    $region69: #{_actor_forward.1} parent=1 // pred_fallthru
      _
    // Predicated region
    $region70: #{_actor_forward.1} parent=1 // pred_check
      _
    $region71: #{_actor_forward.1} parent=1 // pred_check_branch
      %151 = sbr.rel (0) target = $region73
    $region72: #{_actor_forward.1} parent=1 // pred_region
      %153 = dma.done [#allocation10], 16384
    $region73: #{_actor_forward.1} parent=1 // pred_fallthru
      _
    // Predicated region
    $region74: #{_actor_forward.1} parent=1 // pred_check
      _
    $region75: #{_actor_forward.1} parent=1 // pred_check_branch
      %155 = sbr.rel (0) target = $region77
    $region76: #{_actor_forward.1} parent=1 // pred_region
      %157 = dma.done [#allocation13], 224
    $region77: #{_actor_forward.1} parent=1 // pred_fallthru
      _
    // Predicated region
    $region78: #{_actor_forward.1} parent=1 // pred_check
      _
    $region79: #{_actor_forward.1} parent=1 // pred_check_branch
      %159 = sbr.rel (0) target = $region81
    $region80: #{_actor_forward.1} parent=1 // pred_region
      %161 = dma.done [#allocation13], 16
    $region81: #{_actor_forward.1} parent=1 // pred_fallthru
      _
    // Predicated region
    $region82: #{_actor_forward.1} parent=1 // pred_check
      _
    $region83: #{_actor_forward.1} parent=1 // pred_check_branch
      %163 = sbr.rel (0) target = $region85
    $region84: #{_actor_forward.1} parent=1 // pred_region
      %165 = dma.done [#allocation16], 16
    $region85: #{_actor_forward.1} parent=1 // pred_fallthru
      _
    %v167 = vld [vmem:[#allocation12] sm:$0xf]
    %v168 = vld [vmem:[#allocation12 + $0x4] sm:$0x3]
    %v169 = vld [vmem:[#allocation12 + $0x6] sm:$0x1]
    %v170 = vld [vmem:[#allocation12 + $0x7] sm:$0xf]
    %v171 = vld [vmem:[#allocation12 + $0xb] sm:$0x1]
    %v172 = vld [vmem:[#allocation12 + $0xc] sm:$0x1]
    %v173 = vld [vmem:[#allocation12 + $0xd] sm:$0x1]
    %v174 = vld [vmem:[%s3] sm:$0x7]
    %v175 = vld [vmem:[%s0] sm:$0xff]
    %v176 = vld [vmem:[%s0 + $0x8] sm:$0xff]
    %v177 = vld [vmem:[%s0 + $0x10] sm:$0xff]
    %v178 = vld [vmem:[%s0 + $0x18] sm:$0xff]
    %v179 = vld [vmem:[%s0 + $0x20] sm:$0xff]
    %v180 = vld [vmem:[%s0 + $0x28] sm:$0xff]
    %v181 = vld [vmem:[%s0 + $0x30] sm:$0xff]
    %v182 = vld [vmem:[%s0 + $0x38] sm:$0xff]
    %v183 = vld [vmem:[%s0 + $0x40] sm:$0xff]
    %v184 = vld [vmem:[%s0 + $0x48] sm:$0xff]
    %v185 = vld [vmem:[%s0 + $0x50] sm:$0xff]
    %v186 = vld [vmem:[%s0 + $0x58] sm:$0xff]
    %v187 = vld [vmem:[%s0 + $0x60] sm:$0xff]
    %v188 = vld [vmem:[%s0 + $0x68] sm:$0xff]
    %v189 = vld [vmem:[%s0 + $0x70] sm:$0xff]
    %191 = vset.pattern.permute.xlu0 0
    %192 = vperm.xlu0 %191, %v175
    %v193 = vpop.permute.xlu0 %192
    %196 = vset.pattern.permute.xlu0 0
    %197 = vperm.xlu0 %196, %v176
    %v198 = vpop.permute.xlu0 %197
    %201 = vset.pattern.permute.xlu0 0
    %202 = vperm.xlu0 %201, %v177
    %v203 = vpop.permute.xlu0 %202
    %206 = vset.pattern.permute.xlu0 0
    %207 = vperm.xlu0 %206, %v178
    %v208 = vpop.permute.xlu0 %207
    %211 = vset.pattern.permute.xlu0 0
    %212 = vperm.xlu0 %211, %v179
    %v213 = vpop.permute.xlu0 %212
    %216 = vset.pattern.permute.xlu0 0
    %217 = vperm.xlu0 %216, %v180
    %v218 = vpop.permute.xlu0 %217
    %221 = vset.pattern.permute.xlu0 0
    %222 = vperm.xlu0 %221, %v181
    %v223 = vpop.permute.xlu0 %222
    %226 = vset.pattern.permute.xlu0 0
    %227 = vperm.xlu0 %226, %v182
    %v228 = vpop.permute.xlu0 %227
    %231 = vset.pattern.permute.xlu0 0
    %232 = vperm.xlu0 %231, %v183
    %v233 = vpop.permute.xlu0 %232
    %236 = vset.pattern.permute.xlu0 0
    %237 = vperm.xlu0 %236, %v184
    %v238 = vpop.permute.xlu0 %237
    %241 = vset.pattern.permute.xlu0 0
    %242 = vperm.xlu0 %241, %v185
    %v243 = vpop.permute.xlu0 %242
    %246 = vset.pattern.permute.xlu0 0
    %247 = vperm.xlu0 %246, %v186
    %v248 = vpop.permute.xlu0 %247
    %251 = vset.pattern.permute.xlu0 0
    %252 = vperm.xlu0 %251, %v187
    %v253 = vpop.permute.xlu0 %252
    %256 = vset.pattern.permute.xlu0 0
    %257 = vperm.xlu0 %256, %v188
    %v258 = vpop.permute.xlu0 %257
    %261 = vset.pattern.permute.xlu0 0
    %262 = vperm.xlu0 %261, %v189
    %v263 = vpop.permute.xlu0 %262
    %v265 = vperm.slane %v174, 0
    %v266 = vmul.f32 %v193, %v265
    %v267 = vmul.f32 %v198, %v265
    %v268 = vmul.f32 %v203, %v265
    %v269 = vmul.f32 %v208, %v265
    %v270 = vmul.f32 %v213, %v265
    %v271 = vmul.f32 %v218, %v265
    %v272 = vmul.f32 %v223, %v265
    %v273 = vmul.f32 %v228, %v265
    %v274 = vmul.f32 %v233, %v265
    %v275 = vmul.f32 %v238, %v265
    %v276 = vmul.f32 %v243, %v265
    %v277 = vmul.f32 %v248, %v265
    %v278 = vmul.f32 %v253, %v265
    %v279 = vmul.f32 %v258, %v265
    %v280 = vmul.f32 %v263, %v265
    %281 = vset.pattern.permute.xlu0 1
    %282 = vperm.xlu0 %281, %v175
    %v283 = vpop.permute.xlu0 %282
    %285 = vset.pattern.permute.xlu0 1
    %286 = vperm.xlu0 %285, %v176
    %v287 = vpop.permute.xlu0 %286
    %289 = vset.pattern.permute.xlu0 1
    %290 = vperm.xlu0 %289, %v177
    %v291 = vpop.permute.xlu0 %290
    %293 = vset.pattern.permute.xlu0 1
    %294 = vperm.xlu0 %293, %v178
    %v295 = vpop.permute.xlu0 %294
    %297 = vset.pattern.permute.xlu0 1
    %298 = vperm.xlu0 %297, %v179
    %v299 = vpop.permute.xlu0 %298
    %301 = vset.pattern.permute.xlu0 1
    %302 = vperm.xlu0 %301, %v180
    %v303 = vpop.permute.xlu0 %302
    %305 = vset.pattern.permute.xlu0 1
    %306 = vperm.xlu0 %305, %v181
    %v307 = vpop.permute.xlu0 %306
    %309 = vset.pattern.permute.xlu0 1
    %310 = vperm.xlu0 %309, %v182
    %v311 = vpop.permute.xlu0 %310
    %313 = vset.pattern.permute.xlu0 1
    %314 = vperm.xlu0 %313, %v183
    %v315 = vpop.permute.xlu0 %314
    %317 = vset.pattern.permute.xlu0 1
    %318 = vperm.xlu0 %317, %v184
    %v319 = vpop.permute.xlu0 %318
    %321 = vset.pattern.permute.xlu0 1
    %322 = vperm.xlu0 %321, %v185
    %v323 = vpop.permute.xlu0 %322
    %325 = vset.pattern.permute.xlu0 1
    %326 = vperm.xlu0 %325, %v186
    %v327 = vpop.permute.xlu0 %326
    %329 = vset.pattern.permute.xlu0 1
    %330 = vperm.xlu0 %329, %v187
    %v331 = vpop.permute.xlu0 %330
    %333 = vset.pattern.permute.xlu0 1
    %334 = vperm.xlu0 %333, %v188
    %v335 = vpop.permute.xlu0 %334
    %337 = vset.pattern.permute.xlu0 1
    %338 = vperm.xlu0 %337, %v189
    %v339 = vpop.permute.xlu0 %338
    %v341 = vperm.slane %v174, 1
    %v342 = vmul.f32 %v283, %v341
    %v343 = vmul.f32 %v287, %v341
    %v344 = vmul.f32 %v291, %v341
    %v345 = vmul.f32 %v295, %v341
    %v346 = vmul.f32 %v299, %v341
    %v347 = vmul.f32 %v303, %v341
    %v348 = vmul.f32 %v307, %v341
    %v349 = vmul.f32 %v311, %v341
    %v350 = vmul.f32 %v315, %v341
    %v351 = vmul.f32 %v319, %v341
    %v352 = vmul.f32 %v323, %v341
    %v353 = vmul.f32 %v327, %v341
    %v354 = vmul.f32 %v331, %v341
    %v355 = vmul.f32 %v335, %v341
    %v356 = vmul.f32 %v339, %v341
    %v357 = vadd.f32 %v266, %v342
    %v358 = vadd.f32 %v267, %v343
    %v359 = vadd.f32 %v268, %v344
    %v360 = vadd.f32 %v269, %v345
    %v361 = vadd.f32 %v270, %v346
    %v362 = vadd.f32 %v271, %v347
    %v363 = vadd.f32 %v272, %v348
    %v364 = vadd.f32 %v273, %v349
    %v365 = vadd.f32 %v274, %v350
    %v366 = vadd.f32 %v275, %v351
    %v367 = vadd.f32 %v276, %v352
    %v368 = vadd.f32 %v277, %v353
    %v369 = vadd.f32 %v278, %v354
    %v370 = vadd.f32 %v279, %v355
    %v371 = vadd.f32 %v280, %v356
    %372 = vset.pattern.permute.xlu0 2
    %373 = vperm.xlu0 %372, %v175
    %v374 = vpop.permute.xlu0 %373
    %376 = vset.pattern.permute.xlu0 2
    %377 = vperm.xlu0 %376, %v176
    %v378 = vpop.permute.xlu0 %377
    %380 = vset.pattern.permute.xlu0 2
    %381 = vperm.xlu0 %380, %v177
    %v382 = vpop.permute.xlu0 %381
    %384 = vset.pattern.permute.xlu0 2
    %385 = vperm.xlu0 %384, %v178
    %v386 = vpop.permute.xlu0 %385
    %388 = vset.pattern.permute.xlu0 2
    %389 = vperm.xlu0 %388, %v179
    %v390 = vpop.permute.xlu0 %389
    %392 = vset.pattern.permute.xlu0 2
    %393 = vperm.xlu0 %392, %v180
    %v394 = vpop.permute.xlu0 %393
    %396 = vset.pattern.permute.xlu0 2
    %397 = vperm.xlu0 %396, %v181
    %v398 = vpop.permute.xlu0 %397
    %400 = vset.pattern.permute.xlu0 2
    %401 = vperm.xlu0 %400, %v182
    %v402 = vpop.permute.xlu0 %401
    %404 = vset.pattern.permute.xlu0 2
    %405 = vperm.xlu0 %404, %v183
    %v406 = vpop.permute.xlu0 %405
    %408 = vset.pattern.permute.xlu0 2
    %409 = vperm.xlu0 %408, %v184
    %v410 = vpop.permute.xlu0 %409
    %412 = vset.pattern.permute.xlu0 2
    %413 = vperm.xlu0 %412, %v185
    %v414 = vpop.permute.xlu0 %413
    %416 = vset.pattern.permute.xlu0 2
    %417 = vperm.xlu0 %416, %v186
    %v418 = vpop.permute.xlu0 %417
    %420 = vset.pattern.permute.xlu0 2
    %421 = vperm.xlu0 %420, %v187
    %v422 = vpop.permute.xlu0 %421
    %424 = vset.pattern.permute.xlu0 2
    %425 = vperm.xlu0 %424, %v188
    %v426 = vpop.permute.xlu0 %425
    %428 = vset.pattern.permute.xlu0 2
    %429 = vperm.xlu0 %428, %v189
    %v430 = vpop.permute.xlu0 %429
    %v432 = vperm.slane %v174, 2
    %v433 = vmul.f32 %v374, %v432
    %v434 = vmul.f32 %v378, %v432
    %v435 = vmul.f32 %v382, %v432
    %v436 = vmul.f32 %v386, %v432
    %v437 = vmul.f32 %v390, %v432
    %v438 = vmul.f32 %v394, %v432
    %v439 = vmul.f32 %v398, %v432
    %v440 = vmul.f32 %v402, %v432
    %v441 = vmul.f32 %v406, %v432
    %v442 = vmul.f32 %v410, %v432
    %v443 = vmul.f32 %v414, %v432
    %v444 = vmul.f32 %v418, %v432
    %v445 = vmul.f32 %v422, %v432
    %v446 = vmul.f32 %v426, %v432
    %v447 = vmul.f32 %v430, %v432
    %v448 = vadd.f32 %v357, %v433
    %v449 = vadd.f32 %v358, %v434
    %v450 = vadd.f32 %v359, %v435
    %v451 = vadd.f32 %v360, %v436
    %v452 = vadd.f32 %v361, %v437
    %v453 = vadd.f32 %v362, %v438
    %v454 = vadd.f32 %v363, %v439
    %v455 = vadd.f32 %v364, %v440
    %v456 = vadd.f32 %v365, %v441
    %v457 = vadd.f32 %v366, %v442
    %v458 = vadd.f32 %v367, %v443
    %v459 = vadd.f32 %v368, %v444
    %v460 = vadd.f32 %v369, %v445
    %v461 = vadd.f32 %v370, %v446
    %v462 = vadd.f32 %v371, %v447
    %v464 = vperm.slane %v171, 0
    %v466 = vadd.f32 %v448, %v464
    %v467 = vadd.f32 %v449, %v464
    %v468 = vadd.f32 %v450, %v464
    %v469 = vadd.f32 %v451, %v464
    %v470 = vadd.f32 %v452, %v464
    %v471 = vadd.f32 %v453, %v464
    %v472 = vadd.f32 %v454, %v464
    %v473 = vadd.f32 %v455, %v464
    %v474 = vadd.f32 %v456, %v464
    %v475 = vadd.f32 %v457, %v464
    %v476 = vadd.f32 %v458, %v464
    %v477 = vadd.f32 %v459, %v464
    %v478 = vadd.f32 %v460, %v464
    %v479 = vadd.f32 %v461, %v464
    %v480 = vadd.f32 %v462, %v464
    %v481 = vmax.f32 %v466, 0.0
    %v482 = vmax.f32 %v467, 0.0
    %v483 = vmax.f32 %v468, 0.0
    %v484 = vmax.f32 %v469, 0.0
    %v485 = vmax.f32 %v470, 0.0
    %v486 = vmax.f32 %v471, 0.0
    %v487 = vmax.f32 %v472, 0.0
    %v488 = vmax.f32 %v473, 0.0
    %v489 = vmax.f32 %v474, 0.0
    %v490 = vmax.f32 %v475, 0.0
    %v491 = vmax.f32 %v476, 0.0
    %v492 = vmax.f32 %v477, 0.0
    %v493 = vmax.f32 %v478, 0.0
    %v494 = vmax.f32 %v479, 0.0
    %v495 = vmax.f32 %v480, 0.0
    %v496 = vld [vmem:[%s1] sm:$0xff]
    %v497 = vld [vmem:[%s1 + $0x8] sm:$0xff]
    %v498 = vld [vmem:[%s1 + $0x10] sm:$0xff]
    %v499 = vld [vmem:[%s1 + $0x18] sm:$0xff]
    %v500 = vld [vmem:[%s1 + $0x20] sm:$0xff]
    %v501 = vld [vmem:[%s1 + $0x28] sm:$0xff]
    %v502 = vld [vmem:[%s1 + $0x30] sm:$0xff]
    %v503 = vld [vmem:[%s1 + $0x38] sm:$0xff]
    %v504 = vld [vmem:[%s1 + $0x40] sm:$0xff]
    %v505 = vld [vmem:[%s1 + $0x48] sm:$0xff]
    %v506 = vld [vmem:[%s1 + $0x50] sm:$0xff]
    %v507 = vld [vmem:[%s1 + $0x58] sm:$0xff]
    %v508 = vld [vmem:[%s1 + $0x60] sm:$0xff]
    %v509 = vld [vmem:[%s1 + $0x68] sm:$0xff]
    %v510 = vld [vmem:[%s1 + $0x70] sm:$0xff]
    %512 = vset.pattern.permute.xlu0 0
    %513 = vperm.xlu0 %512, %v496
    %v514 = vpop.permute.xlu0 %513
    %517 = vset.pattern.permute.xlu0 0
    %518 = vperm.xlu0 %517, %v497
    %v519 = vpop.permute.xlu0 %518
    %522 = vset.pattern.permute.xlu0 0
    %523 = vperm.xlu0 %522, %v498
    %v524 = vpop.permute.xlu0 %523
    %527 = vset.pattern.permute.xlu0 0
    %528 = vperm.xlu0 %527, %v499
    %v529 = vpop.permute.xlu0 %528
    %532 = vset.pattern.permute.xlu0 0
    %533 = vperm.xlu0 %532, %v500
    %v534 = vpop.permute.xlu0 %533
    %537 = vset.pattern.permute.xlu0 0
    %538 = vperm.xlu0 %537, %v501
    %v539 = vpop.permute.xlu0 %538
    %542 = vset.pattern.permute.xlu0 0
    %543 = vperm.xlu0 %542, %v502
    %v544 = vpop.permute.xlu0 %543
    %547 = vset.pattern.permute.xlu0 0
    %548 = vperm.xlu0 %547, %v503
    %v549 = vpop.permute.xlu0 %548
    %552 = vset.pattern.permute.xlu0 0
    %553 = vperm.xlu0 %552, %v504
    %v554 = vpop.permute.xlu0 %553
    %557 = vset.pattern.permute.xlu0 0
    %558 = vperm.xlu0 %557, %v505
    %v559 = vpop.permute.xlu0 %558
    %562 = vset.pattern.permute.xlu0 0
    %563 = vperm.xlu0 %562, %v506
    %v564 = vpop.permute.xlu0 %563
    %567 = vset.pattern.permute.xlu0 0
    %568 = vperm.xlu0 %567, %v507
    %v569 = vpop.permute.xlu0 %568
    %572 = vset.pattern.permute.xlu0 0
    %573 = vperm.xlu0 %572, %v508
    %v574 = vpop.permute.xlu0 %573
    %577 = vset.pattern.permute.xlu0 0
    %578 = vperm.xlu0 %577, %v509
    %v579 = vpop.permute.xlu0 %578
    %582 = vset.pattern.permute.xlu0 0
    %583 = vperm.xlu0 %582, %v510
    %v584 = vpop.permute.xlu0 %583
    %v586 = vmul.f32 %v514, %v265
    %v587 = vmul.f32 %v519, %v265
    %v588 = vmul.f32 %v524, %v265
    %v589 = vmul.f32 %v529, %v265
    %v590 = vmul.f32 %v534, %v265
    %v591 = vmul.f32 %v539, %v265
    %v592 = vmul.f32 %v544, %v265
    %v593 = vmul.f32 %v549, %v265
    %v594 = vmul.f32 %v554, %v265
    %v595 = vmul.f32 %v559, %v265
    %v596 = vmul.f32 %v564, %v265
    %v597 = vmul.f32 %v569, %v265
    %v598 = vmul.f32 %v574, %v265
    %v599 = vmul.f32 %v579, %v265
    %v600 = vmul.f32 %v584, %v265
    %601 = vset.pattern.permute.xlu0 1
    %602 = vperm.xlu0 %601, %v496
    %v603 = vpop.permute.xlu0 %602
    %605 = vset.pattern.permute.xlu0 1
    %606 = vperm.xlu0 %605, %v497
    %v607 = vpop.permute.xlu0 %606
    %609 = vset.pattern.permute.xlu0 1
    %610 = vperm.xlu0 %609, %v498
    %v611 = vpop.permute.xlu0 %610
    %613 = vset.pattern.permute.xlu0 1
    %614 = vperm.xlu0 %613, %v499
    %v615 = vpop.permute.xlu0 %614
    %617 = vset.pattern.permute.xlu0 1
    %618 = vperm.xlu0 %617, %v500
    %v619 = vpop.permute.xlu0 %618
    %621 = vset.pattern.permute.xlu0 1
    %622 = vperm.xlu0 %621, %v501
    %v623 = vpop.permute.xlu0 %622
    %625 = vset.pattern.permute.xlu0 1
    %626 = vperm.xlu0 %625, %v502
    %v627 = vpop.permute.xlu0 %626
    %629 = vset.pattern.permute.xlu0 1
    %630 = vperm.xlu0 %629, %v503
    %v631 = vpop.permute.xlu0 %630
    %633 = vset.pattern.permute.xlu0 1
    %634 = vperm.xlu0 %633, %v504
    %v635 = vpop.permute.xlu0 %634
    %637 = vset.pattern.permute.xlu0 1
    %638 = vperm.xlu0 %637, %v505
    %v639 = vpop.permute.xlu0 %638
    %641 = vset.pattern.permute.xlu0 1
    %642 = vperm.xlu0 %641, %v506
    %v643 = vpop.permute.xlu0 %642
    %645 = vset.pattern.permute.xlu0 1
    %646 = vperm.xlu0 %645, %v507
    %v647 = vpop.permute.xlu0 %646
    %649 = vset.pattern.permute.xlu0 1
    %650 = vperm.xlu0 %649, %v508
    %v651 = vpop.permute.xlu0 %650
    %653 = vset.pattern.permute.xlu0 1
    %654 = vperm.xlu0 %653, %v509
    %v655 = vpop.permute.xlu0 %654
    %657 = vset.pattern.permute.xlu0 1
    %658 = vperm.xlu0 %657, %v510
    %v659 = vpop.permute.xlu0 %658
    %v661 = vmul.f32 %v603, %v341
    %v662 = vmul.f32 %v607, %v341
    %v663 = vmul.f32 %v611, %v341
    %v664 = vmul.f32 %v615, %v341
    %v665 = vmul.f32 %v619, %v341
    %v666 = vmul.f32 %v623, %v341
    %v667 = vmul.f32 %v627, %v341
    %v668 = vmul.f32 %v631, %v341
    %v669 = vmul.f32 %v635, %v341
    %v670 = vmul.f32 %v639, %v341
    %v671 = vmul.f32 %v643, %v341
    %v672 = vmul.f32 %v647, %v341
    %v673 = vmul.f32 %v651, %v341
    %v674 = vmul.f32 %v655, %v341
    %v675 = vmul.f32 %v659, %v341
    %v676 = vadd.f32 %v586, %v661
    %v677 = vadd.f32 %v587, %v662
    %v678 = vadd.f32 %v588, %v663
    %v679 = vadd.f32 %v589, %v664
    %v680 = vadd.f32 %v590, %v665
    %v681 = vadd.f32 %v591, %v666
    %v682 = vadd.f32 %v592, %v667
    %v683 = vadd.f32 %v593, %v668
    %v684 = vadd.f32 %v594, %v669
    %v685 = vadd.f32 %v595, %v670
    %v686 = vadd.f32 %v596, %v671
    %v687 = vadd.f32 %v597, %v672
    %v688 = vadd.f32 %v598, %v673
    %v689 = vadd.f32 %v599, %v674
    %v690 = vadd.f32 %v600, %v675
    %691 = vset.pattern.permute.xlu0 2
    %692 = vperm.xlu0 %691, %v496
    %v693 = vpop.permute.xlu0 %692
    %695 = vset.pattern.permute.xlu0 2
    %696 = vperm.xlu0 %695, %v497
    %v697 = vpop.permute.xlu0 %696
    %699 = vset.pattern.permute.xlu0 2
    %700 = vperm.xlu0 %699, %v498
    %v701 = vpop.permute.xlu0 %700
    %703 = vset.pattern.permute.xlu0 2
    %704 = vperm.xlu0 %703, %v499
    %v705 = vpop.permute.xlu0 %704
    %707 = vset.pattern.permute.xlu0 2
    %708 = vperm.xlu0 %707, %v500
    %v709 = vpop.permute.xlu0 %708
    %711 = vset.pattern.permute.xlu0 2
    %712 = vperm.xlu0 %711, %v501
    %v713 = vpop.permute.xlu0 %712
    %715 = vset.pattern.permute.xlu0 2
    %716 = vperm.xlu0 %715, %v502
    %v717 = vpop.permute.xlu0 %716
    %719 = vset.pattern.permute.xlu0 2
    %720 = vperm.xlu0 %719, %v503
    %v721 = vpop.permute.xlu0 %720
    %723 = vset.pattern.permute.xlu0 2
    %724 = vperm.xlu0 %723, %v504
    %v725 = vpop.permute.xlu0 %724
    %727 = vset.pattern.permute.xlu0 2
    %728 = vperm.xlu0 %727, %v505
    %v729 = vpop.permute.xlu0 %728
    %731 = vset.pattern.permute.xlu0 2
    %732 = vperm.xlu0 %731, %v506
    %v733 = vpop.permute.xlu0 %732
    %735 = vset.pattern.permute.xlu0 2
    %736 = vperm.xlu0 %735, %v507
    %v737 = vpop.permute.xlu0 %736
    %739 = vset.pattern.permute.xlu0 2
    %740 = vperm.xlu0 %739, %v508
    %v741 = vpop.permute.xlu0 %740
    %743 = vset.pattern.permute.xlu0 2
    %744 = vperm.xlu0 %743, %v509
    %v745 = vpop.permute.xlu0 %744
    %747 = vset.pattern.permute.xlu0 2
    %748 = vperm.xlu0 %747, %v510
    %v749 = vpop.permute.xlu0 %748
    %v751 = vmul.f32 %v693, %v432
    %v752 = vmul.f32 %v697, %v432
    %v753 = vmul.f32 %v701, %v432
    %v754 = vmul.f32 %v705, %v432
    %v755 = vmul.f32 %v709, %v432
    %v756 = vmul.f32 %v713, %v432
    %v757 = vmul.f32 %v717, %v432
    %v758 = vmul.f32 %v721, %v432
    %v759 = vmul.f32 %v725, %v432
    %v760 = vmul.f32 %v729, %v432
    %v761 = vmul.f32 %v733, %v432
    %v762 = vmul.f32 %v737, %v432
    %v763 = vmul.f32 %v741, %v432
    %v764 = vmul.f32 %v745, %v432
    %v765 = vmul.f32 %v749, %v432
    %v766 = vadd.f32 %v676, %v751
    %v767 = vadd.f32 %v677, %v752
    %v768 = vadd.f32 %v678, %v753
    %v769 = vadd.f32 %v679, %v754
    %v770 = vadd.f32 %v680, %v755
    %v771 = vadd.f32 %v681, %v756
    %v772 = vadd.f32 %v682, %v757
    %v773 = vadd.f32 %v683, %v758
    %v774 = vadd.f32 %v684, %v759
    %v775 = vadd.f32 %v685, %v760
    %v776 = vadd.f32 %v686, %v761
    %v777 = vadd.f32 %v687, %v762
    %v778 = vadd.f32 %v688, %v763
    %v779 = vadd.f32 %v689, %v764
    %v780 = vadd.f32 %v690, %v765
    %v781 = vadd.f32 %v766, %v464
    %v782 = vadd.f32 %v767, %v464
    %v783 = vadd.f32 %v768, %v464
    %v784 = vadd.f32 %v769, %v464
    %v785 = vadd.f32 %v770, %v464
    %v786 = vadd.f32 %v771, %v464
    %v787 = vadd.f32 %v772, %v464
    %v788 = vadd.f32 %v773, %v464
    %v789 = vadd.f32 %v774, %v464
    %v790 = vadd.f32 %v775, %v464
    %v791 = vadd.f32 %v776, %v464
    %v792 = vadd.f32 %v777, %v464
    %v793 = vadd.f32 %v778, %v464
    %v794 = vadd.f32 %v779, %v464
    %v795 = vadd.f32 %v780, %v464
    %v796 = vmax.f32 %v781, 0.0
    %v797 = vmax.f32 %v782, 0.0
    %v798 = vmax.f32 %v783, 0.0
    %v799 = vmax.f32 %v784, 0.0
    %v800 = vmax.f32 %v785, 0.0
    %v801 = vmax.f32 %v786, 0.0
    %v802 = vmax.f32 %v787, 0.0
    %v803 = vmax.f32 %v788, 0.0
    %v804 = vmax.f32 %v789, 0.0
    %v805 = vmax.f32 %v790, 0.0
    %v806 = vmax.f32 %v791, 0.0
    %v807 = vmax.f32 %v792, 0.0
    %v808 = vmax.f32 %v793, 0.0
    %v809 = vmax.f32 %v794, 0.0
    %v810 = vmax.f32 %v795, 0.0
    %v811 = vld [vmem:[%s3 + $0x8] sm:$0xff]
    %v812 = vld [vmem:[%s3 + $0x10] sm:$0xff]
    %v813 = vld [vmem:[%s3 + $0x18] sm:$0xff]
    %v814 = vld [vmem:[%s3 + $0x20] sm:$0xff]
    %v815 = vld [vmem:[%s3 + $0x28] sm:$0xff]
    %v816 = vld [vmem:[%s3 + $0x30] sm:$0xff]
    %v817 = vld [vmem:[%s3 + $0x38] sm:$0xff]
    %v818 = vld [vmem:[%s3 + $0x40] sm:$0xff]
    %v819 = vld [vmem:[%s3 + $0x48] sm:$0xff]
    %v820 = vld [vmem:[%s3 + $0x50] sm:$0xff]
    %v821 = vld [vmem:[%s3 + $0x58] sm:$0xff]
    %v822 = vld [vmem:[%s3 + $0x60] sm:$0xff]
    %v823 = vld [vmem:[%s3 + $0x68] sm:$0xff]
    %v824 = vld [vmem:[%s3 + $0x70] sm:$0xff]
    %v825 = vld [vmem:[%s3 + $0x78] sm:$0xff]
    %v826 = vld [vmem:[%s3 + $0x80] sm:$0xff]
    %vm827 = vcmask 523264
    %v829 = vsel %vm827, %v796, 0
    %v832 = vsel %vm827, %v797, 0
    %v835 = vsel %vm827, %v798, 0
    %v838 = vsel %vm827, %v799, 0
    %v841 = vsel %vm827, %v800, 0
    %v844 = vsel %vm827, %v801, 0
    %v847 = vsel %vm827, %v802, 0
    %v850 = vsel %vm827, %v803, 0
    %v853 = vsel %vm827, %v804, 0
    %v856 = vsel %vm827, %v805, 0
    %v859 = vsel %vm827, %v806, 0
    %v862 = vsel %vm827, %v807, 0
    %v865 = vsel %vm827, %v808, 0
    %v868 = vsel %vm827, %v809, 0
    %v871 = vsel %vm827, %v810, 0
    %873 = vmatpush.msra.mxu0 0.0
    %874 = vmatpush.msra.mxu0 0.0
    %875 = vmatpush.msra.mxu0 0.0
    %876 = vmatpush.msra.mxu0 0.0
    %877 = vmatpush.msra.mxu0 0.0
    %878 = vmatpush.msra.mxu0 0.0
    %879 = vmatpush.msra.mxu0 0.0
    %880 = vmatpush.msra.mxu0 0.0
    %881 = vmatpush.msra.mxu0 %v826
    %882 = vmatpush.msra.mxu0 %v825
    %883 = vmatpush.msra.mxu0 %v824
    %884 = vmatpush.msra.mxu0 %v823
    %885 = vmatpush.msra.mxu0 %v822
    %886 = vmatpush.msra.mxu0 %v821
    %887 = vmatpush.msra.mxu0 %v820
    %888 = vmatpush.msra.mxu0 %v819
    %889 = vmatmul.f32.gmra.mxu0 %v829
    %v890 = vpop.f32.mrf.mxu0
    %v891 = vadd.f32 0.0, %v890
    %892 = vmatmul.f32.gmra.mxu0 %v832
    %v893 = vpop.f32.mrf.mxu0
    %v894 = vadd.f32 0.0, %v893
    %895 = vmatmul.f32.gmra.mxu0 %v835
    %v896 = vpop.f32.mrf.mxu0
    %v897 = vadd.f32 0.0, %v896
    %898 = vmatmul.f32.gmra.mxu0 %v838
    %v899 = vpop.f32.mrf.mxu0
    %v900 = vadd.f32 0.0, %v899
    %901 = vmatmul.f32.gmra.mxu0 %v841
    %v902 = vpop.f32.mrf.mxu0
    %v903 = vadd.f32 0.0, %v902
    %904 = vmatmul.f32.gmra.mxu0 %v844
    %v905 = vpop.f32.mrf.mxu0
    %v906 = vadd.f32 0.0, %v905
    %907 = vmatmul.f32.gmra.mxu0 %v847
    %v908 = vpop.f32.mrf.mxu0
    %v909 = vadd.f32 0.0, %v908
    %910 = vmatmul.f32.gmra.mxu0 %v850
    %v911 = vpop.f32.mrf.mxu0
    %v912 = vadd.f32 0.0, %v911
    %913 = vmatmul.f32.gmra.mxu0 %v853
    %v914 = vpop.f32.mrf.mxu0
    %v915 = vadd.f32 0.0, %v914
    %916 = vmatmul.f32.gmra.mxu0 %v856
    %v917 = vpop.f32.mrf.mxu0
    %v918 = vadd.f32 0.0, %v917
    %919 = vmatmul.f32.gmra.mxu0 %v859
    %v920 = vpop.f32.mrf.mxu0
    %v921 = vadd.f32 0.0, %v920
    %922 = vmatmul.f32.gmra.mxu0 %v862
    %v923 = vpop.f32.mrf.mxu0
    %v924 = vadd.f32 0.0, %v923
    %925 = vmatmul.f32.gmra.mxu0 %v865
    %v926 = vpop.f32.mrf.mxu0
    %v927 = vadd.f32 0.0, %v926
    %928 = vmatmul.f32.gmra.mxu0 %v868
    %v929 = vpop.f32.mrf.mxu0
    %v930 = vadd.f32 0.0, %v929
    %931 = vmatmul.f32.gmra.mxu0 %v871
    %v932 = vpop.f32.mrf.mxu0
    %v933 = vadd.f32 0.0, %v932
    %934 = vdwg.mxu0
    %v936 = vsel %vm827, %v481, 0
    %v939 = vsel %vm827, %v482, 0
    %v942 = vsel %vm827, %v483, 0
    %v945 = vsel %vm827, %v484, 0
    %v948 = vsel %vm827, %v485, 0
    %v951 = vsel %vm827, %v486, 0
    %v954 = vsel %vm827, %v487, 0
    %v957 = vsel %vm827, %v488, 0
    %v960 = vsel %vm827, %v489, 0
    %v963 = vsel %vm827, %v490, 0
    %v966 = vsel %vm827, %v491, 0
    %v969 = vsel %vm827, %v492, 0
    %v972 = vsel %vm827, %v493, 0
    %v975 = vsel %vm827, %v494, 0
    %v978 = vsel %vm827, %v495, 0
    %980 = vmatpush.msra.mxu0 0.0
    %981 = vmatpush.msra.mxu0 0.0
    %982 = vmatpush.msra.mxu0 0.0
    %983 = vmatpush.msra.mxu0 0.0
    %984 = vmatpush.msra.mxu0 0.0
    %985 = vmatpush.msra.mxu0 0.0
    %986 = vmatpush.msra.mxu0 0.0
    %987 = vmatpush.msra.mxu0 0.0
    %988 = vmatpush.msra.mxu0 %v818
    %989 = vmatpush.msra.mxu0 %v817
    %990 = vmatpush.msra.mxu0 %v816
    %991 = vmatpush.msra.mxu0 %v815
    %992 = vmatpush.msra.mxu0 %v814
    %993 = vmatpush.msra.mxu0 %v813
    %994 = vmatpush.msra.mxu0 %v812
    %995 = vmatpush.msra.mxu0 %v811
    %996 = vmatmul.f32.gmra.mxu0 %v936
    %v997 = vpop.f32.mrf.mxu0
    %v998 = vadd.f32 %v891, %v997
    %999 = vmatmul.f32.gmra.mxu0 %v939
    %v1000 = vpop.f32.mrf.mxu0
    %v1001 = vadd.f32 %v894, %v1000
    %1002 = vmatmul.f32.gmra.mxu0 %v942
    %v1003 = vpop.f32.mrf.mxu0
    %v1004 = vadd.f32 %v897, %v1003
    %1005 = vmatmul.f32.gmra.mxu0 %v945
    %v1006 = vpop.f32.mrf.mxu0
    %v1007 = vadd.f32 %v900, %v1006
    %1008 = vmatmul.f32.gmra.mxu0 %v948
    %v1009 = vpop.f32.mrf.mxu0
    %v1010 = vadd.f32 %v903, %v1009
    %1011 = vmatmul.f32.gmra.mxu0 %v951
    %v1012 = vpop.f32.mrf.mxu0
    %v1013 = vadd.f32 %v906, %v1012
    %1014 = vmatmul.f32.gmra.mxu0 %v954
    %v1015 = vpop.f32.mrf.mxu0
    %v1016 = vadd.f32 %v909, %v1015
    %1017 = vmatmul.f32.gmra.mxu0 %v957
    %v1018 = vpop.f32.mrf.mxu0
    %v1019 = vadd.f32 %v912, %v1018
    %1020 = vmatmul.f32.gmra.mxu0 %v960
    %v1021 = vpop.f32.mrf.mxu0
    %v1022 = vadd.f32 %v915, %v1021
    %1023 = vmatmul.f32.gmra.mxu0 %v963
    %v1024 = vpop.f32.mrf.mxu0
    %v1025 = vadd.f32 %v918, %v1024
    %1026 = vmatmul.f32.gmra.mxu0 %v966
    %v1027 = vpop.f32.mrf.mxu0
    %v1028 = vadd.f32 %v921, %v1027
    %1029 = vmatmul.f32.gmra.mxu0 %v969
    %v1030 = vpop.f32.mrf.mxu0
    %v1031 = vadd.f32 %v924, %v1030
    %1032 = vmatmul.f32.gmra.mxu0 %v972
    %v1033 = vpop.f32.mrf.mxu0
    %v1034 = vadd.f32 %v927, %v1033
    %1035 = vmatmul.f32.gmra.mxu0 %v975
    %v1036 = vpop.f32.mrf.mxu0
    %v1037 = vadd.f32 %v930, %v1036
    %1038 = vmatmul.f32.gmra.mxu0 %v978
    %v1039 = vpop.f32.mrf.mxu0
    %v1040 = vadd.f32 %v933, %v1039
    %1041 = vdwg.mxu0
    %v1042 = vld [vmem:[%s3 + $0x88] sm:$0xff]
    %v1043 = vld [vmem:[%s3 + $0x90] sm:$0xff]
    %v1044 = vld [vmem:[%s3 + $0x98] sm:$0xff]
    %v1045 = vld [vmem:[%s3 + $0xa0] sm:$0xff]
    %v1046 = vld [vmem:[%s3 + $0xa8] sm:$0xff]
    %v1047 = vld [vmem:[%s3 + $0xb0] sm:$0xff]
    %v1048 = vld [vmem:[%s3 + $0xb8] sm:$0xff]
    %v1049 = vld [vmem:[%s3 + $0xc0] sm:$0xff]
    %vm1050 = vcmask 1045504
    %v1051 = vrot.slane %v481, 2
    %v1052 = vrot.slane %v482, 2
    %v1053 = vsel %vm1050, %v1051, %v1052
    %v1054 = vrot.slane %v483, 2
    %v1055 = vsel %vm1050, %v1052, %v1054
    %v1056 = vrot.slane %v484, 2
    %v1057 = vsel %vm1050, %v1054, %v1056
    %v1058 = vrot.slane %v485, 2
    %v1059 = vsel %vm1050, %v1056, %v1058
    %v1060 = vrot.slane %v486, 2
    %v1061 = vsel %vm1050, %v1058, %v1060
    %v1062 = vrot.slane %v487, 2
    %v1063 = vsel %vm1050, %v1060, %v1062
    %v1064 = vrot.slane %v488, 2
    %v1065 = vsel %vm1050, %v1062, %v1064
    %v1066 = vrot.slane %v489, 2
    %v1067 = vsel %vm1050, %v1064, %v1066
    %v1068 = vrot.slane %v490, 2
    %v1069 = vsel %vm1050, %v1066, %v1068
    %v1070 = vrot.slane %v491, 2
    %v1071 = vsel %vm1050, %v1068, %v1070
    %v1072 = vrot.slane %v492, 2
    %v1073 = vsel %vm1050, %v1070, %v1072
    %v1074 = vrot.slane %v493, 2
    %v1075 = vsel %vm1050, %v1072, %v1074
    %v1076 = vrot.slane %v494, 2
    %v1077 = vsel %vm1050, %v1074, %v1076
    %v1078 = vrot.slane %v495, 2
    %v1079 = vsel %vm1050, %v1076, %v1078
    %v1080 = vsel %vm827, %v1053, 0
    %v1082 = vsel %vm827, %v1055, 0
    %v1084 = vsel %vm827, %v1057, 0
    %v1086 = vsel %vm827, %v1059, 0
    %v1088 = vsel %vm827, %v1061, 0
    %v1090 = vsel %vm827, %v1063, 0
    %v1092 = vsel %vm827, %v1065, 0
    %v1094 = vsel %vm827, %v1067, 0
    %v1096 = vsel %vm827, %v1069, 0
    %v1098 = vsel %vm827, %v1071, 0
    %v1100 = vsel %vm827, %v1073, 0
    %v1102 = vsel %vm827, %v1075, 0
    %v1104 = vsel %vm827, %v1077, 0
    %v1106 = vsel %vm827, %v1079, 0
    %v1108 = vsel %vm827, %v1078, 0
    %1110 = vmatpush.msra.mxu0 0.0
    %1111 = vmatpush.msra.mxu0 0.0
    %1112 = vmatpush.msra.mxu0 0.0
    %1113 = vmatpush.msra.mxu0 0.0
    %1114 = vmatpush.msra.mxu0 0.0
    %1115 = vmatpush.msra.mxu0 0.0
    %1116 = vmatpush.msra.mxu0 0.0
    %1117 = vmatpush.msra.mxu0 0.0
    %1118 = vmatpush.msra.mxu0 %v1049
    %1119 = vmatpush.msra.mxu0 %v1048
    %1120 = vmatpush.msra.mxu0 %v1047
    %1121 = vmatpush.msra.mxu0 %v1046
    %1122 = vmatpush.msra.mxu0 %v1045
    %1123 = vmatpush.msra.mxu0 %v1044
    %1124 = vmatpush.msra.mxu0 %v1043
    %1125 = vmatpush.msra.mxu0 %v1042
    %1126 = vmatmul.f32.gmra.mxu0 %v1080
    %v1127 = vpop.f32.mrf.mxu0
    %v1128 = vadd.f32 0.0, %v1127
    %1129 = vmatmul.f32.gmra.mxu0 %v1082
    %v1130 = vpop.f32.mrf.mxu0
    %v1131 = vadd.f32 0.0, %v1130
    %1132 = vmatmul.f32.gmra.mxu0 %v1084
    %v1133 = vpop.f32.mrf.mxu0
    %v1134 = vadd.f32 0.0, %v1133
    %1135 = vmatmul.f32.gmra.mxu0 %v1086
    %v1136 = vpop.f32.mrf.mxu0
    %v1137 = vadd.f32 0.0, %v1136
    %1138 = vmatmul.f32.gmra.mxu0 %v1088
    %v1139 = vpop.f32.mrf.mxu0
    %v1140 = vadd.f32 0.0, %v1139
    %1141 = vmatmul.f32.gmra.mxu0 %v1090
    %v1142 = vpop.f32.mrf.mxu0
    %v1143 = vadd.f32 0.0, %v1142
    %1144 = vmatmul.f32.gmra.mxu0 %v1092
    %v1145 = vpop.f32.mrf.mxu0
    %v1146 = vadd.f32 0.0, %v1145
    %1147 = vmatmul.f32.gmra.mxu0 %v1094
    %v1148 = vpop.f32.mrf.mxu0
    %v1149 = vadd.f32 0.0, %v1148
    %1150 = vmatmul.f32.gmra.mxu0 %v1096
    %v1151 = vpop.f32.mrf.mxu0
    %v1152 = vadd.f32 0.0, %v1151
    %1153 = vmatmul.f32.gmra.mxu0 %v1098
    %v1154 = vpop.f32.mrf.mxu0
    %v1155 = vadd.f32 0.0, %v1154
    %1156 = vmatmul.f32.gmra.mxu0 %v1100
    %v1157 = vpop.f32.mrf.mxu0
    %v1158 = vadd.f32 0.0, %v1157
    %1159 = vmatmul.f32.gmra.mxu0 %v1102
    %v1160 = vpop.f32.mrf.mxu0
    %v1161 = vadd.f32 0.0, %v1160
    %1162 = vmatmul.f32.gmra.mxu0 %v1104
    %v1163 = vpop.f32.mrf.mxu0
    %v1164 = vadd.f32 0.0, %v1163
    %1165 = vmatmul.f32.gmra.mxu0 %v1106
    %v1166 = vpop.f32.mrf.mxu0
    %v1167 = vadd.f32 0.0, %v1166
    %1168 = vmatmul.f32.gmra.mxu0 %v1108
    %v1169 = vpop.f32.mrf.mxu0
    %v1170 = vadd.f32 0.0, %v1169
    %1171 = vdwg.mxu0
    %v1172 = vadd.f32 %v998, %v1128
    %v1173 = vadd.f32 %v1001, %v1131
    %v1174 = vadd.f32 %v1004, %v1134
    %v1175 = vadd.f32 %v1007, %v1137
    %v1176 = vadd.f32 %v1010, %v1140
    %v1177 = vadd.f32 %v1013, %v1143
    %v1178 = vadd.f32 %v1016, %v1146
    %v1179 = vadd.f32 %v1019, %v1149
    %v1180 = vadd.f32 %v1022, %v1152
    %v1181 = vadd.f32 %v1025, %v1155
    %v1182 = vadd.f32 %v1028, %v1158
    %v1183 = vadd.f32 %v1031, %v1161
    %v1184 = vadd.f32 %v1034, %v1164
    %v1185 = vadd.f32 %v1037, %v1167
    %v1186 = vadd.f32 %v1040, %v1170
    %v1188 = vperm.slane %v172, 0
    %v1190 = vadd.f32 %v1172, %v1188
    %v1191 = vadd.f32 %v1173, %v1188
    %v1192 = vadd.f32 %v1174, %v1188
    %v1193 = vadd.f32 %v1175, %v1188
    %v1194 = vadd.f32 %v1176, %v1188
    %v1195 = vadd.f32 %v1177, %v1188
    %v1196 = vadd.f32 %v1178, %v1188
    %v1197 = vadd.f32 %v1179, %v1188
    %v1198 = vadd.f32 %v1180, %v1188
    %v1199 = vadd.f32 %v1181, %v1188
    %v1200 = vadd.f32 %v1182, %v1188
    %v1201 = vadd.f32 %v1183, %v1188
    %v1202 = vadd.f32 %v1184, %v1188
    %v1203 = vadd.f32 %v1185, %v1188
    %v1204 = vadd.f32 %v1186, %v1188
    %v1205 = vmax.f32 %v1190, 0.0
    %v1206 = vmax.f32 %v1191, 0.0
    %v1207 = vmax.f32 %v1192, 0.0
    %v1208 = vmax.f32 %v1193, 0.0
    %v1209 = vmax.f32 %v1194, 0.0
    %v1210 = vmax.f32 %v1195, 0.0
    %v1211 = vmax.f32 %v1196, 0.0
    %v1212 = vmax.f32 %v1197, 0.0
    %v1213 = vmax.f32 %v1198, 0.0
    %v1214 = vmax.f32 %v1199, 0.0
    %v1215 = vmax.f32 %v1200, 0.0
    %v1216 = vmax.f32 %v1201, 0.0
    %v1217 = vmax.f32 %v1202, 0.0
    %v1218 = vmax.f32 %v1203, 0.0
    %v1219 = vmax.f32 %v1204, 0.0
    %vm1220 = vcmask 517120
    %1221 = vst.msk [vmem:[#allocation2] sm:$0x3] %vm1220, %v1205
    %1223 = vst.sshfl [vmem:[#allocation1] sm:$0xff pattern:$0x73625140] %v1205
    %s1224 = scalar_lea.vmem [#allocation1], 1
    %v1225 = vld [vmem:[%s1224] ss:$4 sm:$0xff]
    %1226 = vrot.lane.b32.xlu0 %v1225, 64
    %v1227 = vpop.permute.xlu0 %1226
    %vm1229 = vcmask 1041920
    %1230 = vst.msk [vmem:[#allocation2] sm:$0x3] %vm1229, %v1227
    %1231 = vst.sshfl [vmem:[#allocation1] sm:$0xff pattern:$0x73625140] %v1205
    %s1232 = scalar_lea.vmem [#allocation1], 2
    %v1233 = vld [vmem:[%s1232] ss:$4 sm:$0xff]
    %1235 = vst.msk [vmem:[#allocation2 + $0x2] sm:$0x3] %vm1220, %v1233
    %1236 = vst.sshfl [vmem:[#allocation1] sm:$0xff pattern:$0x73625140] %v1205
    %s1237 = scalar_lea.vmem [#allocation1], 3
    %v1238 = vld [vmem:[%s1237] ss:$4 sm:$0xff]
    %1239 = vrot.lane.b32.xlu0 %v1238, 64
    %v1240 = vpop.permute.xlu0 %1239
    %1242 = vst.msk [vmem:[#allocation2 + $0x2] sm:$0x3] %vm1229, %v1240
    %1243 = vst.msk [vmem:[#allocation2 + $0x4] sm:$0x3] %vm1220, %v1206
    %1245 = vst.sshfl [vmem:[#allocation1] sm:$0xff pattern:$0x73625140] %v1206
    %s1246 = scalar_lea.vmem [#allocation1], 1
    %v1247 = vld [vmem:[%s1246] ss:$4 sm:$0xff]
    %1248 = vrot.lane.b32.xlu0 %v1247, 64
    %v1249 = vpop.permute.xlu0 %1248
    %1251 = vst.msk [vmem:[#allocation2 + $0x4] sm:$0x3] %vm1229, %v1249
    %1252 = vst.sshfl [vmem:[#allocation1] sm:$0xff pattern:$0x73625140] %v1206
    %s1253 = scalar_lea.vmem [#allocation1], 2
    %v1254 = vld [vmem:[%s1253] ss:$4 sm:$0xff]
    %1256 = vst.msk [vmem:[#allocation2 + $0x6] sm:$0x3] %vm1220, %v1254
    %1257 = vst.sshfl [vmem:[#allocation1] sm:$0xff pattern:$0x73625140] %v1206
    %s1258 = scalar_lea.vmem [#allocation1], 3
    %v1259 = vld [vmem:[%s1258] ss:$4 sm:$0xff]
    %1260 = vrot.lane.b32.xlu0 %v1259, 64
    %v1261 = vpop.permute.xlu0 %1260
    %1263 = vst.msk [vmem:[#allocation2 + $0x6] sm:$0x3] %vm1229, %v1261
    %1264 = vst.msk [vmem:[#allocation2 + $0x8] sm:$0x3] %vm1220, %v1207
    %1266 = vst.sshfl [vmem:[#allocation1] sm:$0xff pattern:$0x73625140] %v1207
    %s1267 = scalar_lea.vmem [#allocation1], 1
    %v1268 = vld [vmem:[%s1267] ss:$4 sm:$0xff]
    %1269 = vrot.lane.b32.xlu0 %v1268, 64
    %v1270 = vpop.permute.xlu0 %1269
    %1272 = vst.msk [vmem:[#allocation2 + $0x8] sm:$0x3] %vm1229, %v1270
    %1273 = vst.sshfl [vmem:[#allocation1] sm:$0xff pattern:$0x73625140] %v1207
    %s1274 = scalar_lea.vmem [#allocation1], 2
    %v1275 = vld [vmem:[%s1274] ss:$4 sm:$0xff]
    %1277 = vst.msk [vmem:[#allocation2 + $0xa] sm:$0x3] %vm1220, %v1275
    %1278 = vst.sshfl [vmem:[#allocation1] sm:$0xff pattern:$0x73625140] %v1207
    %s1279 = scalar_lea.vmem [#allocation1], 3
    %v1280 = vld [vmem:[%s1279] ss:$4 sm:$0xff]
    %1281 = vrot.lane.b32.xlu0 %v1280, 64
    %v1282 = vpop.permute.xlu0 %1281
    %1284 = vst.msk [vmem:[#allocation2 + $0xa] sm:$0x3] %vm1229, %v1282
    %1285 = vst.msk [vmem:[#allocation2 + $0xc] sm:$0x3] %vm1220, %v1208
    %1287 = vst.sshfl [vmem:[#allocation1] sm:$0xff pattern:$0x73625140] %v1208
    %s1288 = scalar_lea.vmem [#allocation1], 1
    %v1289 = vld [vmem:[%s1288] ss:$4 sm:$0xff]
    %1290 = vrot.lane.b32.xlu0 %v1289, 64
    %v1291 = vpop.permute.xlu0 %1290
    %1293 = vst.msk [vmem:[#allocation2 + $0xc] sm:$0x3] %vm1229, %v1291
    %1294 = vst.sshfl [vmem:[#allocation1] sm:$0xff pattern:$0x73625140] %v1208
    %s1295 = scalar_lea.vmem [#allocation1], 2
    %v1296 = vld [vmem:[%s1295] ss:$4 sm:$0xff]
    %1298 = vst.msk [vmem:[#allocation2 + $0xe] sm:$0x3] %vm1220, %v1296
    %1299 = vst.sshfl [vmem:[#allocation1] sm:$0xff pattern:$0x73625140] %v1208
    %s1300 = scalar_lea.vmem [#allocation1], 3
    %v1301 = vld [vmem:[%s1300] ss:$4 sm:$0xff]
    %1302 = vrot.lane.b32.xlu0 %v1301, 64
    %v1303 = vpop.permute.xlu0 %1302
    %1305 = vst.msk [vmem:[#allocation2 + $0xe] sm:$0x3] %vm1229, %v1303
    %1306 = vst.msk [vmem:[#allocation2 + $0x10] sm:$0x3] %vm1220, %v1209
    %1308 = vst.sshfl [vmem:[#allocation1] sm:$0xff pattern:$0x73625140] %v1209
    %s1309 = scalar_lea.vmem [#allocation1], 1
    %v1310 = vld [vmem:[%s1309] ss:$4 sm:$0xff]
    %1311 = vrot.lane.b32.xlu0 %v1310, 64
    %v1312 = vpop.permute.xlu0 %1311
    %1314 = vst.msk [vmem:[#allocation2 + $0x10] sm:$0x3] %vm1229, %v1312
    %1315 = vst.sshfl [vmem:[#allocation1] sm:$0xff pattern:$0x73625140] %v1209
    %s1316 = scalar_lea.vmem [#allocation1], 2
    %v1317 = vld [vmem:[%s1316] ss:$4 sm:$0xff]
    %1319 = vst.msk [vmem:[#allocation2 + $0x12] sm:$0x3] %vm1220, %v1317
    %1320 = vst.sshfl [vmem:[#allocation1] sm:$0xff pattern:$0x73625140] %v1209
    %s1321 = scalar_lea.vmem [#allocation1], 3
    %v1322 = vld [vmem:[%s1321] ss:$4 sm:$0xff]
    %1323 = vrot.lane.b32.xlu0 %v1322, 64
    %v1324 = vpop.permute.xlu0 %1323
    %1326 = vst.msk [vmem:[#allocation2 + $0x12] sm:$0x3] %vm1229, %v1324
    %1327 = vst.msk [vmem:[#allocation2 + $0x14] sm:$0x3] %vm1220, %v1210
    %1329 = vst.sshfl [vmem:[#allocation1] sm:$0xff pattern:$0x73625140] %v1210
    %s1330 = scalar_lea.vmem [#allocation1], 1
    %v1331 = vld [vmem:[%s1330] ss:$4 sm:$0xff]
    %1332 = vrot.lane.b32.xlu0 %v1331, 64
    %v1333 = vpop.permute.xlu0 %1332
    %1335 = vst.msk [vmem:[#allocation2 + $0x14] sm:$0x3] %vm1229, %v1333
    %1336 = vst.sshfl [vmem:[#allocation1] sm:$0xff pattern:$0x73625140] %v1210
    %s1337 = scalar_lea.vmem [#allocation1], 2
    %v1338 = vld [vmem:[%s1337] ss:$4 sm:$0xff]
    %1340 = vst.msk [vmem:[#allocation2 + $0x16] sm:$0x3] %vm1220, %v1338
    %1341 = vst.sshfl [vmem:[#allocation1] sm:$0xff pattern:$0x73625140] %v1210
    %s1342 = scalar_lea.vmem [#allocation1], 3
    %v1343 = vld [vmem:[%s1342] ss:$4 sm:$0xff]
    %1344 = vrot.lane.b32.xlu0 %v1343, 64
    %v1345 = vpop.permute.xlu0 %1344
    %1347 = vst.msk [vmem:[#allocation2 + $0x16] sm:$0x3] %vm1229, %v1345
    %1348 = vst.msk [vmem:[#allocation2 + $0x18] sm:$0x3] %vm1220, %v1211
    %1350 = vst.sshfl [vmem:[#allocation1] sm:$0xff pattern:$0x73625140] %v1211
    %s1351 = scalar_lea.vmem [#allocation1], 1
    %v1352 = vld [vmem:[%s1351] ss:$4 sm:$0xff]
    %1353 = vrot.lane.b32.xlu0 %v1352, 64
    %v1354 = vpop.permute.xlu0 %1353
    %1356 = vst.msk [vmem:[#allocation2 + $0x18] sm:$0x3] %vm1229, %v1354
    %1357 = vst.sshfl [vmem:[#allocation1] sm:$0xff pattern:$0x73625140] %v1211
    %s1358 = scalar_lea.vmem [#allocation1], 2
    %v1359 = vld [vmem:[%s1358] ss:$4 sm:$0xff]
    %1361 = vst.msk [vmem:[#allocation2 + $0x1a] sm:$0x3] %vm1220, %v1359
    %1362 = vst.sshfl [vmem:[#allocation1] sm:$0xff pattern:$0x73625140] %v1211
    %s1363 = scalar_lea.vmem [#allocation1], 3
    %v1364 = vld [vmem:[%s1363] ss:$4 sm:$0xff]
    %1365 = vrot.lane.b32.xlu0 %v1364, 64
    %v1366 = vpop.permute.xlu0 %1365
    %1368 = vst.msk [vmem:[#allocation2 + $0x1a] sm:$0x3] %vm1229, %v1366
    %1369 = vst.msk [vmem:[#allocation2 + $0x1c] sm:$0x3] %vm1220, %v1212
    %1371 = vst.sshfl [vmem:[#allocation1] sm:$0xff pattern:$0x73625140] %v1212
    %s1372 = scalar_lea.vmem [#allocation1], 1
    %v1373 = vld [vmem:[%s1372] ss:$4 sm:$0xff]
    %1374 = vrot.lane.b32.xlu0 %v1373, 64
    %v1375 = vpop.permute.xlu0 %1374
    %1377 = vst.msk [vmem:[#allocation2 + $0x1c] sm:$0x3] %vm1229, %v1375
    %1378 = vst.sshfl [vmem:[#allocation1] sm:$0xff pattern:$0x73625140] %v1212
    %s1379 = scalar_lea.vmem [#allocation1], 2
    %v1380 = vld [vmem:[%s1379] ss:$4 sm:$0xff]
    %1382 = vst.msk [vmem:[#allocation2 + $0x1e] sm:$0x3] %vm1220, %v1380
    %1383 = vst.sshfl [vmem:[#allocation1] sm:$0xff pattern:$0x73625140] %v1212
    %s1384 = scalar_lea.vmem [#allocation1], 3
    %v1385 = vld [vmem:[%s1384] ss:$4 sm:$0xff]
    %1386 = vrot.lane.b32.xlu0 %v1385, 64
    %v1387 = vpop.permute.xlu0 %1386
    %1389 = vst.msk [vmem:[#allocation2 + $0x1e] sm:$0x3] %vm1229, %v1387
    %1390 = vst.msk [vmem:[#allocation2 + $0x20] sm:$0x3] %vm1220, %v1213
    %1392 = vst.sshfl [vmem:[#allocation1] sm:$0xff pattern:$0x73625140] %v1213
    %s1393 = scalar_lea.vmem [#allocation1], 1
    %v1394 = vld [vmem:[%s1393] ss:$4 sm:$0xff]
    %1395 = vrot.lane.b32.xlu0 %v1394, 64
    %v1396 = vpop.permute.xlu0 %1395
    %1398 = vst.msk [vmem:[#allocation2 + $0x20] sm:$0x3] %vm1229, %v1396
    %1399 = vst.sshfl [vmem:[#allocation1] sm:$0xff pattern:$0x73625140] %v1213
    %s1400 = scalar_lea.vmem [#allocation1], 2
    %v1401 = vld [vmem:[%s1400] ss:$4 sm:$0xff]
    %1403 = vst.msk [vmem:[#allocation2 + $0x22] sm:$0x3] %vm1220, %v1401
    %1404 = vst.sshfl [vmem:[#allocation1] sm:$0xff pattern:$0x73625140] %v1213
    %s1405 = scalar_lea.vmem [#allocation1], 3
    %v1406 = vld [vmem:[%s1405] ss:$4 sm:$0xff]
    %1407 = vrot.lane.b32.xlu0 %v1406, 64
    %v1408 = vpop.permute.xlu0 %1407
    %1410 = vst.msk [vmem:[#allocation2 + $0x22] sm:$0x3] %vm1229, %v1408
    %1411 = vst.msk [vmem:[#allocation2 + $0x24] sm:$0x3] %vm1220, %v1214
    %1413 = vst.sshfl [vmem:[#allocation1] sm:$0xff pattern:$0x73625140] %v1214
    %s1414 = scalar_lea.vmem [#allocation1], 1
    %v1415 = vld [vmem:[%s1414] ss:$4 sm:$0xff]
    %1416 = vrot.lane.b32.xlu0 %v1415, 64
    %v1417 = vpop.permute.xlu0 %1416
    %1419 = vst.msk [vmem:[#allocation2 + $0x24] sm:$0x3] %vm1229, %v1417
    %1420 = vst.sshfl [vmem:[#allocation1] sm:$0xff pattern:$0x73625140] %v1214
    %s1421 = scalar_lea.vmem [#allocation1], 2
    %v1422 = vld [vmem:[%s1421] ss:$4 sm:$0xff]
    %1424 = vst.msk [vmem:[#allocation2 + $0x26] sm:$0x3] %vm1220, %v1422
    %1425 = vst.sshfl [vmem:[#allocation1] sm:$0xff pattern:$0x73625140] %v1214
    %s1426 = scalar_lea.vmem [#allocation1], 3
    %v1427 = vld [vmem:[%s1426] ss:$4 sm:$0xff]
    %1428 = vrot.lane.b32.xlu0 %v1427, 64
    %v1429 = vpop.permute.xlu0 %1428
    %1431 = vst.msk [vmem:[#allocation2 + $0x26] sm:$0x3] %vm1229, %v1429
    %1432 = vst.msk [vmem:[#allocation2 + $0x28] sm:$0x3] %vm1220, %v1215
    %1434 = vst.sshfl [vmem:[#allocation1] sm:$0xff pattern:$0x73625140] %v1215
    %s1435 = scalar_lea.vmem [#allocation1], 1
    %v1436 = vld [vmem:[%s1435] ss:$4 sm:$0xff]
    %1437 = vrot.lane.b32.xlu0 %v1436, 64
    %v1438 = vpop.permute.xlu0 %1437
    %1440 = vst.msk [vmem:[#allocation2 + $0x28] sm:$0x3] %vm1229, %v1438
    %1441 = vst.sshfl [vmem:[#allocation1] sm:$0xff pattern:$0x73625140] %v1215
    %s1442 = scalar_lea.vmem [#allocation1], 2
    %v1443 = vld [vmem:[%s1442] ss:$4 sm:$0xff]
    %1445 = vst.msk [vmem:[#allocation2 + $0x2a] sm:$0x3] %vm1220, %v1443
    %1446 = vst.sshfl [vmem:[#allocation1] sm:$0xff pattern:$0x73625140] %v1215
    %s1447 = scalar_lea.vmem [#allocation1], 3
    %v1448 = vld [vmem:[%s1447] ss:$4 sm:$0xff]
    %1449 = vrot.lane.b32.xlu0 %v1448, 64
    %v1450 = vpop.permute.xlu0 %1449
    %1452 = vst.msk [vmem:[#allocation2 + $0x2a] sm:$0x3] %vm1229, %v1450
    %1453 = vst.msk [vmem:[#allocation2 + $0x2c] sm:$0x3] %vm1220, %v1216
    %1455 = vst.sshfl [vmem:[#allocation1] sm:$0xff pattern:$0x73625140] %v1216
    %s1456 = scalar_lea.vmem [#allocation1], 1
    %v1457 = vld [vmem:[%s1456] ss:$4 sm:$0xff]
    %1458 = vrot.lane.b32.xlu0 %v1457, 64
    %v1459 = vpop.permute.xlu0 %1458
    %1461 = vst.msk [vmem:[#allocation2 + $0x2c] sm:$0x3] %vm1229, %v1459
    %1462 = vst.sshfl [vmem:[#allocation1] sm:$0xff pattern:$0x73625140] %v1216
    %s1463 = scalar_lea.vmem [#allocation1], 2
    %v1464 = vld [vmem:[%s1463] ss:$4 sm:$0xff]
    %1466 = vst.msk [vmem:[#allocation2 + $0x2e] sm:$0x3] %vm1220, %v1464
    %1467 = vst.sshfl [vmem:[#allocation1] sm:$0xff pattern:$0x73625140] %v1216
    %s1468 = scalar_lea.vmem [#allocation1], 3
    %v1469 = vld [vmem:[%s1468] ss:$4 sm:$0xff]
    %1470 = vrot.lane.b32.xlu0 %v1469, 64
    %v1471 = vpop.permute.xlu0 %1470
    %1473 = vst.msk [vmem:[#allocation2 + $0x2e] sm:$0x3] %vm1229, %v1471
    %1474 = vst.msk [vmem:[#allocation2 + $0x30] sm:$0x3] %vm1220, %v1217
    %1476 = vst.sshfl [vmem:[#allocation1] sm:$0xff pattern:$0x73625140] %v1217
    %s1477 = scalar_lea.vmem [#allocation1], 1
    %v1478 = vld [vmem:[%s1477] ss:$4 sm:$0xff]
    %1479 = vrot.lane.b32.xlu0 %v1478, 64
    %v1480 = vpop.permute.xlu0 %1479
    %1482 = vst.msk [vmem:[#allocation2 + $0x30] sm:$0x3] %vm1229, %v1480
    %1483 = vst.sshfl [vmem:[#allocation1] sm:$0xff pattern:$0x73625140] %v1217
    %s1484 = scalar_lea.vmem [#allocation1], 2
    %v1485 = vld [vmem:[%s1484] ss:$4 sm:$0xff]
    %1487 = vst.msk [vmem:[#allocation2 + $0x32] sm:$0x3] %vm1220, %v1485
    %1488 = vst.sshfl [vmem:[#allocation1] sm:$0xff pattern:$0x73625140] %v1217
    %s1489 = scalar_lea.vmem [#allocation1], 3
    %v1490 = vld [vmem:[%s1489] ss:$4 sm:$0xff]
    %1491 = vrot.lane.b32.xlu0 %v1490, 64
    %v1492 = vpop.permute.xlu0 %1491
    %1494 = vst.msk [vmem:[#allocation2 + $0x32] sm:$0x3] %vm1229, %v1492
    %1495 = vst.msk [vmem:[#allocation2 + $0x34] sm:$0x3] %vm1220, %v1218
    %1497 = vst.sshfl [vmem:[#allocation1] sm:$0xff pattern:$0x73625140] %v1218
    %s1498 = scalar_lea.vmem [#allocation1], 1
    %v1499 = vld [vmem:[%s1498] ss:$4 sm:$0xff]
    %1500 = vrot.lane.b32.xlu0 %v1499, 64
    %v1501 = vpop.permute.xlu0 %1500
    %1503 = vst.msk [vmem:[#allocation2 + $0x34] sm:$0x3] %vm1229, %v1501
    %1504 = vst.sshfl [vmem:[#allocation1] sm:$0xff pattern:$0x73625140] %v1218
    %s1505 = scalar_lea.vmem [#allocation1], 2
    %v1506 = vld [vmem:[%s1505] ss:$4 sm:$0xff]
    %1508 = vst.msk [vmem:[#allocation2 + $0x36] sm:$0x3] %vm1220, %v1506
    %1509 = vst.sshfl [vmem:[#allocation1] sm:$0xff pattern:$0x73625140] %v1218
    %s1510 = scalar_lea.vmem [#allocation1], 3
    %v1511 = vld [vmem:[%s1510] ss:$4 sm:$0xff]
    %1512 = vrot.lane.b32.xlu0 %v1511, 64
    %v1513 = vpop.permute.xlu0 %1512
    %1515 = vst.msk [vmem:[#allocation2 + $0x36] sm:$0x3] %vm1229, %v1513
    %1516 = vst.msk [vmem:[#allocation2 + $0x38] sm:$0x3] %vm1220, %v1219
    %1518 = vst.sshfl [vmem:[#allocation1] sm:$0xff pattern:$0x73625140] %v1219
    %s1519 = scalar_lea.vmem [#allocation1], 1
    %v1520 = vld [vmem:[%s1519] ss:$4 sm:$0xff]
    %1521 = vrot.lane.b32.xlu0 %v1520, 64
    %v1522 = vpop.permute.xlu0 %1521
    %1524 = vst.msk [vmem:[#allocation2 + $0x38] sm:$0x3] %vm1229, %v1522
    %1525 = vst.sshfl [vmem:[#allocation1] sm:$0xff pattern:$0x73625140] %v1219
    %s1526 = scalar_lea.vmem [#allocation1], 2
    %v1527 = vld [vmem:[%s1526] ss:$4 sm:$0xff]
    %1529 = vst.msk [vmem:[#allocation2 + $0x3a] sm:$0x3] %vm1220, %v1527
    %v1530 = vld [vmem:[#allocation2] sm:$0xff]
    %v1531 = vld [vmem:[#allocation2 + $0x8] sm:$0xff]
    %v1532 = vld [vmem:[#allocation2 + $0x10] sm:$0xff]
    %v1533 = vld [vmem:[#allocation2 + $0x18] sm:$0xff]
    %v1534 = vld [vmem:[#allocation2 + $0x20] sm:$0xff]
    %v1535 = vld [vmem:[#allocation2 + $0x28] sm:$0xff]
    %v1536 = vld [vmem:[#allocation2 + $0x30] sm:$0xff]
    %v1537 = vld [vmem:[#allocation2 + $0x38] sm:$0xf]
    %1546 = vst [vmem:[#allocation1] ss:$4 sm:$0xff] %v1530
    %s1547 = scalar_lea.vmem [#allocation1], 32
    %1548 = vst [vmem:[%s1547] ss:$4 sm:$0xff] %v1531
    %v1549 = vld.sshfl [vmem:[#allocation1] sm:$0xff pattern:$0x73625140]
    %v1550 = vld.sshfl [vmem:[#allocation1 + $0x8] sm:$0xff pattern:$0x73625140]
    %v1551 = vld.sshfl [vmem:[#allocation1 + $0x10] sm:$0xff pattern:$0x73625140]
    %v1552 = vld.sshfl [vmem:[#allocation1 + $0x18] sm:$0xff pattern:$0x73625140]
    %v1553 = vld.sshfl [vmem:[#allocation1 + $0x20] sm:$0xff pattern:$0x73625140]
    %v1554 = vld.sshfl [vmem:[#allocation1 + $0x28] sm:$0xff pattern:$0x73625140]
    %v1555 = vld.sshfl [vmem:[#allocation1 + $0x30] sm:$0xff pattern:$0x73625140]
    %v1556 = vld.sshfl [vmem:[#allocation1 + $0x38] sm:$0xff pattern:$0x73625140]
    %1557 = vst [vmem:[#allocation1] ss:$4 sm:$0xff] %v1532
    %1558 = vst [vmem:[%s1547] ss:$4 sm:$0xff] %v1533
    %v1559 = vld.sshfl [vmem:[#allocation1] sm:$0xff pattern:$0x73625140]
    %v1560 = vld.sshfl [vmem:[#allocation1 + $0x8] sm:$0xff pattern:$0x73625140]
    %v1561 = vld.sshfl [vmem:[#allocation1 + $0x10] sm:$0xff pattern:$0x73625140]
    %v1562 = vld.sshfl [vmem:[#allocation1 + $0x18] sm:$0xff pattern:$0x73625140]
    %v1563 = vld.sshfl [vmem:[#allocation1 + $0x20] sm:$0xff pattern:$0x73625140]
    %v1564 = vld.sshfl [vmem:[#allocation1 + $0x28] sm:$0xff pattern:$0x73625140]
    %v1565 = vld.sshfl [vmem:[#allocation1 + $0x30] sm:$0xff pattern:$0x73625140]
    %v1566 = vld.sshfl [vmem:[#allocation1 + $0x38] sm:$0xff pattern:$0x73625140]
    %1567 = vst [vmem:[#allocation1] ss:$4 sm:$0xff] %v1534
    %1568 = vst [vmem:[%s1547] ss:$4 sm:$0xff] %v1535
    %v1569 = vld.sshfl [vmem:[#allocation1] sm:$0xff pattern:$0x73625140]
    %v1570 = vld.sshfl [vmem:[#allocation1 + $0x8] sm:$0xff pattern:$0x73625140]
    %v1571 = vld.sshfl [vmem:[#allocation1 + $0x10] sm:$0xff pattern:$0x73625140]
    %v1572 = vld.sshfl [vmem:[#allocation1 + $0x18] sm:$0xff pattern:$0x73625140]
    %v1573 = vld.sshfl [vmem:[#allocation1 + $0x20] sm:$0xff pattern:$0x73625140]
    %v1574 = vld.sshfl [vmem:[#allocation1 + $0x28] sm:$0xff pattern:$0x73625140]
    %v1575 = vld.sshfl [vmem:[#allocation1 + $0x30] sm:$0xff pattern:$0x73625140]
    %v1576 = vld.sshfl [vmem:[#allocation1 + $0x38] sm:$0xff pattern:$0x73625140]
    %1577 = vst [vmem:[#allocation1] ss:$4 sm:$0xff] %v1536
    %1578 = vst [vmem:[%s1547] ss:$4 sm:$0xff] %v1537
    %v1579 = vld.sshfl [vmem:[#allocation1] sm:$0xff pattern:$0x73625140]
    %v1580 = vld.sshfl [vmem:[#allocation1 + $0x8] sm:$0xff pattern:$0x73625140]
    %v1581 = vld.sshfl [vmem:[#allocation1 + $0x10] sm:$0xff pattern:$0x73625140]
    %v1582 = vld.sshfl [vmem:[#allocation1 + $0x18] sm:$0xff pattern:$0x73625140]
    %v1583 = vld.sshfl [vmem:[#allocation1 + $0x20] sm:$0xff pattern:$0x73625140]
    %v1584 = vld.sshfl [vmem:[#allocation1 + $0x28] sm:$0xff pattern:$0x73625140]
    %v1615 = vpack.c.bf16 %v1549, %v1549
    %v1616 = vpack.c.bf16 %v1550, %v1550
    %v1617 = vpack.c.bf16 %v1551, %v1551
    %v1618 = vpack.c.bf16 %v1552, %v1552
    %v1619 = vpack.c.bf16 %v1553, %v1553
    %v1620 = vpack.c.bf16 %v1554, %v1554
    %v1621 = vpack.c.bf16 %v1555, %v1555
    %v1622 = vpack.c.bf16 %v1556, %v1556
    %v1623 = vpack.c.bf16 %v1559, %v1559
    %v1624 = vpack.c.bf16 %v1560, %v1560
    %v1625 = vpack.c.bf16 %v1561, %v1561
    %v1626 = vpack.c.bf16 %v1562, %v1562
    %v1627 = vpack.c.bf16 %v1563, %v1563
    %v1628 = vpack.c.bf16 %v1564, %v1564
    %v1629 = vpack.c.bf16 %v1565, %v1565
    %v1630 = vpack.c.bf16 %v1566, %v1566
    %v1631 = vpack.c.bf16 %v1569, %v1569
    %v1632 = vpack.c.bf16 %v1570, %v1570
    %v1633 = vpack.c.bf16 %v1571, %v1571
    %v1634 = vpack.c.bf16 %v1572, %v1572
    %v1635 = vpack.c.bf16 %v1573, %v1573
    %v1636 = vpack.c.bf16 %v1574, %v1574
    %v1637 = vpack.c.bf16 %v1575, %v1575
    %v1638 = vpack.c.bf16 %v1576, %v1576
    %v1639 = vpack.c.bf16 %v1579, %v1579
    %v1640 = vpack.c.bf16 %v1580, %v1580
    %v1641 = vpack.c.bf16 %v1581, %v1581
    %v1642 = vpack.c.bf16 %v1582, %v1582
    %v1643 = vpack.c.bf16 %v1583, %v1583
    %v1644 = vpack.c.bf16 %v1584, %v1584
    %v1645 = vld [vmem:[#allocation3] sm:$0xff]
    %v1646 = vld [vmem:[#allocation3 + $0x8] sm:$0xff]
    %v1647 = vld [vmem:[#allocation3 + $0x10] sm:$0xff]
    %v1648 = vld [vmem:[#allocation3 + $0x18] sm:$0xff]
    %v1649 = vld [vmem:[#allocation3 + $0x20] sm:$0xff]
    %v1650 = vld [vmem:[#allocation3 + $0x28] sm:$0xff]
    %v1651 = vld [vmem:[#allocation3 + $0x30] sm:$0xff]
    %v1652 = vld [vmem:[#allocation3 + $0x38] sm:$0xff]
    %v1653 = vld [vmem:[#allocation3 + $0x40] sm:$0xff]
    %v1654 = vld [vmem:[#allocation3 + $0x48] sm:$0xff]
    %v1655 = vld [vmem:[#allocation3 + $0x50] sm:$0xff]
    %v1656 = vld [vmem:[#allocation3 + $0x58] sm:$0xff]
    %v1657 = vld [vmem:[#allocation3 + $0x60] sm:$0xff]
    %v1658 = vld [vmem:[#allocation3 + $0x68] sm:$0xff]
    %v1659 = vld [vmem:[#allocation3 + $0x70] sm:$0xff]
    %v1660 = vld [vmem:[#allocation3 + $0x78] sm:$0xff]
    %v1661 = vld [vmem:[#allocation3 + $0x80] sm:$0xff]
    %v1662 = vld [vmem:[#allocation3 + $0x88] sm:$0xff]
    %v1663 = vld [vmem:[#allocation3 + $0x90] sm:$0xff]
    %v1664 = vld [vmem:[#allocation3 + $0x98] sm:$0xff]
    %v1665 = vld [vmem:[#allocation3 + $0xa0] sm:$0xff]
    %v1666 = vld [vmem:[#allocation3 + $0xa8] sm:$0xff]
    %v1667 = vld [vmem:[#allocation3 + $0xb0] sm:$0xff]
    %v1668 = vld [vmem:[#allocation3 + $0xb8] sm:$0xff]
    %v1669 = vld [vmem:[#allocation3 + $0xc0] sm:$0xff]
    %v1670 = vld [vmem:[#allocation3 + $0xc8] sm:$0xff]
    %v1671 = vld [vmem:[#allocation3 + $0xd0] sm:$0xff]
    %v1672 = vld [vmem:[#allocation3 + $0xd8] sm:$0xff]
    %v1673 = vld [vmem:[#allocation3 + $0xe0] sm:$0xff]
    %v1674 = vld [vmem:[#allocation3 + $0xe8] sm:$0xff]
    %v1675 = vld [vmem:[#allocation3 + $0xf0] sm:$0xff]
    %v1676 = vld [vmem:[#allocation3 + $0xf8] sm:$0xff]
    %v1677 = vld [vmem:[#allocation3 + $0x100] sm:$0xff]
    %v1678 = vld [vmem:[#allocation3 + $0x108] sm:$0xff]
    %v1679 = vld [vmem:[#allocation3 + $0x110] sm:$0xff]
    %v1680 = vld [vmem:[#allocation3 + $0x118] sm:$0xff]
    %v1681 = vld [vmem:[#allocation3 + $0x120] sm:$0xff]
    %v1682 = vld [vmem:[#allocation3 + $0x128] sm:$0xff]
    %v1683 = vld [vmem:[#allocation3 + $0x130] sm:$0xff]
    %v1684 = vld [vmem:[#allocation3 + $0x138] sm:$0xff]
    %v1685 = vld [vmem:[#allocation3 + $0x140] sm:$0xff]
    %v1686 = vld [vmem:[#allocation3 + $0x148] sm:$0xff]
    %v1687 = vld [vmem:[#allocation3 + $0x150] sm:$0xff]
    %v1688 = vld [vmem:[#allocation3 + $0x158] sm:$0xff]
    %v1689 = vld [vmem:[#allocation3 + $0x160] sm:$0xff]
    %v1690 = vld [vmem:[#allocation3 + $0x168] sm:$0xff]
    %v1691 = vld [vmem:[#allocation3 + $0x170] sm:$0xff]
    %v1692 = vld [vmem:[#allocation3 + $0x178] sm:$0xff]
    %v1693 = vld [vmem:[#allocation3 + $0x180] sm:$0xff]
    %v1694 = vld [vmem:[#allocation3 + $0x188] sm:$0xff]
    %v1695 = vld [vmem:[#allocation3 + $0x190] sm:$0xff]
    %v1696 = vld [vmem:[#allocation3 + $0x198] sm:$0xff]
    %v1697 = vld [vmem:[#allocation3 + $0x1a0] sm:$0xff]
    %v1698 = vld [vmem:[#allocation3 + $0x1a8] sm:$0xff]
    %v1699 = vld [vmem:[#allocation3 + $0x1b0] sm:$0xff]
    %v1700 = vld [vmem:[#allocation3 + $0x1b8] sm:$0xff]
    %v1701 = vld [vmem:[#allocation3 + $0x1c0] sm:$0xff]
    %v1702 = vld [vmem:[#allocation3 + $0x1c8] sm:$0xff]
    %v1703 = vld [vmem:[#allocation3 + $0x1d0] sm:$0xff]
    %v1704 = vld [vmem:[#allocation3 + $0x1d8] sm:$0xff]
    %v1705 = vld [vmem:[#allocation3 + $0x1e0] sm:$0xff]
    %v1706 = vld [vmem:[#allocation3 + $0x1e8] sm:$0xff]
    %v1707 = vld [vmem:[#allocation3 + $0x1f0] sm:$0xff]
    %v1708 = vld [vmem:[#allocation3 + $0x1f8] sm:$0xff]
    %v1709 = vld [vmem:[#allocation3 + $0x200] sm:$0xff]
    %v1710 = vld [vmem:[#allocation3 + $0x208] sm:$0xff]
    %v1711 = vld [vmem:[#allocation3 + $0x210] sm:$0xff]
    %v1712 = vld [vmem:[#allocation3 + $0x218] sm:$0xff]
    %v1713 = vld [vmem:[#allocation3 + $0x220] sm:$0xff]
    %v1714 = vld [vmem:[#allocation3 + $0x228] sm:$0xff]
    %v1715 = vld [vmem:[#allocation3 + $0x230] sm:$0xff]
    %v1716 = vld [vmem:[#allocation3 + $0x238] sm:$0xff]
    %v1717 = vld [vmem:[#allocation3 + $0x240] sm:$0xff]
    %v1718 = vld [vmem:[#allocation3 + $0x248] sm:$0xff]
    %v1719 = vld [vmem:[#allocation3 + $0x250] sm:$0xff]
    %v1720 = vld [vmem:[#allocation3 + $0x258] sm:$0xff]
    %v1721 = vld [vmem:[#allocation3 + $0x260] sm:$0xff]
    %v1722 = vld [vmem:[#allocation3 + $0x268] sm:$0xff]
    %v1723 = vld [vmem:[#allocation3 + $0x270] sm:$0xff]
    %v1724 = vld [vmem:[#allocation3 + $0x278] sm:$0xff]
    %v1725 = vld [vmem:[#allocation3 + $0x280] sm:$0xff]
    %v1726 = vld [vmem:[#allocation3 + $0x288] sm:$0xff]
    %v1727 = vld [vmem:[#allocation3 + $0x290] sm:$0xff]
    %v1728 = vld [vmem:[#allocation3 + $0x298] sm:$0xff]
    %v1729 = vld [vmem:[#allocation3 + $0x2a0] sm:$0xff]
    %v1730 = vld [vmem:[#allocation3 + $0x2a8] sm:$0xff]
    %v1731 = vld [vmem:[#allocation3 + $0x2b0] sm:$0xff]
    %v1732 = vld [vmem:[#allocation3 + $0x2b8] sm:$0xff]
    %v1733 = vld [vmem:[#allocation3 + $0x2c0] sm:$0xff]
    %v1734 = vld [vmem:[#allocation3 + $0x2c8] sm:$0xff]
    %v1735 = vld [vmem:[#allocation3 + $0x2d0] sm:$0xff]
    %v1736 = vld [vmem:[#allocation3 + $0x2d8] sm:$0xff]
    %v1737 = vld [vmem:[#allocation3 + $0x2e0] sm:$0xff]
    %v1738 = vld [vmem:[#allocation3 + $0x2e8] sm:$0xff]
    %v1739 = vld [vmem:[#allocation3 + $0x2f0] sm:$0xff]
    %v1740 = vld [vmem:[#allocation3 + $0x2f8] sm:$0xff]
    %v1741 = vld [vmem:[#allocation3 + $0x300] sm:$0xff]
    %v1742 = vld [vmem:[#allocation3 + $0x308] sm:$0xff]
    %v1743 = vld [vmem:[#allocation3 + $0x310] sm:$0xff]
    %v1744 = vld [vmem:[#allocation3 + $0x318] sm:$0xff]
    %v1745 = vld [vmem:[#allocation3 + $0x320] sm:$0xff]
    %v1746 = vld [vmem:[#allocation3 + $0x328] sm:$0xff]
    %v1747 = vld [vmem:[#allocation3 + $0x330] sm:$0xff]
    %v1748 = vld [vmem:[#allocation3 + $0x338] sm:$0xff]
    %v1749 = vld [vmem:[#allocation3 + $0x340] sm:$0xff]
    %v1750 = vld [vmem:[#allocation3 + $0x348] sm:$0xff]
    %v1751 = vld [vmem:[#allocation3 + $0x350] sm:$0xff]
    %v1752 = vld [vmem:[#allocation3 + $0x358] sm:$0xff]
    %v1753 = vld [vmem:[#allocation3 + $0x360] sm:$0xff]
    %v1754 = vld [vmem:[#allocation3 + $0x368] sm:$0xff]
    %v1755 = vld [vmem:[#allocation3 + $0x370] sm:$0xff]
    %v1756 = vld [vmem:[#allocation3 + $0x378] sm:$0xff]
    %v1757 = vld [vmem:[#allocation3 + $0x380] sm:$0xff]
    %v1758 = vld [vmem:[#allocation3 + $0x388] sm:$0xff]
    %v1759 = vld [vmem:[#allocation3 + $0x390] sm:$0xff]
    %v1760 = vld [vmem:[#allocation3 + $0x398] sm:$0xff]
    %v1761 = vld [vmem:[#allocation3 + $0x3a0] sm:$0xff]
    %v1762 = vld [vmem:[#allocation3 + $0x3a8] sm:$0xff]
    %v1763 = vld [vmem:[#allocation3 + $0x3b0] sm:$0xff]
    %v1764 = vld [vmem:[#allocation3 + $0x3b8] sm:$0xff]
    %v1765 = vld [vmem:[#allocation3 + $0x3c0] sm:$0xff]
    %v1766 = vld [vmem:[#allocation3 + $0x3c8] sm:$0xff]
    %v1767 = vld [vmem:[#allocation3 + $0x3d0] sm:$0xff]
    %v1768 = vld [vmem:[#allocation3 + $0x3d8] sm:$0xff]
    %v1769 = vld [vmem:[#allocation3 + $0x3e0] sm:$0xff]
    %v1770 = vld [vmem:[#allocation3 + $0x3e8] sm:$0xff]
    %v1771 = vld [vmem:[#allocation3 + $0x3f0] sm:$0xff]
    %v1772 = vld [vmem:[#allocation3 + $0x3f8] sm:$0xff]
    %v1773 = vld [vmem:[#allocation3 + $0x400] sm:$0xff]
    %v1774 = vld [vmem:[#allocation3 + $0x408] sm:$0xff]
    %v1775 = vld [vmem:[#allocation3 + $0x410] sm:$0xff]
    %v1776 = vld [vmem:[#allocation3 + $0x418] sm:$0xff]
    %v1777 = vld [vmem:[#allocation3 + $0x420] sm:$0xff]
    %v1778 = vld [vmem:[#allocation3 + $0x428] sm:$0xff]
    %v1779 = vld [vmem:[#allocation3 + $0x430] sm:$0xff]
    %v1780 = vld [vmem:[#allocation3 + $0x438] sm:$0xff]
    %v1781 = vld [vmem:[#allocation3 + $0x440] sm:$0xff]
    %v1782 = vld [vmem:[#allocation3 + $0x448] sm:$0xff]
    %v1783 = vld [vmem:[#allocation3 + $0x450] sm:$0xff]
    %v1784 = vld [vmem:[#allocation3 + $0x458] sm:$0xff]
    %v1785 = vld [vmem:[#allocation3 + $0x460] sm:$0xff]
    %v1786 = vld [vmem:[#allocation3 + $0x468] sm:$0xff]
    %v1787 = vld [vmem:[#allocation3 + $0x470] sm:$0xff]
    %v1788 = vld [vmem:[#allocation3 + $0x478] sm:$0xff]
    %v1789 = vld [vmem:[#allocation3 + $0x480] sm:$0xff]
    %v1790 = vld [vmem:[#allocation3 + $0x488] sm:$0xff]
    %v1791 = vld [vmem:[#allocation3 + $0x490] sm:$0xff]
    %v1792 = vld [vmem:[#allocation3 + $0x498] sm:$0xff]
    %v1793 = vld [vmem:[#allocation3 + $0x4a0] sm:$0xff]
    %v1794 = vld [vmem:[#allocation3 + $0x4a8] sm:$0xff]
    %v1795 = vld [vmem:[#allocation3 + $0x4b0] sm:$0xff]
    %v1796 = vld [vmem:[#allocation3 + $0x4b8] sm:$0xff]
    %v1797 = vld [vmem:[#allocation3 + $0x4c0] sm:$0xff]
    %v1798 = vld [vmem:[#allocation3 + $0x4c8] sm:$0xff]
    %v1799 = vld [vmem:[#allocation3 + $0x4d0] sm:$0xff]
    %v1800 = vld [vmem:[#allocation3 + $0x4d8] sm:$0xff]
    %v1801 = vld [vmem:[#allocation3 + $0x4e0] sm:$0xff]
    %v1802 = vld [vmem:[#allocation3 + $0x4e8] sm:$0xff]
    %v1803 = vld [vmem:[#allocation3 + $0x4f0] sm:$0xff]
    %v1804 = vld [vmem:[#allocation3 + $0x4f8] sm:$0xff]
    %v1805 = vld [vmem:[#allocation3 + $0x500] sm:$0xff]
    %v1806 = vld [vmem:[#allocation3 + $0x508] sm:$0xff]
    %v1807 = vld [vmem:[#allocation3 + $0x510] sm:$0xff]
    %v1808 = vld [vmem:[#allocation3 + $0x518] sm:$0xff]
    %v1809 = vld [vmem:[#allocation3 + $0x520] sm:$0xff]
    %v1810 = vld [vmem:[#allocation3 + $0x528] sm:$0xff]
    %v1811 = vld [vmem:[#allocation3 + $0x530] sm:$0xff]
    %v1812 = vld [vmem:[#allocation3 + $0x538] sm:$0xff]
    %v1813 = vld [vmem:[#allocation3 + $0x540] sm:$0xff]
    %v1814 = vld [vmem:[#allocation3 + $0x548] sm:$0xff]
    %v1815 = vld [vmem:[#allocation3 + $0x550] sm:$0xff]
    %v1816 = vld [vmem:[#allocation3 + $0x558] sm:$0xff]
    %v1817 = vld [vmem:[#allocation3 + $0x560] sm:$0xff]
    %v1818 = vld [vmem:[#allocation3 + $0x568] sm:$0xff]
    %v1819 = vld [vmem:[#allocation3 + $0x570] sm:$0xff]
    %v1820 = vld [vmem:[#allocation3 + $0x578] sm:$0xff]
    %v1821 = vld [vmem:[#allocation3 + $0x580] sm:$0xff]
    %v1822 = vld [vmem:[#allocation3 + $0x588] sm:$0xff]
    %v1823 = vld [vmem:[#allocation3 + $0x590] sm:$0xff]
    %v1824 = vld [vmem:[#allocation3 + $0x598] sm:$0xff]
    %v1825 = vld [vmem:[#allocation3 + $0x5a0] sm:$0xff]
    %v1826 = vld [vmem:[#allocation3 + $0x5a8] sm:$0xff]
    %v1827 = vld [vmem:[#allocation3 + $0x5b0] sm:$0xff]
    %v1828 = vld [vmem:[#allocation3 + $0x5b8] sm:$0xff]
    %v1829 = vld [vmem:[#allocation3 + $0x5c0] sm:$0xff]
    %v1830 = vld [vmem:[#allocation3 + $0x5c8] sm:$0xff]
    %v1831 = vld [vmem:[#allocation3 + $0x5d0] sm:$0xff]
    %v1832 = vld [vmem:[#allocation3 + $0x5d8] sm:$0xff]
    %v1833 = vld [vmem:[#allocation3 + $0x5e0] sm:$0xff]
    %v1834 = vld [vmem:[#allocation3 + $0x5e8] sm:$0xff]
    %v1835 = vld [vmem:[#allocation3 + $0x5f0] sm:$0xff]
    %v1836 = vld [vmem:[#allocation3 + $0x5f8] sm:$0xff]
    %v1837 = vld [vmem:[#allocation3 + $0x600] sm:$0xff]
    %v1838 = vld [vmem:[#allocation3 + $0x608] sm:$0xff]
    %v1839 = vld [vmem:[#allocation3 + $0x610] sm:$0xff]
    %v1840 = vld [vmem:[#allocation3 + $0x618] sm:$0xff]
    %v1841 = vld [vmem:[#allocation3 + $0x620] sm:$0xff]
    %v1842 = vld [vmem:[#allocation3 + $0x628] sm:$0xff]
    %v1843 = vld [vmem:[#allocation3 + $0x630] sm:$0xff]
    %v1844 = vld [vmem:[#allocation3 + $0x638] sm:$0xff]
    %v1845 = vld [vmem:[#allocation3 + $0x640] sm:$0xff]
    %v1846 = vld [vmem:[#allocation3 + $0x648] sm:$0xff]
    %v1847 = vld [vmem:[#allocation3 + $0x650] sm:$0xff]
    %v1848 = vld [vmem:[#allocation3 + $0x658] sm:$0xff]
    %v1849 = vld [vmem:[#allocation3 + $0x660] sm:$0xff]
    %v1850 = vld [vmem:[#allocation3 + $0x668] sm:$0xff]
    %v1851 = vld [vmem:[#allocation3 + $0x670] sm:$0xff]
    %v1852 = vld [vmem:[#allocation3 + $0x678] sm:$0xff]
    %v1853 = vld [vmem:[#allocation3 + $0x680] sm:$0xff]
    %v1854 = vld [vmem:[#allocation3 + $0x688] sm:$0xff]
    %v1855 = vld [vmem:[#allocation3 + $0x690] sm:$0xff]
    %v1856 = vld [vmem:[#allocation3 + $0x698] sm:$0xff]
    %v1857 = vld [vmem:[#allocation3 + $0x6a0] sm:$0xff]
    %v1858 = vld [vmem:[#allocation3 + $0x6a8] sm:$0xff]
    %v1859 = vld [vmem:[#allocation3 + $0x6b0] sm:$0xff]
    %v1860 = vld [vmem:[#allocation3 + $0x6b8] sm:$0xff]
    %v1861 = vld [vmem:[#allocation3 + $0x6c0] sm:$0xff]
    %v1862 = vld [vmem:[#allocation3 + $0x6c8] sm:$0xff]
    %v1863 = vld [vmem:[#allocation3 + $0x6d0] sm:$0xff]
    %v1864 = vld [vmem:[#allocation3 + $0x6d8] sm:$0xff]
    %v1865 = vld [vmem:[#allocation3 + $0x6e0] sm:$0xff]
    %v1866 = vld [vmem:[#allocation3 + $0x6e8] sm:$0xff]
    %v1867 = vld [vmem:[#allocation3 + $0x6f0] sm:$0xff]
    %v1868 = vld [vmem:[#allocation3 + $0x6f8] sm:$0xff]
    %v1869 = vld [vmem:[#allocation3 + $0x700] sm:$0xff]
    %v1870 = vld [vmem:[#allocation3 + $0x708] sm:$0xff]
    %v1871 = vld [vmem:[#allocation3 + $0x710] sm:$0xff]
    %v1872 = vld [vmem:[#allocation3 + $0x718] sm:$0xff]
    %v1873 = vld [vmem:[#allocation3 + $0x720] sm:$0xff]
    %v1874 = vld [vmem:[#allocation3 + $0x728] sm:$0xff]
    %v1875 = vld [vmem:[#allocation3 + $0x730] sm:$0xff]
    %v1876 = vld [vmem:[#allocation3 + $0x738] sm:$0xff]
    %v1877 = vld [vmem:[#allocation3 + $0x740] sm:$0xff]
    %v1878 = vld [vmem:[#allocation3 + $0x748] sm:$0xff]
    %v1879 = vld [vmem:[#allocation3 + $0x750] sm:$0xff]
    %v1880 = vld [vmem:[#allocation3 + $0x758] sm:$0xff]
    %v1881 = vld [vmem:[#allocation3 + $0x760] sm:$0xff]
    %v1882 = vld [vmem:[#allocation3 + $0x768] sm:$0xff]
    %v1883 = vld [vmem:[#allocation3 + $0x770] sm:$0xff]
    %v1884 = vld [vmem:[#allocation3 + $0x778] sm:$0xff]
    %v1885 = vld [vmem:[#allocation3 + $0x780] sm:$0xff]
    %v1886 = vld [vmem:[#allocation3 + $0x788] sm:$0xff]
    %v1887 = vld [vmem:[#allocation3 + $0x790] sm:$0xff]
    %v1888 = vld [vmem:[#allocation3 + $0x798] sm:$0xff]
    %v1889 = vld [vmem:[#allocation3 + $0x7a0] sm:$0xff]
    %v1890 = vld [vmem:[#allocation3 + $0x7a8] sm:$0xff]
    %v1891 = vld [vmem:[#allocation3 + $0x7b0] sm:$0xff]
    %v1892 = vld [vmem:[#allocation3 + $0x7b8] sm:$0xff]
    %v1893 = vld [vmem:[#allocation3 + $0x7c0] sm:$0xff]
    %v1894 = vld [vmem:[#allocation3 + $0x7c8] sm:$0xff]
    %v1895 = vld [vmem:[#allocation3 + $0x7d0] sm:$0xff]
    %v1896 = vld [vmem:[#allocation3 + $0x7d8] sm:$0xff]
    %v1897 = vld [vmem:[#allocation3 + $0x7e0] sm:$0xff]
    %v1898 = vld [vmem:[#allocation3 + $0x7e8] sm:$0xff]
    %v1899 = vld [vmem:[#allocation3 + $0x7f0] sm:$0xff]
    %v1900 = vld [vmem:[#allocation3 + $0x7f8] sm:$0xff]
    %v1901 = vld [vmem:[#allocation3 + $0x800] sm:$0xff]
    %v1902 = vld [vmem:[#allocation3 + $0x808] sm:$0xff]
    %v1903 = vld [vmem:[#allocation3 + $0x810] sm:$0xff]
    %v1904 = vld [vmem:[#allocation3 + $0x818] sm:$0xff]
    %v1905 = vld [vmem:[#allocation3 + $0x820] sm:$0xff]
    %v1906 = vld [vmem:[#allocation3 + $0x828] sm:$0xff]
    %v1907 = vld [vmem:[#allocation3 + $0x830] sm:$0xff]
    %v1908 = vld [vmem:[#allocation3 + $0x838] sm:$0xff]
    %v1909 = vld [vmem:[#allocation3 + $0x840] sm:$0xff]
    %v1910 = vld [vmem:[#allocation3 + $0x848] sm:$0xff]
    %v1911 = vld [vmem:[#allocation3 + $0x850] sm:$0xff]
    %v1912 = vld [vmem:[#allocation3 + $0x858] sm:$0xff]
    %v1913 = vld [vmem:[#allocation3 + $0x860] sm:$0xff]
    %v1914 = vld [vmem:[#allocation3 + $0x868] sm:$0xff]
    %v1915 = vld [vmem:[#allocation3 + $0x870] sm:$0xff]
    %v1916 = vld [vmem:[#allocation3 + $0x878] sm:$0xff]
    %v1917 = vld [vmem:[#allocation3 + $0x880] sm:$0xff]
    %v1918 = vld [vmem:[#allocation3 + $0x888] sm:$0xff]
    %v1919 = vld [vmem:[#allocation3 + $0x890] sm:$0xff]
    %v1920 = vld [vmem:[#allocation3 + $0x898] sm:$0xff]
    %v1921 = vld [vmem:[#allocation3 + $0x8a0] sm:$0xff]
    %v1922 = vld [vmem:[#allocation3 + $0x8a8] sm:$0xff]
    %v1923 = vld [vmem:[#allocation3 + $0x8b0] sm:$0xff]
    %v1924 = vld [vmem:[#allocation3 + $0x8b8] sm:$0xff]
    %v1925 = vld [vmem:[#allocation3 + $0x8c0] sm:$0xff]
    %v1926 = vld [vmem:[#allocation3 + $0x8c8] sm:$0xff]
    %v1927 = vld [vmem:[#allocation3 + $0x8d0] sm:$0xff]
    %v1928 = vld [vmem:[#allocation3 + $0x8d8] sm:$0xff]
    %v1929 = vld [vmem:[#allocation3 + $0x8e0] sm:$0xff]
    %v1930 = vld [vmem:[#allocation3 + $0x8e8] sm:$0xff]
    %v1931 = vld [vmem:[#allocation3 + $0x8f0] sm:$0xff]
    %v1932 = vld [vmem:[#allocation3 + $0x8f8] sm:$0xff]
    %v1933 = vld [vmem:[#allocation3 + $0x900] sm:$0xff]
    %v1934 = vld [vmem:[#allocation3 + $0x908] sm:$0xff]
    %v1935 = vld [vmem:[#allocation3 + $0x910] sm:$0xff]
    %v1936 = vld [vmem:[#allocation3 + $0x918] sm:$0xff]
    %v1937 = vld [vmem:[#allocation3 + $0x920] sm:$0xff]
    %v1938 = vld [vmem:[#allocation3 + $0x928] sm:$0xff]
    %v1939 = vld [vmem:[#allocation3 + $0x930] sm:$0xff]
    %v1940 = vld [vmem:[#allocation3 + $0x938] sm:$0xff]
    %v1941 = vld [vmem:[#allocation3 + $0x940] sm:$0xff]
    %v1942 = vld [vmem:[#allocation3 + $0x948] sm:$0xff]
    %v1943 = vld [vmem:[#allocation3 + $0x950] sm:$0xff]
    %v1944 = vld [vmem:[#allocation3 + $0x958] sm:$0xff]
    %v1945 = vld [vmem:[#allocation3 + $0x960] sm:$0xff]
    %v1946 = vld [vmem:[#allocation3 + $0x968] sm:$0xff]
    %v1947 = vld [vmem:[#allocation3 + $0x970] sm:$0xff]
    %v1948 = vld [vmem:[#allocation3 + $0x978] sm:$0xff]
    %v1949 = vld [vmem:[#allocation3 + $0x980] sm:$0xff]
    %v1950 = vld [vmem:[#allocation3 + $0x988] sm:$0xff]
    %v1951 = vld [vmem:[#allocation3 + $0x990] sm:$0xff]
    %v1952 = vld [vmem:[#allocation3 + $0x998] sm:$0xff]
    %v1953 = vld [vmem:[#allocation3 + $0x9a0] sm:$0xff]
    %v1954 = vld [vmem:[#allocation3 + $0x9a8] sm:$0xff]
    %v1955 = vld [vmem:[#allocation3 + $0x9b0] sm:$0xff]
    %v1956 = vld [vmem:[#allocation3 + $0x9b8] sm:$0xff]
    %v1957 = vld [vmem:[#allocation3 + $0x9c0] sm:$0xff]
    %v1958 = vld [vmem:[#allocation3 + $0x9c8] sm:$0xff]
    %v1959 = vld [vmem:[#allocation3 + $0x9d0] sm:$0xff]
    %v1960 = vld [vmem:[#allocation3 + $0x9d8] sm:$0xff]
    %v1961 = vld [vmem:[#allocation3 + $0x9e0] sm:$0xff]
    %v1962 = vld [vmem:[#allocation3 + $0x9e8] sm:$0xff]
    %v1963 = vld [vmem:[#allocation3 + $0x9f0] sm:$0xff]
    %v1964 = vld [vmem:[#allocation3 + $0x9f8] sm:$0xff]
    %v1965 = vld [vmem:[#allocation3 + $0xa00] sm:$0xff]
    %v1966 = vld [vmem:[#allocation3 + $0xa08] sm:$0xff]
    %v1967 = vld [vmem:[#allocation3 + $0xa10] sm:$0xff]
    %v1968 = vld [vmem:[#allocation3 + $0xa18] sm:$0xff]
    %v1969 = vld [vmem:[#allocation3 + $0xa20] sm:$0xff]
    %v1970 = vld [vmem:[#allocation3 + $0xa28] sm:$0xff]
    %v1971 = vld [vmem:[#allocation3 + $0xa30] sm:$0xff]
    %v1972 = vld [vmem:[#allocation3 + $0xa38] sm:$0xff]
    %v1973 = vld [vmem:[#allocation3 + $0xa40] sm:$0xff]
    %v1974 = vld [vmem:[#allocation3 + $0xa48] sm:$0xff]
    %v1975 = vld [vmem:[#allocation3 + $0xa50] sm:$0xff]
    %v1976 = vld [vmem:[#allocation3 + $0xa58] sm:$0xff]
    %v1977 = vld [vmem:[#allocation3 + $0xa60] sm:$0xff]
    %v1978 = vld [vmem:[#allocation3 + $0xa68] sm:$0xff]
    %v1979 = vld [vmem:[#allocation3 + $0xa70] sm:$0xff]
    %v1980 = vld [vmem:[#allocation3 + $0xa78] sm:$0xff]
    %v1981 = vld [vmem:[#allocation3 + $0xa80] sm:$0xff]
    %v1982 = vld [vmem:[#allocation3 + $0xa88] sm:$0xff]
    %v1983 = vld [vmem:[#allocation3 + $0xa90] sm:$0xff]
    %v1984 = vld [vmem:[#allocation3 + $0xa98] sm:$0xff]
    %v1985 = vld [vmem:[#allocation3 + $0xaa0] sm:$0xff]
    %v1986 = vld [vmem:[#allocation3 + $0xaa8] sm:$0xff]
    %v1987 = vld [vmem:[#allocation3 + $0xab0] sm:$0xff]
    %v1988 = vld [vmem:[#allocation3 + $0xab8] sm:$0xff]
    %v1989 = vld [vmem:[#allocation3 + $0xac0] sm:$0xff]
    %v1990 = vld [vmem:[#allocation3 + $0xac8] sm:$0xff]
    %v1991 = vld [vmem:[#allocation3 + $0xad0] sm:$0xff]
    %v1992 = vld [vmem:[#allocation3 + $0xad8] sm:$0xff]
    %v1993 = vld [vmem:[#allocation3 + $0xae0] sm:$0xff]
    %v1994 = vld [vmem:[#allocation3 + $0xae8] sm:$0xff]
    %v1995 = vld [vmem:[#allocation3 + $0xaf0] sm:$0xff]
    %v1996 = vld [vmem:[#allocation3 + $0xaf8] sm:$0xff]
    %v1997 = vld [vmem:[#allocation3 + $0xb00] sm:$0xff]
    %v1998 = vld [vmem:[#allocation3 + $0xb08] sm:$0xff]
    %v1999 = vld [vmem:[#allocation3 + $0xb10] sm:$0xff]
    %v2000 = vld [vmem:[#allocation3 + $0xb18] sm:$0xff]
    %v2001 = vld [vmem:[#allocation3 + $0xb20] sm:$0xff]
    %v2002 = vld [vmem:[#allocation3 + $0xb28] sm:$0xff]
    %v2003 = vld [vmem:[#allocation3 + $0xb30] sm:$0xff]
    %v2004 = vld [vmem:[#allocation3 + $0xb38] sm:$0xff]
    %v2005 = vld [vmem:[#allocation3 + $0xb40] sm:$0xff]
    %v2006 = vld [vmem:[#allocation3 + $0xb48] sm:$0xff]
    %v2007 = vld [vmem:[#allocation3 + $0xb50] sm:$0xff]
    %v2008 = vld [vmem:[#allocation3 + $0xb58] sm:$0xff]
    %v2009 = vld [vmem:[#allocation3 + $0xb60] sm:$0xff]
    %v2010 = vld [vmem:[#allocation3 + $0xb68] sm:$0xff]
    %v2011 = vld [vmem:[#allocation3 + $0xb70] sm:$0xff]
    %v2012 = vld [vmem:[#allocation3 + $0xb78] sm:$0xff]
    %v2013 = vld [vmem:[#allocation3 + $0xb80] sm:$0xff]
    %v2014 = vld [vmem:[#allocation3 + $0xb88] sm:$0xff]
    %v2015 = vld [vmem:[#allocation3 + $0xb90] sm:$0xff]
    %v2016 = vld [vmem:[#allocation3 + $0xb98] sm:$0xff]
    %v2017 = vld [vmem:[#allocation3 + $0xba0] sm:$0xff]
    %v2018 = vld [vmem:[#allocation3 + $0xba8] sm:$0xff]
    %v2019 = vld [vmem:[#allocation3 + $0xbb0] sm:$0xff]
    %v2020 = vld [vmem:[#allocation3 + $0xbb8] sm:$0xff]
    %v2021 = vld [vmem:[#allocation3 + $0xbc0] sm:$0xff]
    %v2022 = vld [vmem:[#allocation3 + $0xbc8] sm:$0xff]
    %v2023 = vld [vmem:[#allocation3 + $0xbd0] sm:$0xff]
    %v2024 = vld [vmem:[#allocation3 + $0xbd8] sm:$0xff]
    %v2025 = vld [vmem:[#allocation3 + $0xbe0] sm:$0xff]
    %v2026 = vld [vmem:[#allocation3 + $0xbe8] sm:$0xff]
    %v2027 = vld [vmem:[#allocation3 + $0xbf0] sm:$0xff]
    %v2028 = vld [vmem:[#allocation3 + $0xbf8] sm:$0xff]
    %v2029 = vld [vmem:[#allocation3 + $0xc00] sm:$0xff]
    %v2030 = vld [vmem:[#allocation3 + $0xc08] sm:$0xff]
    %v2031 = vld [vmem:[#allocation3 + $0xc10] sm:$0xff]
    %v2032 = vld [vmem:[#allocation3 + $0xc18] sm:$0xff]
    %v2033 = vld [vmem:[#allocation3 + $0xc20] sm:$0xff]
    %v2034 = vld [vmem:[#allocation3 + $0xc28] sm:$0xff]
    %v2035 = vld [vmem:[#allocation3 + $0xc30] sm:$0xff]
    %v2036 = vld [vmem:[#allocation3 + $0xc38] sm:$0xff]
    %v2037 = vld [vmem:[#allocation3 + $0xc40] sm:$0xff]
    %v2038 = vld [vmem:[#allocation3 + $0xc48] sm:$0xff]
    %v2039 = vld [vmem:[#allocation3 + $0xc50] sm:$0xff]
    %v2040 = vld [vmem:[#allocation3 + $0xc58] sm:$0xff]
    %v2041 = vld [vmem:[#allocation3 + $0xc60] sm:$0xff]
    %v2042 = vld [vmem:[#allocation3 + $0xc68] sm:$0xff]
    %v2043 = vld [vmem:[#allocation3 + $0xc70] sm:$0xff]
    %v2044 = vld [vmem:[#allocation3 + $0xc78] sm:$0xff]
    %v2045 = vld [vmem:[#allocation3 + $0xc80] sm:$0xff]
    %v2046 = vld [vmem:[#allocation3 + $0xc88] sm:$0xff]
    %v2047 = vld [vmem:[#allocation3 + $0xc90] sm:$0xff]
    %v2048 = vld [vmem:[#allocation3 + $0xc98] sm:$0xff]
    %v2049 = vld [vmem:[#allocation3 + $0xca0] sm:$0xff]
    %v2050 = vld [vmem:[#allocation3 + $0xca8] sm:$0xff]
    %v2051 = vld [vmem:[#allocation3 + $0xcb0] sm:$0xff]
    %v2052 = vld [vmem:[#allocation3 + $0xcb8] sm:$0xff]
    %v2053 = vld [vmem:[#allocation3 + $0xcc0] sm:$0xff]
    %v2054 = vld [vmem:[#allocation3 + $0xcc8] sm:$0xff]
    %v2055 = vld [vmem:[#allocation3 + $0xcd0] sm:$0xff]
    %v2056 = vld [vmem:[#allocation3 + $0xcd8] sm:$0xff]
    %v2057 = vld [vmem:[#allocation3 + $0xce0] sm:$0xff]
    %v2058 = vld [vmem:[#allocation3 + $0xce8] sm:$0xff]
    %v2059 = vld [vmem:[#allocation3 + $0xcf0] sm:$0xff]
    %v2060 = vld [vmem:[#allocation3 + $0xcf8] sm:$0xff]
    %v2061 = vld [vmem:[#allocation3 + $0xd00] sm:$0xff]
    %v2062 = vld [vmem:[#allocation3 + $0xd08] sm:$0xff]
    %v2063 = vld [vmem:[#allocation3 + $0xd10] sm:$0xff]
    %v2064 = vld [vmem:[#allocation3 + $0xd18] sm:$0xff]
    %v2065 = vld [vmem:[#allocation3 + $0xd20] sm:$0xff]
    %v2066 = vld [vmem:[#allocation3 + $0xd28] sm:$0xff]
    %v2067 = vld [vmem:[#allocation3 + $0xd30] sm:$0xff]
    %v2068 = vld [vmem:[#allocation3 + $0xd38] sm:$0xff]
    %v2069 = vld [vmem:[#allocation3 + $0xd40] sm:$0xff]
    %v2070 = vld [vmem:[#allocation3 + $0xd48] sm:$0xff]
    %v2071 = vld [vmem:[#allocation3 + $0xd50] sm:$0xff]
    %v2072 = vld [vmem:[#allocation3 + $0xd58] sm:$0xff]
    %v2073 = vld [vmem:[#allocation3 + $0xd60] sm:$0xff]
    %v2074 = vld [vmem:[#allocation3 + $0xd68] sm:$0xff]
    %v2075 = vld [vmem:[#allocation3 + $0xd70] sm:$0xff]
    %v2076 = vld [vmem:[#allocation3 + $0xd78] sm:$0xff]
    %v2077 = vld [vmem:[#allocation3 + $0xd80] sm:$0xff]
    %v2078 = vld [vmem:[#allocation3 + $0xd88] sm:$0xff]
    %v2079 = vld [vmem:[#allocation3 + $0xd90] sm:$0xff]
    %v2080 = vld [vmem:[#allocation3 + $0xd98] sm:$0xff]
    %v2081 = vld [vmem:[#allocation3 + $0xda0] sm:$0xff]
    %v2082 = vld [vmem:[#allocation3 + $0xda8] sm:$0xff]
    %v2083 = vld [vmem:[#allocation3 + $0xdb0] sm:$0xff]
    %v2084 = vld [vmem:[#allocation3 + $0xdb8] sm:$0xff]
    %v2085 = vld [vmem:[#allocation3 + $0xdc0] sm:$0xff]
    %v2086 = vld [vmem:[#allocation3 + $0xdc8] sm:$0xff]
    %v2087 = vld [vmem:[#allocation3 + $0xdd0] sm:$0xff]
    %v2088 = vld [vmem:[#allocation3 + $0xdd8] sm:$0xff]
    %v2089 = vld [vmem:[#allocation3 + $0xde0] sm:$0xff]
    %v2090 = vld [vmem:[#allocation3 + $0xde8] sm:$0xff]
    %v2091 = vld [vmem:[#allocation3 + $0xdf0] sm:$0xff]
    %v2092 = vld [vmem:[#allocation3 + $0xdf8] sm:$0xff]
    %v2093 = vld [vmem:[#allocation3 + $0xe00] sm:$0xff]
    %v2094 = vld [vmem:[#allocation3 + $0xe08] sm:$0xff]
    %v2095 = vld [vmem:[#allocation3 + $0xe10] sm:$0xff]
    %v2096 = vld [vmem:[#allocation3 + $0xe18] sm:$0xff]
    %v2097 = vld [vmem:[#allocation3 + $0xe20] sm:$0xff]
    %v2098 = vld [vmem:[#allocation3 + $0xe28] sm:$0xff]
    %v2099 = vld [vmem:[#allocation3 + $0xe30] sm:$0xff]
    %v2100 = vld [vmem:[#allocation3 + $0xe38] sm:$0xff]
    %v2101 = vld [vmem:[#allocation3 + $0xe40] sm:$0xff]
    %v2102 = vld [vmem:[#allocation3 + $0xe48] sm:$0xff]
    %v2103 = vld [vmem:[#allocation3 + $0xe50] sm:$0xff]
    %v2104 = vld [vmem:[#allocation3 + $0xe58] sm:$0xff]
    %v2105 = vld [vmem:[#allocation3 + $0xe60] sm:$0xff]
    %v2106 = vld [vmem:[#allocation3 + $0xe68] sm:$0xff]
    %v2107 = vld [vmem:[#allocation3 + $0xe70] sm:$0xff]
    %v2108 = vld [vmem:[#allocation3 + $0xe78] sm:$0xff]
    %v2109 = vld [vmem:[#allocation3 + $0xe80] sm:$0xff]
    %v2110 = vld [vmem:[#allocation3 + $0xe88] sm:$0xff]
    %v2111 = vld [vmem:[#allocation3 + $0xe90] sm:$0xff]
    %v2112 = vld [vmem:[#allocation3 + $0xe98] sm:$0xff]
    %v2113 = vld [vmem:[#allocation3 + $0xea0] sm:$0xff]
    %v2114 = vld [vmem:[#allocation3 + $0xea8] sm:$0xff]
    %v2115 = vld [vmem:[#allocation3 + $0xeb0] sm:$0xff]
    %v2116 = vld [vmem:[#allocation3 + $0xeb8] sm:$0xff]
    %v2117 = vld [vmem:[#allocation3 + $0xec0] sm:$0xff]
    %v2118 = vld [vmem:[#allocation3 + $0xec8] sm:$0xff]
    %v2119 = vld [vmem:[#allocation3 + $0xed0] sm:$0xff]
    %v2120 = vld [vmem:[#allocation3 + $0xed8] sm:$0xff]
    %v2121 = vld [vmem:[#allocation3 + $0xee0] sm:$0xff]
    %v2122 = vld [vmem:[#allocation3 + $0xee8] sm:$0xff]
    %v2123 = vld [vmem:[#allocation3 + $0xef0] sm:$0xff]
    %v2124 = vld [vmem:[#allocation3 + $0xef8] sm:$0xff]
    %v2125 = vld [vmem:[#allocation3 + $0xf00] sm:$0xff]
    %v2126 = vld [vmem:[#allocation3 + $0xf08] sm:$0xff]
    %v2127 = vld [vmem:[#allocation3 + $0xf10] sm:$0xff]
    %v2128 = vld [vmem:[#allocation3 + $0xf18] sm:$0xff]
    %v2129 = vld [vmem:[#allocation3 + $0xf20] sm:$0xff]
    %v2130 = vld [vmem:[#allocation3 + $0xf28] sm:$0xff]
    %v2131 = vld [vmem:[#allocation3 + $0xf30] sm:$0xff]
    %v2132 = vld [vmem:[#allocation3 + $0xf38] sm:$0xff]
    %v2133 = vld [vmem:[#allocation3 + $0xf40] sm:$0xff]
    %v2134 = vld [vmem:[#allocation3 + $0xf48] sm:$0xff]
    %v2135 = vld [vmem:[#allocation3 + $0xf50] sm:$0xff]
    %v2136 = vld [vmem:[#allocation3 + $0xf58] sm:$0xff]
    %v2137 = vld [vmem:[#allocation3 + $0xf60] sm:$0xff]
    %v2138 = vld [vmem:[#allocation3 + $0xf68] sm:$0xff]
    %v2139 = vld [vmem:[#allocation3 + $0xf70] sm:$0xff]
    %v2140 = vld [vmem:[#allocation3 + $0xf78] sm:$0xff]
    %v2141 = vld [vmem:[#allocation3 + $0xf80] sm:$0xff]
    %v2142 = vld [vmem:[#allocation3 + $0xf88] sm:$0xff]
    %v2143 = vld [vmem:[#allocation3 + $0xf90] sm:$0xff]
    %v2144 = vld [vmem:[#allocation3 + $0xf98] sm:$0xff]
    %v2145 = vld [vmem:[#allocation3 + $0xfa0] sm:$0xff]
    %v2146 = vld [vmem:[#allocation3 + $0xfa8] sm:$0xff]
    %v2147 = vld [vmem:[#allocation3 + $0xfb0] sm:$0xff]
    %v2148 = vld [vmem:[#allocation3 + $0xfb8] sm:$0xff]
    %v2149 = vld [vmem:[#allocation3 + $0xfc0] sm:$0xff]
    %v2150 = vld [vmem:[#allocation3 + $0xfc8] sm:$0xff]
    %v2151 = vld [vmem:[#allocation3 + $0xfd0] sm:$0xff]
    %v2152 = vld [vmem:[#allocation3 + $0xfd8] sm:$0xff]
    %v2153 = vld [vmem:[#allocation3 + $0xfe0] sm:$0xff]
    %v2154 = vld [vmem:[#allocation3 + $0xfe8] sm:$0xff]
    %v2155 = vld [vmem:[#allocation3 + $0xff0] sm:$0xff]
    %v2156 = vld [vmem:[#allocation3 + $0xff8] sm:$0xff]
    %v2157 = vld [vmem:[#allocation3 + $0x1000] sm:$0xff]
    %v2158 = vld [vmem:[#allocation3 + $0x1008] sm:$0xff]
    %v2159 = vld [vmem:[#allocation3 + $0x1010] sm:$0xff]
    %v2160 = vld [vmem:[#allocation3 + $0x1018] sm:$0xff]
    %v2161 = vld [vmem:[#allocation3 + $0x1020] sm:$0xff]
    %v2162 = vld [vmem:[#allocation3 + $0x1028] sm:$0xff]
    %v2163 = vld [vmem:[#allocation3 + $0x1030] sm:$0xff]
    %v2164 = vld [vmem:[#allocation3 + $0x1038] sm:$0xff]
    %v2165 = vld [vmem:[#allocation3 + $0x1040] sm:$0xff]
    %v2166 = vld [vmem:[#allocation3 + $0x1048] sm:$0xff]
    %v2167 = vld [vmem:[#allocation3 + $0x1050] sm:$0xff]
    %v2168 = vld [vmem:[#allocation3 + $0x1058] sm:$0xff]
    %v2169 = vld [vmem:[#allocation3 + $0x1060] sm:$0xff]
    %v2170 = vld [vmem:[#allocation3 + $0x1068] sm:$0xff]
    %v2171 = vld [vmem:[#allocation3 + $0x1070] sm:$0xff]
    %v2172 = vld [vmem:[#allocation3 + $0x1078] sm:$0xff]
    %v2173 = vld [vmem:[#allocation3 + $0x1080] sm:$0xff]
    %v2174 = vld [vmem:[#allocation3 + $0x1088] sm:$0xff]
    %v2175 = vld [vmem:[#allocation3 + $0x1090] sm:$0xff]
    %v2176 = vld [vmem:[#allocation3 + $0x1098] sm:$0xff]
    %v2177 = vld [vmem:[#allocation3 + $0x10a0] sm:$0xff]
    %v2178 = vld [vmem:[#allocation3 + $0x10a8] sm:$0xff]
    %v2179 = vld [vmem:[#allocation3 + $0x10b0] sm:$0xff]
    %v2180 = vld [vmem:[#allocation3 + $0x10b8] sm:$0xff]
    %v2181 = vld [vmem:[#allocation3 + $0x10c0] sm:$0xff]
    %v2182 = vld [vmem:[#allocation3 + $0x10c8] sm:$0xff]
    %v2183 = vld [vmem:[#allocation3 + $0x10d0] sm:$0xff]
    %v2184 = vld [vmem:[#allocation3 + $0x10d8] sm:$0xff]
    %v2185 = vld [vmem:[#allocation3 + $0x10e0] sm:$0xff]
    %v2186 = vld [vmem:[#allocation3 + $0x10e8] sm:$0xff]
    %v2187 = vld [vmem:[#allocation3 + $0x10f0] sm:$0xff]
    %v2188 = vld [vmem:[#allocation3 + $0x10f8] sm:$0xff]
    %v2189 = vld [vmem:[#allocation3 + $0x1100] sm:$0xff]
    %v2190 = vld [vmem:[#allocation3 + $0x1108] sm:$0xff]
    %v2191 = vld [vmem:[#allocation3 + $0x1110] sm:$0xff]
    %v2192 = vld [vmem:[#allocation3 + $0x1118] sm:$0xff]
    %v2193 = vld [vmem:[#allocation3 + $0x1120] sm:$0xff]
    %v2194 = vld [vmem:[#allocation3 + $0x1128] sm:$0xff]
    %v2195 = vld [vmem:[#allocation3 + $0x1130] sm:$0xff]
    %v2196 = vld [vmem:[#allocation3 + $0x1138] sm:$0xff]
    %v2197 = vld [vmem:[#allocation3 + $0x1140] sm:$0xff]
    %v2198 = vld [vmem:[#allocation3 + $0x1148] sm:$0xff]
    %v2199 = vld [vmem:[#allocation3 + $0x1150] sm:$0xff]
    %v2200 = vld [vmem:[#allocation3 + $0x1158] sm:$0xff]
    %v2201 = vld [vmem:[#allocation3 + $0x1160] sm:$0xff]
    %v2202 = vld [vmem:[#allocation3 + $0x1168] sm:$0xff]
    %v2203 = vld [vmem:[#allocation3 + $0x1170] sm:$0xff]
    %v2204 = vld [vmem:[#allocation3 + $0x1178] sm:$0xff]
    %v2205 = vld [vmem:[#allocation3 + $0x1180] sm:$0xff]
    %v2206 = vld [vmem:[#allocation3 + $0x1188] sm:$0xff]
    %v2207 = vld [vmem:[#allocation3 + $0x1190] sm:$0xff]
    %v2208 = vld [vmem:[#allocation3 + $0x1198] sm:$0xff]
    %v2209 = vld [vmem:[#allocation3 + $0x11a0] sm:$0xff]
    %v2210 = vld [vmem:[#allocation3 + $0x11a8] sm:$0xff]
    %v2211 = vld [vmem:[#allocation3 + $0x11b0] sm:$0xff]
    %v2212 = vld [vmem:[#allocation3 + $0x11b8] sm:$0xff]
    %v2213 = vld [vmem:[#allocation3 + $0x11c0] sm:$0xff]
    %v2214 = vld [vmem:[#allocation3 + $0x11c8] sm:$0xff]
    %v2215 = vld [vmem:[#allocation3 + $0x11d0] sm:$0xff]
    %v2216 = vld [vmem:[#allocation3 + $0x11d8] sm:$0xff]
    %v2217 = vld [vmem:[#allocation3 + $0x11e0] sm:$0xff]
    %v2218 = vld [vmem:[#allocation3 + $0x11e8] sm:$0xff]
    %v2219 = vld [vmem:[#allocation3 + $0x11f0] sm:$0xff]
    %v2220 = vld [vmem:[#allocation3 + $0x11f8] sm:$0xff]
    %v2221 = vld [vmem:[#allocation3 + $0x1200] sm:$0xff]
    %v2222 = vld [vmem:[#allocation3 + $0x1208] sm:$0xff]
    %v2223 = vld [vmem:[#allocation3 + $0x1210] sm:$0xff]
    %v2224 = vld [vmem:[#allocation3 + $0x1218] sm:$0xff]
    %v2225 = vld [vmem:[#allocation3 + $0x1220] sm:$0xff]
    %v2226 = vld [vmem:[#allocation3 + $0x1228] sm:$0xff]
    %v2227 = vld [vmem:[#allocation3 + $0x1230] sm:$0xff]
    %v2228 = vld [vmem:[#allocation3 + $0x1238] sm:$0xff]
    %v2229 = vld [vmem:[#allocation3 + $0x1240] sm:$0xff]
    %v2230 = vld [vmem:[#allocation3 + $0x1248] sm:$0xff]
    %v2231 = vld [vmem:[#allocation3 + $0x1250] sm:$0xff]
    %v2232 = vld [vmem:[#allocation3 + $0x1258] sm:$0xff]
    %v2233 = vld [vmem:[#allocation3 + $0x1260] sm:$0xff]
    %v2234 = vld [vmem:[#allocation3 + $0x1268] sm:$0xff]
    %v2235 = vld [vmem:[#allocation3 + $0x1270] sm:$0xff]
    %v2236 = vld [vmem:[#allocation3 + $0x1278] sm:$0xff]
    %v2237 = vld [vmem:[#allocation3 + $0x1280] sm:$0xff]
    %v2238 = vld [vmem:[#allocation3 + $0x1288] sm:$0xff]
    %v2239 = vld [vmem:[#allocation3 + $0x1290] sm:$0xff]
    %v2240 = vld [vmem:[#allocation3 + $0x1298] sm:$0xff]
    %v2241 = vld [vmem:[#allocation3 + $0x12a0] sm:$0xff]
    %v2242 = vld [vmem:[#allocation3 + $0x12a8] sm:$0xff]
    %v2243 = vld [vmem:[#allocation3 + $0x12b0] sm:$0xff]
    %v2244 = vld [vmem:[#allocation3 + $0x12b8] sm:$0xff]
    %v2245 = vld [vmem:[#allocation3 + $0x12c0] sm:$0xff]
    %v2246 = vld [vmem:[#allocation3 + $0x12c8] sm:$0xff]
    %v2247 = vld [vmem:[#allocation3 + $0x12d0] sm:$0xff]
    %v2248 = vld [vmem:[#allocation3 + $0x12d8] sm:$0xff]
    %v2249 = vld [vmem:[#allocation3 + $0x12e0] sm:$0xff]
    %v2250 = vld [vmem:[#allocation3 + $0x12e8] sm:$0xff]
    %v2251 = vld [vmem:[#allocation3 + $0x12f0] sm:$0xff]
    %v2252 = vld [vmem:[#allocation3 + $0x12f8] sm:$0xff]
    %v2253 = vld [vmem:[#allocation3 + $0x1300] sm:$0xff]
    %v2254 = vld [vmem:[#allocation3 + $0x1308] sm:$0xff]
    %v2255 = vld [vmem:[#allocation3 + $0x1310] sm:$0xff]
    %v2256 = vld [vmem:[#allocation3 + $0x1318] sm:$0xff]
    %v2257 = vld [vmem:[#allocation3 + $0x1320] sm:$0xff]
    %v2258 = vld [vmem:[#allocation3 + $0x1328] sm:$0xff]
    %v2259 = vld [vmem:[#allocation3 + $0x1330] sm:$0xff]
    %v2260 = vld [vmem:[#allocation3 + $0x1338] sm:$0xff]
    %v2261 = vld [vmem:[#allocation3 + $0x1340] sm:$0xff]
    %v2262 = vld [vmem:[#allocation3 + $0x1348] sm:$0xff]
    %v2263 = vld [vmem:[#allocation3 + $0x1350] sm:$0xff]
    %v2264 = vld [vmem:[#allocation3 + $0x1358] sm:$0xff]
    %v2265 = vld [vmem:[#allocation3 + $0x1360] sm:$0xff]
    %v2266 = vld [vmem:[#allocation3 + $0x1368] sm:$0xff]
    %v2267 = vld [vmem:[#allocation3 + $0x1370] sm:$0xff]
    %v2268 = vld [vmem:[#allocation3 + $0x1378] sm:$0xff]
    %v2269 = vld [vmem:[#allocation3 + $0x1380] sm:$0xff]
    %v2270 = vld [vmem:[#allocation3 + $0x1388] sm:$0xff]
    %v2271 = vld [vmem:[#allocation3 + $0x1390] sm:$0xff]
    %v2272 = vld [vmem:[#allocation3 + $0x1398] sm:$0xff]
    %v2273 = vld [vmem:[#allocation3 + $0x13a0] sm:$0xff]
    %v2274 = vld [vmem:[#allocation3 + $0x13a8] sm:$0xff]
    %v2275 = vld [vmem:[#allocation3 + $0x13b0] sm:$0xff]
    %v2276 = vld [vmem:[#allocation3 + $0x13b8] sm:$0xff]
    %v2277 = vld [vmem:[#allocation3 + $0x13c0] sm:$0xff]
    %v2278 = vld [vmem:[#allocation3 + $0x13c8] sm:$0xff]
    %v2279 = vld [vmem:[#allocation3 + $0x13d0] sm:$0xff]
    %v2280 = vld [vmem:[#allocation3 + $0x13d8] sm:$0xff]
    %v2281 = vld [vmem:[#allocation3 + $0x13e0] sm:$0xff]
    %v2282 = vld [vmem:[#allocation3 + $0x13e8] sm:$0xff]
    %v2283 = vld [vmem:[#allocation3 + $0x13f0] sm:$0xff]
    %v2284 = vld [vmem:[#allocation3 + $0x13f8] sm:$0xff]
    %v2285 = vld [vmem:[#allocation3 + $0x1400] sm:$0xff]
    %v2286 = vld [vmem:[#allocation3 + $0x1408] sm:$0xff]
    %v2287 = vld [vmem:[#allocation3 + $0x1410] sm:$0xff]
    %v2288 = vld [vmem:[#allocation3 + $0x1418] sm:$0xff]
    %v2289 = vld [vmem:[#allocation3 + $0x1420] sm:$0xff]
    %v2290 = vld [vmem:[#allocation3 + $0x1428] sm:$0xff]
    %v2291 = vld [vmem:[#allocation3 + $0x1430] sm:$0xff]
    %v2292 = vld [vmem:[#allocation3 + $0x1438] sm:$0xff]
    %v2293 = vld [vmem:[#allocation3 + $0x1440] sm:$0xff]
    %v2294 = vld [vmem:[#allocation3 + $0x1448] sm:$0xff]
    %v2295 = vld [vmem:[#allocation3 + $0x1450] sm:$0xff]
    %v2296 = vld [vmem:[#allocation3 + $0x1458] sm:$0xff]
    %v2297 = vld [vmem:[#allocation3 + $0x1460] sm:$0xff]
    %v2298 = vld [vmem:[#allocation3 + $0x1468] sm:$0xff]
    %v2299 = vld [vmem:[#allocation3 + $0x1470] sm:$0xff]
    %v2300 = vld [vmem:[#allocation3 + $0x1478] sm:$0xff]
    %v2301 = vld [vmem:[#allocation3 + $0x1480] sm:$0xff]
    %v2302 = vld [vmem:[#allocation3 + $0x1488] sm:$0xff]
    %v2303 = vld [vmem:[#allocation3 + $0x1490] sm:$0xff]
    %v2304 = vld [vmem:[#allocation3 + $0x1498] sm:$0xff]
    %v2305 = vld [vmem:[#allocation3 + $0x14a0] sm:$0xff]
    %v2306 = vld [vmem:[#allocation3 + $0x14a8] sm:$0xff]
    %v2307 = vld [vmem:[#allocation3 + $0x14b0] sm:$0xff]
    %v2308 = vld [vmem:[#allocation3 + $0x14b8] sm:$0xff]
    %v2309 = vld [vmem:[#allocation3 + $0x14c0] sm:$0xff]
    %v2310 = vld [vmem:[#allocation3 + $0x14c8] sm:$0xff]
    %v2311 = vld [vmem:[#allocation3 + $0x14d0] sm:$0xff]
    %v2312 = vld [vmem:[#allocation3 + $0x14d8] sm:$0xff]
    %v2313 = vld [vmem:[#allocation3 + $0x14e0] sm:$0xff]
    %v2314 = vld [vmem:[#allocation3 + $0x14e8] sm:$0xff]
    %v2315 = vld [vmem:[#allocation3 + $0x14f0] sm:$0xff]
    %v2316 = vld [vmem:[#allocation3 + $0x14f8] sm:$0xff]
    %v2317 = vld [vmem:[#allocation3 + $0x1500] sm:$0xff]
    %v2318 = vld [vmem:[#allocation3 + $0x1508] sm:$0xff]
    %v2319 = vld [vmem:[#allocation3 + $0x1510] sm:$0xff]
    %v2320 = vld [vmem:[#allocation3 + $0x1518] sm:$0xff]
    %v2321 = vld [vmem:[#allocation3 + $0x1520] sm:$0xff]
    %v2322 = vld [vmem:[#allocation3 + $0x1528] sm:$0xff]
    %v2323 = vld [vmem:[#allocation3 + $0x1530] sm:$0xff]
    %v2324 = vld [vmem:[#allocation3 + $0x1538] sm:$0xff]
    %v2325 = vld [vmem:[#allocation3 + $0x1540] sm:$0xff]
    %v2326 = vld [vmem:[#allocation3 + $0x1548] sm:$0xff]
    %v2327 = vld [vmem:[#allocation3 + $0x1550] sm:$0xff]
    %v2328 = vld [vmem:[#allocation3 + $0x1558] sm:$0xff]
    %v2329 = vld [vmem:[#allocation3 + $0x1560] sm:$0xff]
    %v2330 = vld [vmem:[#allocation3 + $0x1568] sm:$0xff]
    %v2331 = vld [vmem:[#allocation3 + $0x1570] sm:$0xff]
    %v2332 = vld [vmem:[#allocation3 + $0x1578] sm:$0xff]
    %v2333 = vld [vmem:[#allocation3 + $0x1580] sm:$0xff]
    %v2334 = vld [vmem:[#allocation3 + $0x1588] sm:$0xff]
    %v2335 = vld [vmem:[#allocation3 + $0x1590] sm:$0xff]
    %v2336 = vld [vmem:[#allocation3 + $0x1598] sm:$0xff]
    %v2337 = vld [vmem:[#allocation3 + $0x15a0] sm:$0xff]
    %v2338 = vld [vmem:[#allocation3 + $0x15a8] sm:$0xff]
    %v2339 = vld [vmem:[#allocation3 + $0x15b0] sm:$0xff]
    %v2340 = vld [vmem:[#allocation3 + $0x15b8] sm:$0xff]
    %v2341 = vld [vmem:[#allocation3 + $0x15c0] sm:$0xff]
    %v2342 = vld [vmem:[#allocation3 + $0x15c8] sm:$0xff]
    %v2343 = vld [vmem:[#allocation3 + $0x15d0] sm:$0xff]
    %v2344 = vld [vmem:[#allocation3 + $0x15d8] sm:$0xff]
    %v2345 = vld [vmem:[#allocation3 + $0x15e0] sm:$0xff]
    %v2346 = vld [vmem:[#allocation3 + $0x15e8] sm:$0xff]
    %v2347 = vld [vmem:[#allocation3 + $0x15f0] sm:$0xff]
    %v2348 = vld [vmem:[#allocation3 + $0x15f8] sm:$0xff]
    %v2349 = vld [vmem:[#allocation3 + $0x1600] sm:$0xff]
    %v2350 = vld [vmem:[#allocation3 + $0x1608] sm:$0xff]
    %v2351 = vld [vmem:[#allocation3 + $0x1610] sm:$0xff]
    %v2352 = vld [vmem:[#allocation3 + $0x1618] sm:$0xff]
    %v2353 = vld [vmem:[#allocation3 + $0x1620] sm:$0xff]
    %v2354 = vld [vmem:[#allocation3 + $0x1628] sm:$0xff]
    %v2355 = vld [vmem:[#allocation3 + $0x1630] sm:$0xff]
    %v2356 = vld [vmem:[#allocation3 + $0x1638] sm:$0xff]
    %v2357 = vld [vmem:[#allocation3 + $0x1640] sm:$0xff]
    %v2358 = vld [vmem:[#allocation3 + $0x1648] sm:$0xff]
    %v2359 = vld [vmem:[#allocation3 + $0x1650] sm:$0xff]
    %v2360 = vld [vmem:[#allocation3 + $0x1658] sm:$0xff]
    %v2361 = vld [vmem:[#allocation3 + $0x1660] sm:$0xff]
    %v2362 = vld [vmem:[#allocation3 + $0x1668] sm:$0xff]
    %v2363 = vld [vmem:[#allocation3 + $0x1670] sm:$0xff]
    %v2364 = vld [vmem:[#allocation3 + $0x1678] sm:$0xff]
    %v2365 = vld [vmem:[#allocation3 + $0x1680] sm:$0xff]
    %v2366 = vld [vmem:[#allocation3 + $0x1688] sm:$0xff]
    %v2367 = vld [vmem:[#allocation3 + $0x1690] sm:$0xff]
    %v2368 = vld [vmem:[#allocation3 + $0x1698] sm:$0xff]
    %v2369 = vld [vmem:[#allocation3 + $0x16a0] sm:$0xff]
    %v2370 = vld [vmem:[#allocation3 + $0x16a8] sm:$0xff]
    %v2371 = vld [vmem:[#allocation3 + $0x16b0] sm:$0xff]
    %v2372 = vld [vmem:[#allocation3 + $0x16b8] sm:$0xff]
    %v2373 = vld [vmem:[#allocation3 + $0x16c0] sm:$0xff]
    %v2374 = vld [vmem:[#allocation3 + $0x16c8] sm:$0xff]
    %v2375 = vld [vmem:[#allocation3 + $0x16d0] sm:$0xff]
    %v2376 = vld [vmem:[#allocation3 + $0x16d8] sm:$0xff]
    %v2377 = vld [vmem:[#allocation3 + $0x16e0] sm:$0xff]
    %v2378 = vld [vmem:[#allocation3 + $0x16e8] sm:$0xff]
    %v2379 = vld [vmem:[#allocation3 + $0x16f0] sm:$0xff]
    %v2380 = vld [vmem:[#allocation3 + $0x16f8] sm:$0xff]
    %v2381 = vld [vmem:[#allocation3 + $0x1700] sm:$0xff]
    %v2382 = vld [vmem:[#allocation3 + $0x1708] sm:$0xff]
    %v2383 = vld [vmem:[#allocation3 + $0x1710] sm:$0xff]
    %v2384 = vld [vmem:[#allocation3 + $0x1718] sm:$0xff]
    %v2385 = vld [vmem:[#allocation3 + $0x1720] sm:$0xff]
    %v2386 = vld [vmem:[#allocation3 + $0x1728] sm:$0xff]
    %v2387 = vld [vmem:[#allocation3 + $0x1730] sm:$0xff]
    %v2388 = vld [vmem:[#allocation3 + $0x1738] sm:$0xff]
    %v2389 = vld [vmem:[#allocation3 + $0x1740] sm:$0xff]
    %v2390 = vld [vmem:[#allocation3 + $0x1748] sm:$0xff]
    %v2391 = vld [vmem:[#allocation3 + $0x1750] sm:$0xff]
    %v2392 = vld [vmem:[#allocation3 + $0x1758] sm:$0xff]
    %v2393 = vld [vmem:[#allocation3 + $0x1760] sm:$0xff]
    %v2394 = vld [vmem:[#allocation3 + $0x1768] sm:$0xff]
    %v2395 = vld [vmem:[#allocation3 + $0x1770] sm:$0xff]
    %v2396 = vld [vmem:[#allocation3 + $0x1778] sm:$0xff]
    %v2397 = vld [vmem:[#allocation3 + $0x1780] sm:$0xff]
    %v2398 = vld [vmem:[#allocation3 + $0x1788] sm:$0xff]
    %v2399 = vld [vmem:[#allocation3 + $0x1790] sm:$0xff]
    %v2400 = vld [vmem:[#allocation3 + $0x1798] sm:$0xff]
    %v2401 = vld [vmem:[#allocation3 + $0x17a0] sm:$0xff]
    %v2402 = vld [vmem:[#allocation3 + $0x17a8] sm:$0xff]
    %v2403 = vld [vmem:[#allocation3 + $0x17b0] sm:$0xff]
    %v2404 = vld [vmem:[#allocation3 + $0x17b8] sm:$0xff]
    %v2405 = vld [vmem:[#allocation3 + $0x17c0] sm:$0xff]
    %v2406 = vld [vmem:[#allocation3 + $0x17c8] sm:$0xff]
    %v2407 = vld [vmem:[#allocation3 + $0x17d0] sm:$0xff]
    %v2408 = vld [vmem:[#allocation3 + $0x17d8] sm:$0xff]
    %v2409 = vld [vmem:[#allocation3 + $0x17e0] sm:$0xff]
    %v2410 = vld [vmem:[#allocation3 + $0x17e8] sm:$0xff]
    %v2411 = vld [vmem:[#allocation3 + $0x17f0] sm:$0xff]
    %v2412 = vld [vmem:[#allocation3 + $0x17f8] sm:$0xff]
    %v2413 = vld [vmem:[#allocation3 + $0x1800] sm:$0xff]
    %v2414 = vld [vmem:[#allocation3 + $0x1808] sm:$0xff]
    %v2415 = vld [vmem:[#allocation3 + $0x1810] sm:$0xff]
    %v2416 = vld [vmem:[#allocation3 + $0x1818] sm:$0xff]
    %v2417 = vld [vmem:[#allocation3 + $0x1820] sm:$0xff]
    %v2418 = vld [vmem:[#allocation3 + $0x1828] sm:$0xff]
    %v2419 = vld [vmem:[#allocation3 + $0x1830] sm:$0xff]
    %v2420 = vld [vmem:[#allocation3 + $0x1838] sm:$0xff]
    %v2421 = vld [vmem:[#allocation3 + $0x1840] sm:$0xff]
    %v2422 = vld [vmem:[#allocation3 + $0x1848] sm:$0xff]
    %v2423 = vld [vmem:[#allocation3 + $0x1850] sm:$0xff]
    %v2424 = vld [vmem:[#allocation3 + $0x1858] sm:$0xff]
    %v2425 = vld [vmem:[#allocation3 + $0x1860] sm:$0xff]
    %v2426 = vld [vmem:[#allocation3 + $0x1868] sm:$0xff]
    %v2427 = vld [vmem:[#allocation3 + $0x1870] sm:$0xff]
    %v2428 = vld [vmem:[#allocation3 + $0x1878] sm:$0xff]
    %v2429 = vld [vmem:[#allocation3 + $0x1880] sm:$0xff]
    %v2430 = vld [vmem:[#allocation3 + $0x1888] sm:$0xff]
    %v2431 = vld [vmem:[#allocation3 + $0x1890] sm:$0xff]
    %v2432 = vld [vmem:[#allocation3 + $0x1898] sm:$0xff]
    %v2433 = vld [vmem:[#allocation3 + $0x18a0] sm:$0xff]
    %v2434 = vld [vmem:[#allocation3 + $0x18a8] sm:$0xff]
    %v2435 = vld [vmem:[#allocation3 + $0x18b0] sm:$0xff]
    %v2436 = vld [vmem:[#allocation3 + $0x18b8] sm:$0xff]
    %v2437 = vld [vmem:[#allocation3 + $0x18c0] sm:$0xff]
    %v2438 = vld [vmem:[#allocation3 + $0x18c8] sm:$0xff]
    %v2439 = vld [vmem:[#allocation3 + $0x18d0] sm:$0xff]
    %v2440 = vld [vmem:[#allocation3 + $0x18d8] sm:$0xff]
    %v2441 = vld [vmem:[#allocation3 + $0x18e0] sm:$0xff]
    %v2442 = vld [vmem:[#allocation3 + $0x18e8] sm:$0xff]
    %v2443 = vld [vmem:[#allocation3 + $0x18f0] sm:$0xff]
    %v2444 = vld [vmem:[#allocation3 + $0x18f8] sm:$0xff]
    %v2445 = vld [vmem:[#allocation3 + $0x1900] sm:$0xff]
    %v2446 = vld [vmem:[#allocation3 + $0x1908] sm:$0xff]
    %v2447 = vld [vmem:[#allocation3 + $0x1910] sm:$0xff]
    %v2448 = vld [vmem:[#allocation3 + $0x1918] sm:$0xff]
    %v2449 = vld [vmem:[#allocation3 + $0x1920] sm:$0xff]
    %v2450 = vld [vmem:[#allocation3 + $0x1928] sm:$0xff]
    %v2451 = vld [vmem:[#allocation3 + $0x1930] sm:$0xff]
    %v2452 = vld [vmem:[#allocation3 + $0x1938] sm:$0xff]
    %v2453 = vld [vmem:[#allocation3 + $0x1940] sm:$0xff]
    %v2454 = vld [vmem:[#allocation3 + $0x1948] sm:$0xff]
    %v2455 = vld [vmem:[#allocation3 + $0x1950] sm:$0xff]
    %v2456 = vld [vmem:[#allocation3 + $0x1958] sm:$0xff]
    %v2457 = vld [vmem:[#allocation3 + $0x1960] sm:$0xff]
    %v2458 = vld [vmem:[#allocation3 + $0x1968] sm:$0xff]
    %v2459 = vld [vmem:[#allocation3 + $0x1970] sm:$0xff]
    %v2460 = vld [vmem:[#allocation3 + $0x1978] sm:$0xff]
    %v2461 = vld [vmem:[#allocation3 + $0x1980] sm:$0xff]
    %v2462 = vld [vmem:[#allocation3 + $0x1988] sm:$0xff]
    %v2463 = vld [vmem:[#allocation3 + $0x1990] sm:$0xff]
    %v2464 = vld [vmem:[#allocation3 + $0x1998] sm:$0xff]
    %v2465 = vld [vmem:[#allocation3 + $0x19a0] sm:$0xff]
    %v2466 = vld [vmem:[#allocation3 + $0x19a8] sm:$0xff]
    %v2467 = vld [vmem:[#allocation3 + $0x19b0] sm:$0xff]
    %v2468 = vld [vmem:[#allocation3 + $0x19b8] sm:$0xff]
    %v2469 = vld [vmem:[#allocation3 + $0x19c0] sm:$0xff]
    %v2470 = vld [vmem:[#allocation3 + $0x19c8] sm:$0xff]
    %v2471 = vld [vmem:[#allocation3 + $0x19d0] sm:$0xff]
    %v2472 = vld [vmem:[#allocation3 + $0x19d8] sm:$0xff]
    %v2473 = vld [vmem:[#allocation3 + $0x19e0] sm:$0xff]
    %v2474 = vld [vmem:[#allocation3 + $0x19e8] sm:$0xff]
    %v2475 = vld [vmem:[#allocation3 + $0x19f0] sm:$0xff]
    %v2476 = vld [vmem:[#allocation3 + $0x19f8] sm:$0xff]
    %v2477 = vld [vmem:[#allocation3 + $0x1a00] sm:$0xff]
    %v2478 = vld [vmem:[#allocation3 + $0x1a08] sm:$0xff]
    %v2479 = vld [vmem:[#allocation3 + $0x1a10] sm:$0xff]
    %v2480 = vld [vmem:[#allocation3 + $0x1a18] sm:$0xff]
    %v2481 = vld [vmem:[#allocation3 + $0x1a20] sm:$0xff]
    %v2482 = vld [vmem:[#allocation3 + $0x1a28] sm:$0xff]
    %v2483 = vld [vmem:[#allocation3 + $0x1a30] sm:$0xff]
    %v2484 = vld [vmem:[#allocation3 + $0x1a38] sm:$0xff]
    %v2485 = vld [vmem:[#allocation3 + $0x1a40] sm:$0xff]
    %v2486 = vld [vmem:[#allocation3 + $0x1a48] sm:$0xff]
    %v2487 = vld [vmem:[#allocation3 + $0x1a50] sm:$0xff]
    %v2488 = vld [vmem:[#allocation3 + $0x1a58] sm:$0xff]
    %v2489 = vld [vmem:[#allocation3 + $0x1a60] sm:$0xff]
    %v2490 = vld [vmem:[#allocation3 + $0x1a68] sm:$0xff]
    %v2491 = vld [vmem:[#allocation3 + $0x1a70] sm:$0xff]
    %v2492 = vld [vmem:[#allocation3 + $0x1a78] sm:$0xff]
    %v2493 = vld [vmem:[#allocation3 + $0x1a80] sm:$0xff]
    %v2494 = vld [vmem:[#allocation3 + $0x1a88] sm:$0xff]
    %v2495 = vld [vmem:[#allocation3 + $0x1a90] sm:$0xff]
    %v2496 = vld [vmem:[#allocation3 + $0x1a98] sm:$0xff]
    %v2497 = vld [vmem:[#allocation3 + $0x1aa0] sm:$0xff]
    %v2498 = vld [vmem:[#allocation3 + $0x1aa8] sm:$0xff]
    %v2499 = vld [vmem:[#allocation3 + $0x1ab0] sm:$0xff]
    %v2500 = vld [vmem:[#allocation3 + $0x1ab8] sm:$0xff]
    %v2501 = vld [vmem:[#allocation3 + $0x1ac0] sm:$0xff]
    %v2502 = vld [vmem:[#allocation3 + $0x1ac8] sm:$0xff]
    %v2503 = vld [vmem:[#allocation3 + $0x1ad0] sm:$0xff]
    %v2504 = vld [vmem:[#allocation3 + $0x1ad8] sm:$0xff]
    %v2505 = vld [vmem:[#allocation3 + $0x1ae0] sm:$0xff]
    %v2506 = vld [vmem:[#allocation3 + $0x1ae8] sm:$0xff]
    %v2507 = vld [vmem:[#allocation3 + $0x1af0] sm:$0xff]
    %v2508 = vld [vmem:[#allocation3 + $0x1af8] sm:$0xff]
    %v2509 = vld [vmem:[#allocation3 + $0x1b00] sm:$0xff]
    %v2510 = vld [vmem:[#allocation3 + $0x1b08] sm:$0xff]
    %v2511 = vld [vmem:[#allocation3 + $0x1b10] sm:$0xff]
    %v2512 = vld [vmem:[#allocation3 + $0x1b18] sm:$0xff]
    %v2513 = vld [vmem:[#allocation3 + $0x1b20] sm:$0xff]
    %v2514 = vld [vmem:[#allocation3 + $0x1b28] sm:$0xff]
    %v2515 = vld [vmem:[#allocation3 + $0x1b30] sm:$0xff]
    %v2516 = vld [vmem:[#allocation3 + $0x1b38] sm:$0xff]
    %v2517 = vld [vmem:[#allocation3 + $0x1b40] sm:$0xff]
    %v2518 = vld [vmem:[#allocation3 + $0x1b48] sm:$0xff]
    %v2519 = vld [vmem:[#allocation3 + $0x1b50] sm:$0xff]
    %v2520 = vld [vmem:[#allocation3 + $0x1b58] sm:$0xff]
    %v2521 = vld [vmem:[#allocation3 + $0x1b60] sm:$0xff]
    %v2522 = vld [vmem:[#allocation3 + $0x1b68] sm:$0xff]
    %v2523 = vld [vmem:[#allocation3 + $0x1b70] sm:$0xff]
    %v2524 = vld [vmem:[#allocation3 + $0x1b78] sm:$0xff]
    %v2525 = vld [vmem:[#allocation3 + $0x1b80] sm:$0xff]
    %v2526 = vld [vmem:[#allocation3 + $0x1b88] sm:$0xff]
    %v2527 = vld [vmem:[#allocation3 + $0x1b90] sm:$0xff]
    %v2528 = vld [vmem:[#allocation3 + $0x1b98] sm:$0xff]
    %v2529 = vld [vmem:[#allocation3 + $0x1ba0] sm:$0xff]
    %v2530 = vld [vmem:[#allocation3 + $0x1ba8] sm:$0xff]
    %v2531 = vld [vmem:[#allocation3 + $0x1bb0] sm:$0xff]
    %v2532 = vld [vmem:[#allocation3 + $0x1bb8] sm:$0xff]
    %v2533 = vld [vmem:[#allocation3 + $0x1bc0] sm:$0xff]
    %v2534 = vld [vmem:[#allocation3 + $0x1bc8] sm:$0xff]
    %v2535 = vld [vmem:[#allocation3 + $0x1bd0] sm:$0xff]
    %v2536 = vld [vmem:[#allocation3 + $0x1bd8] sm:$0xff]
    %v2537 = vld [vmem:[#allocation3 + $0x1be0] sm:$0xff]
    %v2538 = vld [vmem:[#allocation3 + $0x1be8] sm:$0xff]
    %v2539 = vld [vmem:[#allocation3 + $0x1bf0] sm:$0xff]
    %v2540 = vld [vmem:[#allocation3 + $0x1bf8] sm:$0xff]
    %v2541 = vld [vmem:[#allocation3 + $0x1c00] sm:$0xff]
    %v2542 = vld [vmem:[#allocation3 + $0x1c08] sm:$0xff]
    %v2543 = vld [vmem:[#allocation3 + $0x1c10] sm:$0xff]
    %v2544 = vld [vmem:[#allocation3 + $0x1c18] sm:$0xff]
    %v2545 = vld [vmem:[#allocation3 + $0x1c20] sm:$0xff]
    %v2546 = vld [vmem:[#allocation3 + $0x1c28] sm:$0xff]
    %v2547 = vld [vmem:[#allocation3 + $0x1c30] sm:$0xff]
    %v2548 = vld [vmem:[#allocation3 + $0x1c38] sm:$0xff]
    %v2549 = vld [vmem:[#allocation3 + $0x1c40] sm:$0xff]
    %v2550 = vld [vmem:[#allocation3 + $0x1c48] sm:$0xff]
    %v2551 = vld [vmem:[#allocation3 + $0x1c50] sm:$0xff]
    %v2552 = vld [vmem:[#allocation3 + $0x1c58] sm:$0xff]
    %v2553 = vld [vmem:[#allocation3 + $0x1c60] sm:$0xff]
    %v2554 = vld [vmem:[#allocation3 + $0x1c68] sm:$0xff]
    %v2555 = vld [vmem:[#allocation3 + $0x1c70] sm:$0xff]
    %v2556 = vld [vmem:[#allocation3 + $0x1c78] sm:$0xff]
    %v2557 = vld [vmem:[#allocation3 + $0x1c80] sm:$0xff]
    %v2558 = vld [vmem:[#allocation3 + $0x1c88] sm:$0xff]
    %v2559 = vld [vmem:[#allocation3 + $0x1c90] sm:$0xff]
    %v2560 = vld [vmem:[#allocation3 + $0x1c98] sm:$0xff]
    %v2561 = vld [vmem:[#allocation3 + $0x1ca0] sm:$0xff]
    %v2562 = vld [vmem:[#allocation3 + $0x1ca8] sm:$0xff]
    %v2563 = vld [vmem:[#allocation3 + $0x1cb0] sm:$0xff]
    %v2564 = vld [vmem:[#allocation3 + $0x1cb8] sm:$0xff]
    %v2565 = vld [vmem:[#allocation3 + $0x1cc0] sm:$0xff]
    %v2566 = vld [vmem:[#allocation3 + $0x1cc8] sm:$0xff]
    %v2567 = vld [vmem:[#allocation3 + $0x1cd0] sm:$0xff]
    %v2568 = vld [vmem:[#allocation3 + $0x1cd8] sm:$0xff]
    %v2569 = vld [vmem:[#allocation3 + $0x1ce0] sm:$0xff]
    %v2570 = vld [vmem:[#allocation3 + $0x1ce8] sm:$0xff]
    %v2571 = vld [vmem:[#allocation3 + $0x1cf0] sm:$0xff]
    %v2572 = vld [vmem:[#allocation3 + $0x1cf8] sm:$0xff]
    %v2573 = vld [vmem:[#allocation3 + $0x1d00] sm:$0xff]
    %v2574 = vld [vmem:[#allocation3 + $0x1d08] sm:$0xff]
    %v2575 = vld [vmem:[#allocation3 + $0x1d10] sm:$0xff]
    %v2576 = vld [vmem:[#allocation3 + $0x1d18] sm:$0xff]
    %v2577 = vld [vmem:[#allocation3 + $0x1d20] sm:$0xff]
    %v2578 = vld [vmem:[#allocation3 + $0x1d28] sm:$0xff]
    %v2579 = vld [vmem:[#allocation3 + $0x1d30] sm:$0xff]
    %v2580 = vld [vmem:[#allocation3 + $0x1d38] sm:$0xff]
    %v2581 = vld [vmem:[#allocation3 + $0x1d40] sm:$0xff]
    %v2582 = vld [vmem:[#allocation3 + $0x1d48] sm:$0xff]
    %v2583 = vld [vmem:[#allocation3 + $0x1d50] sm:$0xff]
    %v2584 = vld [vmem:[#allocation3 + $0x1d58] sm:$0xff]
    %v2585 = vld [vmem:[#allocation3 + $0x1d60] sm:$0xff]
    %v2586 = vld [vmem:[#allocation3 + $0x1d68] sm:$0xff]
    %v2587 = vld [vmem:[#allocation3 + $0x1d70] sm:$0xff]
    %v2588 = vld [vmem:[#allocation3 + $0x1d78] sm:$0xff]
    %v2590 = vperm.slane %v167, 0
    %v2591 = vperm.slane %v167, 1
    %v2592 = vperm.slane %v167, 2
    %v2593 = vperm.slane %v167, 3
    %v3542 = vunpack.c.l.b16 %v1645
    %v3543 = vunpack.c.h.b16 %v1645
    %v3544 = vunpack.c.l.b16 %v1646
    %v3545 = vunpack.c.h.b16 %v1646
    %v3546 = vunpack.c.l.b16 %v1647
    %v3547 = vunpack.c.h.b16 %v1647
    %v3548 = vunpack.c.l.b16 %v1648
    %v3549 = vunpack.c.h.b16 %v1648
    %v3550 = vunpack.c.l.b16 %v1649
    %v3551 = vunpack.c.h.b16 %v1649
    %v3552 = vunpack.c.l.b16 %v1650
    %v3553 = vunpack.c.h.b16 %v1650
    %v3554 = vunpack.c.l.b16 %v1651
    %v3555 = vunpack.c.h.b16 %v1651
    %v3556 = vunpack.c.l.b16 %v1652
    %v3557 = vunpack.c.h.b16 %v1652
    %v3558 = vunpack.c.l.b16 %v1653
    %v3559 = vunpack.c.h.b16 %v1653
    %v3560 = vunpack.c.l.b16 %v1654
    %v3561 = vunpack.c.h.b16 %v1654
    %v3562 = vunpack.c.l.b16 %v1655
    %v3563 = vunpack.c.h.b16 %v1655
    %v3564 = vunpack.c.l.b16 %v1656
    %v3565 = vunpack.c.h.b16 %v1656
    %v3566 = vunpack.c.l.b16 %v1657
    %v3567 = vunpack.c.h.b16 %v1657
    %v3568 = vunpack.c.l.b16 %v1658
    %v3569 = vunpack.c.h.b16 %v1658
    %v3570 = vunpack.c.l.b16 %v1659
    %v3571 = vunpack.c.h.b16 %v1659
    %v3572 = vunpack.c.l.b16 %v1660
    %v3573 = vunpack.c.h.b16 %v1660
    %v3574 = vunpack.c.l.b16 %v1661
    %v3575 = vunpack.c.h.b16 %v1661
    %v3576 = vunpack.c.l.b16 %v1662
    %v3577 = vunpack.c.h.b16 %v1662
    %v3578 = vunpack.c.l.b16 %v1663
    %v3579 = vunpack.c.h.b16 %v1663
    %v3580 = vunpack.c.l.b16 %v1664
    %v3581 = vunpack.c.h.b16 %v1664
    %v3582 = vunpack.c.l.b16 %v1665
    %v3583 = vunpack.c.h.b16 %v1665
    %v3584 = vunpack.c.l.b16 %v1666
    %v3585 = vunpack.c.h.b16 %v1666
    %v3586 = vunpack.c.l.b16 %v1667
    %v3587 = vunpack.c.h.b16 %v1667
    %v3588 = vunpack.c.l.b16 %v1668
    %v3589 = vunpack.c.h.b16 %v1668
    %v3590 = vunpack.c.l.b16 %v1669
    %v3591 = vunpack.c.h.b16 %v1669
    %v3592 = vunpack.c.l.b16 %v1670
    %v3593 = vunpack.c.h.b16 %v1670
    %v3594 = vunpack.c.l.b16 %v1671
    %v3595 = vunpack.c.h.b16 %v1671
    %v3596 = vunpack.c.l.b16 %v1672
    %v3597 = vunpack.c.h.b16 %v1672
    %v3598 = vunpack.c.l.b16 %v1673
    %v3599 = vunpack.c.h.b16 %v1673
    %v3600 = vunpack.c.l.b16 %v1674
    %v3601 = vunpack.c.h.b16 %v1674
    %v3602 = vunpack.c.l.b16 %v1675
    %v3603 = vunpack.c.h.b16 %v1675
    %v3604 = vunpack.c.l.b16 %v1676
    %v3605 = vunpack.c.h.b16 %v1676
    %v3606 = vunpack.c.l.b16 %v1677
    %v3607 = vunpack.c.h.b16 %v1677
    %v3608 = vunpack.c.l.b16 %v1678
    %v3609 = vunpack.c.h.b16 %v1678
    %v3610 = vunpack.c.l.b16 %v1679
    %v3611 = vunpack.c.h.b16 %v1679
    %v3612 = vunpack.c.l.b16 %v1680
    %v3613 = vunpack.c.h.b16 %v1680
    %v3614 = vunpack.c.l.b16 %v1681
    %v3615 = vunpack.c.h.b16 %v1681
    %v3616 = vunpack.c.l.b16 %v1682
    %v3617 = vunpack.c.h.b16 %v1682
    %v3618 = vunpack.c.l.b16 %v1683
    %v3619 = vunpack.c.h.b16 %v1683
    %v3620 = vunpack.c.l.b16 %v1684
    %v3621 = vunpack.c.h.b16 %v1684
    %v3622 = vunpack.c.l.b16 %v1685
    %v3623 = vunpack.c.h.b16 %v1685
    %v3624 = vunpack.c.l.b16 %v1686
    %v3625 = vunpack.c.h.b16 %v1686
    %v3626 = vunpack.c.l.b16 %v1687
    %v3627 = vunpack.c.h.b16 %v1687
    %v3628 = vunpack.c.l.b16 %v1688
    %v3629 = vunpack.c.h.b16 %v1688
    %v3630 = vunpack.c.l.b16 %v1689
    %v3631 = vunpack.c.h.b16 %v1689
    %v3632 = vunpack.c.l.b16 %v1690
    %v3633 = vunpack.c.h.b16 %v1690
    %v3634 = vunpack.c.l.b16 %v1691
    %v3635 = vunpack.c.h.b16 %v1691
    %v3636 = vunpack.c.l.b16 %v1692
    %v3637 = vunpack.c.h.b16 %v1692
    %v3638 = vunpack.c.l.b16 %v1693
    %v3639 = vunpack.c.h.b16 %v1693
    %v3640 = vunpack.c.l.b16 %v1694
    %v3641 = vunpack.c.h.b16 %v1694
    %v3642 = vunpack.c.l.b16 %v1695
    %v3643 = vunpack.c.h.b16 %v1695
    %v3644 = vunpack.c.l.b16 %v1696
    %v3645 = vunpack.c.h.b16 %v1696
    %v3646 = vunpack.c.l.b16 %v1697
    %v3647 = vunpack.c.h.b16 %v1697
    %v3648 = vunpack.c.l.b16 %v1698
    %v3649 = vunpack.c.h.b16 %v1698
    %v3650 = vunpack.c.l.b16 %v1699
    %v3651 = vunpack.c.h.b16 %v1699
    %v3652 = vunpack.c.l.b16 %v1700
    %v3653 = vunpack.c.h.b16 %v1700
    %v3654 = vunpack.c.l.b16 %v1701
    %v3655 = vunpack.c.h.b16 %v1701
    %v3656 = vunpack.c.l.b16 %v1702
    %v3657 = vunpack.c.h.b16 %v1702
    %v3658 = vunpack.c.l.b16 %v1703
    %v3659 = vunpack.c.h.b16 %v1703
    %v3660 = vunpack.c.l.b16 %v1704
    %v3661 = vunpack.c.h.b16 %v1704
    %v3662 = vunpack.c.l.b16 %v1705
    %v3663 = vunpack.c.h.b16 %v1705
    %v3664 = vunpack.c.l.b16 %v1706
    %v3665 = vunpack.c.h.b16 %v1706
    %v3666 = vunpack.c.l.b16 %v1707
    %v3667 = vunpack.c.h.b16 %v1707
    %v3668 = vunpack.c.l.b16 %v1708
    %v3669 = vunpack.c.h.b16 %v1708
    %v3670 = vunpack.c.l.b16 %v1709
    %v3671 = vunpack.c.h.b16 %v1709
    %v3672 = vunpack.c.l.b16 %v1710
    %v3673 = vunpack.c.h.b16 %v1710
    %v3674 = vunpack.c.l.b16 %v1711
    %v3675 = vunpack.c.h.b16 %v1711
    %v3676 = vunpack.c.l.b16 %v1712
    %v3677 = vunpack.c.h.b16 %v1712
    %v3678 = vunpack.c.l.b16 %v1713
    %v3679 = vunpack.c.h.b16 %v1713
    %v3680 = vunpack.c.l.b16 %v1714
    %v3681 = vunpack.c.h.b16 %v1714
    %v3682 = vunpack.c.l.b16 %v1715
    %v3683 = vunpack.c.h.b16 %v1715
    %v3684 = vunpack.c.l.b16 %v1716
    %v3685 = vunpack.c.h.b16 %v1716
    %v3686 = vunpack.c.l.b16 %v1717
    %v3687 = vunpack.c.h.b16 %v1717
    %v3688 = vunpack.c.l.b16 %v1718
    %v3689 = vunpack.c.h.b16 %v1718
    %v3690 = vunpack.c.l.b16 %v1719
    %v3691 = vunpack.c.h.b16 %v1719
    %v3692 = vunpack.c.l.b16 %v1720
    %v3693 = vunpack.c.h.b16 %v1720
    %v3694 = vunpack.c.l.b16 %v1721
    %v3695 = vunpack.c.h.b16 %v1721
    %v3696 = vunpack.c.l.b16 %v1722
    %v3697 = vunpack.c.h.b16 %v1722
    %v3698 = vunpack.c.l.b16 %v1723
    %v3699 = vunpack.c.h.b16 %v1723
    %v3700 = vunpack.c.l.b16 %v1724
    %v3701 = vunpack.c.h.b16 %v1724
    %v3702 = vunpack.c.l.b16 %v1725
    %v3703 = vunpack.c.h.b16 %v1725
    %v3704 = vunpack.c.l.b16 %v1726
    %v3705 = vunpack.c.h.b16 %v1726
    %v3706 = vunpack.c.l.b16 %v1727
    %v3707 = vunpack.c.h.b16 %v1727
    %v3708 = vunpack.c.l.b16 %v1728
    %v3709 = vunpack.c.h.b16 %v1728
    %v3710 = vunpack.c.l.b16 %v1729
    %v3711 = vunpack.c.h.b16 %v1729
    %v3712 = vunpack.c.l.b16 %v1730
    %v3713 = vunpack.c.h.b16 %v1730
    %v3714 = vunpack.c.l.b16 %v1731
    %v3715 = vunpack.c.h.b16 %v1731
    %v3716 = vunpack.c.l.b16 %v1732
    %v3717 = vunpack.c.h.b16 %v1732
    %v3718 = vunpack.c.l.b16 %v1733
    %v3719 = vunpack.c.h.b16 %v1733
    %v3720 = vunpack.c.l.b16 %v1734
    %v3721 = vunpack.c.h.b16 %v1734
    %v3722 = vunpack.c.l.b16 %v1735
    %v3723 = vunpack.c.h.b16 %v1735
    %v3724 = vunpack.c.l.b16 %v1736
    %v3725 = vunpack.c.h.b16 %v1736
    %v3726 = vunpack.c.l.b16 %v1737
    %v3727 = vunpack.c.h.b16 %v1737
    %v3728 = vunpack.c.l.b16 %v1738
    %v3729 = vunpack.c.h.b16 %v1738
    %v3730 = vunpack.c.l.b16 %v1739
    %v3731 = vunpack.c.h.b16 %v1739
    %v3732 = vunpack.c.l.b16 %v1740
    %v3733 = vunpack.c.h.b16 %v1740
    %v3734 = vunpack.c.l.b16 %v1741
    %v3735 = vunpack.c.h.b16 %v1741
    %v3736 = vunpack.c.l.b16 %v1742
    %v3737 = vunpack.c.h.b16 %v1742
    %v3738 = vunpack.c.l.b16 %v1743
    %v3739 = vunpack.c.h.b16 %v1743
    %v3740 = vunpack.c.l.b16 %v1744
    %v3741 = vunpack.c.h.b16 %v1744
    %v3742 = vunpack.c.l.b16 %v1745
    %v3743 = vunpack.c.h.b16 %v1745
    %v3744 = vunpack.c.l.b16 %v1746
    %v3745 = vunpack.c.h.b16 %v1746
    %v3746 = vunpack.c.l.b16 %v1747
    %v3747 = vunpack.c.h.b16 %v1747
    %v3748 = vunpack.c.l.b16 %v1748
    %v3749 = vunpack.c.h.b16 %v1748
    %v3750 = vunpack.c.l.b16 %v1749
    %v3751 = vunpack.c.h.b16 %v1749
    %v3752 = vunpack.c.l.b16 %v1750
    %v3753 = vunpack.c.h.b16 %v1750
    %v3754 = vunpack.c.l.b16 %v1751
    %v3755 = vunpack.c.h.b16 %v1751
    %v3756 = vunpack.c.l.b16 %v1752
    %v3757 = vunpack.c.h.b16 %v1752
    %v3758 = vunpack.c.l.b16 %v1753
    %v3759 = vunpack.c.h.b16 %v1753
    %v3760 = vunpack.c.l.b16 %v1754
    %v3761 = vunpack.c.h.b16 %v1754
    %v3762 = vunpack.c.l.b16 %v1755
    %v3763 = vunpack.c.h.b16 %v1755
    %v3764 = vunpack.c.l.b16 %v1756
    %v3765 = vunpack.c.h.b16 %v1756
    %v3766 = vunpack.c.l.b16 %v1757
    %v3767 = vunpack.c.h.b16 %v1757
    %v3768 = vunpack.c.l.b16 %v1758
    %v3769 = vunpack.c.h.b16 %v1758
    %v3770 = vunpack.c.l.b16 %v1759
    %v3771 = vunpack.c.h.b16 %v1759
    %v3772 = vunpack.c.l.b16 %v1760
    %v3773 = vunpack.c.h.b16 %v1760
    %v3774 = vunpack.c.l.b16 %v1761
    %v3775 = vunpack.c.h.b16 %v1761
    %v3776 = vunpack.c.l.b16 %v1762
    %v3777 = vunpack.c.h.b16 %v1762
    %v3778 = vunpack.c.l.b16 %v1763
    %v3779 = vunpack.c.h.b16 %v1763
    %v3780 = vunpack.c.l.b16 %v1764
    %v3781 = vunpack.c.h.b16 %v1764
    %v3782 = vunpack.c.l.b16 %v1765
    %v3783 = vunpack.c.h.b16 %v1765
    %v3784 = vunpack.c.l.b16 %v1766
    %v3785 = vunpack.c.h.b16 %v1766
    %v3786 = vunpack.c.l.b16 %v1767
    %v3787 = vunpack.c.h.b16 %v1767
    %v3788 = vunpack.c.l.b16 %v1768
    %v3789 = vunpack.c.h.b16 %v1768
    %v3790 = vunpack.c.l.b16 %v1769
    %v3791 = vunpack.c.h.b16 %v1769
    %v3792 = vunpack.c.l.b16 %v1770
    %v3793 = vunpack.c.h.b16 %v1770
    %v3794 = vunpack.c.l.b16 %v1771
    %v3795 = vunpack.c.h.b16 %v1771
    %v3796 = vunpack.c.l.b16 %v1772
    %v3797 = vunpack.c.h.b16 %v1772
    %v3798 = vunpack.c.l.b16 %v1773
    %v3799 = vunpack.c.h.b16 %v1773
    %v3800 = vunpack.c.l.b16 %v1774
    %v3801 = vunpack.c.h.b16 %v1774
    %v3802 = vunpack.c.l.b16 %v1775
    %v3803 = vunpack.c.h.b16 %v1775
    %v3804 = vunpack.c.l.b16 %v1776
    %v3805 = vunpack.c.h.b16 %v1776
    %v3806 = vunpack.c.l.b16 %v1777
    %v3807 = vunpack.c.h.b16 %v1777
    %v3808 = vunpack.c.l.b16 %v1778
    %v3809 = vunpack.c.h.b16 %v1778
    %v3810 = vunpack.c.l.b16 %v1779
    %v3811 = vunpack.c.h.b16 %v1779
    %v3812 = vunpack.c.l.b16 %v1780
    %v3813 = vunpack.c.h.b16 %v1780
    %v3814 = vunpack.c.l.b16 %v1781
    %v3815 = vunpack.c.h.b16 %v1781
    %v3816 = vunpack.c.l.b16 %v1782
    %v3817 = vunpack.c.h.b16 %v1782
    %v3818 = vunpack.c.l.b16 %v1783
    %v3819 = vunpack.c.h.b16 %v1783
    %v3820 = vunpack.c.l.b16 %v1784
    %v3821 = vunpack.c.h.b16 %v1784
    %v3822 = vunpack.c.l.b16 %v1785
    %v3823 = vunpack.c.h.b16 %v1785
    %v3824 = vunpack.c.l.b16 %v1786
    %v3825 = vunpack.c.h.b16 %v1786
    %v3826 = vunpack.c.l.b16 %v1787
    %v3827 = vunpack.c.h.b16 %v1787
    %v3828 = vunpack.c.l.b16 %v1788
    %v3829 = vunpack.c.h.b16 %v1788
    %v3830 = vunpack.c.l.b16 %v1789
    %v3831 = vunpack.c.h.b16 %v1789
    %v3832 = vunpack.c.l.b16 %v1790
    %v3833 = vunpack.c.h.b16 %v1790
    %v3834 = vunpack.c.l.b16 %v1791
    %v3835 = vunpack.c.h.b16 %v1791
    %v3836 = vunpack.c.l.b16 %v1792
    %v3837 = vunpack.c.h.b16 %v1792
    %v3838 = vunpack.c.l.b16 %v1793
    %v3839 = vunpack.c.h.b16 %v1793
    %v3840 = vunpack.c.l.b16 %v1794
    %v3841 = vunpack.c.h.b16 %v1794
    %v3842 = vunpack.c.l.b16 %v1795
    %v3843 = vunpack.c.h.b16 %v1795
    %v3844 = vunpack.c.l.b16 %v1796
    %v3845 = vunpack.c.h.b16 %v1796
    %v3846 = vunpack.c.l.b16 %v1797
    %v3847 = vunpack.c.h.b16 %v1797
    %v3848 = vunpack.c.l.b16 %v1798
    %v3849 = vunpack.c.h.b16 %v1798
    %v3850 = vunpack.c.l.b16 %v1799
    %v3851 = vunpack.c.h.b16 %v1799
    %v3852 = vunpack.c.l.b16 %v1800
    %v3853 = vunpack.c.h.b16 %v1800
    %v3854 = vunpack.c.l.b16 %v1801
    %v3855 = vunpack.c.h.b16 %v1801
    %v3856 = vunpack.c.l.b16 %v1802
    %v3857 = vunpack.c.h.b16 %v1802
    %v3858 = vunpack.c.l.b16 %v1803
    %v3859 = vunpack.c.h.b16 %v1803
    %v3860 = vunpack.c.l.b16 %v1804
    %v3861 = vunpack.c.h.b16 %v1804
    %v3862 = vunpack.c.l.b16 %v1805
    %v3863 = vunpack.c.h.b16 %v1805
    %v3864 = vunpack.c.l.b16 %v1806
    %v3865 = vunpack.c.h.b16 %v1806
    %v3866 = vunpack.c.l.b16 %v1807
    %v3867 = vunpack.c.h.b16 %v1807
    %v3868 = vunpack.c.l.b16 %v1808
    %v3869 = vunpack.c.h.b16 %v1808
    %v3870 = vunpack.c.l.b16 %v1809
    %v3871 = vunpack.c.h.b16 %v1809
    %v3872 = vunpack.c.l.b16 %v1810
    %v3873 = vunpack.c.h.b16 %v1810
    %v3874 = vunpack.c.l.b16 %v1811
    %v3875 = vunpack.c.h.b16 %v1811
    %v3876 = vunpack.c.l.b16 %v1812
    %v3877 = vunpack.c.h.b16 %v1812
    %v3878 = vunpack.c.l.b16 %v1813
    %v3879 = vunpack.c.h.b16 %v1813
    %v3880 = vunpack.c.l.b16 %v1814
    %v3881 = vunpack.c.h.b16 %v1814
    %v3882 = vunpack.c.l.b16 %v1815
    %v3883 = vunpack.c.h.b16 %v1815
    %v3884 = vunpack.c.l.b16 %v1816
    %v3885 = vunpack.c.h.b16 %v1816
    %v3886 = vunpack.c.l.b16 %v1817
    %v3887 = vunpack.c.h.b16 %v1817
    %v3888 = vunpack.c.l.b16 %v1818
    %v3889 = vunpack.c.h.b16 %v1818
    %v3890 = vunpack.c.l.b16 %v1819
    %v3891 = vunpack.c.h.b16 %v1819
    %v3892 = vunpack.c.l.b16 %v1820
    %v3893 = vunpack.c.h.b16 %v1820
    %v3894 = vunpack.c.l.b16 %v1821
    %v3895 = vunpack.c.h.b16 %v1821
    %v3896 = vunpack.c.l.b16 %v1822
    %v3897 = vunpack.c.h.b16 %v1822
    %v3898 = vunpack.c.l.b16 %v1823
    %v3899 = vunpack.c.h.b16 %v1823
    %v3900 = vunpack.c.l.b16 %v1824
    %v3901 = vunpack.c.h.b16 %v1824
    %v3902 = vunpack.c.l.b16 %v1825
    %v3903 = vunpack.c.h.b16 %v1825
    %v3904 = vunpack.c.l.b16 %v1826
    %v3905 = vunpack.c.h.b16 %v1826
    %v3906 = vunpack.c.l.b16 %v1827
    %v3907 = vunpack.c.h.b16 %v1827
    %v3908 = vunpack.c.l.b16 %v1828
    %v3909 = vunpack.c.h.b16 %v1828
    %v3910 = vunpack.c.l.b16 %v1829
    %v3911 = vunpack.c.h.b16 %v1829
    %v3912 = vunpack.c.l.b16 %v1830
    %v3913 = vunpack.c.h.b16 %v1830
    %v3914 = vunpack.c.l.b16 %v1831
    %v3915 = vunpack.c.h.b16 %v1831
    %v3916 = vunpack.c.l.b16 %v1832
    %v3917 = vunpack.c.h.b16 %v1832
    %v3918 = vunpack.c.l.b16 %v1833
    %v3919 = vunpack.c.h.b16 %v1833
    %v3920 = vunpack.c.l.b16 %v1834
    %v3921 = vunpack.c.h.b16 %v1834
    %v3922 = vunpack.c.l.b16 %v1835
    %v3923 = vunpack.c.h.b16 %v1835
    %v3924 = vunpack.c.l.b16 %v1836
    %v3925 = vunpack.c.h.b16 %v1836
    %v3926 = vunpack.c.l.b16 %v1837
    %v3927 = vunpack.c.h.b16 %v1837
    %v3928 = vunpack.c.l.b16 %v1838
    %v3929 = vunpack.c.h.b16 %v1838
    %v3930 = vunpack.c.l.b16 %v1839
    %v3931 = vunpack.c.h.b16 %v1839
    %v3932 = vunpack.c.l.b16 %v1840
    %v3933 = vunpack.c.h.b16 %v1840
    %v3934 = vunpack.c.l.b16 %v1841
    %v3935 = vunpack.c.h.b16 %v1841
    %v3936 = vunpack.c.l.b16 %v1842
    %v3937 = vunpack.c.h.b16 %v1842
    %v3938 = vunpack.c.l.b16 %v1843
    %v3939 = vunpack.c.h.b16 %v1843
    %v3940 = vunpack.c.l.b16 %v1844
    %v3941 = vunpack.c.h.b16 %v1844
    %v3942 = vunpack.c.l.b16 %v1845
    %v3943 = vunpack.c.h.b16 %v1845
    %v3944 = vunpack.c.l.b16 %v1846
    %v3945 = vunpack.c.h.b16 %v1846
    %v3946 = vunpack.c.l.b16 %v1847
    %v3947 = vunpack.c.h.b16 %v1847
    %v3948 = vunpack.c.l.b16 %v1848
    %v3949 = vunpack.c.h.b16 %v1848
    %v3950 = vunpack.c.l.b16 %v1849
    %v3951 = vunpack.c.h.b16 %v1849
    %v3952 = vunpack.c.l.b16 %v1850
    %v3953 = vunpack.c.h.b16 %v1850
    %v3954 = vunpack.c.l.b16 %v1851
    %v3955 = vunpack.c.h.b16 %v1851
    %v3956 = vunpack.c.l.b16 %v1852
    %v3957 = vunpack.c.h.b16 %v1852
    %v3958 = vunpack.c.l.b16 %v1853
    %v3959 = vunpack.c.h.b16 %v1853
    %v3960 = vunpack.c.l.b16 %v1854
    %v3961 = vunpack.c.h.b16 %v1854
    %v3962 = vunpack.c.l.b16 %v1855
    %v3963 = vunpack.c.h.b16 %v1855
    %v3964 = vunpack.c.l.b16 %v1856
    %v3965 = vunpack.c.h.b16 %v1856
    %v3966 = vunpack.c.l.b16 %v1857
    %v3967 = vunpack.c.h.b16 %v1857
    %v3968 = vunpack.c.l.b16 %v1858
    %v3969 = vunpack.c.h.b16 %v1858
    %v3970 = vunpack.c.l.b16 %v1859
    %v3971 = vunpack.c.h.b16 %v1859
    %v3972 = vunpack.c.l.b16 %v1860
    %v3973 = vunpack.c.h.b16 %v1860
    %v3974 = vunpack.c.l.b16 %v1861
    %v3975 = vunpack.c.h.b16 %v1861
    %v3976 = vunpack.c.l.b16 %v1862
    %v3977 = vunpack.c.h.b16 %v1862
    %v3978 = vunpack.c.l.b16 %v1863
    %v3979 = vunpack.c.h.b16 %v1863
    %v3980 = vunpack.c.l.b16 %v1864
    %v3981 = vunpack.c.h.b16 %v1864
    %v3982 = vunpack.c.l.b16 %v1865
    %v3983 = vunpack.c.h.b16 %v1865
    %v3984 = vunpack.c.l.b16 %v1866
    %v3985 = vunpack.c.h.b16 %v1866
    %v3986 = vunpack.c.l.b16 %v1867
    %v3987 = vunpack.c.h.b16 %v1867
    %v3988 = vunpack.c.l.b16 %v1868
    %v3989 = vunpack.c.h.b16 %v1868
    %v3990 = vunpack.c.l.b16 %v1869
    %v3991 = vunpack.c.h.b16 %v1869
    %v3992 = vunpack.c.l.b16 %v1870
    %v3993 = vunpack.c.h.b16 %v1870
    %v3994 = vunpack.c.l.b16 %v1871
    %v3995 = vunpack.c.h.b16 %v1871
    %v3996 = vunpack.c.l.b16 %v1872
    %v3997 = vunpack.c.h.b16 %v1872
    %v3998 = vunpack.c.l.b16 %v1873
    %v3999 = vunpack.c.h.b16 %v1873
    %v4000 = vunpack.c.l.b16 %v1874
    %v4001 = vunpack.c.h.b16 %v1874
    %v4002 = vunpack.c.l.b16 %v1875
    %v4003 = vunpack.c.h.b16 %v1875
    %v4004 = vunpack.c.l.b16 %v1876
    %v4005 = vunpack.c.h.b16 %v1876
    %v4006 = vunpack.c.l.b16 %v1877
    %v4007 = vunpack.c.h.b16 %v1877
    %v4008 = vunpack.c.l.b16 %v1878
    %v4009 = vunpack.c.h.b16 %v1878
    %v4010 = vunpack.c.l.b16 %v1879
    %v4011 = vunpack.c.h.b16 %v1879
    %v4012 = vunpack.c.l.b16 %v1880
    %v4013 = vunpack.c.h.b16 %v1880
    %v4014 = vunpack.c.l.b16 %v1881
    %v4015 = vunpack.c.h.b16 %v1881
    %v4016 = vunpack.c.l.b16 %v1882
    %v4017 = vunpack.c.h.b16 %v1882
    %v4018 = vunpack.c.l.b16 %v1883
    %v4019 = vunpack.c.h.b16 %v1883
    %v4020 = vunpack.c.l.b16 %v1884
    %v4021 = vunpack.c.h.b16 %v1884
    %v4022 = vunpack.c.l.b16 %v1885
    %v4023 = vunpack.c.h.b16 %v1885
    %v4024 = vunpack.c.l.b16 %v1886
    %v4025 = vunpack.c.h.b16 %v1886
    %v4026 = vunpack.c.l.b16 %v1887
    %v4027 = vunpack.c.h.b16 %v1887
    %v4028 = vunpack.c.l.b16 %v1888
    %v4029 = vunpack.c.h.b16 %v1888
    %v4030 = vunpack.c.l.b16 %v1889
    %v4031 = vunpack.c.h.b16 %v1889
    %v4032 = vunpack.c.l.b16 %v1890
    %v4033 = vunpack.c.h.b16 %v1890
    %v4034 = vunpack.c.l.b16 %v1891
    %v4035 = vunpack.c.h.b16 %v1891
    %v4036 = vunpack.c.l.b16 %v1892
    %v4037 = vunpack.c.h.b16 %v1892
    %v4038 = vunpack.c.l.b16 %v1893
    %v4039 = vunpack.c.h.b16 %v1893
    %v4040 = vunpack.c.l.b16 %v1894
    %v4041 = vunpack.c.h.b16 %v1894
    %v4042 = vunpack.c.l.b16 %v1895
    %v4043 = vunpack.c.h.b16 %v1895
    %v4044 = vunpack.c.l.b16 %v1896
    %v4045 = vunpack.c.h.b16 %v1896
    %v4046 = vunpack.c.l.b16 %v1897
    %v4047 = vunpack.c.h.b16 %v1897
    %v4048 = vunpack.c.l.b16 %v1898
    %v4049 = vunpack.c.h.b16 %v1898
    %v4050 = vunpack.c.l.b16 %v1899
    %v4051 = vunpack.c.h.b16 %v1899
    %v4052 = vunpack.c.l.b16 %v1900
    %v4053 = vunpack.c.h.b16 %v1900
    %v4054 = vunpack.c.l.b16 %v1901
    %v4055 = vunpack.c.h.b16 %v1901
    %v4056 = vunpack.c.l.b16 %v1902
    %v4057 = vunpack.c.h.b16 %v1902
    %v4058 = vunpack.c.l.b16 %v1903
    %v4059 = vunpack.c.h.b16 %v1903
    %v4060 = vunpack.c.l.b16 %v1904
    %v4061 = vunpack.c.h.b16 %v1904
    %v4062 = vunpack.c.l.b16 %v1905
    %v4063 = vunpack.c.h.b16 %v1905
    %v4064 = vunpack.c.l.b16 %v1906
    %v4065 = vunpack.c.h.b16 %v1906
    %v4066 = vunpack.c.l.b16 %v1907
    %v4067 = vunpack.c.h.b16 %v1907
    %v4068 = vunpack.c.l.b16 %v1908
    %v4069 = vunpack.c.h.b16 %v1908
    %v4070 = vunpack.c.l.b16 %v1909
    %v4071 = vunpack.c.h.b16 %v1909
    %v4072 = vunpack.c.l.b16 %v1910
    %v4073 = vunpack.c.h.b16 %v1910
    %v4074 = vunpack.c.l.b16 %v1911
    %v4075 = vunpack.c.h.b16 %v1911
    %v4076 = vunpack.c.l.b16 %v1912
    %v4077 = vunpack.c.h.b16 %v1912
    %v4078 = vunpack.c.l.b16 %v1913
    %v4079 = vunpack.c.h.b16 %v1913
    %v4080 = vunpack.c.l.b16 %v1914
    %v4081 = vunpack.c.h.b16 %v1914
    %v4082 = vunpack.c.l.b16 %v1915
    %v4083 = vunpack.c.h.b16 %v1915
    %v4084 = vunpack.c.l.b16 %v1916
    %v4085 = vunpack.c.h.b16 %v1916
    %v4086 = vunpack.c.l.b16 %v1917
    %v4087 = vunpack.c.h.b16 %v1917
    %v4088 = vunpack.c.l.b16 %v1918
    %v4089 = vunpack.c.h.b16 %v1918
    %v4090 = vunpack.c.l.b16 %v1919
    %v4091 = vunpack.c.h.b16 %v1919
    %v4092 = vunpack.c.l.b16 %v1920
    %v4093 = vunpack.c.h.b16 %v1920
    %v4094 = vunpack.c.l.b16 %v1921
    %v4095 = vunpack.c.h.b16 %v1921
    %v4096 = vunpack.c.l.b16 %v1922
    %v4097 = vunpack.c.h.b16 %v1922
    %v4098 = vunpack.c.l.b16 %v1923
    %v4099 = vunpack.c.h.b16 %v1923
    %v4100 = vunpack.c.l.b16 %v1924
    %v4101 = vunpack.c.h.b16 %v1924
    %v4102 = vunpack.c.l.b16 %v1925
    %v4103 = vunpack.c.h.b16 %v1925
    %v4104 = vunpack.c.l.b16 %v1926
    %v4105 = vunpack.c.h.b16 %v1926
    %v4106 = vunpack.c.l.b16 %v1927
    %v4107 = vunpack.c.h.b16 %v1927
    %v4108 = vunpack.c.l.b16 %v1928
    %v4109 = vunpack.c.h.b16 %v1928
    %v4110 = vunpack.c.l.b16 %v1929
    %v4111 = vunpack.c.h.b16 %v1929
    %v4112 = vunpack.c.l.b16 %v1930
    %v4113 = vunpack.c.h.b16 %v1930
    %v4114 = vunpack.c.l.b16 %v1931
    %v4115 = vunpack.c.h.b16 %v1931
    %v4116 = vunpack.c.l.b16 %v1932
    %v4117 = vunpack.c.h.b16 %v1932
    %v4118 = vunpack.c.l.b16 %v1933
    %v4119 = vunpack.c.h.b16 %v1933
    %v4120 = vunpack.c.l.b16 %v1934
    %v4121 = vunpack.c.h.b16 %v1934
    %v4122 = vunpack.c.l.b16 %v1935
    %v4123 = vunpack.c.h.b16 %v1935
    %v4124 = vunpack.c.l.b16 %v1936
    %v4125 = vunpack.c.h.b16 %v1936
    %v4126 = vunpack.c.l.b16 %v1937
    %v4127 = vunpack.c.h.b16 %v1937
    %v4128 = vunpack.c.l.b16 %v1938
    %v4129 = vunpack.c.h.b16 %v1938
    %v4130 = vunpack.c.l.b16 %v1939
    %v4131 = vunpack.c.h.b16 %v1939
    %v4132 = vunpack.c.l.b16 %v1940
    %v4133 = vunpack.c.h.b16 %v1940
    %v4134 = vunpack.c.l.b16 %v1941
    %v4135 = vunpack.c.h.b16 %v1941
    %v4136 = vunpack.c.l.b16 %v1942
    %v4137 = vunpack.c.h.b16 %v1942
    %v4138 = vunpack.c.l.b16 %v1943
    %v4139 = vunpack.c.h.b16 %v1943
    %v4140 = vunpack.c.l.b16 %v1944
    %v4141 = vunpack.c.h.b16 %v1944
    %v4142 = vunpack.c.l.b16 %v1945
    %v4143 = vunpack.c.h.b16 %v1945
    %v4144 = vunpack.c.l.b16 %v1946
    %v4145 = vunpack.c.h.b16 %v1946
    %v4146 = vunpack.c.l.b16 %v1947
    %v4147 = vunpack.c.h.b16 %v1947
    %v4148 = vunpack.c.l.b16 %v1948
    %v4149 = vunpack.c.h.b16 %v1948
    %v4150 = vunpack.c.l.b16 %v1949
    %v4151 = vunpack.c.h.b16 %v1949
    %v4152 = vunpack.c.l.b16 %v1950
    %v4153 = vunpack.c.h.b16 %v1950
    %v4154 = vunpack.c.l.b16 %v1951
    %v4155 = vunpack.c.h.b16 %v1951
    %v4156 = vunpack.c.l.b16 %v1952
    %v4157 = vunpack.c.h.b16 %v1952
    %v4158 = vunpack.c.l.b16 %v1953
    %v4159 = vunpack.c.h.b16 %v1953
    %v4160 = vunpack.c.l.b16 %v1954
    %v4161 = vunpack.c.h.b16 %v1954
    %v4162 = vunpack.c.l.b16 %v1955
    %v4163 = vunpack.c.h.b16 %v1955
    %v4164 = vunpack.c.l.b16 %v1956
    %v4165 = vunpack.c.h.b16 %v1956
    %v4166 = vunpack.c.l.b16 %v1957
    %v4167 = vunpack.c.h.b16 %v1957
    %v4168 = vunpack.c.l.b16 %v1958
    %v4169 = vunpack.c.h.b16 %v1958
    %v4170 = vunpack.c.l.b16 %v1959
    %v4171 = vunpack.c.h.b16 %v1959
    %v4172 = vunpack.c.l.b16 %v1960
    %v4173 = vunpack.c.h.b16 %v1960
    %v4174 = vunpack.c.l.b16 %v1961
    %v4175 = vunpack.c.h.b16 %v1961
    %v4176 = vunpack.c.l.b16 %v1962
    %v4177 = vunpack.c.h.b16 %v1962
    %v4178 = vunpack.c.l.b16 %v1963
    %v4179 = vunpack.c.h.b16 %v1963
    %v4180 = vunpack.c.l.b16 %v1964
    %v4181 = vunpack.c.h.b16 %v1964
    %v4182 = vunpack.c.l.b16 %v1965
    %v4183 = vunpack.c.h.b16 %v1965
    %v4184 = vunpack.c.l.b16 %v1966
    %v4185 = vunpack.c.h.b16 %v1966
    %v4186 = vunpack.c.l.b16 %v1967
    %v4187 = vunpack.c.h.b16 %v1967
    %v4188 = vunpack.c.l.b16 %v1968
    %v4189 = vunpack.c.h.b16 %v1968
    %v4190 = vunpack.c.l.b16 %v1969
    %v4191 = vunpack.c.h.b16 %v1969
    %v4192 = vunpack.c.l.b16 %v1970
    %v4193 = vunpack.c.h.b16 %v1970
    %v4194 = vunpack.c.l.b16 %v1971
    %v4195 = vunpack.c.h.b16 %v1971
    %v4196 = vunpack.c.l.b16 %v1972
    %v4197 = vunpack.c.h.b16 %v1972
    %v4198 = vunpack.c.l.b16 %v1973
    %v4199 = vunpack.c.h.b16 %v1973
    %v4200 = vunpack.c.l.b16 %v1974
    %v4201 = vunpack.c.h.b16 %v1974
    %v4202 = vunpack.c.l.b16 %v1975
    %v4203 = vunpack.c.h.b16 %v1975
    %v4204 = vunpack.c.l.b16 %v1976
    %v4205 = vunpack.c.h.b16 %v1976
    %v4206 = vunpack.c.l.b16 %v1977
    %v4207 = vunpack.c.h.b16 %v1977
    %v4208 = vunpack.c.l.b16 %v1978
    %v4209 = vunpack.c.h.b16 %v1978
    %v4210 = vunpack.c.l.b16 %v1979
    %v4211 = vunpack.c.h.b16 %v1979
    %v4212 = vunpack.c.l.b16 %v1980
    %v4213 = vunpack.c.h.b16 %v1980
    %v4214 = vunpack.c.l.b16 %v1981
    %v4215 = vunpack.c.h.b16 %v1981
    %v4216 = vunpack.c.l.b16 %v1982
    %v4217 = vunpack.c.h.b16 %v1982
    %v4218 = vunpack.c.l.b16 %v1983
    %v4219 = vunpack.c.h.b16 %v1983
    %v4220 = vunpack.c.l.b16 %v1984
    %v4221 = vunpack.c.h.b16 %v1984
    %v4222 = vunpack.c.l.b16 %v1985
    %v4223 = vunpack.c.h.b16 %v1985
    %v4224 = vunpack.c.l.b16 %v1986
    %v4225 = vunpack.c.h.b16 %v1986
    %v4226 = vunpack.c.l.b16 %v1987
    %v4227 = vunpack.c.h.b16 %v1987
    %v4228 = vunpack.c.l.b16 %v1988
    %v4229 = vunpack.c.h.b16 %v1988
    %v4230 = vunpack.c.l.b16 %v1989
    %v4231 = vunpack.c.h.b16 %v1989
    %v4232 = vunpack.c.l.b16 %v1990
    %v4233 = vunpack.c.h.b16 %v1990
    %v4234 = vunpack.c.l.b16 %v1991
    %v4235 = vunpack.c.h.b16 %v1991
    %v4236 = vunpack.c.l.b16 %v1992
    %v4237 = vunpack.c.h.b16 %v1992
    %v4238 = vunpack.c.l.b16 %v1993
    %v4239 = vunpack.c.h.b16 %v1993
    %v4240 = vunpack.c.l.b16 %v1994
    %v4241 = vunpack.c.h.b16 %v1994
    %v4242 = vunpack.c.l.b16 %v1995
    %v4243 = vunpack.c.h.b16 %v1995
    %v4244 = vunpack.c.l.b16 %v1996
    %v4245 = vunpack.c.h.b16 %v1996
    %v4246 = vunpack.c.l.b16 %v1997
    %v4247 = vunpack.c.h.b16 %v1997
    %v4248 = vunpack.c.l.b16 %v1998
    %v4249 = vunpack.c.h.b16 %v1998
    %v4250 = vunpack.c.l.b16 %v1999
    %v4251 = vunpack.c.h.b16 %v1999
    %v4252 = vunpack.c.l.b16 %v2000
    %v4253 = vunpack.c.h.b16 %v2000
    %v4254 = vunpack.c.l.b16 %v2001
    %v4255 = vunpack.c.h.b16 %v2001
    %v4256 = vunpack.c.l.b16 %v2002
    %v4257 = vunpack.c.h.b16 %v2002
    %v4258 = vunpack.c.l.b16 %v2003
    %v4259 = vunpack.c.h.b16 %v2003
    %v4260 = vunpack.c.l.b16 %v2004
    %v4261 = vunpack.c.h.b16 %v2004
    %v4262 = vunpack.c.l.b16 %v2005
    %v4263 = vunpack.c.h.b16 %v2005
    %v4264 = vunpack.c.l.b16 %v2006
    %v4265 = vunpack.c.h.b16 %v2006
    %v4266 = vunpack.c.l.b16 %v2007
    %v4267 = vunpack.c.h.b16 %v2007
    %v4268 = vunpack.c.l.b16 %v2008
    %v4269 = vunpack.c.h.b16 %v2008
    %v4270 = vunpack.c.l.b16 %v2009
    %v4271 = vunpack.c.h.b16 %v2009
    %v4272 = vunpack.c.l.b16 %v2010
    %v4273 = vunpack.c.h.b16 %v2010
    %v4274 = vunpack.c.l.b16 %v2011
    %v4275 = vunpack.c.h.b16 %v2011
    %v4276 = vunpack.c.l.b16 %v2012
    %v4277 = vunpack.c.h.b16 %v2012
    %v4278 = vunpack.c.l.b16 %v2013
    %v4279 = vunpack.c.h.b16 %v2013
    %v4280 = vunpack.c.l.b16 %v2014
    %v4281 = vunpack.c.h.b16 %v2014
    %v4282 = vunpack.c.l.b16 %v2015
    %v4283 = vunpack.c.h.b16 %v2015
    %v4284 = vunpack.c.l.b16 %v2016
    %v4285 = vunpack.c.h.b16 %v2016
    %v4286 = vunpack.c.l.b16 %v2017
    %v4287 = vunpack.c.h.b16 %v2017
    %v4288 = vunpack.c.l.b16 %v2018
    %v4289 = vunpack.c.h.b16 %v2018
    %v4290 = vunpack.c.l.b16 %v2019
    %v4291 = vunpack.c.h.b16 %v2019
    %v4292 = vunpack.c.l.b16 %v2020
    %v4293 = vunpack.c.h.b16 %v2020
    %v4294 = vunpack.c.l.b16 %v2021
    %v4295 = vunpack.c.h.b16 %v2021
    %v4296 = vunpack.c.l.b16 %v2022
    %v4297 = vunpack.c.h.b16 %v2022
    %v4298 = vunpack.c.l.b16 %v2023
    %v4299 = vunpack.c.h.b16 %v2023
    %v4300 = vunpack.c.l.b16 %v2024
    %v4301 = vunpack.c.h.b16 %v2024
    %v4302 = vunpack.c.l.b16 %v2025
    %v4303 = vunpack.c.h.b16 %v2025
    %v4304 = vunpack.c.l.b16 %v2026
    %v4305 = vunpack.c.h.b16 %v2026
    %v4306 = vunpack.c.l.b16 %v2027
    %v4307 = vunpack.c.h.b16 %v2027
    %v4308 = vunpack.c.l.b16 %v2028
    %v4309 = vunpack.c.h.b16 %v2028
    %v4310 = vunpack.c.l.b16 %v2029
    %v4311 = vunpack.c.h.b16 %v2029
    %v4312 = vunpack.c.l.b16 %v2030
    %v4313 = vunpack.c.h.b16 %v2030
    %v4314 = vunpack.c.l.b16 %v2031
    %v4315 = vunpack.c.h.b16 %v2031
    %v4316 = vunpack.c.l.b16 %v2032
    %v4317 = vunpack.c.h.b16 %v2032
    %v4318 = vunpack.c.l.b16 %v2033
    %v4319 = vunpack.c.h.b16 %v2033
    %v4320 = vunpack.c.l.b16 %v2034
    %v4321 = vunpack.c.h.b16 %v2034
    %v4322 = vunpack.c.l.b16 %v2035
    %v4323 = vunpack.c.h.b16 %v2035
    %v4324 = vunpack.c.l.b16 %v2036
    %v4325 = vunpack.c.h.b16 %v2036
    %v4326 = vunpack.c.l.b16 %v2037
    %v4327 = vunpack.c.h.b16 %v2037
    %v4328 = vunpack.c.l.b16 %v2038
    %v4329 = vunpack.c.h.b16 %v2038
    %v4330 = vunpack.c.l.b16 %v2039
    %v4331 = vunpack.c.h.b16 %v2039
    %v4332 = vunpack.c.l.b16 %v2040
    %v4333 = vunpack.c.h.b16 %v2040
    %v4334 = vunpack.c.l.b16 %v2041
    %v4335 = vunpack.c.h.b16 %v2041
    %v4336 = vunpack.c.l.b16 %v2042
    %v4337 = vunpack.c.h.b16 %v2042
    %v4338 = vunpack.c.l.b16 %v2043
    %v4339 = vunpack.c.h.b16 %v2043
    %v4340 = vunpack.c.l.b16 %v2044
    %v4341 = vunpack.c.h.b16 %v2044
    %v4342 = vunpack.c.l.b16 %v2045
    %v4343 = vunpack.c.h.b16 %v2045
    %v4344 = vunpack.c.l.b16 %v2046
    %v4345 = vunpack.c.h.b16 %v2046
    %v4346 = vunpack.c.l.b16 %v2047
    %v4347 = vunpack.c.h.b16 %v2047
    %v4348 = vunpack.c.l.b16 %v2048
    %v4349 = vunpack.c.h.b16 %v2048
    %v4350 = vunpack.c.l.b16 %v2049
    %v4351 = vunpack.c.h.b16 %v2049
    %v4352 = vunpack.c.l.b16 %v2050
    %v4353 = vunpack.c.h.b16 %v2050
    %v4354 = vunpack.c.l.b16 %v2051
    %v4355 = vunpack.c.h.b16 %v2051
    %v4356 = vunpack.c.l.b16 %v2052
    %v4357 = vunpack.c.h.b16 %v2052
    %v4358 = vunpack.c.l.b16 %v2053
    %v4359 = vunpack.c.h.b16 %v2053
    %v4360 = vunpack.c.l.b16 %v2054
    %v4361 = vunpack.c.h.b16 %v2054
    %v4362 = vunpack.c.l.b16 %v2055
    %v4363 = vunpack.c.h.b16 %v2055
    %v4364 = vunpack.c.l.b16 %v2056
    %v4365 = vunpack.c.h.b16 %v2056
    %v4366 = vunpack.c.l.b16 %v2057
    %v4367 = vunpack.c.h.b16 %v2057
    %v4368 = vunpack.c.l.b16 %v2058
    %v4369 = vunpack.c.h.b16 %v2058
    %v4370 = vunpack.c.l.b16 %v2059
    %v4371 = vunpack.c.h.b16 %v2059
    %v4372 = vunpack.c.l.b16 %v2060
    %v4373 = vunpack.c.h.b16 %v2060
    %v4374 = vunpack.c.l.b16 %v2061
    %v4375 = vunpack.c.h.b16 %v2061
    %v4376 = vunpack.c.l.b16 %v2062
    %v4377 = vunpack.c.h.b16 %v2062
    %v4378 = vunpack.c.l.b16 %v2063
    %v4379 = vunpack.c.h.b16 %v2063
    %v4380 = vunpack.c.l.b16 %v2064
    %v4381 = vunpack.c.h.b16 %v2064
    %v4382 = vunpack.c.l.b16 %v2065
    %v4383 = vunpack.c.h.b16 %v2065
    %v4384 = vunpack.c.l.b16 %v2066
    %v4385 = vunpack.c.h.b16 %v2066
    %v4386 = vunpack.c.l.b16 %v2067
    %v4387 = vunpack.c.h.b16 %v2067
    %v4388 = vunpack.c.l.b16 %v2068
    %v4389 = vunpack.c.h.b16 %v2068
    %v4390 = vunpack.c.l.b16 %v2069
    %v4391 = vunpack.c.h.b16 %v2069
    %v4392 = vunpack.c.l.b16 %v2070
    %v4393 = vunpack.c.h.b16 %v2070
    %v4394 = vunpack.c.l.b16 %v2071
    %v4395 = vunpack.c.h.b16 %v2071
    %v4396 = vunpack.c.l.b16 %v2072
    %v4397 = vunpack.c.h.b16 %v2072
    %v4398 = vunpack.c.l.b16 %v2073
    %v4399 = vunpack.c.h.b16 %v2073
    %v4400 = vunpack.c.l.b16 %v2074
    %v4401 = vunpack.c.h.b16 %v2074
    %v4402 = vunpack.c.l.b16 %v2075
    %v4403 = vunpack.c.h.b16 %v2075
    %v4404 = vunpack.c.l.b16 %v2076
    %v4405 = vunpack.c.h.b16 %v2076
    %v4406 = vunpack.c.l.b16 %v2077
    %v4407 = vunpack.c.h.b16 %v2077
    %v4408 = vunpack.c.l.b16 %v2078
    %v4409 = vunpack.c.h.b16 %v2078
    %v4410 = vunpack.c.l.b16 %v2079
    %v4411 = vunpack.c.h.b16 %v2079
    %v4412 = vunpack.c.l.b16 %v2080
    %v4413 = vunpack.c.h.b16 %v2080
    %v4414 = vunpack.c.l.b16 %v2081
    %v4415 = vunpack.c.h.b16 %v2081
    %v4416 = vunpack.c.l.b16 %v2082
    %v4417 = vunpack.c.h.b16 %v2082
    %v4418 = vunpack.c.l.b16 %v2083
    %v4419 = vunpack.c.h.b16 %v2083
    %v4420 = vunpack.c.l.b16 %v2084
    %v4421 = vunpack.c.h.b16 %v2084
    %v4422 = vunpack.c.l.b16 %v2085
    %v4423 = vunpack.c.h.b16 %v2085
    %v4424 = vunpack.c.l.b16 %v2086
    %v4425 = vunpack.c.h.b16 %v2086
    %v4426 = vunpack.c.l.b16 %v2087
    %v4427 = vunpack.c.h.b16 %v2087
    %v4428 = vunpack.c.l.b16 %v2088
    %v4429 = vunpack.c.h.b16 %v2088
    %v4430 = vunpack.c.l.b16 %v2089
    %v4431 = vunpack.c.h.b16 %v2089
    %v4432 = vunpack.c.l.b16 %v2090
    %v4433 = vunpack.c.h.b16 %v2090
    %v4434 = vunpack.c.l.b16 %v2091
    %v4435 = vunpack.c.h.b16 %v2091
    %v4436 = vunpack.c.l.b16 %v2092
    %v4437 = vunpack.c.h.b16 %v2092
    %v4438 = vunpack.c.l.b16 %v2093
    %v4439 = vunpack.c.h.b16 %v2093
    %v4440 = vunpack.c.l.b16 %v2094
    %v4441 = vunpack.c.h.b16 %v2094
    %v4442 = vunpack.c.l.b16 %v2095
    %v4443 = vunpack.c.h.b16 %v2095
    %v4444 = vunpack.c.l.b16 %v2096
    %v4445 = vunpack.c.h.b16 %v2096
    %v4446 = vunpack.c.l.b16 %v2097
    %v4447 = vunpack.c.h.b16 %v2097
    %v4448 = vunpack.c.l.b16 %v2098
    %v4449 = vunpack.c.h.b16 %v2098
    %v4450 = vunpack.c.l.b16 %v2099
    %v4451 = vunpack.c.h.b16 %v2099
    %v4452 = vunpack.c.l.b16 %v2100
    %v4453 = vunpack.c.h.b16 %v2100
    %v4454 = vunpack.c.l.b16 %v2101
    %v4455 = vunpack.c.h.b16 %v2101
    %v4456 = vunpack.c.l.b16 %v2102
    %v4457 = vunpack.c.h.b16 %v2102
    %v4458 = vunpack.c.l.b16 %v2103
    %v4459 = vunpack.c.h.b16 %v2103
    %v4460 = vunpack.c.l.b16 %v2104
    %v4461 = vunpack.c.h.b16 %v2104
    %v4462 = vunpack.c.l.b16 %v2105
    %v4463 = vunpack.c.h.b16 %v2105
    %v4464 = vunpack.c.l.b16 %v2106
    %v4465 = vunpack.c.h.b16 %v2106
    %v4466 = vunpack.c.l.b16 %v2107
    %v4467 = vunpack.c.h.b16 %v2107
    %v4468 = vunpack.c.l.b16 %v2108
    %v4469 = vunpack.c.h.b16 %v2108
    %v4470 = vunpack.c.l.b16 %v2109
    %v4471 = vunpack.c.h.b16 %v2109
    %v4472 = vunpack.c.l.b16 %v2110
    %v4473 = vunpack.c.h.b16 %v2110
    %v4474 = vunpack.c.l.b16 %v2111
    %v4475 = vunpack.c.h.b16 %v2111
    %v4476 = vunpack.c.l.b16 %v2112
    %v4477 = vunpack.c.h.b16 %v2112
    %v4478 = vunpack.c.l.b16 %v2113
    %v4479 = vunpack.c.h.b16 %v2113
    %v4480 = vunpack.c.l.b16 %v2114
    %v4481 = vunpack.c.h.b16 %v2114
    %v4482 = vunpack.c.l.b16 %v2115
    %v4483 = vunpack.c.h.b16 %v2115
    %v4484 = vunpack.c.l.b16 %v2116
    %v4485 = vunpack.c.h.b16 %v2116
    %v4486 = vunpack.c.l.b16 %v2117
    %v4487 = vunpack.c.h.b16 %v2117
    %v4488 = vunpack.c.l.b16 %v2118
    %v4489 = vunpack.c.h.b16 %v2118
    %v4490 = vunpack.c.l.b16 %v2119
    %v4491 = vunpack.c.h.b16 %v2119
    %v4492 = vunpack.c.l.b16 %v2120
    %v4493 = vunpack.c.h.b16 %v2120
    %v4494 = vunpack.c.l.b16 %v2121
    %v4495 = vunpack.c.h.b16 %v2121
    %v4496 = vunpack.c.l.b16 %v2122
    %v4497 = vunpack.c.h.b16 %v2122
    %v4498 = vunpack.c.l.b16 %v2123
    %v4499 = vunpack.c.h.b16 %v2123
    %v4500 = vunpack.c.l.b16 %v2124
    %v4501 = vunpack.c.h.b16 %v2124
    %v4502 = vunpack.c.l.b16 %v2125
    %v4503 = vunpack.c.h.b16 %v2125
    %v4504 = vunpack.c.l.b16 %v2126
    %v4505 = vunpack.c.h.b16 %v2126
    %v4506 = vunpack.c.l.b16 %v2127
    %v4507 = vunpack.c.h.b16 %v2127
    %v4508 = vunpack.c.l.b16 %v2128
    %v4509 = vunpack.c.h.b16 %v2128
    %v4510 = vunpack.c.l.b16 %v2129
    %v4511 = vunpack.c.h.b16 %v2129
    %v4512 = vunpack.c.l.b16 %v2130
    %v4513 = vunpack.c.h.b16 %v2130
    %v4514 = vunpack.c.l.b16 %v2131
    %v4515 = vunpack.c.h.b16 %v2131
    %v4516 = vunpack.c.l.b16 %v2132
    %v4517 = vunpack.c.h.b16 %v2132
    %v4518 = vunpack.c.l.b16 %v2133
    %v4519 = vunpack.c.h.b16 %v2133
    %v4520 = vunpack.c.l.b16 %v2134
    %v4521 = vunpack.c.h.b16 %v2134
    %v4522 = vunpack.c.l.b16 %v2135
    %v4523 = vunpack.c.h.b16 %v2135
    %v4524 = vunpack.c.l.b16 %v2136
    %v4525 = vunpack.c.h.b16 %v2136
    %v4526 = vunpack.c.l.b16 %v2137
    %v4527 = vunpack.c.h.b16 %v2137
    %v4528 = vunpack.c.l.b16 %v2138
    %v4529 = vunpack.c.h.b16 %v2138
    %v4530 = vunpack.c.l.b16 %v2139
    %v4531 = vunpack.c.h.b16 %v2139
    %v4532 = vunpack.c.l.b16 %v2140
    %v4533 = vunpack.c.h.b16 %v2140
    %v4534 = vunpack.c.l.b16 %v2141
    %v4535 = vunpack.c.h.b16 %v2141
    %v4536 = vunpack.c.l.b16 %v2142
    %v4537 = vunpack.c.h.b16 %v2142
    %v4538 = vunpack.c.l.b16 %v2143
    %v4539 = vunpack.c.h.b16 %v2143
    %v4540 = vunpack.c.l.b16 %v2144
    %v4541 = vunpack.c.h.b16 %v2144
    %v4542 = vunpack.c.l.b16 %v2145
    %v4543 = vunpack.c.h.b16 %v2145
    %v4544 = vunpack.c.l.b16 %v2146
    %v4545 = vunpack.c.h.b16 %v2146
    %v4546 = vunpack.c.l.b16 %v2147
    %v4547 = vunpack.c.h.b16 %v2147
    %v4548 = vunpack.c.l.b16 %v2148
    %v4549 = vunpack.c.h.b16 %v2148
    %v4550 = vunpack.c.l.b16 %v2149
    %v4551 = vunpack.c.h.b16 %v2149
    %v4552 = vunpack.c.l.b16 %v2150
    %v4553 = vunpack.c.h.b16 %v2150
    %v4554 = vunpack.c.l.b16 %v2151
    %v4555 = vunpack.c.h.b16 %v2151
    %v4556 = vunpack.c.l.b16 %v2152
    %v4557 = vunpack.c.h.b16 %v2152
    %v4558 = vunpack.c.l.b16 %v2153
    %v4559 = vunpack.c.h.b16 %v2153
    %v4560 = vunpack.c.l.b16 %v2154
    %v4561 = vunpack.c.h.b16 %v2154
    %v4562 = vunpack.c.l.b16 %v2155
    %v4563 = vunpack.c.h.b16 %v2155
    %v4564 = vunpack.c.l.b16 %v2156
    %v4565 = vunpack.c.h.b16 %v2156
    %v4566 = vunpack.c.l.b16 %v2157
    %v4567 = vunpack.c.h.b16 %v2157
    %v4568 = vunpack.c.l.b16 %v2158
    %v4569 = vunpack.c.h.b16 %v2158
    %v4570 = vunpack.c.l.b16 %v2159
    %v4571 = vunpack.c.h.b16 %v2159
    %v4572 = vunpack.c.l.b16 %v2160
    %v4573 = vunpack.c.h.b16 %v2160
    %v4574 = vunpack.c.l.b16 %v2161
    %v4575 = vunpack.c.h.b16 %v2161
    %v4576 = vunpack.c.l.b16 %v2162
    %v4577 = vunpack.c.h.b16 %v2162
    %v4578 = vunpack.c.l.b16 %v2163
    %v4579 = vunpack.c.h.b16 %v2163
    %v4580 = vunpack.c.l.b16 %v2164
    %v4581 = vunpack.c.h.b16 %v2164
    %v4582 = vunpack.c.l.b16 %v2165
    %v4583 = vunpack.c.h.b16 %v2165
    %v4584 = vunpack.c.l.b16 %v2166
    %v4585 = vunpack.c.h.b16 %v2166
    %v4586 = vunpack.c.l.b16 %v2167
    %v4587 = vunpack.c.h.b16 %v2167
    %v4588 = vunpack.c.l.b16 %v2168
    %v4589 = vunpack.c.h.b16 %v2168
    %v4590 = vunpack.c.l.b16 %v2169
    %v4591 = vunpack.c.h.b16 %v2169
    %v4592 = vunpack.c.l.b16 %v2170
    %v4593 = vunpack.c.h.b16 %v2170
    %v4594 = vunpack.c.l.b16 %v2171
    %v4595 = vunpack.c.h.b16 %v2171
    %v4596 = vunpack.c.l.b16 %v2172
    %v4597 = vunpack.c.h.b16 %v2172
    %v4598 = vunpack.c.l.b16 %v2173
    %v4599 = vunpack.c.h.b16 %v2173
    %v4600 = vunpack.c.l.b16 %v2174
    %v4601 = vunpack.c.h.b16 %v2174
    %v4602 = vunpack.c.l.b16 %v2175
    %v4603 = vunpack.c.h.b16 %v2175
    %v4604 = vunpack.c.l.b16 %v2176
    %v4605 = vunpack.c.h.b16 %v2176
    %v4606 = vunpack.c.l.b16 %v2177
    %v4607 = vunpack.c.h.b16 %v2177
    %v4608 = vunpack.c.l.b16 %v2178
    %v4609 = vunpack.c.h.b16 %v2178
    %v4610 = vunpack.c.l.b16 %v2179
    %v4611 = vunpack.c.h.b16 %v2179
    %v4612 = vunpack.c.l.b16 %v2180
    %v4613 = vunpack.c.h.b16 %v2180
    %v4614 = vunpack.c.l.b16 %v2181
    %v4615 = vunpack.c.h.b16 %v2181
    %v4616 = vunpack.c.l.b16 %v2182
    %v4617 = vunpack.c.h.b16 %v2182
    %v4618 = vunpack.c.l.b16 %v2183
    %v4619 = vunpack.c.h.b16 %v2183
    %v4620 = vunpack.c.l.b16 %v2184
    %v4621 = vunpack.c.h.b16 %v2184
    %v4622 = vunpack.c.l.b16 %v2185
    %v4623 = vunpack.c.h.b16 %v2185
    %v4624 = vunpack.c.l.b16 %v2186
    %v4625 = vunpack.c.h.b16 %v2186
    %v4626 = vunpack.c.l.b16 %v2187
    %v4627 = vunpack.c.h.b16 %v2187
    %v4628 = vunpack.c.l.b16 %v2188
    %v4629 = vunpack.c.h.b16 %v2188
    %v4630 = vunpack.c.l.b16 %v2189
    %v4631 = vunpack.c.h.b16 %v2189
    %v4632 = vunpack.c.l.b16 %v2190
    %v4633 = vunpack.c.h.b16 %v2190
    %v4634 = vunpack.c.l.b16 %v2191
    %v4635 = vunpack.c.h.b16 %v2191
    %v4636 = vunpack.c.l.b16 %v2192
    %v4637 = vunpack.c.h.b16 %v2192
    %v4638 = vunpack.c.l.b16 %v2193
    %v4639 = vunpack.c.h.b16 %v2193
    %v4640 = vunpack.c.l.b16 %v2194
    %v4641 = vunpack.c.h.b16 %v2194
    %v4642 = vunpack.c.l.b16 %v2195
    %v4643 = vunpack.c.h.b16 %v2195
    %v4644 = vunpack.c.l.b16 %v2196
    %v4645 = vunpack.c.h.b16 %v2196
    %v4646 = vunpack.c.l.b16 %v2197
    %v4647 = vunpack.c.h.b16 %v2197
    %v4648 = vunpack.c.l.b16 %v2198
    %v4649 = vunpack.c.h.b16 %v2198
    %v4650 = vunpack.c.l.b16 %v2199
    %v4651 = vunpack.c.h.b16 %v2199
    %v4652 = vunpack.c.l.b16 %v2200
    %v4653 = vunpack.c.h.b16 %v2200
    %v4654 = vunpack.c.l.b16 %v2201
    %v4655 = vunpack.c.h.b16 %v2201
    %v4656 = vunpack.c.l.b16 %v2202
    %v4657 = vunpack.c.h.b16 %v2202
    %v4658 = vunpack.c.l.b16 %v2203
    %v4659 = vunpack.c.h.b16 %v2203
    %v4660 = vunpack.c.l.b16 %v2204
    %v4661 = vunpack.c.h.b16 %v2204
    %v4662 = vunpack.c.l.b16 %v2205
    %v4663 = vunpack.c.h.b16 %v2205
    %v4664 = vunpack.c.l.b16 %v2206
    %v4665 = vunpack.c.h.b16 %v2206
    %v4666 = vunpack.c.l.b16 %v2207
    %v4667 = vunpack.c.h.b16 %v2207
    %v4668 = vunpack.c.l.b16 %v2208
    %v4669 = vunpack.c.h.b16 %v2208
    %v4670 = vunpack.c.l.b16 %v2209
    %v4671 = vunpack.c.h.b16 %v2209
    %v4672 = vunpack.c.l.b16 %v2210
    %v4673 = vunpack.c.h.b16 %v2210
    %v4674 = vunpack.c.l.b16 %v2211
    %v4675 = vunpack.c.h.b16 %v2211
    %v4676 = vunpack.c.l.b16 %v2212
    %v4677 = vunpack.c.h.b16 %v2212
    %v4678 = vunpack.c.l.b16 %v2213
    %v4679 = vunpack.c.h.b16 %v2213
    %v4680 = vunpack.c.l.b16 %v2214
    %v4681 = vunpack.c.h.b16 %v2214
    %v4682 = vunpack.c.l.b16 %v2215
    %v4683 = vunpack.c.h.b16 %v2215
    %v4684 = vunpack.c.l.b16 %v2216
    %v4685 = vunpack.c.h.b16 %v2216
    %v4686 = vunpack.c.l.b16 %v2217
    %v4687 = vunpack.c.h.b16 %v2217
    %v4688 = vunpack.c.l.b16 %v2218
    %v4689 = vunpack.c.h.b16 %v2218
    %v4690 = vunpack.c.l.b16 %v2219
    %v4691 = vunpack.c.h.b16 %v2219
    %v4692 = vunpack.c.l.b16 %v2220
    %v4693 = vunpack.c.h.b16 %v2220
    %v4694 = vunpack.c.l.b16 %v2221
    %v4695 = vunpack.c.h.b16 %v2221
    %v4696 = vunpack.c.l.b16 %v2222
    %v4697 = vunpack.c.h.b16 %v2222
    %v4698 = vunpack.c.l.b16 %v2223
    %v4699 = vunpack.c.h.b16 %v2223
    %v4700 = vunpack.c.l.b16 %v2224
    %v4701 = vunpack.c.h.b16 %v2224
    %v4702 = vunpack.c.l.b16 %v2225
    %v4703 = vunpack.c.h.b16 %v2225
    %v4704 = vunpack.c.l.b16 %v2226
    %v4705 = vunpack.c.h.b16 %v2226
    %v4706 = vunpack.c.l.b16 %v2227
    %v4707 = vunpack.c.h.b16 %v2227
    %v4708 = vunpack.c.l.b16 %v2228
    %v4709 = vunpack.c.h.b16 %v2228
    %v4710 = vunpack.c.l.b16 %v2229
    %v4711 = vunpack.c.h.b16 %v2229
    %v4712 = vunpack.c.l.b16 %v2230
    %v4713 = vunpack.c.h.b16 %v2230
    %v4714 = vunpack.c.l.b16 %v2231
    %v4715 = vunpack.c.h.b16 %v2231
    %v4716 = vunpack.c.l.b16 %v2232
    %v4717 = vunpack.c.h.b16 %v2232
    %v4718 = vunpack.c.l.b16 %v2233
    %v4719 = vunpack.c.h.b16 %v2233
    %v4720 = vunpack.c.l.b16 %v2234
    %v4721 = vunpack.c.h.b16 %v2234
    %v4722 = vunpack.c.l.b16 %v2235
    %v4723 = vunpack.c.h.b16 %v2235
    %v4724 = vunpack.c.l.b16 %v2236
    %v4725 = vunpack.c.h.b16 %v2236
    %v4726 = vunpack.c.l.b16 %v2237
    %v4727 = vunpack.c.h.b16 %v2237
    %v4728 = vunpack.c.l.b16 %v2238
    %v4729 = vunpack.c.h.b16 %v2238
    %v4730 = vunpack.c.l.b16 %v2239
    %v4731 = vunpack.c.h.b16 %v2239
    %v4732 = vunpack.c.l.b16 %v2240
    %v4733 = vunpack.c.h.b16 %v2240
    %v4734 = vunpack.c.l.b16 %v2241
    %v4735 = vunpack.c.h.b16 %v2241
    %v4736 = vunpack.c.l.b16 %v2242
    %v4737 = vunpack.c.h.b16 %v2242
    %v4738 = vunpack.c.l.b16 %v2243
    %v4739 = vunpack.c.h.b16 %v2243
    %v4740 = vunpack.c.l.b16 %v2244
    %v4741 = vunpack.c.h.b16 %v2244
    %v4742 = vunpack.c.l.b16 %v2245
    %v4743 = vunpack.c.h.b16 %v2245
    %v4744 = vunpack.c.l.b16 %v2246
    %v4745 = vunpack.c.h.b16 %v2246
    %v4746 = vunpack.c.l.b16 %v2247
    %v4747 = vunpack.c.h.b16 %v2247
    %v4748 = vunpack.c.l.b16 %v2248
    %v4749 = vunpack.c.h.b16 %v2248
    %v4750 = vunpack.c.l.b16 %v2249
    %v4751 = vunpack.c.h.b16 %v2249
    %v4752 = vunpack.c.l.b16 %v2250
    %v4753 = vunpack.c.h.b16 %v2250
    %v4754 = vunpack.c.l.b16 %v2251
    %v4755 = vunpack.c.h.b16 %v2251
    %v4756 = vunpack.c.l.b16 %v2252
    %v4757 = vunpack.c.h.b16 %v2252
    %v4758 = vunpack.c.l.b16 %v2253
    %v4759 = vunpack.c.h.b16 %v2253
    %v4760 = vunpack.c.l.b16 %v2254
    %v4761 = vunpack.c.h.b16 %v2254
    %v4762 = vunpack.c.l.b16 %v2255
    %v4763 = vunpack.c.h.b16 %v2255
    %v4764 = vunpack.c.l.b16 %v2256
    %v4765 = vunpack.c.h.b16 %v2256
    %v4766 = vunpack.c.l.b16 %v2257
    %v4767 = vunpack.c.h.b16 %v2257
    %v4768 = vunpack.c.l.b16 %v2258
    %v4769 = vunpack.c.h.b16 %v2258
    %v4770 = vunpack.c.l.b16 %v2259
    %v4771 = vunpack.c.h.b16 %v2259
    %v4772 = vunpack.c.l.b16 %v2260
    %v4773 = vunpack.c.h.b16 %v2260
    %v4774 = vunpack.c.l.b16 %v2261
    %v4775 = vunpack.c.h.b16 %v2261
    %v4776 = vunpack.c.l.b16 %v2262
    %v4777 = vunpack.c.h.b16 %v2262
    %v4778 = vunpack.c.l.b16 %v2263
    %v4779 = vunpack.c.h.b16 %v2263
    %v4780 = vunpack.c.l.b16 %v2264
    %v4781 = vunpack.c.h.b16 %v2264
    %v4782 = vunpack.c.l.b16 %v2265
    %v4783 = vunpack.c.h.b16 %v2265
    %v4784 = vunpack.c.l.b16 %v2266
    %v4785 = vunpack.c.h.b16 %v2266
    %v4786 = vunpack.c.l.b16 %v2267
    %v4787 = vunpack.c.h.b16 %v2267
    %v4788 = vunpack.c.l.b16 %v2268
    %v4789 = vunpack.c.h.b16 %v2268
    %v4790 = vunpack.c.l.b16 %v2269
    %v4791 = vunpack.c.h.b16 %v2269
    %v4792 = vunpack.c.l.b16 %v2270
    %v4793 = vunpack.c.h.b16 %v2270
    %v4794 = vunpack.c.l.b16 %v2271
    %v4795 = vunpack.c.h.b16 %v2271
    %v4796 = vunpack.c.l.b16 %v2272
    %v4797 = vunpack.c.h.b16 %v2272
    %v4798 = vunpack.c.l.b16 %v2273
    %v4799 = vunpack.c.h.b16 %v2273
    %v4800 = vunpack.c.l.b16 %v2274
    %v4801 = vunpack.c.h.b16 %v2274
    %v4802 = vunpack.c.l.b16 %v2275
    %v4803 = vunpack.c.h.b16 %v2275
    %v4804 = vunpack.c.l.b16 %v2276
    %v4805 = vunpack.c.h.b16 %v2276
    %v4806 = vunpack.c.l.b16 %v2277
    %v4807 = vunpack.c.h.b16 %v2277
    %v4808 = vunpack.c.l.b16 %v2278
    %v4809 = vunpack.c.h.b16 %v2278
    %v4810 = vunpack.c.l.b16 %v2279
    %v4811 = vunpack.c.h.b16 %v2279
    %v4812 = vunpack.c.l.b16 %v2280
    %v4813 = vunpack.c.h.b16 %v2280
    %v4814 = vunpack.c.l.b16 %v2281
    %v4815 = vunpack.c.h.b16 %v2281
    %v4816 = vunpack.c.l.b16 %v2282
    %v4817 = vunpack.c.h.b16 %v2282
    %v4818 = vunpack.c.l.b16 %v2283
    %v4819 = vunpack.c.h.b16 %v2283
    %v4820 = vunpack.c.l.b16 %v2284
    %v4821 = vunpack.c.h.b16 %v2284
    %v4822 = vunpack.c.l.b16 %v2285
    %v4823 = vunpack.c.h.b16 %v2285
    %v4824 = vunpack.c.l.b16 %v2286
    %v4825 = vunpack.c.h.b16 %v2286
    %v4826 = vunpack.c.l.b16 %v2287
    %v4827 = vunpack.c.h.b16 %v2287
    %v4828 = vunpack.c.l.b16 %v2288
    %v4829 = vunpack.c.h.b16 %v2288
    %v4830 = vunpack.c.l.b16 %v2289
    %v4831 = vunpack.c.h.b16 %v2289
    %v4832 = vunpack.c.l.b16 %v2290
    %v4833 = vunpack.c.h.b16 %v2290
    %v4834 = vunpack.c.l.b16 %v2291
    %v4835 = vunpack.c.h.b16 %v2291
    %v4836 = vunpack.c.l.b16 %v2292
    %v4837 = vunpack.c.h.b16 %v2292
    %v4838 = vunpack.c.l.b16 %v2293
    %v4839 = vunpack.c.h.b16 %v2293
    %v4840 = vunpack.c.l.b16 %v2294
    %v4841 = vunpack.c.h.b16 %v2294
    %v4842 = vunpack.c.l.b16 %v2295
    %v4843 = vunpack.c.h.b16 %v2295
    %v4844 = vunpack.c.l.b16 %v2296
    %v4845 = vunpack.c.h.b16 %v2296
    %v4846 = vunpack.c.l.b16 %v2297
    %v4847 = vunpack.c.h.b16 %v2297
    %v4848 = vunpack.c.l.b16 %v2298
    %v4849 = vunpack.c.h.b16 %v2298
    %v4850 = vunpack.c.l.b16 %v2299
    %v4851 = vunpack.c.h.b16 %v2299
    %v4852 = vunpack.c.l.b16 %v2300
    %v4853 = vunpack.c.h.b16 %v2300
    %v4854 = vunpack.c.l.b16 %v2301
    %v4855 = vunpack.c.h.b16 %v2301
    %v4856 = vunpack.c.l.b16 %v2302
    %v4857 = vunpack.c.h.b16 %v2302
    %v4858 = vunpack.c.l.b16 %v2303
    %v4859 = vunpack.c.h.b16 %v2303
    %v4860 = vunpack.c.l.b16 %v2304
    %v4861 = vunpack.c.h.b16 %v2304
    %v4862 = vunpack.c.l.b16 %v2305
    %v4863 = vunpack.c.h.b16 %v2305
    %v4864 = vunpack.c.l.b16 %v2306
    %v4865 = vunpack.c.h.b16 %v2306
    %v4866 = vunpack.c.l.b16 %v2307
    %v4867 = vunpack.c.h.b16 %v2307
    %v4868 = vunpack.c.l.b16 %v2308
    %v4869 = vunpack.c.h.b16 %v2308
    %v4870 = vunpack.c.l.b16 %v2309
    %v4871 = vunpack.c.h.b16 %v2309
    %v4872 = vunpack.c.l.b16 %v2310
    %v4873 = vunpack.c.h.b16 %v2310
    %v4874 = vunpack.c.l.b16 %v2311
    %v4875 = vunpack.c.h.b16 %v2311
    %v4876 = vunpack.c.l.b16 %v2312
    %v4877 = vunpack.c.h.b16 %v2312
    %v4878 = vunpack.c.l.b16 %v2313
    %v4879 = vunpack.c.h.b16 %v2313
    %v4880 = vunpack.c.l.b16 %v2314
    %v4881 = vunpack.c.h.b16 %v2314
    %v4882 = vunpack.c.l.b16 %v2315
    %v4883 = vunpack.c.h.b16 %v2315
    %v4884 = vunpack.c.l.b16 %v2316
    %v4885 = vunpack.c.h.b16 %v2316
    %v4886 = vunpack.c.l.b16 %v2317
    %v4887 = vunpack.c.h.b16 %v2317
    %v4888 = vunpack.c.l.b16 %v2318
    %v4889 = vunpack.c.h.b16 %v2318
    %v4890 = vunpack.c.l.b16 %v2319
    %v4891 = vunpack.c.h.b16 %v2319
    %v4892 = vunpack.c.l.b16 %v2320
    %v4893 = vunpack.c.h.b16 %v2320
    %v4894 = vunpack.c.l.b16 %v2321
    %v4895 = vunpack.c.h.b16 %v2321
    %v4896 = vunpack.c.l.b16 %v2322
    %v4897 = vunpack.c.h.b16 %v2322
    %v4898 = vunpack.c.l.b16 %v2323
    %v4899 = vunpack.c.h.b16 %v2323
    %v4900 = vunpack.c.l.b16 %v2324
    %v4901 = vunpack.c.h.b16 %v2324
    %v4902 = vunpack.c.l.b16 %v2325
    %v4903 = vunpack.c.h.b16 %v2325
    %v4904 = vunpack.c.l.b16 %v2326
    %v4905 = vunpack.c.h.b16 %v2326
    %v4906 = vunpack.c.l.b16 %v2327
    %v4907 = vunpack.c.h.b16 %v2327
    %v4908 = vunpack.c.l.b16 %v2328
    %v4909 = vunpack.c.h.b16 %v2328
    %v4910 = vunpack.c.l.b16 %v2329
    %v4911 = vunpack.c.h.b16 %v2329
    %v4912 = vunpack.c.l.b16 %v2330
    %v4913 = vunpack.c.h.b16 %v2330
    %v4914 = vunpack.c.l.b16 %v2331
    %v4915 = vunpack.c.h.b16 %v2331
    %v4916 = vunpack.c.l.b16 %v2332
    %v4917 = vunpack.c.h.b16 %v2332
    %v4918 = vunpack.c.l.b16 %v2333
    %v4919 = vunpack.c.h.b16 %v2333
    %v4920 = vunpack.c.l.b16 %v2334
    %v4921 = vunpack.c.h.b16 %v2334
    %v4922 = vunpack.c.l.b16 %v2335
    %v4923 = vunpack.c.h.b16 %v2335
    %v4924 = vunpack.c.l.b16 %v2336
    %v4925 = vunpack.c.h.b16 %v2336
    %v4926 = vunpack.c.l.b16 %v2337
    %v4927 = vunpack.c.h.b16 %v2337
    %v4928 = vunpack.c.l.b16 %v2338
    %v4929 = vunpack.c.h.b16 %v2338
    %v4930 = vunpack.c.l.b16 %v2339
    %v4931 = vunpack.c.h.b16 %v2339
    %v4932 = vunpack.c.l.b16 %v2340
    %v4933 = vunpack.c.h.b16 %v2340
    %v4934 = vunpack.c.l.b16 %v2341
    %v4935 = vunpack.c.h.b16 %v2341
    %v4936 = vunpack.c.l.b16 %v2342
    %v4937 = vunpack.c.h.b16 %v2342
    %v4938 = vunpack.c.l.b16 %v2343
    %v4939 = vunpack.c.h.b16 %v2343
    %v4940 = vunpack.c.l.b16 %v2344
    %v4941 = vunpack.c.h.b16 %v2344
    %v4942 = vunpack.c.l.b16 %v2345
    %v4943 = vunpack.c.h.b16 %v2345
    %v4944 = vunpack.c.l.b16 %v2346
    %v4945 = vunpack.c.h.b16 %v2346
    %v4946 = vunpack.c.l.b16 %v2347
    %v4947 = vunpack.c.h.b16 %v2347
    %v4948 = vunpack.c.l.b16 %v2348
    %v4949 = vunpack.c.h.b16 %v2348
    %v4950 = vunpack.c.l.b16 %v2349
    %v4951 = vunpack.c.h.b16 %v2349
    %v4952 = vunpack.c.l.b16 %v2350
    %v4953 = vunpack.c.h.b16 %v2350
    %v4954 = vunpack.c.l.b16 %v2351
    %v4955 = vunpack.c.h.b16 %v2351
    %v4956 = vunpack.c.l.b16 %v2352
    %v4957 = vunpack.c.h.b16 %v2352
    %v4958 = vunpack.c.l.b16 %v2353
    %v4959 = vunpack.c.h.b16 %v2353
    %v4960 = vunpack.c.l.b16 %v2354
    %v4961 = vunpack.c.h.b16 %v2354
    %v4962 = vunpack.c.l.b16 %v2355
    %v4963 = vunpack.c.h.b16 %v2355
    %v4964 = vunpack.c.l.b16 %v2356
    %v4965 = vunpack.c.h.b16 %v2356
    %v4966 = vunpack.c.l.b16 %v2357
    %v4967 = vunpack.c.h.b16 %v2357
    %v4968 = vunpack.c.l.b16 %v2358
    %v4969 = vunpack.c.h.b16 %v2358
    %v4970 = vunpack.c.l.b16 %v2359
    %v4971 = vunpack.c.h.b16 %v2359
    %v4972 = vunpack.c.l.b16 %v2360
    %v4973 = vunpack.c.h.b16 %v2360
    %v4974 = vunpack.c.l.b16 %v2361
    %v4975 = vunpack.c.h.b16 %v2361
    %v4976 = vunpack.c.l.b16 %v2362
    %v4977 = vunpack.c.h.b16 %v2362
    %v4978 = vunpack.c.l.b16 %v2363
    %v4979 = vunpack.c.h.b16 %v2363
    %v4980 = vunpack.c.l.b16 %v2364
    %v4981 = vunpack.c.h.b16 %v2364
    %v4982 = vunpack.c.l.b16 %v2365
    %v4983 = vunpack.c.h.b16 %v2365
    %v4984 = vunpack.c.l.b16 %v2366
    %v4985 = vunpack.c.h.b16 %v2366
    %v4986 = vunpack.c.l.b16 %v2367
    %v4987 = vunpack.c.h.b16 %v2367
    %v4988 = vunpack.c.l.b16 %v2368
    %v4989 = vunpack.c.h.b16 %v2368
    %v4990 = vunpack.c.l.b16 %v2369
    %v4991 = vunpack.c.h.b16 %v2369
    %v4992 = vunpack.c.l.b16 %v2370
    %v4993 = vunpack.c.h.b16 %v2370
    %v4994 = vunpack.c.l.b16 %v2371
    %v4995 = vunpack.c.h.b16 %v2371
    %v4996 = vunpack.c.l.b16 %v2372
    %v4997 = vunpack.c.h.b16 %v2372
    %v4998 = vunpack.c.l.b16 %v2373
    %v4999 = vunpack.c.h.b16 %v2373
    %v5000 = vunpack.c.l.b16 %v2374
    %v5001 = vunpack.c.h.b16 %v2374
    %v5002 = vunpack.c.l.b16 %v2375
    %v5003 = vunpack.c.h.b16 %v2375
    %v5004 = vunpack.c.l.b16 %v2376
    %v5005 = vunpack.c.h.b16 %v2376
    %v5006 = vunpack.c.l.b16 %v2377
    %v5007 = vunpack.c.h.b16 %v2377
    %v5008 = vunpack.c.l.b16 %v2378
    %v5009 = vunpack.c.h.b16 %v2378
    %v5010 = vunpack.c.l.b16 %v2379
    %v5011 = vunpack.c.h.b16 %v2379
    %v5012 = vunpack.c.l.b16 %v2380
    %v5013 = vunpack.c.h.b16 %v2380
    %v5014 = vunpack.c.l.b16 %v2381
    %v5015 = vunpack.c.h.b16 %v2381
    %v5016 = vunpack.c.l.b16 %v2382
    %v5017 = vunpack.c.h.b16 %v2382
    %v5018 = vunpack.c.l.b16 %v2383
    %v5019 = vunpack.c.h.b16 %v2383
    %v5020 = vunpack.c.l.b16 %v2384
    %v5021 = vunpack.c.h.b16 %v2384
    %v5022 = vunpack.c.l.b16 %v2385
    %v5023 = vunpack.c.h.b16 %v2385
    %v5024 = vunpack.c.l.b16 %v2386
    %v5025 = vunpack.c.h.b16 %v2386
    %v5026 = vunpack.c.l.b16 %v2387
    %v5027 = vunpack.c.h.b16 %v2387
    %v5028 = vunpack.c.l.b16 %v2388
    %v5029 = vunpack.c.h.b16 %v2388
    %v5030 = vunpack.c.l.b16 %v2389
    %v5031 = vunpack.c.h.b16 %v2389
    %v5032 = vunpack.c.l.b16 %v2390
    %v5033 = vunpack.c.h.b16 %v2390
    %v5034 = vunpack.c.l.b16 %v2391
    %v5035 = vunpack.c.h.b16 %v2391
    %v5036 = vunpack.c.l.b16 %v2392
    %v5037 = vunpack.c.h.b16 %v2392
    %v5038 = vunpack.c.l.b16 %v2393
    %v5039 = vunpack.c.h.b16 %v2393
    %v5040 = vunpack.c.l.b16 %v2394
    %v5041 = vunpack.c.h.b16 %v2394
    %v5042 = vunpack.c.l.b16 %v2395
    %v5043 = vunpack.c.h.b16 %v2395
    %v5044 = vunpack.c.l.b16 %v2396
    %v5045 = vunpack.c.h.b16 %v2396
    %v5046 = vunpack.c.l.b16 %v2397
    %v5047 = vunpack.c.h.b16 %v2397
    %v5048 = vunpack.c.l.b16 %v2398
    %v5049 = vunpack.c.h.b16 %v2398
    %v5050 = vunpack.c.l.b16 %v2399
    %v5051 = vunpack.c.h.b16 %v2399
    %v5052 = vunpack.c.l.b16 %v2400
    %v5053 = vunpack.c.h.b16 %v2400
    %v5054 = vunpack.c.l.b16 %v2401
    %v5055 = vunpack.c.h.b16 %v2401
    %v5056 = vunpack.c.l.b16 %v2402
    %v5057 = vunpack.c.h.b16 %v2402
    %v5058 = vunpack.c.l.b16 %v2403
    %v5059 = vunpack.c.h.b16 %v2403
    %v5060 = vunpack.c.l.b16 %v2404
    %v5061 = vunpack.c.h.b16 %v2404
    %v5062 = vunpack.c.l.b16 %v2405
    %v5063 = vunpack.c.h.b16 %v2405
    %v5064 = vunpack.c.l.b16 %v2406
    %v5065 = vunpack.c.h.b16 %v2406
    %v5066 = vunpack.c.l.b16 %v2407
    %v5067 = vunpack.c.h.b16 %v2407
    %v5068 = vunpack.c.l.b16 %v2408
    %v5069 = vunpack.c.h.b16 %v2408
    %v5070 = vunpack.c.l.b16 %v2409
    %v5071 = vunpack.c.h.b16 %v2409
    %v5072 = vunpack.c.l.b16 %v2410
    %v5073 = vunpack.c.h.b16 %v2410
    %v5074 = vunpack.c.l.b16 %v2411
    %v5075 = vunpack.c.h.b16 %v2411
    %v5076 = vunpack.c.l.b16 %v2412
    %v5077 = vunpack.c.h.b16 %v2412
    %v5078 = vunpack.c.l.b16 %v2413
    %v5079 = vunpack.c.h.b16 %v2413
    %v5080 = vunpack.c.l.b16 %v2414
    %v5081 = vunpack.c.h.b16 %v2414
    %v5082 = vunpack.c.l.b16 %v2415
    %v5083 = vunpack.c.h.b16 %v2415
    %v5084 = vunpack.c.l.b16 %v2416
    %v5085 = vunpack.c.h.b16 %v2416
    %v5086 = vunpack.c.l.b16 %v2417
    %v5087 = vunpack.c.h.b16 %v2417
    %v5088 = vunpack.c.l.b16 %v2418
    %v5089 = vunpack.c.h.b16 %v2418
    %v5090 = vunpack.c.l.b16 %v2419
    %v5091 = vunpack.c.h.b16 %v2419
    %v5092 = vunpack.c.l.b16 %v2420
    %v5093 = vunpack.c.h.b16 %v2420
    %v5094 = vunpack.c.l.b16 %v2421
    %v5095 = vunpack.c.h.b16 %v2421
    %v5096 = vunpack.c.l.b16 %v2422
    %v5097 = vunpack.c.h.b16 %v2422
    %v5098 = vunpack.c.l.b16 %v2423
    %v5099 = vunpack.c.h.b16 %v2423
    %v5100 = vunpack.c.l.b16 %v2424
    %v5101 = vunpack.c.h.b16 %v2424
    %v5102 = vunpack.c.l.b16 %v2425
    %v5103 = vunpack.c.h.b16 %v2425
    %v5104 = vunpack.c.l.b16 %v2426
    %v5105 = vunpack.c.h.b16 %v2426
    %v5106 = vunpack.c.l.b16 %v2427
    %v5107 = vunpack.c.h.b16 %v2427
    %v5108 = vunpack.c.l.b16 %v2428
    %v5109 = vunpack.c.h.b16 %v2428
    %v5110 = vunpack.c.l.b16 %v2429
    %v5111 = vunpack.c.h.b16 %v2429
    %v5112 = vunpack.c.l.b16 %v2430
    %v5113 = vunpack.c.h.b16 %v2430
    %v5114 = vunpack.c.l.b16 %v2431
    %v5115 = vunpack.c.h.b16 %v2431
    %v5116 = vunpack.c.l.b16 %v2432
    %v5117 = vunpack.c.h.b16 %v2432
    %v5118 = vunpack.c.l.b16 %v2433
    %v5119 = vunpack.c.h.b16 %v2433
    %v5120 = vunpack.c.l.b16 %v2434
    %v5121 = vunpack.c.h.b16 %v2434
    %v5122 = vunpack.c.l.b16 %v2435
    %v5123 = vunpack.c.h.b16 %v2435
    %v5124 = vunpack.c.l.b16 %v2436
    %v5125 = vunpack.c.h.b16 %v2436
    %v5126 = vunpack.c.l.b16 %v2437
    %v5127 = vunpack.c.h.b16 %v2437
    %v5128 = vunpack.c.l.b16 %v2438
    %v5129 = vunpack.c.h.b16 %v2438
    %v5130 = vunpack.c.l.b16 %v2439
    %v5131 = vunpack.c.h.b16 %v2439
    %v5132 = vunpack.c.l.b16 %v2440
    %v5133 = vunpack.c.h.b16 %v2440
    %v5134 = vunpack.c.l.b16 %v2441
    %v5135 = vunpack.c.h.b16 %v2441
    %v5136 = vunpack.c.l.b16 %v2442
    %v5137 = vunpack.c.h.b16 %v2442
    %v5138 = vunpack.c.l.b16 %v2443
    %v5139 = vunpack.c.h.b16 %v2443
    %v5140 = vunpack.c.l.b16 %v2444
    %v5141 = vunpack.c.h.b16 %v2444
    %v5142 = vunpack.c.l.b16 %v2445
    %v5143 = vunpack.c.h.b16 %v2445
    %v5144 = vunpack.c.l.b16 %v2446
    %v5145 = vunpack.c.h.b16 %v2446
    %v5146 = vunpack.c.l.b16 %v2447
    %v5147 = vunpack.c.h.b16 %v2447
    %v5148 = vunpack.c.l.b16 %v2448
    %v5149 = vunpack.c.h.b16 %v2448
    %v5150 = vunpack.c.l.b16 %v2449
    %v5151 = vunpack.c.h.b16 %v2449
    %v5152 = vunpack.c.l.b16 %v2450
    %v5153 = vunpack.c.h.b16 %v2450
    %v5154 = vunpack.c.l.b16 %v2451
    %v5155 = vunpack.c.h.b16 %v2451
    %v5156 = vunpack.c.l.b16 %v2452
    %v5157 = vunpack.c.h.b16 %v2452
    %v5158 = vunpack.c.l.b16 %v2453
    %v5159 = vunpack.c.h.b16 %v2453
    %v5160 = vunpack.c.l.b16 %v2454
    %v5161 = vunpack.c.h.b16 %v2454
    %v5162 = vunpack.c.l.b16 %v2455
    %v5163 = vunpack.c.h.b16 %v2455
    %v5164 = vunpack.c.l.b16 %v2456
    %v5165 = vunpack.c.h.b16 %v2456
    %v5166 = vunpack.c.l.b16 %v2457
    %v5167 = vunpack.c.h.b16 %v2457
    %v5168 = vunpack.c.l.b16 %v2458
    %v5169 = vunpack.c.h.b16 %v2458
    %v5170 = vunpack.c.l.b16 %v2459
    %v5171 = vunpack.c.h.b16 %v2459
    %v5172 = vunpack.c.l.b16 %v2460
    %v5173 = vunpack.c.h.b16 %v2460
    %v5174 = vunpack.c.l.b16 %v2461
    %v5175 = vunpack.c.h.b16 %v2461
    %v5176 = vunpack.c.l.b16 %v2462
    %v5177 = vunpack.c.h.b16 %v2462
    %v5178 = vunpack.c.l.b16 %v2463
    %v5179 = vunpack.c.h.b16 %v2463
    %v5180 = vunpack.c.l.b16 %v2464
    %v5181 = vunpack.c.h.b16 %v2464
    %v5182 = vunpack.c.l.b16 %v2465
    %v5183 = vunpack.c.h.b16 %v2465
    %v5184 = vunpack.c.l.b16 %v2466
    %v5185 = vunpack.c.h.b16 %v2466
    %v5186 = vunpack.c.l.b16 %v2467
    %v5187 = vunpack.c.h.b16 %v2467
    %v5188 = vunpack.c.l.b16 %v2468
    %v5189 = vunpack.c.h.b16 %v2468
    %v5190 = vunpack.c.l.b16 %v2469
    %v5191 = vunpack.c.h.b16 %v2469
    %v5192 = vunpack.c.l.b16 %v2470
    %v5193 = vunpack.c.h.b16 %v2470
    %v5194 = vunpack.c.l.b16 %v2471
    %v5195 = vunpack.c.h.b16 %v2471
    %v5196 = vunpack.c.l.b16 %v2472
    %v5197 = vunpack.c.h.b16 %v2472
    %v5198 = vunpack.c.l.b16 %v2473
    %v5199 = vunpack.c.h.b16 %v2473
    %v5200 = vunpack.c.l.b16 %v2474
    %v5201 = vunpack.c.h.b16 %v2474
    %v5202 = vunpack.c.l.b16 %v2475
    %v5203 = vunpack.c.h.b16 %v2475
    %v5204 = vunpack.c.l.b16 %v2476
    %v5205 = vunpack.c.h.b16 %v2476
    %v5206 = vunpack.c.l.b16 %v2477
    %v5207 = vunpack.c.h.b16 %v2477
    %v5208 = vunpack.c.l.b16 %v2478
    %v5209 = vunpack.c.h.b16 %v2478
    %v5210 = vunpack.c.l.b16 %v2479
    %v5211 = vunpack.c.h.b16 %v2479
    %v5212 = vunpack.c.l.b16 %v2480
    %v5213 = vunpack.c.h.b16 %v2480
    %v5214 = vunpack.c.l.b16 %v2481
    %v5215 = vunpack.c.h.b16 %v2481
    %v5216 = vunpack.c.l.b16 %v2482
    %v5217 = vunpack.c.h.b16 %v2482
    %v5218 = vunpack.c.l.b16 %v2483
    %v5219 = vunpack.c.h.b16 %v2483
    %v5220 = vunpack.c.l.b16 %v2484
    %v5221 = vunpack.c.h.b16 %v2484
    %v5222 = vunpack.c.l.b16 %v2485
    %v5223 = vunpack.c.h.b16 %v2485
    %v5224 = vunpack.c.l.b16 %v2486
    %v5225 = vunpack.c.h.b16 %v2486
    %v5226 = vunpack.c.l.b16 %v2487
    %v5227 = vunpack.c.h.b16 %v2487
    %v5228 = vunpack.c.l.b16 %v2488
    %v5229 = vunpack.c.h.b16 %v2488
    %v5230 = vunpack.c.l.b16 %v2489
    %v5231 = vunpack.c.h.b16 %v2489
    %v5232 = vunpack.c.l.b16 %v2490
    %v5233 = vunpack.c.h.b16 %v2490
    %v5234 = vunpack.c.l.b16 %v2491
    %v5235 = vunpack.c.h.b16 %v2491
    %v5236 = vunpack.c.l.b16 %v2492
    %v5237 = vunpack.c.h.b16 %v2492
    %v5238 = vunpack.c.l.b16 %v2493
    %v5239 = vunpack.c.h.b16 %v2493
    %v5240 = vunpack.c.l.b16 %v2494
    %v5241 = vunpack.c.h.b16 %v2494
    %v5242 = vunpack.c.l.b16 %v2495
    %v5243 = vunpack.c.h.b16 %v2495
    %v5244 = vunpack.c.l.b16 %v2496
    %v5245 = vunpack.c.h.b16 %v2496
    %v5246 = vunpack.c.l.b16 %v2497
    %v5247 = vunpack.c.h.b16 %v2497
    %v5248 = vunpack.c.l.b16 %v2498
    %v5249 = vunpack.c.h.b16 %v2498
    %v5250 = vunpack.c.l.b16 %v2499
    %v5251 = vunpack.c.h.b16 %v2499
    %v5252 = vunpack.c.l.b16 %v2500
    %v5253 = vunpack.c.h.b16 %v2500
    %v5254 = vunpack.c.l.b16 %v2501
    %v5255 = vunpack.c.h.b16 %v2501
    %v5256 = vunpack.c.l.b16 %v2502
    %v5257 = vunpack.c.h.b16 %v2502
    %v5258 = vunpack.c.l.b16 %v2503
    %v5259 = vunpack.c.h.b16 %v2503
    %v5260 = vunpack.c.l.b16 %v2504
    %v5261 = vunpack.c.h.b16 %v2504
    %v5262 = vunpack.c.l.b16 %v2505
    %v5263 = vunpack.c.h.b16 %v2505
    %v5264 = vunpack.c.l.b16 %v2506
    %v5265 = vunpack.c.h.b16 %v2506
    %v5266 = vunpack.c.l.b16 %v2507
    %v5267 = vunpack.c.h.b16 %v2507
    %v5268 = vunpack.c.l.b16 %v2508
    %v5269 = vunpack.c.h.b16 %v2508
    %v5270 = vunpack.c.l.b16 %v2509
    %v5271 = vunpack.c.h.b16 %v2509
    %v5272 = vunpack.c.l.b16 %v2510
    %v5273 = vunpack.c.h.b16 %v2510
    %v5274 = vunpack.c.l.b16 %v2511
    %v5275 = vunpack.c.h.b16 %v2511
    %v5276 = vunpack.c.l.b16 %v2512
    %v5277 = vunpack.c.h.b16 %v2512
    %v5278 = vunpack.c.l.b16 %v2513
    %v5279 = vunpack.c.h.b16 %v2513
    %v5280 = vunpack.c.l.b16 %v2514
    %v5281 = vunpack.c.h.b16 %v2514
    %v5282 = vunpack.c.l.b16 %v2515
    %v5283 = vunpack.c.h.b16 %v2515
    %v5284 = vunpack.c.l.b16 %v2516
    %v5285 = vunpack.c.h.b16 %v2516
    %v5286 = vunpack.c.l.b16 %v2517
    %v5287 = vunpack.c.h.b16 %v2517
    %v5288 = vunpack.c.l.b16 %v2518
    %v5289 = vunpack.c.h.b16 %v2518
    %v5290 = vunpack.c.l.b16 %v2519
    %v5291 = vunpack.c.h.b16 %v2519
    %v5292 = vunpack.c.l.b16 %v2520
    %v5293 = vunpack.c.h.b16 %v2520
    %v5294 = vunpack.c.l.b16 %v2521
    %v5295 = vunpack.c.h.b16 %v2521
    %v5296 = vunpack.c.l.b16 %v2522
    %v5297 = vunpack.c.h.b16 %v2522
    %v5298 = vunpack.c.l.b16 %v2523
    %v5299 = vunpack.c.h.b16 %v2523
    %v5300 = vunpack.c.l.b16 %v2524
    %v5301 = vunpack.c.h.b16 %v2524
    %v5302 = vunpack.c.l.b16 %v2525
    %v5303 = vunpack.c.h.b16 %v2525
    %v5304 = vunpack.c.l.b16 %v2526
    %v5305 = vunpack.c.h.b16 %v2526
    %v5306 = vunpack.c.l.b16 %v2527
    %v5307 = vunpack.c.h.b16 %v2527
    %v5308 = vunpack.c.l.b16 %v2528
    %v5309 = vunpack.c.h.b16 %v2528
    %v5310 = vunpack.c.l.b16 %v2529
    %v5311 = vunpack.c.h.b16 %v2529
    %v5312 = vunpack.c.l.b16 %v2530
    %v5313 = vunpack.c.h.b16 %v2530
    %v5314 = vunpack.c.l.b16 %v2531
    %v5315 = vunpack.c.h.b16 %v2531
    %v5316 = vunpack.c.l.b16 %v2532
    %v5317 = vunpack.c.h.b16 %v2532
    %v5318 = vunpack.c.l.b16 %v2533
    %v5319 = vunpack.c.h.b16 %v2533
    %v5320 = vunpack.c.l.b16 %v2534
    %v5321 = vunpack.c.h.b16 %v2534
    %v5322 = vunpack.c.l.b16 %v2535
    %v5323 = vunpack.c.h.b16 %v2535
    %v5324 = vunpack.c.l.b16 %v2536
    %v5325 = vunpack.c.h.b16 %v2536
    %v5326 = vunpack.c.l.b16 %v2537
    %v5327 = vunpack.c.h.b16 %v2537
    %v5328 = vunpack.c.l.b16 %v2538
    %v5329 = vunpack.c.h.b16 %v2538
    %v5330 = vunpack.c.l.b16 %v2539
    %v5331 = vunpack.c.h.b16 %v2539
    %v5332 = vunpack.c.l.b16 %v2540
    %v5333 = vunpack.c.h.b16 %v2540
    %v5334 = vunpack.c.l.b16 %v2541
    %v5335 = vunpack.c.h.b16 %v2541
    %v5336 = vunpack.c.l.b16 %v2542
    %v5337 = vunpack.c.h.b16 %v2542
    %v5338 = vunpack.c.l.b16 %v2543
    %v5339 = vunpack.c.h.b16 %v2543
    %v5340 = vunpack.c.l.b16 %v2544
    %v5341 = vunpack.c.h.b16 %v2544
    %v5342 = vunpack.c.l.b16 %v2545
    %v5343 = vunpack.c.h.b16 %v2545
    %v5344 = vunpack.c.l.b16 %v2546
    %v5345 = vunpack.c.h.b16 %v2546
    %v5346 = vunpack.c.l.b16 %v2547
    %v5347 = vunpack.c.h.b16 %v2547
    %v5348 = vunpack.c.l.b16 %v2548
    %v5349 = vunpack.c.h.b16 %v2548
    %v5350 = vunpack.c.l.b16 %v2549
    %v5351 = vunpack.c.h.b16 %v2549
    %v5352 = vunpack.c.l.b16 %v2550
    %v5353 = vunpack.c.h.b16 %v2550
    %v5354 = vunpack.c.l.b16 %v2551
    %v5355 = vunpack.c.h.b16 %v2551
    %v5356 = vunpack.c.l.b16 %v2552
    %v5357 = vunpack.c.h.b16 %v2552
    %v5358 = vunpack.c.l.b16 %v2553
    %v5359 = vunpack.c.h.b16 %v2553
    %v5360 = vunpack.c.l.b16 %v2554
    %v5361 = vunpack.c.h.b16 %v2554
    %v5362 = vunpack.c.l.b16 %v2555
    %v5363 = vunpack.c.h.b16 %v2555
    %v5364 = vunpack.c.l.b16 %v2556
    %v5365 = vunpack.c.h.b16 %v2556
    %v5366 = vunpack.c.l.b16 %v2557
    %v5367 = vunpack.c.h.b16 %v2557
    %v5368 = vunpack.c.l.b16 %v2558
    %v5369 = vunpack.c.h.b16 %v2558
    %v5370 = vunpack.c.l.b16 %v2559
    %v5371 = vunpack.c.h.b16 %v2559
    %v5372 = vunpack.c.l.b16 %v2560
    %v5373 = vunpack.c.h.b16 %v2560
    %v5374 = vunpack.c.l.b16 %v2561
    %v5375 = vunpack.c.h.b16 %v2561
    %v5376 = vunpack.c.l.b16 %v2562
    %v5377 = vunpack.c.h.b16 %v2562
    %v5378 = vunpack.c.l.b16 %v2563
    %v5379 = vunpack.c.h.b16 %v2563
    %v5380 = vunpack.c.l.b16 %v2564
    %v5381 = vunpack.c.h.b16 %v2564
    %v5382 = vunpack.c.l.b16 %v2565
    %v5383 = vunpack.c.h.b16 %v2565
    %v5384 = vunpack.c.l.b16 %v2566
    %v5385 = vunpack.c.h.b16 %v2566
    %v5386 = vunpack.c.l.b16 %v2567
    %v5387 = vunpack.c.h.b16 %v2567
    %v5388 = vunpack.c.l.b16 %v2568
    %v5389 = vunpack.c.h.b16 %v2568
    %v5390 = vunpack.c.l.b16 %v2569
    %v5391 = vunpack.c.h.b16 %v2569
    %v5392 = vunpack.c.l.b16 %v2570
    %v5393 = vunpack.c.h.b16 %v2570
    %v5394 = vunpack.c.l.b16 %v2571
    %v5395 = vunpack.c.h.b16 %v2571
    %v5396 = vunpack.c.l.b16 %v2572
    %v5397 = vunpack.c.h.b16 %v2572
    %v5398 = vunpack.c.l.b16 %v2573
    %v5399 = vunpack.c.h.b16 %v2573
    %v5400 = vunpack.c.l.b16 %v2574
    %v5401 = vunpack.c.h.b16 %v2574
    %v5402 = vunpack.c.l.b16 %v2575
    %v5403 = vunpack.c.h.b16 %v2575
    %v5404 = vunpack.c.l.b16 %v2576
    %v5405 = vunpack.c.h.b16 %v2576
    %v5406 = vunpack.c.l.b16 %v2577
    %v5407 = vunpack.c.h.b16 %v2577
    %v5408 = vunpack.c.l.b16 %v2578
    %v5409 = vunpack.c.h.b16 %v2578
    %v5410 = vunpack.c.l.b16 %v2579
    %v5411 = vunpack.c.h.b16 %v2579
    %v5412 = vunpack.c.l.b16 %v2580
    %v5413 = vunpack.c.h.b16 %v2580
    %v5414 = vunpack.c.l.b16 %v2581
    %v5415 = vunpack.c.h.b16 %v2581
    %v5416 = vunpack.c.l.b16 %v2582
    %v5417 = vunpack.c.h.b16 %v2582
    %v5418 = vunpack.c.l.b16 %v2583
    %v5419 = vunpack.c.h.b16 %v2583
    %v5420 = vunpack.c.l.b16 %v2584
    %v5421 = vunpack.c.h.b16 %v2584
    %v5422 = vunpack.c.l.b16 %v2585
    %v5423 = vunpack.c.h.b16 %v2585
    %v5424 = vunpack.c.l.b16 %v2586
    %v5425 = vunpack.c.h.b16 %v2586
    %v5426 = vunpack.c.l.b16 %v2587
    %v5427 = vunpack.c.h.b16 %v2587
    %v5428 = vunpack.c.l.b16 %v2588
    %v5429 = vunpack.c.h.b16 %v2588
    %v5430 = vpack.c.b16 %v3546, %v3542
    %v5431 = vpack.c.b16 %v3547, %v3543
    %v5432 = vpack.c.b16 %v3548, %v3544
    %v5433 = vpack.c.b16 %v3549, %v3545
    %v5434 = vpack.c.b16 %v3554, %v3550
    %v5435 = vpack.c.b16 %v3555, %v3551
    %v5436 = vpack.c.b16 %v3556, %v3552
    %v5437 = vpack.c.b16 %v3557, %v3553
    %v5438 = vpack.c.b16 %v3562, %v3558
    %v5439 = vpack.c.b16 %v3563, %v3559
    %v5440 = vpack.c.b16 %v3564, %v3560
    %v5441 = vpack.c.b16 %v3565, %v3561
    %v5442 = vpack.c.b16 %v3570, %v3566
    %v5443 = vpack.c.b16 %v3571, %v3567
    %v5444 = vpack.c.b16 %v3572, %v3568
    %v5445 = vpack.c.b16 %v3573, %v3569
    %v5446 = vpack.c.b16 %v3578, %v3574
    %v5447 = vpack.c.b16 %v3579, %v3575
    %v5448 = vpack.c.b16 %v3580, %v3576
    %v5449 = vpack.c.b16 %v3581, %v3577
    %v5450 = vpack.c.b16 %v3586, %v3582
    %v5451 = vpack.c.b16 %v3587, %v3583
    %v5452 = vpack.c.b16 %v3588, %v3584
    %v5453 = vpack.c.b16 %v3589, %v3585
    %v5454 = vpack.c.b16 %v3594, %v3590
    %v5455 = vpack.c.b16 %v3595, %v3591
    %v5456 = vpack.c.b16 %v3596, %v3592
    %v5457 = vpack.c.b16 %v3597, %v3593
    %v5458 = vpack.c.b16 %v3602, %v3598
    %v5459 = vpack.c.b16 %v3603, %v3599
    %v5460 = vpack.c.b16 %v3604, %v3600
    %v5461 = vpack.c.b16 %v3605, %v3601
    %v5462 = vpack.c.b16 %v3610, %v3606
    %v5463 = vpack.c.b16 %v3611, %v3607
    %v5464 = vpack.c.b16 %v3612, %v3608
    %v5465 = vpack.c.b16 %v3613, %v3609
    %v5466 = vpack.c.b16 %v3618, %v3614
    %v5467 = vpack.c.b16 %v3619, %v3615
    %v5468 = vpack.c.b16 %v3620, %v3616
    %v5469 = vpack.c.b16 %v3621, %v3617
    %v5470 = vpack.c.b16 %v3626, %v3622
    %v5471 = vpack.c.b16 %v3627, %v3623
    %v5472 = vpack.c.b16 %v3628, %v3624
    %v5473 = vpack.c.b16 %v3629, %v3625
    %v5474 = vpack.c.b16 %v3634, %v3630
    %v5475 = vpack.c.b16 %v3635, %v3631
    %v5476 = vpack.c.b16 %v3636, %v3632
    %v5477 = vpack.c.b16 %v3637, %v3633
    %v5478 = vpack.c.b16 %v3642, %v3638
    %v5479 = vpack.c.b16 %v3643, %v3639
    %v5480 = vpack.c.b16 %v3644, %v3640
    %v5481 = vpack.c.b16 %v3645, %v3641
    %v5482 = vpack.c.b16 %v3650, %v3646
    %v5483 = vpack.c.b16 %v3651, %v3647
    %v5484 = vpack.c.b16 %v3652, %v3648
    %v5485 = vpack.c.b16 %v3653, %v3649
    %v5486 = vpack.c.b16 %v3658, %v3654
    %v5487 = vpack.c.b16 %v3659, %v3655
    %v5488 = vpack.c.b16 %v3660, %v3656
    %v5489 = vpack.c.b16 %v3661, %v3657
    %v5490 = vpack.c.b16 %v3666, %v3662
    %v5491 = vpack.c.b16 %v3667, %v3663
    %v5492 = vpack.c.b16 %v3668, %v3664
    %v5493 = vpack.c.b16 %v3669, %v3665
    %v5494 = vpack.c.b16 %v3674, %v3670
    %v5495 = vpack.c.b16 %v3675, %v3671
    %v5496 = vpack.c.b16 %v3676, %v3672
    %v5497 = vpack.c.b16 %v3677, %v3673
    %v5498 = vpack.c.b16 %v3682, %v3678
    %v5499 = vpack.c.b16 %v3683, %v3679
    %v5500 = vpack.c.b16 %v3684, %v3680
    %v5501 = vpack.c.b16 %v3685, %v3681
    %v5502 = vpack.c.b16 %v3690, %v3686
    %v5503 = vpack.c.b16 %v3691, %v3687
    %v5504 = vpack.c.b16 %v3692, %v3688
    %v5505 = vpack.c.b16 %v3693, %v3689
    %v5506 = vpack.c.b16 %v3698, %v3694
    %v5507 = vpack.c.b16 %v3699, %v3695
    %v5508 = vpack.c.b16 %v3700, %v3696
    %v5509 = vpack.c.b16 %v3701, %v3697
    %v5510 = vpack.c.b16 %v3706, %v3702
    %v5511 = vpack.c.b16 %v3707, %v3703
    %v5512 = vpack.c.b16 %v3708, %v3704
    %v5513 = vpack.c.b16 %v3709, %v3705
    %v5514 = vpack.c.b16 %v3714, %v3710
    %v5515 = vpack.c.b16 %v3715, %v3711
    %v5516 = vpack.c.b16 %v3716, %v3712
    %v5517 = vpack.c.b16 %v3717, %v3713
    %v5518 = vpack.c.b16 %v3722, %v3718
    %v5519 = vpack.c.b16 %v3723, %v3719
    %v5520 = vpack.c.b16 %v3724, %v3720
    %v5521 = vpack.c.b16 %v3725, %v3721
    %v5522 = vpack.c.b16 %v3730, %v3726
    %v5523 = vpack.c.b16 %v3731, %v3727
    %v5524 = vpack.c.b16 %v3732, %v3728
    %v5525 = vpack.c.b16 %v3733, %v3729
    %v5526 = vpack.c.b16 %v3738, %v3734
    %v5527 = vpack.c.b16 %v3739, %v3735
    %v5528 = vpack.c.b16 %v3740, %v3736
    %v5529 = vpack.c.b16 %v3741, %v3737
    %v5530 = vpack.c.b16 %v3746, %v3742
    %v5531 = vpack.c.b16 %v3747, %v3743
    %v5532 = vpack.c.b16 %v3748, %v3744
    %v5533 = vpack.c.b16 %v3749, %v3745
    %v5534 = vpack.c.b16 %v3754, %v3750
    %v5535 = vpack.c.b16 %v3755, %v3751
    %v5536 = vpack.c.b16 %v3756, %v3752
    %v5537 = vpack.c.b16 %v3757, %v3753
    %v5538 = vpack.c.b16 %v3762, %v3758
    %v5539 = vpack.c.b16 %v3763, %v3759
    %v5540 = vpack.c.b16 %v3764, %v3760
    %v5541 = vpack.c.b16 %v3765, %v3761
    %v5542 = vpack.c.b16 %v3770, %v3766
    %v5543 = vpack.c.b16 %v3771, %v3767
    %v5544 = vpack.c.b16 %v3772, %v3768
    %v5545 = vpack.c.b16 %v3773, %v3769
    %v5546 = vpack.c.b16 %v3778, %v3774
    %v5547 = vpack.c.b16 %v3779, %v3775
    %v5548 = vpack.c.b16 %v3780, %v3776
    %v5549 = vpack.c.b16 %v3781, %v3777
    %v5550 = vpack.c.b16 %v3786, %v3782
    %v5551 = vpack.c.b16 %v3787, %v3783
    %v5552 = vpack.c.b16 %v3788, %v3784
    %v5553 = vpack.c.b16 %v3789, %v3785
    %v5554 = vpack.c.b16 %v3794, %v3790
    %v5555 = vpack.c.b16 %v3795, %v3791
    %v5556 = vpack.c.b16 %v3796, %v3792
    %v5557 = vpack.c.b16 %v3797, %v3793
    %v5558 = vpack.c.b16 %v3802, %v3798
    %v5559 = vpack.c.b16 %v3803, %v3799
    %v5560 = vpack.c.b16 %v3804, %v3800
    %v5561 = vpack.c.b16 %v3805, %v3801
    %v5562 = vpack.c.b16 %v3810, %v3806
    %v5563 = vpack.c.b16 %v3811, %v3807
    %v5564 = vpack.c.b16 %v3812, %v3808
    %v5565 = vpack.c.b16 %v3813, %v3809
    %v5566 = vpack.c.b16 %v3818, %v3814
    %v5567 = vpack.c.b16 %v3819, %v3815
    %v5568 = vpack.c.b16 %v3820, %v3816
    %v5569 = vpack.c.b16 %v3821, %v3817
    %v5570 = vpack.c.b16 %v3826, %v3822
    %v5571 = vpack.c.b16 %v3827, %v3823
    %v5572 = vpack.c.b16 %v3828, %v3824
    %v5573 = vpack.c.b16 %v3829, %v3825
    %v5574 = vpack.c.b16 %v3834, %v3830
    %v5575 = vpack.c.b16 %v3835, %v3831
    %v5576 = vpack.c.b16 %v3836, %v3832
    %v5577 = vpack.c.b16 %v3837, %v3833
    %v5578 = vpack.c.b16 %v3842, %v3838
    %v5579 = vpack.c.b16 %v3843, %v3839
    %v5580 = vpack.c.b16 %v3844, %v3840
    %v5581 = vpack.c.b16 %v3845, %v3841
    %v5582 = vpack.c.b16 %v3850, %v3846
    %v5583 = vpack.c.b16 %v3851, %v3847
    %v5584 = vpack.c.b16 %v3852, %v3848
    %v5585 = vpack.c.b16 %v3853, %v3849
    %v5586 = vpack.c.b16 %v3858, %v3854
    %v5587 = vpack.c.b16 %v3859, %v3855
    %v5588 = vpack.c.b16 %v3860, %v3856
    %v5589 = vpack.c.b16 %v3861, %v3857
    %v5590 = vpack.c.b16 %v3866, %v3862
    %v5591 = vpack.c.b16 %v3867, %v3863
    %v5592 = vpack.c.b16 %v3868, %v3864
    %v5593 = vpack.c.b16 %v3869, %v3865
    %v5594 = vpack.c.b16 %v3874, %v3870
    %v5595 = vpack.c.b16 %v3875, %v3871
    %v5596 = vpack.c.b16 %v3876, %v3872
    %v5597 = vpack.c.b16 %v3877, %v3873
    %v5598 = vpack.c.b16 %v3882, %v3878
    %v5599 = vpack.c.b16 %v3883, %v3879
    %v5600 = vpack.c.b16 %v3884, %v3880
    %v5601 = vpack.c.b16 %v3885, %v3881
    %v5602 = vpack.c.b16 %v3890, %v3886
    %v5603 = vpack.c.b16 %v3891, %v3887
    %v5604 = vpack.c.b16 %v3892, %v3888
    %v5605 = vpack.c.b16 %v3893, %v3889
    %v5606 = vpack.c.b16 %v3898, %v3894
    %v5607 = vpack.c.b16 %v3899, %v3895
    %v5608 = vpack.c.b16 %v3900, %v3896
    %v5609 = vpack.c.b16 %v3901, %v3897
    %v5610 = vpack.c.b16 %v3906, %v3902
    %v5611 = vpack.c.b16 %v3907, %v3903
    %v5612 = vpack.c.b16 %v3908, %v3904
    %v5613 = vpack.c.b16 %v3909, %v3905
    %v5614 = vpack.c.b16 %v3914, %v3910
    %v5615 = vpack.c.b16 %v3915, %v3911
    %v5616 = vpack.c.b16 %v3916, %v3912
    %v5617 = vpack.c.b16 %v3917, %v3913
    %v5618 = vpack.c.b16 %v3922, %v3918
    %v5619 = vpack.c.b16 %v3923, %v3919
    %v5620 = vpack.c.b16 %v3924, %v3920
    %v5621 = vpack.c.b16 %v3925, %v3921
    %v5622 = vpack.c.b16 %v3930, %v3926
    %v5623 = vpack.c.b16 %v3931, %v3927
    %v5624 = vpack.c.b16 %v3932, %v3928
    %v5625 = vpack.c.b16 %v3933, %v3929
    %v5626 = vpack.c.b16 %v3938, %v3934
    %v5627 = vpack.c.b16 %v3939, %v3935
    %v5628 = vpack.c.b16 %v3940, %v3936
    %v5629 = vpack.c.b16 %v3941, %v3937
    %v5630 = vpack.c.b16 %v3946, %v3942
    %v5631 = vpack.c.b16 %v3947, %v3943
    %v5632 = vpack.c.b16 %v3948, %v3944
    %v5633 = vpack.c.b16 %v3949, %v3945
    %v5634 = vpack.c.b16 %v3954, %v3950
    %v5635 = vpack.c.b16 %v3955, %v3951
    %v5636 = vpack.c.b16 %v3956, %v3952
    %v5637 = vpack.c.b16 %v3957, %v3953
    %v5638 = vpack.c.b16 %v3962, %v3958
    %v5639 = vpack.c.b16 %v3963, %v3959
    %v5640 = vpack.c.b16 %v3964, %v3960
    %v5641 = vpack.c.b16 %v3965, %v3961
    %v5642 = vpack.c.b16 %v3970, %v3966
    %v5643 = vpack.c.b16 %v3971, %v3967
    %v5644 = vpack.c.b16 %v3972, %v3968
    %v5645 = vpack.c.b16 %v3973, %v3969
    %v5646 = vpack.c.b16 %v3978, %v3974
    %v5647 = vpack.c.b16 %v3979, %v3975
    %v5648 = vpack.c.b16 %v3980, %v3976
    %v5649 = vpack.c.b16 %v3981, %v3977
    %v5650 = vpack.c.b16 %v3986, %v3982
    %v5651 = vpack.c.b16 %v3987, %v3983
    %v5652 = vpack.c.b16 %v3988, %v3984
    %v5653 = vpack.c.b16 %v3989, %v3985
    %v5654 = vpack.c.b16 %v3994, %v3990
    %v5655 = vpack.c.b16 %v3995, %v3991
    %v5656 = vpack.c.b16 %v3996, %v3992
    %v5657 = vpack.c.b16 %v3997, %v3993
    %v5658 = vpack.c.b16 %v4002, %v3998
    %v5659 = vpack.c.b16 %v4003, %v3999
    %v5660 = vpack.c.b16 %v4004, %v4000
    %v5661 = vpack.c.b16 %v4005, %v4001
    %v5662 = vpack.c.b16 %v4010, %v4006
    %v5663 = vpack.c.b16 %v4011, %v4007
    %v5664 = vpack.c.b16 %v4012, %v4008
    %v5665 = vpack.c.b16 %v4013, %v4009
    %v5666 = vpack.c.b16 %v4018, %v4014
    %v5667 = vpack.c.b16 %v4019, %v4015
    %v5668 = vpack.c.b16 %v4020, %v4016
    %v5669 = vpack.c.b16 %v4021, %v4017
    %v5670 = vpack.c.b16 %v4026, %v4022
    %v5671 = vpack.c.b16 %v4027, %v4023
    %v5672 = vpack.c.b16 %v4028, %v4024
    %v5673 = vpack.c.b16 %v4029, %v4025
    %v5674 = vpack.c.b16 %v4034, %v4030
    %v5675 = vpack.c.b16 %v4035, %v4031
    %v5676 = vpack.c.b16 %v4036, %v4032
    %v5677 = vpack.c.b16 %v4037, %v4033
    %v5678 = vpack.c.b16 %v4042, %v4038
    %v5679 = vpack.c.b16 %v4043, %v4039
    %v5680 = vpack.c.b16 %v4044, %v4040
    %v5681 = vpack.c.b16 %v4045, %v4041
    %v5682 = vpack.c.b16 %v4050, %v4046
    %v5683 = vpack.c.b16 %v4051, %v4047
    %v5684 = vpack.c.b16 %v4052, %v4048
    %v5685 = vpack.c.b16 %v4053, %v4049
    %v5686 = vpack.c.b16 %v4058, %v4054
    %v5687 = vpack.c.b16 %v4059, %v4055
    %v5688 = vpack.c.b16 %v4060, %v4056
    %v5689 = vpack.c.b16 %v4061, %v4057
    %v5690 = vpack.c.b16 %v4066, %v4062
    %v5691 = vpack.c.b16 %v4067, %v4063
    %v5692 = vpack.c.b16 %v4068, %v4064
    %v5693 = vpack.c.b16 %v4069, %v4065
    %v5694 = vpack.c.b16 %v4074, %v4070
    %v5695 = vpack.c.b16 %v4075, %v4071
    %v5696 = vpack.c.b16 %v4076, %v4072
    %v5697 = vpack.c.b16 %v4077, %v4073
    %v5698 = vpack.c.b16 %v4082, %v4078
    %v5699 = vpack.c.b16 %v4083, %v4079
    %v5700 = vpack.c.b16 %v4084, %v4080
    %v5701 = vpack.c.b16 %v4085, %v4081
    %v5702 = vpack.c.b16 %v4090, %v4086
    %v5703 = vpack.c.b16 %v4091, %v4087
    %v5704 = vpack.c.b16 %v4092, %v4088
    %v5705 = vpack.c.b16 %v4093, %v4089
    %v5706 = vpack.c.b16 %v4098, %v4094
    %v5707 = vpack.c.b16 %v4099, %v4095
    %v5708 = vpack.c.b16 %v4100, %v4096
    %v5709 = vpack.c.b16 %v4101, %v4097
    %v5710 = vpack.c.b16 %v4106, %v4102
    %v5711 = vpack.c.b16 %v4107, %v4103
    %v5712 = vpack.c.b16 %v4108, %v4104
    %v5713 = vpack.c.b16 %v4109, %v4105
    %v5714 = vpack.c.b16 %v4114, %v4110
    %v5715 = vpack.c.b16 %v4115, %v4111
    %v5716 = vpack.c.b16 %v4116, %v4112
    %v5717 = vpack.c.b16 %v4117, %v4113
    %v5718 = vpack.c.b16 %v4122, %v4118
    %v5719 = vpack.c.b16 %v4123, %v4119
    %v5720 = vpack.c.b16 %v4124, %v4120
    %v5721 = vpack.c.b16 %v4125, %v4121
    %v5722 = vpack.c.b16 %v4130, %v4126
    %v5723 = vpack.c.b16 %v4131, %v4127
    %v5724 = vpack.c.b16 %v4132, %v4128
    %v5725 = vpack.c.b16 %v4133, %v4129
    %v5726 = vpack.c.b16 %v4138, %v4134
    %v5727 = vpack.c.b16 %v4139, %v4135
    %v5728 = vpack.c.b16 %v4140, %v4136
    %v5729 = vpack.c.b16 %v4141, %v4137
    %v5730 = vpack.c.b16 %v4146, %v4142
    %v5731 = vpack.c.b16 %v4147, %v4143
    %v5732 = vpack.c.b16 %v4148, %v4144
    %v5733 = vpack.c.b16 %v4149, %v4145
    %v5734 = vpack.c.b16 %v4154, %v4150
    %v5735 = vpack.c.b16 %v4155, %v4151
    %v5736 = vpack.c.b16 %v4156, %v4152
    %v5737 = vpack.c.b16 %v4157, %v4153
    %v5738 = vpack.c.b16 %v4162, %v4158
    %v5739 = vpack.c.b16 %v4163, %v4159
    %v5740 = vpack.c.b16 %v4164, %v4160
    %v5741 = vpack.c.b16 %v4165, %v4161
    %v5742 = vpack.c.b16 %v4170, %v4166
    %v5743 = vpack.c.b16 %v4171, %v4167
    %v5744 = vpack.c.b16 %v4172, %v4168
    %v5745 = vpack.c.b16 %v4173, %v4169
    %v5746 = vpack.c.b16 %v4178, %v4174
    %v5747 = vpack.c.b16 %v4179, %v4175
    %v5748 = vpack.c.b16 %v4180, %v4176
    %v5749 = vpack.c.b16 %v4181, %v4177
    %v5750 = vpack.c.b16 %v4186, %v4182
    %v5751 = vpack.c.b16 %v4187, %v4183
    %v5752 = vpack.c.b16 %v4188, %v4184
    %v5753 = vpack.c.b16 %v4189, %v4185
    %v5754 = vpack.c.b16 %v4194, %v4190
    %v5755 = vpack.c.b16 %v4195, %v4191
    %v5756 = vpack.c.b16 %v4196, %v4192
    %v5757 = vpack.c.b16 %v4197, %v4193
    %v5758 = vpack.c.b16 %v4202, %v4198
    %v5759 = vpack.c.b16 %v4203, %v4199
    %v5760 = vpack.c.b16 %v4204, %v4200
    %v5761 = vpack.c.b16 %v4205, %v4201
    %v5762 = vpack.c.b16 %v4210, %v4206
    %v5763 = vpack.c.b16 %v4211, %v4207
    %v5764 = vpack.c.b16 %v4212, %v4208
    %v5765 = vpack.c.b16 %v4213, %v4209
    %v5766 = vpack.c.b16 %v4218, %v4214
    %v5767 = vpack.c.b16 %v4219, %v4215
    %v5768 = vpack.c.b16 %v4220, %v4216
    %v5769 = vpack.c.b16 %v4221, %v4217
    %v5770 = vpack.c.b16 %v4226, %v4222
    %v5771 = vpack.c.b16 %v4227, %v4223
    %v5772 = vpack.c.b16 %v4228, %v4224
    %v5773 = vpack.c.b16 %v4229, %v4225
    %v5774 = vpack.c.b16 %v4234, %v4230
    %v5775 = vpack.c.b16 %v4235, %v4231
    %v5776 = vpack.c.b16 %v4236, %v4232
    %v5777 = vpack.c.b16 %v4237, %v4233
    %v5778 = vpack.c.b16 %v4242, %v4238
    %v5779 = vpack.c.b16 %v4243, %v4239
    %v5780 = vpack.c.b16 %v4244, %v4240
    %v5781 = vpack.c.b16 %v4245, %v4241
    %v5782 = vpack.c.b16 %v4250, %v4246
    %v5783 = vpack.c.b16 %v4251, %v4247
    %v5784 = vpack.c.b16 %v4252, %v4248
    %v5785 = vpack.c.b16 %v4253, %v4249
    %v5786 = vpack.c.b16 %v4258, %v4254
    %v5787 = vpack.c.b16 %v4259, %v4255
    %v5788 = vpack.c.b16 %v4260, %v4256
    %v5789 = vpack.c.b16 %v4261, %v4257
    %v5790 = vpack.c.b16 %v4266, %v4262
    %v5791 = vpack.c.b16 %v4267, %v4263
    %v5792 = vpack.c.b16 %v4268, %v4264
    %v5793 = vpack.c.b16 %v4269, %v4265
    %v5794 = vpack.c.b16 %v4274, %v4270
    %v5795 = vpack.c.b16 %v4275, %v4271
    %v5796 = vpack.c.b16 %v4276, %v4272
    %v5797 = vpack.c.b16 %v4277, %v4273
    %v5798 = vpack.c.b16 %v4282, %v4278
    %v5799 = vpack.c.b16 %v4283, %v4279
    %v5800 = vpack.c.b16 %v4284, %v4280
    %v5801 = vpack.c.b16 %v4285, %v4281
    %v5802 = vpack.c.b16 %v4290, %v4286
    %v5803 = vpack.c.b16 %v4291, %v4287
    %v5804 = vpack.c.b16 %v4292, %v4288
    %v5805 = vpack.c.b16 %v4293, %v4289
    %v5806 = vpack.c.b16 %v4298, %v4294
    %v5807 = vpack.c.b16 %v4299, %v4295
    %v5808 = vpack.c.b16 %v4300, %v4296
    %v5809 = vpack.c.b16 %v4301, %v4297
    %v5810 = vpack.c.b16 %v4306, %v4302
    %v5811 = vpack.c.b16 %v4307, %v4303
    %v5812 = vpack.c.b16 %v4308, %v4304
    %v5813 = vpack.c.b16 %v4309, %v4305
    %v5814 = vpack.c.b16 %v4314, %v4310
    %v5815 = vpack.c.b16 %v4315, %v4311
    %v5816 = vpack.c.b16 %v4316, %v4312
    %v5817 = vpack.c.b16 %v4317, %v4313
    %v5818 = vpack.c.b16 %v4322, %v4318
    %v5819 = vpack.c.b16 %v4323, %v4319
    %v5820 = vpack.c.b16 %v4324, %v4320
    %v5821 = vpack.c.b16 %v4325, %v4321
    %v5822 = vpack.c.b16 %v4330, %v4326
    %v5823 = vpack.c.b16 %v4331, %v4327
    %v5824 = vpack.c.b16 %v4332, %v4328
    %v5825 = vpack.c.b16 %v4333, %v4329
    %v5826 = vpack.c.b16 %v4338, %v4334
    %v5827 = vpack.c.b16 %v4339, %v4335
    %v5828 = vpack.c.b16 %v4340, %v4336
    %v5829 = vpack.c.b16 %v4341, %v4337
    %v5830 = vpack.c.b16 %v4346, %v4342
    %v5831 = vpack.c.b16 %v4347, %v4343
    %v5832 = vpack.c.b16 %v4348, %v4344
    %v5833 = vpack.c.b16 %v4349, %v4345
    %v5834 = vpack.c.b16 %v4354, %v4350
    %v5835 = vpack.c.b16 %v4355, %v4351
    %v5836 = vpack.c.b16 %v4356, %v4352
    %v5837 = vpack.c.b16 %v4357, %v4353
    %v5838 = vpack.c.b16 %v4362, %v4358
    %v5839 = vpack.c.b16 %v4363, %v4359
    %v5840 = vpack.c.b16 %v4364, %v4360
    %v5841 = vpack.c.b16 %v4365, %v4361
    %v5842 = vpack.c.b16 %v4370, %v4366
    %v5843 = vpack.c.b16 %v4371, %v4367
    %v5844 = vpack.c.b16 %v4372, %v4368
    %v5845 = vpack.c.b16 %v4373, %v4369
    %v5846 = vpack.c.b16 %v4378, %v4374
    %v5847 = vpack.c.b16 %v4379, %v4375
    %v5848 = vpack.c.b16 %v4380, %v4376
    %v5849 = vpack.c.b16 %v4381, %v4377
    %v5850 = vpack.c.b16 %v4386, %v4382
    %v5851 = vpack.c.b16 %v4387, %v4383
    %v5852 = vpack.c.b16 %v4388, %v4384
    %v5853 = vpack.c.b16 %v4389, %v4385
    %v5854 = vpack.c.b16 %v4394, %v4390
    %v5855 = vpack.c.b16 %v4395, %v4391
    %v5856 = vpack.c.b16 %v4396, %v4392
    %v5857 = vpack.c.b16 %v4397, %v4393
    %v5858 = vpack.c.b16 %v4402, %v4398
    %v5859 = vpack.c.b16 %v4403, %v4399
    %v5860 = vpack.c.b16 %v4404, %v4400
    %v5861 = vpack.c.b16 %v4405, %v4401
    %v5862 = vpack.c.b16 %v4410, %v4406
    %v5863 = vpack.c.b16 %v4411, %v4407
    %v5864 = vpack.c.b16 %v4412, %v4408
    %v5865 = vpack.c.b16 %v4413, %v4409
    %v5866 = vpack.c.b16 %v4418, %v4414
    %v5867 = vpack.c.b16 %v4419, %v4415
    %v5868 = vpack.c.b16 %v4420, %v4416
    %v5869 = vpack.c.b16 %v4421, %v4417
    %v5870 = vpack.c.b16 %v4426, %v4422
    %v5871 = vpack.c.b16 %v4427, %v4423
    %v5872 = vpack.c.b16 %v4428, %v4424
    %v5873 = vpack.c.b16 %v4429, %v4425
    %v5874 = vpack.c.b16 %v4434, %v4430
    %v5875 = vpack.c.b16 %v4435, %v4431
    %v5876 = vpack.c.b16 %v4436, %v4432
    %v5877 = vpack.c.b16 %v4437, %v4433
    %v5878 = vpack.c.b16 %v4442, %v4438
    %v5879 = vpack.c.b16 %v4443, %v4439
    %v5880 = vpack.c.b16 %v4444, %v4440
    %v5881 = vpack.c.b16 %v4445, %v4441
    %v5882 = vpack.c.b16 %v4450, %v4446
    %v5883 = vpack.c.b16 %v4451, %v4447
    %v5884 = vpack.c.b16 %v4452, %v4448
    %v5885 = vpack.c.b16 %v4453, %v4449
    %v5886 = vpack.c.b16 %v4458, %v4454
    %v5887 = vpack.c.b16 %v4459, %v4455
    %v5888 = vpack.c.b16 %v4460, %v4456
    %v5889 = vpack.c.b16 %v4461, %v4457
    %v5890 = vpack.c.b16 %v4466, %v4462
    %v5891 = vpack.c.b16 %v4467, %v4463
    %v5892 = vpack.c.b16 %v4468, %v4464
    %v5893 = vpack.c.b16 %v4469, %v4465
    %v5894 = vpack.c.b16 %v4474, %v4470
    %v5895 = vpack.c.b16 %v4475, %v4471
    %v5896 = vpack.c.b16 %v4476, %v4472
    %v5897 = vpack.c.b16 %v4477, %v4473
    %v5898 = vpack.c.b16 %v4482, %v4478
    %v5899 = vpack.c.b16 %v4483, %v4479
    %v5900 = vpack.c.b16 %v4484, %v4480
    %v5901 = vpack.c.b16 %v4485, %v4481
    %v5902 = vpack.c.b16 %v4490, %v4486
    %v5903 = vpack.c.b16 %v4491, %v4487
    %v5904 = vpack.c.b16 %v4492, %v4488
    %v5905 = vpack.c.b16 %v4493, %v4489
    %v5906 = vpack.c.b16 %v4498, %v4494
    %v5907 = vpack.c.b16 %v4499, %v4495
    %v5908 = vpack.c.b16 %v4500, %v4496
    %v5909 = vpack.c.b16 %v4501, %v4497
    %v5910 = vpack.c.b16 %v4506, %v4502
    %v5911 = vpack.c.b16 %v4507, %v4503
    %v5912 = vpack.c.b16 %v4508, %v4504
    %v5913 = vpack.c.b16 %v4509, %v4505
    %v5914 = vpack.c.b16 %v4514, %v4510
    %v5915 = vpack.c.b16 %v4515, %v4511
    %v5916 = vpack.c.b16 %v4516, %v4512
    %v5917 = vpack.c.b16 %v4517, %v4513
    %v5918 = vpack.c.b16 %v4522, %v4518
    %v5919 = vpack.c.b16 %v4523, %v4519
    %v5920 = vpack.c.b16 %v4524, %v4520
    %v5921 = vpack.c.b16 %v4525, %v4521
    %v5922 = vpack.c.b16 %v4530, %v4526
    %v5923 = vpack.c.b16 %v4531, %v4527
    %v5924 = vpack.c.b16 %v4532, %v4528
    %v5925 = vpack.c.b16 %v4533, %v4529
    %v5926 = vpack.c.b16 %v4538, %v4534
    %v5927 = vpack.c.b16 %v4539, %v4535
    %v5928 = vpack.c.b16 %v4540, %v4536
    %v5929 = vpack.c.b16 %v4541, %v4537
    %v5930 = vpack.c.b16 %v4546, %v4542
    %v5931 = vpack.c.b16 %v4547, %v4543
    %v5932 = vpack.c.b16 %v4548, %v4544
    %v5933 = vpack.c.b16 %v4549, %v4545
    %v5934 = vpack.c.b16 %v4554, %v4550
    %v5935 = vpack.c.b16 %v4555, %v4551
    %v5936 = vpack.c.b16 %v4556, %v4552
    %v5937 = vpack.c.b16 %v4557, %v4553
    %v5938 = vpack.c.b16 %v4562, %v4558
    %v5939 = vpack.c.b16 %v4563, %v4559
    %v5940 = vpack.c.b16 %v4564, %v4560
    %v5941 = vpack.c.b16 %v4565, %v4561
    %v5942 = vpack.c.b16 %v4570, %v4566
    %v5943 = vpack.c.b16 %v4571, %v4567
    %v5944 = vpack.c.b16 %v4572, %v4568
    %v5945 = vpack.c.b16 %v4573, %v4569
    %v5946 = vpack.c.b16 %v4578, %v4574
    %v5947 = vpack.c.b16 %v4579, %v4575
    %v5948 = vpack.c.b16 %v4580, %v4576
    %v5949 = vpack.c.b16 %v4581, %v4577
    %v5950 = vpack.c.b16 %v4586, %v4582
    %v5951 = vpack.c.b16 %v4587, %v4583
    %v5952 = vpack.c.b16 %v4588, %v4584
    %v5953 = vpack.c.b16 %v4589, %v4585
    %v5954 = vpack.c.b16 %v4594, %v4590
    %v5955 = vpack.c.b16 %v4595, %v4591
    %v5956 = vpack.c.b16 %v4596, %v4592
    %v5957 = vpack.c.b16 %v4597, %v4593
    %v5958 = vpack.c.b16 %v4602, %v4598
    %v5959 = vpack.c.b16 %v4603, %v4599
    %v5960 = vpack.c.b16 %v4604, %v4600
    %v5961 = vpack.c.b16 %v4605, %v4601
    %v5962 = vpack.c.b16 %v4610, %v4606
    %v5963 = vpack.c.b16 %v4611, %v4607
    %v5964 = vpack.c.b16 %v4612, %v4608
    %v5965 = vpack.c.b16 %v4613, %v4609
    %v5966 = vpack.c.b16 %v4618, %v4614
    %v5967 = vpack.c.b16 %v4619, %v4615
    %v5968 = vpack.c.b16 %v4620, %v4616
    %v5969 = vpack.c.b16 %v4621, %v4617
    %v5970 = vpack.c.b16 %v4626, %v4622
    %v5971 = vpack.c.b16 %v4627, %v4623
    %v5972 = vpack.c.b16 %v4628, %v4624
    %v5973 = vpack.c.b16 %v4629, %v4625
    %v5974 = vpack.c.b16 %v4634, %v4630
    %v5975 = vpack.c.b16 %v4635, %v4631
    %v5976 = vpack.c.b16 %v4636, %v4632
    %v5977 = vpack.c.b16 %v4637, %v4633
    %v5978 = vpack.c.b16 %v4642, %v4638
    %v5979 = vpack.c.b16 %v4643, %v4639
    %v5980 = vpack.c.b16 %v4644, %v4640
    %v5981 = vpack.c.b16 %v4645, %v4641
    %v5982 = vpack.c.b16 %v4650, %v4646
    %v5983 = vpack.c.b16 %v4651, %v4647
    %v5984 = vpack.c.b16 %v4652, %v4648
    %v5985 = vpack.c.b16 %v4653, %v4649
    %v5986 = vpack.c.b16 %v4658, %v4654
    %v5987 = vpack.c.b16 %v4659, %v4655
    %v5988 = vpack.c.b16 %v4660, %v4656
    %v5989 = vpack.c.b16 %v4661, %v4657
    %v5990 = vpack.c.b16 %v4666, %v4662
    %v5991 = vpack.c.b16 %v4667, %v4663
    %v5992 = vpack.c.b16 %v4668, %v4664
    %v5993 = vpack.c.b16 %v4669, %v4665
    %v5994 = vpack.c.b16 %v4674, %v4670
    %v5995 = vpack.c.b16 %v4675, %v4671
    %v5996 = vpack.c.b16 %v4676, %v4672
    %v5997 = vpack.c.b16 %v4677, %v4673
    %v5998 = vpack.c.b16 %v4682, %v4678
    %v5999 = vpack.c.b16 %v4683, %v4679
    %v6000 = vpack.c.b16 %v4684, %v4680
    %v6001 = vpack.c.b16 %v4685, %v4681
    %v6002 = vpack.c.b16 %v4690, %v4686
    %v6003 = vpack.c.b16 %v4691, %v4687
    %v6004 = vpack.c.b16 %v4692, %v4688
    %v6005 = vpack.c.b16 %v4693, %v4689
    %v6006 = vpack.c.b16 %v4698, %v4694
    %v6007 = vpack.c.b16 %v4699, %v4695
    %v6008 = vpack.c.b16 %v4700, %v4696
    %v6009 = vpack.c.b16 %v4701, %v4697
    %v6010 = vpack.c.b16 %v4706, %v4702
    %v6011 = vpack.c.b16 %v4707, %v4703
    %v6012 = vpack.c.b16 %v4708, %v4704
    %v6013 = vpack.c.b16 %v4709, %v4705
    %v6014 = vpack.c.b16 %v4714, %v4710
    %v6015 = vpack.c.b16 %v4715, %v4711
    %v6016 = vpack.c.b16 %v4716, %v4712
    %v6017 = vpack.c.b16 %v4717, %v4713
    %v6018 = vpack.c.b16 %v4722, %v4718
    %v6019 = vpack.c.b16 %v4723, %v4719
    %v6020 = vpack.c.b16 %v4724, %v4720
    %v6021 = vpack.c.b16 %v4725, %v4721
    %v6022 = vpack.c.b16 %v4730, %v4726
    %v6023 = vpack.c.b16 %v4731, %v4727
    %v6024 = vpack.c.b16 %v4732, %v4728
    %v6025 = vpack.c.b16 %v4733, %v4729
    %v6026 = vpack.c.b16 %v4738, %v4734
    %v6027 = vpack.c.b16 %v4739, %v4735
    %v6028 = vpack.c.b16 %v4740, %v4736
    %v6029 = vpack.c.b16 %v4741, %v4737
    %v6030 = vpack.c.b16 %v4746, %v4742
    %v6031 = vpack.c.b16 %v4747, %v4743
    %v6032 = vpack.c.b16 %v4748, %v4744
    %v6033 = vpack.c.b16 %v4749, %v4745
    %v6034 = vpack.c.b16 %v4754, %v4750
    %v6035 = vpack.c.b16 %v4755, %v4751
    %v6036 = vpack.c.b16 %v4756, %v4752
    %v6037 = vpack.c.b16 %v4757, %v4753
    %v6038 = vpack.c.b16 %v4762, %v4758
    %v6039 = vpack.c.b16 %v4763, %v4759
    %v6040 = vpack.c.b16 %v4764, %v4760
    %v6041 = vpack.c.b16 %v4765, %v4761
    %v6042 = vpack.c.b16 %v4770, %v4766
    %v6043 = vpack.c.b16 %v4771, %v4767
    %v6044 = vpack.c.b16 %v4772, %v4768
    %v6045 = vpack.c.b16 %v4773, %v4769
    %v6046 = vpack.c.b16 %v4778, %v4774
    %v6047 = vpack.c.b16 %v4779, %v4775
    %v6048 = vpack.c.b16 %v4780, %v4776
    %v6049 = vpack.c.b16 %v4781, %v4777
    %v6050 = vpack.c.b16 %v4786, %v4782
    %v6051 = vpack.c.b16 %v4787, %v4783
    %v6052 = vpack.c.b16 %v4788, %v4784
    %v6053 = vpack.c.b16 %v4789, %v4785
    %v6054 = vpack.c.b16 %v4794, %v4790
    %v6055 = vpack.c.b16 %v4795, %v4791
    %v6056 = vpack.c.b16 %v4796, %v4792
    %v6057 = vpack.c.b16 %v4797, %v4793
    %v6058 = vpack.c.b16 %v4802, %v4798
    %v6059 = vpack.c.b16 %v4803, %v4799
    %v6060 = vpack.c.b16 %v4804, %v4800
    %v6061 = vpack.c.b16 %v4805, %v4801
    %v6062 = vpack.c.b16 %v4810, %v4806
    %v6063 = vpack.c.b16 %v4811, %v4807
    %v6064 = vpack.c.b16 %v4812, %v4808
    %v6065 = vpack.c.b16 %v4813, %v4809
    %v6066 = vpack.c.b16 %v4818, %v4814
    %v6067 = vpack.c.b16 %v4819, %v4815
    %v6068 = vpack.c.b16 %v4820, %v4816
    %v6069 = vpack.c.b16 %v4821, %v4817
    %v6070 = vpack.c.b16 %v4826, %v4822
    %v6071 = vpack.c.b16 %v4827, %v4823
    %v6072 = vpack.c.b16 %v4828, %v4824
    %v6073 = vpack.c.b16 %v4829, %v4825
    %v6074 = vpack.c.b16 %v4834, %v4830
    %v6075 = vpack.c.b16 %v4835, %v4831
    %v6076 = vpack.c.b16 %v4836, %v4832
    %v6077 = vpack.c.b16 %v4837, %v4833
    %v6078 = vpack.c.b16 %v4842, %v4838
    %v6079 = vpack.c.b16 %v4843, %v4839
    %v6080 = vpack.c.b16 %v4844, %v4840
    %v6081 = vpack.c.b16 %v4845, %v4841
    %v6082 = vpack.c.b16 %v4850, %v4846
    %v6083 = vpack.c.b16 %v4851, %v4847
    %v6084 = vpack.c.b16 %v4852, %v4848
    %v6085 = vpack.c.b16 %v4853, %v4849
    %v6086 = vpack.c.b16 %v4858, %v4854
    %v6087 = vpack.c.b16 %v4859, %v4855
    %v6088 = vpack.c.b16 %v4860, %v4856
    %v6089 = vpack.c.b16 %v4861, %v4857
    %v6090 = vpack.c.b16 %v4866, %v4862
    %v6091 = vpack.c.b16 %v4867, %v4863
    %v6092 = vpack.c.b16 %v4868, %v4864
    %v6093 = vpack.c.b16 %v4869, %v4865
    %v6094 = vpack.c.b16 %v4874, %v4870
    %v6095 = vpack.c.b16 %v4875, %v4871
    %v6096 = vpack.c.b16 %v4876, %v4872
    %v6097 = vpack.c.b16 %v4877, %v4873
    %v6098 = vpack.c.b16 %v4882, %v4878
    %v6099 = vpack.c.b16 %v4883, %v4879
    %v6100 = vpack.c.b16 %v4884, %v4880
    %v6101 = vpack.c.b16 %v4885, %v4881
    %v6102 = vpack.c.b16 %v4890, %v4886
    %v6103 = vpack.c.b16 %v4891, %v4887
    %v6104 = vpack.c.b16 %v4892, %v4888
    %v6105 = vpack.c.b16 %v4893, %v4889
    %v6106 = vpack.c.b16 %v4898, %v4894
    %v6107 = vpack.c.b16 %v4899, %v4895
    %v6108 = vpack.c.b16 %v4900, %v4896
    %v6109 = vpack.c.b16 %v4901, %v4897
    %v6110 = vpack.c.b16 %v4906, %v4902
    %v6111 = vpack.c.b16 %v4907, %v4903
    %v6112 = vpack.c.b16 %v4908, %v4904
    %v6113 = vpack.c.b16 %v4909, %v4905
    %v6114 = vpack.c.b16 %v4914, %v4910
    %v6115 = vpack.c.b16 %v4915, %v4911
    %v6116 = vpack.c.b16 %v4916, %v4912
    %v6117 = vpack.c.b16 %v4917, %v4913
    %v6118 = vpack.c.b16 %v4922, %v4918
    %v6119 = vpack.c.b16 %v4923, %v4919
    %v6120 = vpack.c.b16 %v4924, %v4920
    %v6121 = vpack.c.b16 %v4925, %v4921
    %v6122 = vpack.c.b16 %v4930, %v4926
    %v6123 = vpack.c.b16 %v4931, %v4927
    %v6124 = vpack.c.b16 %v4932, %v4928
    %v6125 = vpack.c.b16 %v4933, %v4929
    %v6126 = vpack.c.b16 %v4938, %v4934
    %v6127 = vpack.c.b16 %v4939, %v4935
    %v6128 = vpack.c.b16 %v4940, %v4936
    %v6129 = vpack.c.b16 %v4941, %v4937
    %v6130 = vpack.c.b16 %v4946, %v4942
    %v6131 = vpack.c.b16 %v4947, %v4943
    %v6132 = vpack.c.b16 %v4948, %v4944
    %v6133 = vpack.c.b16 %v4949, %v4945
    %v6134 = vpack.c.b16 %v4954, %v4950
    %v6135 = vpack.c.b16 %v4955, %v4951
    %v6136 = vpack.c.b16 %v4956, %v4952
    %v6137 = vpack.c.b16 %v4957, %v4953
    %v6138 = vpack.c.b16 %v4962, %v4958
    %v6139 = vpack.c.b16 %v4963, %v4959
    %v6140 = vpack.c.b16 %v4964, %v4960
    %v6141 = vpack.c.b16 %v4965, %v4961
    %v6142 = vpack.c.b16 %v4970, %v4966
    %v6143 = vpack.c.b16 %v4971, %v4967
    %v6144 = vpack.c.b16 %v4972, %v4968
    %v6145 = vpack.c.b16 %v4973, %v4969
    %v6146 = vpack.c.b16 %v4978, %v4974
    %v6147 = vpack.c.b16 %v4979, %v4975
    %v6148 = vpack.c.b16 %v4980, %v4976
    %v6149 = vpack.c.b16 %v4981, %v4977
    %v6150 = vpack.c.b16 %v4986, %v4982
    %v6151 = vpack.c.b16 %v4987, %v4983
    %v6152 = vpack.c.b16 %v4988, %v4984
    %v6153 = vpack.c.b16 %v4989, %v4985
    %v6154 = vpack.c.b16 %v4994, %v4990
    %v6155 = vpack.c.b16 %v4995, %v4991
    %v6156 = vpack.c.b16 %v4996, %v4992
    %v6157 = vpack.c.b16 %v4997, %v4993
    %v6158 = vpack.c.b16 %v5002, %v4998
    %v6159 = vpack.c.b16 %v5003, %v4999
    %v6160 = vpack.c.b16 %v5004, %v5000
    %v6161 = vpack.c.b16 %v5005, %v5001
    %v6162 = vpack.c.b16 %v5010, %v5006
    %v6163 = vpack.c.b16 %v5011, %v5007
    %v6164 = vpack.c.b16 %v5012, %v5008
    %v6165 = vpack.c.b16 %v5013, %v5009
    %v6166 = vpack.c.b16 %v5018, %v5014
    %v6167 = vpack.c.b16 %v5019, %v5015
    %v6168 = vpack.c.b16 %v5020, %v5016
    %v6169 = vpack.c.b16 %v5021, %v5017
    %v6170 = vpack.c.b16 %v5026, %v5022
    %v6171 = vpack.c.b16 %v5027, %v5023
    %v6172 = vpack.c.b16 %v5028, %v5024
    %v6173 = vpack.c.b16 %v5029, %v5025
    %v6174 = vpack.c.b16 %v5034, %v5030
    %v6175 = vpack.c.b16 %v5035, %v5031
    %v6176 = vpack.c.b16 %v5036, %v5032
    %v6177 = vpack.c.b16 %v5037, %v5033
    %v6178 = vpack.c.b16 %v5042, %v5038
    %v6179 = vpack.c.b16 %v5043, %v5039
    %v6180 = vpack.c.b16 %v5044, %v5040
    %v6181 = vpack.c.b16 %v5045, %v5041
    %v6182 = vpack.c.b16 %v5050, %v5046
    %v6183 = vpack.c.b16 %v5051, %v5047
    %v6184 = vpack.c.b16 %v5052, %v5048
    %v6185 = vpack.c.b16 %v5053, %v5049
    %v6186 = vpack.c.b16 %v5058, %v5054
    %v6187 = vpack.c.b16 %v5059, %v5055
    %v6188 = vpack.c.b16 %v5060, %v5056
    %v6189 = vpack.c.b16 %v5061, %v5057
    %v6190 = vpack.c.b16 %v5066, %v5062
    %v6191 = vpack.c.b16 %v5067, %v5063
    %v6192 = vpack.c.b16 %v5068, %v5064
    %v6193 = vpack.c.b16 %v5069, %v5065
    %v6194 = vpack.c.b16 %v5074, %v5070
    %v6195 = vpack.c.b16 %v5075, %v5071
    %v6196 = vpack.c.b16 %v5076, %v5072
    %v6197 = vpack.c.b16 %v5077, %v5073
    %v6198 = vpack.c.b16 %v5082, %v5078
    %v6199 = vpack.c.b16 %v5083, %v5079
    %v6200 = vpack.c.b16 %v5084, %v5080
    %v6201 = vpack.c.b16 %v5085, %v5081
    %v6202 = vpack.c.b16 %v5090, %v5086
    %v6203 = vpack.c.b16 %v5091, %v5087
    %v6204 = vpack.c.b16 %v5092, %v5088
    %v6205 = vpack.c.b16 %v5093, %v5089
    %v6206 = vpack.c.b16 %v5098, %v5094
    %v6207 = vpack.c.b16 %v5099, %v5095
    %v6208 = vpack.c.b16 %v5100, %v5096
    %v6209 = vpack.c.b16 %v5101, %v5097
    %v6210 = vpack.c.b16 %v5106, %v5102
    %v6211 = vpack.c.b16 %v5107, %v5103
    %v6212 = vpack.c.b16 %v5108, %v5104
    %v6213 = vpack.c.b16 %v5109, %v5105
    %v6214 = vpack.c.b16 %v5114, %v5110
    %v6215 = vpack.c.b16 %v5115, %v5111
    %v6216 = vpack.c.b16 %v5116, %v5112
    %v6217 = vpack.c.b16 %v5117, %v5113
    %v6218 = vpack.c.b16 %v5122, %v5118
    %v6219 = vpack.c.b16 %v5123, %v5119
    %v6220 = vpack.c.b16 %v5124, %v5120
    %v6221 = vpack.c.b16 %v5125, %v5121
    %v6222 = vpack.c.b16 %v5130, %v5126
    %v6223 = vpack.c.b16 %v5131, %v5127
    %v6224 = vpack.c.b16 %v5132, %v5128
    %v6225 = vpack.c.b16 %v5133, %v5129
    %v6226 = vpack.c.b16 %v5138, %v5134
    %v6227 = vpack.c.b16 %v5139, %v5135
    %v6228 = vpack.c.b16 %v5140, %v5136
    %v6229 = vpack.c.b16 %v5141, %v5137
    %v6230 = vpack.c.b16 %v5146, %v5142
    %v6231 = vpack.c.b16 %v5147, %v5143
    %v6232 = vpack.c.b16 %v5148, %v5144
    %v6233 = vpack.c.b16 %v5149, %v5145
    %v6234 = vpack.c.b16 %v5154, %v5150
    %v6235 = vpack.c.b16 %v5155, %v5151
    %v6236 = vpack.c.b16 %v5156, %v5152
    %v6237 = vpack.c.b16 %v5157, %v5153
    %v6238 = vpack.c.b16 %v5162, %v5158
    %v6239 = vpack.c.b16 %v5163, %v5159
    %v6240 = vpack.c.b16 %v5164, %v5160
    %v6241 = vpack.c.b16 %v5165, %v5161
    %v6242 = vpack.c.b16 %v5170, %v5166
    %v6243 = vpack.c.b16 %v5171, %v5167
    %v6244 = vpack.c.b16 %v5172, %v5168
    %v6245 = vpack.c.b16 %v5173, %v5169
    %v6246 = vpack.c.b16 %v5178, %v5174
    %v6247 = vpack.c.b16 %v5179, %v5175
    %v6248 = vpack.c.b16 %v5180, %v5176
    %v6249 = vpack.c.b16 %v5181, %v5177
    %v6250 = vpack.c.b16 %v5186, %v5182
    %v6251 = vpack.c.b16 %v5187, %v5183
    %v6252 = vpack.c.b16 %v5188, %v5184
    %v6253 = vpack.c.b16 %v5189, %v5185
    %v6254 = vpack.c.b16 %v5194, %v5190
    %v6255 = vpack.c.b16 %v5195, %v5191
    %v6256 = vpack.c.b16 %v5196, %v5192
    %v6257 = vpack.c.b16 %v5197, %v5193
    %v6258 = vpack.c.b16 %v5202, %v5198
    %v6259 = vpack.c.b16 %v5203, %v5199
    %v6260 = vpack.c.b16 %v5204, %v5200
    %v6261 = vpack.c.b16 %v5205, %v5201
    %v6262 = vpack.c.b16 %v5210, %v5206
    %v6263 = vpack.c.b16 %v5211, %v5207
    %v6264 = vpack.c.b16 %v5212, %v5208
    %v6265 = vpack.c.b16 %v5213, %v5209
    %v6266 = vpack.c.b16 %v5218, %v5214
    %v6267 = vpack.c.b16 %v5219, %v5215
    %v6268 = vpack.c.b16 %v5220, %v5216
    %v6269 = vpack.c.b16 %v5221, %v5217
    %v6270 = vpack.c.b16 %v5226, %v5222
    %v6271 = vpack.c.b16 %v5227, %v5223
    %v6272 = vpack.c.b16 %v5228, %v5224
    %v6273 = vpack.c.b16 %v5229, %v5225
    %v6274 = vpack.c.b16 %v5234, %v5230
    %v6275 = vpack.c.b16 %v5235, %v5231
    %v6276 = vpack.c.b16 %v5236, %v5232
    %v6277 = vpack.c.b16 %v5237, %v5233
    %v6278 = vpack.c.b16 %v5242, %v5238
    %v6279 = vpack.c.b16 %v5243, %v5239
    %v6280 = vpack.c.b16 %v5244, %v5240
    %v6281 = vpack.c.b16 %v5245, %v5241
    %v6282 = vpack.c.b16 %v5250, %v5246
    %v6283 = vpack.c.b16 %v5251, %v5247
    %v6284 = vpack.c.b16 %v5252, %v5248
    %v6285 = vpack.c.b16 %v5253, %v5249
    %v6286 = vpack.c.b16 %v5258, %v5254
    %v6287 = vpack.c.b16 %v5259, %v5255
    %v6288 = vpack.c.b16 %v5260, %v5256
    %v6289 = vpack.c.b16 %v5261, %v5257
    %v6290 = vpack.c.b16 %v5266, %v5262
    %v6291 = vpack.c.b16 %v5267, %v5263
    %v6292 = vpack.c.b16 %v5268, %v5264
    %v6293 = vpack.c.b16 %v5269, %v5265
    %v6294 = vpack.c.b16 %v5274, %v5270
    %v6295 = vpack.c.b16 %v5275, %v5271
    %v6296 = vpack.c.b16 %v5276, %v5272
    %v6297 = vpack.c.b16 %v5277, %v5273
    %v6298 = vpack.c.b16 %v5282, %v5278
    %v6299 = vpack.c.b16 %v5283, %v5279
    %v6300 = vpack.c.b16 %v5284, %v5280
    %v6301 = vpack.c.b16 %v5285, %v5281
    %v6302 = vpack.c.b16 %v5290, %v5286
    %v6303 = vpack.c.b16 %v5291, %v5287
    %v6304 = vpack.c.b16 %v5292, %v5288
    %v6305 = vpack.c.b16 %v5293, %v5289
    %v6306 = vpack.c.b16 %v5298, %v5294
    %v6307 = vpack.c.b16 %v5299, %v5295
    %v6308 = vpack.c.b16 %v5300, %v5296
    %v6309 = vpack.c.b16 %v5301, %v5297
    %v6310 = vpack.c.b16 %v5306, %v5302
    %v6311 = vpack.c.b16 %v5307, %v5303
    %v6312 = vpack.c.b16 %v5308, %v5304
    %v6313 = vpack.c.b16 %v5309, %v5305
    %v6314 = vpack.c.b16 %v5314, %v5310
    %v6315 = vpack.c.b16 %v5315, %v5311
    %v6316 = vpack.c.b16 %v5316, %v5312
    %v6317 = vpack.c.b16 %v5317, %v5313
    %v6318 = vpack.c.b16 %v5322, %v5318
    %v6319 = vpack.c.b16 %v5323, %v5319
    %v6320 = vpack.c.b16 %v5324, %v5320
    %v6321 = vpack.c.b16 %v5325, %v5321
    %v6322 = vpack.c.b16 %v5330, %v5326
    %v6323 = vpack.c.b16 %v5331, %v5327
    %v6324 = vpack.c.b16 %v5332, %v5328
    %v6325 = vpack.c.b16 %v5333, %v5329
    %v6326 = vpack.c.b16 %v5338, %v5334
    %v6327 = vpack.c.b16 %v5339, %v5335
    %v6328 = vpack.c.b16 %v5340, %v5336
    %v6329 = vpack.c.b16 %v5341, %v5337
    %v6330 = vpack.c.b16 %v5346, %v5342
    %v6331 = vpack.c.b16 %v5347, %v5343
    %v6332 = vpack.c.b16 %v5348, %v5344
    %v6333 = vpack.c.b16 %v5349, %v5345
    %v6334 = vpack.c.b16 %v5354, %v5350
    %v6335 = vpack.c.b16 %v5355, %v5351
    %v6336 = vpack.c.b16 %v5356, %v5352
    %v6337 = vpack.c.b16 %v5357, %v5353
    %v6338 = vpack.c.b16 %v5362, %v5358
    %v6339 = vpack.c.b16 %v5363, %v5359
    %v6340 = vpack.c.b16 %v5364, %v5360
    %v6341 = vpack.c.b16 %v5365, %v5361
    %v6342 = vpack.c.b16 %v5370, %v5366
    %v6343 = vpack.c.b16 %v5371, %v5367
    %v6344 = vpack.c.b16 %v5372, %v5368
    %v6345 = vpack.c.b16 %v5373, %v5369
    %v6346 = vpack.c.b16 %v5378, %v5374
    %v6347 = vpack.c.b16 %v5379, %v5375
    %v6348 = vpack.c.b16 %v5380, %v5376
    %v6349 = vpack.c.b16 %v5381, %v5377
    %v6350 = vpack.c.b16 %v5386, %v5382
    %v6351 = vpack.c.b16 %v5387, %v5383
    %v6352 = vpack.c.b16 %v5388, %v5384
    %v6353 = vpack.c.b16 %v5389, %v5385
    %v6354 = vpack.c.b16 %v5394, %v5390
    %v6355 = vpack.c.b16 %v5395, %v5391
    %v6356 = vpack.c.b16 %v5396, %v5392
    %v6357 = vpack.c.b16 %v5397, %v5393
    %v6358 = vpack.c.b16 %v5402, %v5398
    %v6359 = vpack.c.b16 %v5403, %v5399
    %v6360 = vpack.c.b16 %v5404, %v5400
    %v6361 = vpack.c.b16 %v5405, %v5401
    %v6362 = vpack.c.b16 %v5410, %v5406
    %v6363 = vpack.c.b16 %v5411, %v5407
    %v6364 = vpack.c.b16 %v5412, %v5408
    %v6365 = vpack.c.b16 %v5413, %v5409
    %v6366 = vpack.c.b16 %v5418, %v5414
    %v6367 = vpack.c.b16 %v5419, %v5415
    %v6368 = vpack.c.b16 %v5420, %v5416
    %v6369 = vpack.c.b16 %v5421, %v5417
    %v6370 = vpack.c.b16 %v5426, %v5422
    %v6371 = vpack.c.b16 %v5427, %v5423
    %v6372 = vpack.c.b16 %v5428, %v5424
    %v6373 = vpack.c.b16 %v5429, %v5425
    %v7319 = vsel %vm827, %v1644, 0
    %7321 = vmatpush.bf16.msra.mxu0 %v5458
    %7322 = vmatpush.bf16.msra.mxu0 %v5454
    %7323 = vmatpush.bf16.msra.mxu0 %v5450
    %7324 = vmatpush.bf16.msra.mxu0 %v5446
    %7325 = vmatpush.bf16.msra.mxu0 %v5442
    %7326 = vmatpush.bf16.msra.mxu0 %v5438
    %7327 = vmatpush.bf16.msra.mxu0 %v5434
    %7328 = vmatpush.bf16.msra.mxu0 %v5430
    %7329 = vmatmul.bf16.gmra.mxu0 %v1615
    %v7330 = vpop.f32.mrf.mxu0
    %v7331 = vadd.f32 %v2590, %v7330
    %v7332 = vpop.f32.mrf.mxu0
    %7333 = vdwg.mxu0
    %7334 = vmatpush.bf16.msra.mxu0 %v5490
    %7335 = vmatpush.bf16.msra.mxu0 %v5486
    %7336 = vmatpush.bf16.msra.mxu0 %v5482
    %7337 = vmatpush.bf16.msra.mxu0 %v5478
    %7338 = vmatpush.bf16.msra.mxu0 %v5474
    %7339 = vmatpush.bf16.msra.mxu0 %v5470
    %7340 = vmatpush.bf16.msra.mxu0 %v5466
    %7341 = vmatpush.bf16.msra.mxu0 %v5462
    %7342 = vmatmul.bf16.gmra.mxu0 %v1616
    %v7343 = vpop.f32.mrf.mxu0
    %v7344 = vadd.f32 %v7331, %v7343
    %v7345 = vpop.f32.mrf.mxu0
    %7346 = vdwg.mxu0
    %7347 = vmatpush.bf16.msra.mxu0 %v5522
    %7348 = vmatpush.bf16.msra.mxu0 %v5518
    %7349 = vmatpush.bf16.msra.mxu0 %v5514
    %7350 = vmatpush.bf16.msra.mxu0 %v5510
    %7351 = vmatpush.bf16.msra.mxu0 %v5506
    %7352 = vmatpush.bf16.msra.mxu0 %v5502
    %7353 = vmatpush.bf16.msra.mxu0 %v5498
    %7354 = vmatpush.bf16.msra.mxu0 %v5494
    %7355 = vmatmul.bf16.gmra.mxu0 %v1617
    %v7356 = vpop.f32.mrf.mxu0
    %v7357 = vadd.f32 %v7344, %v7356
    %v7358 = vpop.f32.mrf.mxu0
    %7359 = vdwg.mxu0
    %7360 = vmatpush.bf16.msra.mxu0 %v5554
    %7361 = vmatpush.bf16.msra.mxu0 %v5550
    %7362 = vmatpush.bf16.msra.mxu0 %v5546
    %7363 = vmatpush.bf16.msra.mxu0 %v5542
    %7364 = vmatpush.bf16.msra.mxu0 %v5538
    %7365 = vmatpush.bf16.msra.mxu0 %v5534
    %7366 = vmatpush.bf16.msra.mxu0 %v5530
    %7367 = vmatpush.bf16.msra.mxu0 %v5526
    %7368 = vmatmul.bf16.gmra.mxu0 %v1618
    %v7369 = vpop.f32.mrf.mxu0
    %v7370 = vadd.f32 %v7357, %v7369
    %v7371 = vpop.f32.mrf.mxu0
    %7372 = vdwg.mxu0
    %7373 = vmatpush.bf16.msra.mxu0 %v5586
    %7374 = vmatpush.bf16.msra.mxu0 %v5582
    %7375 = vmatpush.bf16.msra.mxu0 %v5578
    %7376 = vmatpush.bf16.msra.mxu0 %v5574
    %7377 = vmatpush.bf16.msra.mxu0 %v5570
    %7378 = vmatpush.bf16.msra.mxu0 %v5566
    %7379 = vmatpush.bf16.msra.mxu0 %v5562
    %7380 = vmatpush.bf16.msra.mxu0 %v5558
    %7381 = vmatmul.bf16.gmra.mxu0 %v1619
    %v7382 = vpop.f32.mrf.mxu0
    %v7383 = vadd.f32 %v7370, %v7382
    %v7384 = vpop.f32.mrf.mxu0
    %7385 = vdwg.mxu0
    %7386 = vmatpush.bf16.msra.mxu0 %v5618
    %7387 = vmatpush.bf16.msra.mxu0 %v5614
    %7388 = vmatpush.bf16.msra.mxu0 %v5610
    %7389 = vmatpush.bf16.msra.mxu0 %v5606
    %7390 = vmatpush.bf16.msra.mxu0 %v5602
    %7391 = vmatpush.bf16.msra.mxu0 %v5598
    %7392 = vmatpush.bf16.msra.mxu0 %v5594
    %7393 = vmatpush.bf16.msra.mxu0 %v5590
    %7394 = vmatmul.bf16.gmra.mxu0 %v1620
    %v7395 = vpop.f32.mrf.mxu0
    %v7396 = vadd.f32 %v7383, %v7395
    %v7397 = vpop.f32.mrf.mxu0
    %7398 = vdwg.mxu0
    %7399 = vmatpush.bf16.msra.mxu0 %v5650
    %7400 = vmatpush.bf16.msra.mxu0 %v5646
    %7401 = vmatpush.bf16.msra.mxu0 %v5642
    %7402 = vmatpush.bf16.msra.mxu0 %v5638
    %7403 = vmatpush.bf16.msra.mxu0 %v5634
    %7404 = vmatpush.bf16.msra.mxu0 %v5630
    %7405 = vmatpush.bf16.msra.mxu0 %v5626
    %7406 = vmatpush.bf16.msra.mxu0 %v5622
    %7407 = vmatmul.bf16.gmra.mxu0 %v1621
    %v7408 = vpop.f32.mrf.mxu0
    %v7409 = vadd.f32 %v7396, %v7408
    %v7410 = vpop.f32.mrf.mxu0
    %7411 = vdwg.mxu0
    %7412 = vmatpush.bf16.msra.mxu0 %v5682
    %7413 = vmatpush.bf16.msra.mxu0 %v5678
    %7414 = vmatpush.bf16.msra.mxu0 %v5674
    %7415 = vmatpush.bf16.msra.mxu0 %v5670
    %7416 = vmatpush.bf16.msra.mxu0 %v5666
    %7417 = vmatpush.bf16.msra.mxu0 %v5662
    %7418 = vmatpush.bf16.msra.mxu0 %v5658
    %7419 = vmatpush.bf16.msra.mxu0 %v5654
    %7420 = vmatmul.bf16.gmra.mxu0 %v1622
    %v7421 = vpop.f32.mrf.mxu0
    %v7422 = vadd.f32 %v7409, %v7421
    %v7423 = vpop.f32.mrf.mxu0
    %7424 = vdwg.mxu0
    %7425 = vmatpush.bf16.msra.mxu0 %v5714
    %7426 = vmatpush.bf16.msra.mxu0 %v5710
    %7427 = vmatpush.bf16.msra.mxu0 %v5706
    %7428 = vmatpush.bf16.msra.mxu0 %v5702
    %7429 = vmatpush.bf16.msra.mxu0 %v5698
    %7430 = vmatpush.bf16.msra.mxu0 %v5694
    %7431 = vmatpush.bf16.msra.mxu0 %v5690
    %7432 = vmatpush.bf16.msra.mxu0 %v5686
    %7433 = vmatmul.bf16.gmra.mxu0 %v1623
    %v7434 = vpop.f32.mrf.mxu0
    %v7435 = vadd.f32 %v7422, %v7434
    %v7436 = vpop.f32.mrf.mxu0
    %7437 = vdwg.mxu0
    %7438 = vmatpush.bf16.msra.mxu0 %v5746
    %7439 = vmatpush.bf16.msra.mxu0 %v5742
    %7440 = vmatpush.bf16.msra.mxu0 %v5738
    %7441 = vmatpush.bf16.msra.mxu0 %v5734
    %7442 = vmatpush.bf16.msra.mxu0 %v5730
    %7443 = vmatpush.bf16.msra.mxu0 %v5726
    %7444 = vmatpush.bf16.msra.mxu0 %v5722
    %7445 = vmatpush.bf16.msra.mxu0 %v5718
    %7446 = vmatmul.bf16.gmra.mxu0 %v1624
    %v7447 = vpop.f32.mrf.mxu0
    %v7448 = vadd.f32 %v7435, %v7447
    %v7449 = vpop.f32.mrf.mxu0
    %7450 = vdwg.mxu0
    %7451 = vmatpush.bf16.msra.mxu0 %v5778
    %7452 = vmatpush.bf16.msra.mxu0 %v5774
    %7453 = vmatpush.bf16.msra.mxu0 %v5770
    %7454 = vmatpush.bf16.msra.mxu0 %v5766
    %7455 = vmatpush.bf16.msra.mxu0 %v5762
    %7456 = vmatpush.bf16.msra.mxu0 %v5758
    %7457 = vmatpush.bf16.msra.mxu0 %v5754
    %7458 = vmatpush.bf16.msra.mxu0 %v5750
    %7459 = vmatmul.bf16.gmra.mxu0 %v1625
    %v7460 = vpop.f32.mrf.mxu0
    %v7461 = vadd.f32 %v7448, %v7460
    %v7462 = vpop.f32.mrf.mxu0
    %7463 = vdwg.mxu0
    %7464 = vmatpush.bf16.msra.mxu0 %v5810
    %7465 = vmatpush.bf16.msra.mxu0 %v5806
    %7466 = vmatpush.bf16.msra.mxu0 %v5802
    %7467 = vmatpush.bf16.msra.mxu0 %v5798
    %7468 = vmatpush.bf16.msra.mxu0 %v5794
    %7469 = vmatpush.bf16.msra.mxu0 %v5790
    %7470 = vmatpush.bf16.msra.mxu0 %v5786
    %7471 = vmatpush.bf16.msra.mxu0 %v5782
    %7472 = vmatmul.bf16.gmra.mxu0 %v1626
    %v7473 = vpop.f32.mrf.mxu0
    %v7474 = vadd.f32 %v7461, %v7473
    %v7475 = vpop.f32.mrf.mxu0
    %7476 = vdwg.mxu0
    %7477 = vmatpush.bf16.msra.mxu0 %v5842
    %7478 = vmatpush.bf16.msra.mxu0 %v5838
    %7479 = vmatpush.bf16.msra.mxu0 %v5834
    %7480 = vmatpush.bf16.msra.mxu0 %v5830
    %7481 = vmatpush.bf16.msra.mxu0 %v5826
    %7482 = vmatpush.bf16.msra.mxu0 %v5822
    %7483 = vmatpush.bf16.msra.mxu0 %v5818
    %7484 = vmatpush.bf16.msra.mxu0 %v5814
    %7485 = vmatmul.bf16.gmra.mxu0 %v1627
    %v7486 = vpop.f32.mrf.mxu0
    %v7487 = vadd.f32 %v7474, %v7486
    %v7488 = vpop.f32.mrf.mxu0
    %7489 = vdwg.mxu0
    %7490 = vmatpush.bf16.msra.mxu0 %v5874
    %7491 = vmatpush.bf16.msra.mxu0 %v5870
    %7492 = vmatpush.bf16.msra.mxu0 %v5866
    %7493 = vmatpush.bf16.msra.mxu0 %v5862
    %7494 = vmatpush.bf16.msra.mxu0 %v5858
    %7495 = vmatpush.bf16.msra.mxu0 %v5854
    %7496 = vmatpush.bf16.msra.mxu0 %v5850
    %7497 = vmatpush.bf16.msra.mxu0 %v5846
    %7498 = vmatmul.bf16.gmra.mxu0 %v1628
    %v7499 = vpop.f32.mrf.mxu0
    %v7500 = vadd.f32 %v7487, %v7499
    %v7501 = vpop.f32.mrf.mxu0
    %7502 = vdwg.mxu0
    %7503 = vmatpush.bf16.msra.mxu0 %v5906
    %7504 = vmatpush.bf16.msra.mxu0 %v5902
    %7505 = vmatpush.bf16.msra.mxu0 %v5898
    %7506 = vmatpush.bf16.msra.mxu0 %v5894
    %7507 = vmatpush.bf16.msra.mxu0 %v5890
    %7508 = vmatpush.bf16.msra.mxu0 %v5886
    %7509 = vmatpush.bf16.msra.mxu0 %v5882
    %7510 = vmatpush.bf16.msra.mxu0 %v5878
    %7511 = vmatmul.bf16.gmra.mxu0 %v1629
    %v7512 = vpop.f32.mrf.mxu0
    %v7513 = vadd.f32 %v7500, %v7512
    %v7514 = vpop.f32.mrf.mxu0
    %7515 = vdwg.mxu0
    %7516 = vmatpush.bf16.msra.mxu0 %v5938
    %7517 = vmatpush.bf16.msra.mxu0 %v5934
    %7518 = vmatpush.bf16.msra.mxu0 %v5930
    %7519 = vmatpush.bf16.msra.mxu0 %v5926
    %7520 = vmatpush.bf16.msra.mxu0 %v5922
    %7521 = vmatpush.bf16.msra.mxu0 %v5918
    %7522 = vmatpush.bf16.msra.mxu0 %v5914
    %7523 = vmatpush.bf16.msra.mxu0 %v5910
    %7524 = vmatmul.bf16.gmra.mxu0 %v1630
    %v7525 = vpop.f32.mrf.mxu0
    %v7526 = vadd.f32 %v7513, %v7525
    %v7527 = vpop.f32.mrf.mxu0
    %7528 = vdwg.mxu0
    %7529 = vmatpush.bf16.msra.mxu0 %v5970
    %7530 = vmatpush.bf16.msra.mxu0 %v5966
    %7531 = vmatpush.bf16.msra.mxu0 %v5962
    %7532 = vmatpush.bf16.msra.mxu0 %v5958
    %7533 = vmatpush.bf16.msra.mxu0 %v5954
    %7534 = vmatpush.bf16.msra.mxu0 %v5950
    %7535 = vmatpush.bf16.msra.mxu0 %v5946
    %7536 = vmatpush.bf16.msra.mxu0 %v5942
    %7537 = vmatmul.bf16.gmra.mxu0 %v1631
    %v7538 = vpop.f32.mrf.mxu0
    %v7539 = vadd.f32 %v7526, %v7538
    %v7540 = vpop.f32.mrf.mxu0
    %7541 = vdwg.mxu0
    %7542 = vmatpush.bf16.msra.mxu0 %v6002
    %7543 = vmatpush.bf16.msra.mxu0 %v5998
    %7544 = vmatpush.bf16.msra.mxu0 %v5994
    %7545 = vmatpush.bf16.msra.mxu0 %v5990
    %7546 = vmatpush.bf16.msra.mxu0 %v5986
    %7547 = vmatpush.bf16.msra.mxu0 %v5982
    %7548 = vmatpush.bf16.msra.mxu0 %v5978
    %7549 = vmatpush.bf16.msra.mxu0 %v5974
    %7550 = vmatmul.bf16.gmra.mxu0 %v1632
    %v7551 = vpop.f32.mrf.mxu0
    %v7552 = vadd.f32 %v7539, %v7551
    %v7553 = vpop.f32.mrf.mxu0
    %7554 = vdwg.mxu0
    %7555 = vmatpush.bf16.msra.mxu0 %v6034
    %7556 = vmatpush.bf16.msra.mxu0 %v6030
    %7557 = vmatpush.bf16.msra.mxu0 %v6026
    %7558 = vmatpush.bf16.msra.mxu0 %v6022
    %7559 = vmatpush.bf16.msra.mxu0 %v6018
    %7560 = vmatpush.bf16.msra.mxu0 %v6014
    %7561 = vmatpush.bf16.msra.mxu0 %v6010
    %7562 = vmatpush.bf16.msra.mxu0 %v6006
    %7563 = vmatmul.bf16.gmra.mxu0 %v1633
    %v7564 = vpop.f32.mrf.mxu0
    %v7565 = vadd.f32 %v7552, %v7564
    %v7566 = vpop.f32.mrf.mxu0
    %7567 = vdwg.mxu0
    %7568 = vmatpush.bf16.msra.mxu0 %v6066
    %7569 = vmatpush.bf16.msra.mxu0 %v6062
    %7570 = vmatpush.bf16.msra.mxu0 %v6058
    %7571 = vmatpush.bf16.msra.mxu0 %v6054
    %7572 = vmatpush.bf16.msra.mxu0 %v6050
    %7573 = vmatpush.bf16.msra.mxu0 %v6046
    %7574 = vmatpush.bf16.msra.mxu0 %v6042
    %7575 = vmatpush.bf16.msra.mxu0 %v6038
    %7576 = vmatmul.bf16.gmra.mxu0 %v1634
    %v7577 = vpop.f32.mrf.mxu0
    %v7578 = vadd.f32 %v7565, %v7577
    %v7579 = vpop.f32.mrf.mxu0
    %7580 = vdwg.mxu0
    %7581 = vmatpush.bf16.msra.mxu0 %v6098
    %7582 = vmatpush.bf16.msra.mxu0 %v6094
    %7583 = vmatpush.bf16.msra.mxu0 %v6090
    %7584 = vmatpush.bf16.msra.mxu0 %v6086
    %7585 = vmatpush.bf16.msra.mxu0 %v6082
    %7586 = vmatpush.bf16.msra.mxu0 %v6078
    %7587 = vmatpush.bf16.msra.mxu0 %v6074
    %7588 = vmatpush.bf16.msra.mxu0 %v6070
    %7589 = vmatmul.bf16.gmra.mxu0 %v1635
    %v7590 = vpop.f32.mrf.mxu0
    %v7591 = vadd.f32 %v7578, %v7590
    %v7592 = vpop.f32.mrf.mxu0
    %7593 = vdwg.mxu0
    %7594 = vmatpush.bf16.msra.mxu0 %v6130
    %7595 = vmatpush.bf16.msra.mxu0 %v6126
    %7596 = vmatpush.bf16.msra.mxu0 %v6122
    %7597 = vmatpush.bf16.msra.mxu0 %v6118
    %7598 = vmatpush.bf16.msra.mxu0 %v6114
    %7599 = vmatpush.bf16.msra.mxu0 %v6110
    %7600 = vmatpush.bf16.msra.mxu0 %v6106
    %7601 = vmatpush.bf16.msra.mxu0 %v6102
    %7602 = vmatmul.bf16.gmra.mxu0 %v1636
    %v7603 = vpop.f32.mrf.mxu0
    %v7604 = vadd.f32 %v7591, %v7603
    %v7605 = vpop.f32.mrf.mxu0
    %7606 = vdwg.mxu0
    %7607 = vmatpush.bf16.msra.mxu0 %v6162
    %7608 = vmatpush.bf16.msra.mxu0 %v6158
    %7609 = vmatpush.bf16.msra.mxu0 %v6154
    %7610 = vmatpush.bf16.msra.mxu0 %v6150
    %7611 = vmatpush.bf16.msra.mxu0 %v6146
    %7612 = vmatpush.bf16.msra.mxu0 %v6142
    %7613 = vmatpush.bf16.msra.mxu0 %v6138
    %7614 = vmatpush.bf16.msra.mxu0 %v6134
    %7615 = vmatmul.bf16.gmra.mxu0 %v1637
    %v7616 = vpop.f32.mrf.mxu0
    %v7617 = vadd.f32 %v7604, %v7616
    %v7618 = vpop.f32.mrf.mxu0
    %7619 = vdwg.mxu0
    %7620 = vmatpush.bf16.msra.mxu0 %v6194
    %7621 = vmatpush.bf16.msra.mxu0 %v6190
    %7622 = vmatpush.bf16.msra.mxu0 %v6186
    %7623 = vmatpush.bf16.msra.mxu0 %v6182
    %7624 = vmatpush.bf16.msra.mxu0 %v6178
    %7625 = vmatpush.bf16.msra.mxu0 %v6174
    %7626 = vmatpush.bf16.msra.mxu0 %v6170
    %7627 = vmatpush.bf16.msra.mxu0 %v6166
    %7628 = vmatmul.bf16.gmra.mxu0 %v1638
    %v7629 = vpop.f32.mrf.mxu0
    %v7630 = vadd.f32 %v7617, %v7629
    %v7631 = vpop.f32.mrf.mxu0
    %7632 = vdwg.mxu0
    %7633 = vmatpush.bf16.msra.mxu0 %v6226
    %7634 = vmatpush.bf16.msra.mxu0 %v6222
    %7635 = vmatpush.bf16.msra.mxu0 %v6218
    %7636 = vmatpush.bf16.msra.mxu0 %v6214
    %7637 = vmatpush.bf16.msra.mxu0 %v6210
    %7638 = vmatpush.bf16.msra.mxu0 %v6206
    %7639 = vmatpush.bf16.msra.mxu0 %v6202
    %7640 = vmatpush.bf16.msra.mxu0 %v6198
    %7641 = vmatmul.bf16.gmra.mxu0 %v1639
    %v7642 = vpop.f32.mrf.mxu0
    %v7643 = vadd.f32 %v7630, %v7642
    %v7644 = vpop.f32.mrf.mxu0
    %7645 = vdwg.mxu0
    %7646 = vmatpush.bf16.msra.mxu0 %v6258
    %7647 = vmatpush.bf16.msra.mxu0 %v6254
    %7648 = vmatpush.bf16.msra.mxu0 %v6250
    %7649 = vmatpush.bf16.msra.mxu0 %v6246
    %7650 = vmatpush.bf16.msra.mxu0 %v6242
    %7651 = vmatpush.bf16.msra.mxu0 %v6238
    %7652 = vmatpush.bf16.msra.mxu0 %v6234
    %7653 = vmatpush.bf16.msra.mxu0 %v6230
    %7654 = vmatmul.bf16.gmra.mxu0 %v1640
    %v7655 = vpop.f32.mrf.mxu0
    %v7656 = vadd.f32 %v7643, %v7655
    %v7657 = vpop.f32.mrf.mxu0
    %7658 = vdwg.mxu0
    %7659 = vmatpush.bf16.msra.mxu0 %v6290
    %7660 = vmatpush.bf16.msra.mxu0 %v6286
    %7661 = vmatpush.bf16.msra.mxu0 %v6282
    %7662 = vmatpush.bf16.msra.mxu0 %v6278
    %7663 = vmatpush.bf16.msra.mxu0 %v6274
    %7664 = vmatpush.bf16.msra.mxu0 %v6270
    %7665 = vmatpush.bf16.msra.mxu0 %v6266
    %7666 = vmatpush.bf16.msra.mxu0 %v6262
    %7667 = vmatmul.bf16.gmra.mxu0 %v1641
    %v7668 = vpop.f32.mrf.mxu0
    %v7669 = vadd.f32 %v7656, %v7668
    %v7670 = vpop.f32.mrf.mxu0
    %7671 = vdwg.mxu0
    %7672 = vmatpush.bf16.msra.mxu0 %v6322
    %7673 = vmatpush.bf16.msra.mxu0 %v6318
    %7674 = vmatpush.bf16.msra.mxu0 %v6314
    %7675 = vmatpush.bf16.msra.mxu0 %v6310
    %7676 = vmatpush.bf16.msra.mxu0 %v6306
    %7677 = vmatpush.bf16.msra.mxu0 %v6302
    %7678 = vmatpush.bf16.msra.mxu0 %v6298
    %7679 = vmatpush.bf16.msra.mxu0 %v6294
    %7680 = vmatmul.bf16.gmra.mxu0 %v1642
    %v7681 = vpop.f32.mrf.mxu0
    %v7682 = vadd.f32 %v7669, %v7681
    %v7683 = vpop.f32.mrf.mxu0
    %7684 = vdwg.mxu0
    %7685 = vmatpush.bf16.msra.mxu0 %v6354
    %7686 = vmatpush.bf16.msra.mxu0 %v6350
    %7687 = vmatpush.bf16.msra.mxu0 %v6346
    %7688 = vmatpush.bf16.msra.mxu0 %v6342
    %7689 = vmatpush.bf16.msra.mxu0 %v6338
    %7690 = vmatpush.bf16.msra.mxu0 %v6334
    %7691 = vmatpush.bf16.msra.mxu0 %v6330
    %7692 = vmatpush.bf16.msra.mxu0 %v6326
    %7693 = vmatmul.bf16.gmra.mxu0 %v1643
    %v7694 = vpop.f32.mrf.mxu0
    %v7695 = vadd.f32 %v7682, %v7694
    %v7696 = vpop.f32.mrf.mxu0
    %7697 = vdwg.mxu0
    %7698 = vmatpush.bf16.msra.mxu0 0
    %7699 = vmatpush.bf16.msra.mxu0 0
    %7700 = vmatpush.bf16.msra.mxu0 0
    %7701 = vmatpush.bf16.msra.mxu0 0
    %7702 = vmatpush.bf16.msra.mxu0 %v6370
    %7703 = vmatpush.bf16.msra.mxu0 %v6366
    %7704 = vmatpush.bf16.msra.mxu0 %v6362
    %7705 = vmatpush.bf16.msra.mxu0 %v6358
    %7706 = vmatmul.bf16.gmra.mxu0 %v7319
    %v7707 = vpop.f32.mrf.mxu0
    %v7708 = vadd.f32 %v7695, %v7707
    %v7709 = vpop.f32.mrf.mxu0
    %7710 = vdwg.mxu0
    %7711 = vmatpush.bf16.msra.mxu0 %v5459
    %7712 = vmatpush.bf16.msra.mxu0 %v5455
    %7713 = vmatpush.bf16.msra.mxu0 %v5451
    %7714 = vmatpush.bf16.msra.mxu0 %v5447
    %7715 = vmatpush.bf16.msra.mxu0 %v5443
    %7716 = vmatpush.bf16.msra.mxu0 %v5439
    %7717 = vmatpush.bf16.msra.mxu0 %v5435
    %7718 = vmatpush.bf16.msra.mxu0 %v5431
    %7719 = vmatmul.bf16.gmra.mxu0 %v1615
    %v7720 = vpop.f32.mrf.mxu0
    %v7721 = vadd.f32 %v2591, %v7720
    %v7722 = vpop.f32.mrf.mxu0
    %7723 = vdwg.mxu0
    %7724 = vmatpush.bf16.msra.mxu0 %v5491
    %7725 = vmatpush.bf16.msra.mxu0 %v5487
    %7726 = vmatpush.bf16.msra.mxu0 %v5483
    %7727 = vmatpush.bf16.msra.mxu0 %v5479
    %7728 = vmatpush.bf16.msra.mxu0 %v5475
    %7729 = vmatpush.bf16.msra.mxu0 %v5471
    %7730 = vmatpush.bf16.msra.mxu0 %v5467
    %7731 = vmatpush.bf16.msra.mxu0 %v5463
    %7732 = vmatmul.bf16.gmra.mxu0 %v1616
    %v7733 = vpop.f32.mrf.mxu0
    %v7734 = vadd.f32 %v7721, %v7733
    %v7735 = vpop.f32.mrf.mxu0
    %7736 = vdwg.mxu0
    %7737 = vmatpush.bf16.msra.mxu0 %v5523
    %7738 = vmatpush.bf16.msra.mxu0 %v5519
    %7739 = vmatpush.bf16.msra.mxu0 %v5515
    %7740 = vmatpush.bf16.msra.mxu0 %v5511
    %7741 = vmatpush.bf16.msra.mxu0 %v5507
    %7742 = vmatpush.bf16.msra.mxu0 %v5503
    %7743 = vmatpush.bf16.msra.mxu0 %v5499
    %7744 = vmatpush.bf16.msra.mxu0 %v5495
    %7745 = vmatmul.bf16.gmra.mxu0 %v1617
    %v7746 = vpop.f32.mrf.mxu0
    %v7747 = vadd.f32 %v7734, %v7746
    %v7748 = vpop.f32.mrf.mxu0
    %7749 = vdwg.mxu0
    %7750 = vmatpush.bf16.msra.mxu0 %v5555
    %7751 = vmatpush.bf16.msra.mxu0 %v5551
    %7752 = vmatpush.bf16.msra.mxu0 %v5547
    %7753 = vmatpush.bf16.msra.mxu0 %v5543
    %7754 = vmatpush.bf16.msra.mxu0 %v5539
    %7755 = vmatpush.bf16.msra.mxu0 %v5535
    %7756 = vmatpush.bf16.msra.mxu0 %v5531
    %7757 = vmatpush.bf16.msra.mxu0 %v5527
    %7758 = vmatmul.bf16.gmra.mxu0 %v1618
    %v7759 = vpop.f32.mrf.mxu0
    %v7760 = vadd.f32 %v7747, %v7759
    %v7761 = vpop.f32.mrf.mxu0
    %7762 = vdwg.mxu0
    %7763 = vmatpush.bf16.msra.mxu0 %v5587
    %7764 = vmatpush.bf16.msra.mxu0 %v5583
    %7765 = vmatpush.bf16.msra.mxu0 %v5579
    %7766 = vmatpush.bf16.msra.mxu0 %v5575
    %7767 = vmatpush.bf16.msra.mxu0 %v5571
    %7768 = vmatpush.bf16.msra.mxu0 %v5567
    %7769 = vmatpush.bf16.msra.mxu0 %v5563
    %7770 = vmatpush.bf16.msra.mxu0 %v5559
    %7771 = vmatmul.bf16.gmra.mxu0 %v1619
    %v7772 = vpop.f32.mrf.mxu0
    %v7773 = vadd.f32 %v7760, %v7772
    %v7774 = vpop.f32.mrf.mxu0
    %7775 = vdwg.mxu0
    %7776 = vmatpush.bf16.msra.mxu0 %v5619
    %7777 = vmatpush.bf16.msra.mxu0 %v5615
    %7778 = vmatpush.bf16.msra.mxu0 %v5611
    %7779 = vmatpush.bf16.msra.mxu0 %v5607
    %7780 = vmatpush.bf16.msra.mxu0 %v5603
    %7781 = vmatpush.bf16.msra.mxu0 %v5599
    %7782 = vmatpush.bf16.msra.mxu0 %v5595
    %7783 = vmatpush.bf16.msra.mxu0 %v5591
    %7784 = vmatmul.bf16.gmra.mxu0 %v1620
    %v7785 = vpop.f32.mrf.mxu0
    %v7786 = vadd.f32 %v7773, %v7785
    %v7787 = vpop.f32.mrf.mxu0
    %7788 = vdwg.mxu0
    %7789 = vmatpush.bf16.msra.mxu0 %v5651
    %7790 = vmatpush.bf16.msra.mxu0 %v5647
    %7791 = vmatpush.bf16.msra.mxu0 %v5643
    %7792 = vmatpush.bf16.msra.mxu0 %v5639
    %7793 = vmatpush.bf16.msra.mxu0 %v5635
    %7794 = vmatpush.bf16.msra.mxu0 %v5631
    %7795 = vmatpush.bf16.msra.mxu0 %v5627
    %7796 = vmatpush.bf16.msra.mxu0 %v5623
    %7797 = vmatmul.bf16.gmra.mxu0 %v1621
    %v7798 = vpop.f32.mrf.mxu0
    %v7799 = vadd.f32 %v7786, %v7798
    %v7800 = vpop.f32.mrf.mxu0
    %7801 = vdwg.mxu0
    %7802 = vmatpush.bf16.msra.mxu0 %v5683
    %7803 = vmatpush.bf16.msra.mxu0 %v5679
    %7804 = vmatpush.bf16.msra.mxu0 %v5675
    %7805 = vmatpush.bf16.msra.mxu0 %v5671
    %7806 = vmatpush.bf16.msra.mxu0 %v5667
    %7807 = vmatpush.bf16.msra.mxu0 %v5663
    %7808 = vmatpush.bf16.msra.mxu0 %v5659
    %7809 = vmatpush.bf16.msra.mxu0 %v5655
    %7810 = vmatmul.bf16.gmra.mxu0 %v1622
    %v7811 = vpop.f32.mrf.mxu0
    %v7812 = vadd.f32 %v7799, %v7811
    %v7813 = vpop.f32.mrf.mxu0
    %7814 = vdwg.mxu0
    %7815 = vmatpush.bf16.msra.mxu0 %v5715
    %7816 = vmatpush.bf16.msra.mxu0 %v5711
    %7817 = vmatpush.bf16.msra.mxu0 %v5707
    %7818 = vmatpush.bf16.msra.mxu0 %v5703
    %7819 = vmatpush.bf16.msra.mxu0 %v5699
    %7820 = vmatpush.bf16.msra.mxu0 %v5695
    %7821 = vmatpush.bf16.msra.mxu0 %v5691
    %7822 = vmatpush.bf16.msra.mxu0 %v5687
    %7823 = vmatmul.bf16.gmra.mxu0 %v1623
    %v7824 = vpop.f32.mrf.mxu0
    %v7825 = vadd.f32 %v7812, %v7824
    %v7826 = vpop.f32.mrf.mxu0
    %7827 = vdwg.mxu0
    %7828 = vmatpush.bf16.msra.mxu0 %v5747
    %7829 = vmatpush.bf16.msra.mxu0 %v5743
    %7830 = vmatpush.bf16.msra.mxu0 %v5739
    %7831 = vmatpush.bf16.msra.mxu0 %v5735
    %7832 = vmatpush.bf16.msra.mxu0 %v5731
    %7833 = vmatpush.bf16.msra.mxu0 %v5727
    %7834 = vmatpush.bf16.msra.mxu0 %v5723
    %7835 = vmatpush.bf16.msra.mxu0 %v5719
    %7836 = vmatmul.bf16.gmra.mxu0 %v1624
    %v7837 = vpop.f32.mrf.mxu0
    %v7838 = vadd.f32 %v7825, %v7837
    %v7839 = vpop.f32.mrf.mxu0
    %7840 = vdwg.mxu0
    %7841 = vmatpush.bf16.msra.mxu0 %v5779
    %7842 = vmatpush.bf16.msra.mxu0 %v5775
    %7843 = vmatpush.bf16.msra.mxu0 %v5771
    %7844 = vmatpush.bf16.msra.mxu0 %v5767
    %7845 = vmatpush.bf16.msra.mxu0 %v5763
    %7846 = vmatpush.bf16.msra.mxu0 %v5759
    %7847 = vmatpush.bf16.msra.mxu0 %v5755
    %7848 = vmatpush.bf16.msra.mxu0 %v5751
    %7849 = vmatmul.bf16.gmra.mxu0 %v1625
    %v7850 = vpop.f32.mrf.mxu0
    %v7851 = vadd.f32 %v7838, %v7850
    %v7852 = vpop.f32.mrf.mxu0
    %7853 = vdwg.mxu0
    %7854 = vmatpush.bf16.msra.mxu0 %v5811
    %7855 = vmatpush.bf16.msra.mxu0 %v5807
    %7856 = vmatpush.bf16.msra.mxu0 %v5803
    %7857 = vmatpush.bf16.msra.mxu0 %v5799
    %7858 = vmatpush.bf16.msra.mxu0 %v5795
    %7859 = vmatpush.bf16.msra.mxu0 %v5791
    %7860 = vmatpush.bf16.msra.mxu0 %v5787
    %7861 = vmatpush.bf16.msra.mxu0 %v5783
    %7862 = vmatmul.bf16.gmra.mxu0 %v1626
    %v7863 = vpop.f32.mrf.mxu0
    %v7864 = vadd.f32 %v7851, %v7863
    %v7865 = vpop.f32.mrf.mxu0
    %7866 = vdwg.mxu0
    %7867 = vmatpush.bf16.msra.mxu0 %v5843
    %7868 = vmatpush.bf16.msra.mxu0 %v5839
    %7869 = vmatpush.bf16.msra.mxu0 %v5835
    %7870 = vmatpush.bf16.msra.mxu0 %v5831
    %7871 = vmatpush.bf16.msra.mxu0 %v5827
    %7872 = vmatpush.bf16.msra.mxu0 %v5823
    %7873 = vmatpush.bf16.msra.mxu0 %v5819
    %7874 = vmatpush.bf16.msra.mxu0 %v5815
    %7875 = vmatmul.bf16.gmra.mxu0 %v1627
    %v7876 = vpop.f32.mrf.mxu0
    %v7877 = vadd.f32 %v7864, %v7876
    %v7878 = vpop.f32.mrf.mxu0
    %7879 = vdwg.mxu0
    %7880 = vmatpush.bf16.msra.mxu0 %v5875
    %7881 = vmatpush.bf16.msra.mxu0 %v5871
    %7882 = vmatpush.bf16.msra.mxu0 %v5867
    %7883 = vmatpush.bf16.msra.mxu0 %v5863
    %7884 = vmatpush.bf16.msra.mxu0 %v5859
    %7885 = vmatpush.bf16.msra.mxu0 %v5855
    %7886 = vmatpush.bf16.msra.mxu0 %v5851
    %7887 = vmatpush.bf16.msra.mxu0 %v5847
    %7888 = vmatmul.bf16.gmra.mxu0 %v1628
    %v7889 = vpop.f32.mrf.mxu0
    %v7890 = vadd.f32 %v7877, %v7889
    %v7891 = vpop.f32.mrf.mxu0
    %7892 = vdwg.mxu0
    %7893 = vmatpush.bf16.msra.mxu0 %v5907
    %7894 = vmatpush.bf16.msra.mxu0 %v5903
    %7895 = vmatpush.bf16.msra.mxu0 %v5899
    %7896 = vmatpush.bf16.msra.mxu0 %v5895
    %7897 = vmatpush.bf16.msra.mxu0 %v5891
    %7898 = vmatpush.bf16.msra.mxu0 %v5887
    %7899 = vmatpush.bf16.msra.mxu0 %v5883
    %7900 = vmatpush.bf16.msra.mxu0 %v5879
    %7901 = vmatmul.bf16.gmra.mxu0 %v1629
    %v7902 = vpop.f32.mrf.mxu0
    %v7903 = vadd.f32 %v7890, %v7902
    %v7904 = vpop.f32.mrf.mxu0
    %7905 = vdwg.mxu0
    %7906 = vmatpush.bf16.msra.mxu0 %v5939
    %7907 = vmatpush.bf16.msra.mxu0 %v5935
    %7908 = vmatpush.bf16.msra.mxu0 %v5931
    %7909 = vmatpush.bf16.msra.mxu0 %v5927
    %7910 = vmatpush.bf16.msra.mxu0 %v5923
    %7911 = vmatpush.bf16.msra.mxu0 %v5919
    %7912 = vmatpush.bf16.msra.mxu0 %v5915
    %7913 = vmatpush.bf16.msra.mxu0 %v5911
    %7914 = vmatmul.bf16.gmra.mxu0 %v1630
    %v7915 = vpop.f32.mrf.mxu0
    %v7916 = vadd.f32 %v7903, %v7915
    %v7917 = vpop.f32.mrf.mxu0
    %7918 = vdwg.mxu0
    %7919 = vmatpush.bf16.msra.mxu0 %v5971
    %7920 = vmatpush.bf16.msra.mxu0 %v5967
    %7921 = vmatpush.bf16.msra.mxu0 %v5963
    %7922 = vmatpush.bf16.msra.mxu0 %v5959
    %7923 = vmatpush.bf16.msra.mxu0 %v5955
    %7924 = vmatpush.bf16.msra.mxu0 %v5951
    %7925 = vmatpush.bf16.msra.mxu0 %v5947
    %7926 = vmatpush.bf16.msra.mxu0 %v5943
    %7927 = vmatmul.bf16.gmra.mxu0 %v1631
    %v7928 = vpop.f32.mrf.mxu0
    %v7929 = vadd.f32 %v7916, %v7928
    %v7930 = vpop.f32.mrf.mxu0
    %7931 = vdwg.mxu0
    %7932 = vmatpush.bf16.msra.mxu0 %v6003
    %7933 = vmatpush.bf16.msra.mxu0 %v5999
    %7934 = vmatpush.bf16.msra.mxu0 %v5995
    %7935 = vmatpush.bf16.msra.mxu0 %v5991
    %7936 = vmatpush.bf16.msra.mxu0 %v5987
    %7937 = vmatpush.bf16.msra.mxu0 %v5983
    %7938 = vmatpush.bf16.msra.mxu0 %v5979
    %7939 = vmatpush.bf16.msra.mxu0 %v5975
    %7940 = vmatmul.bf16.gmra.mxu0 %v1632
    %v7941 = vpop.f32.mrf.mxu0
    %v7942 = vadd.f32 %v7929, %v7941
    %v7943 = vpop.f32.mrf.mxu0
    %7944 = vdwg.mxu0
    %7945 = vmatpush.bf16.msra.mxu0 %v6035
    %7946 = vmatpush.bf16.msra.mxu0 %v6031
    %7947 = vmatpush.bf16.msra.mxu0 %v6027
    %7948 = vmatpush.bf16.msra.mxu0 %v6023
    %7949 = vmatpush.bf16.msra.mxu0 %v6019
    %7950 = vmatpush.bf16.msra.mxu0 %v6015
    %7951 = vmatpush.bf16.msra.mxu0 %v6011
    %7952 = vmatpush.bf16.msra.mxu0 %v6007
    %7953 = vmatmul.bf16.gmra.mxu0 %v1633
    %v7954 = vpop.f32.mrf.mxu0
    %v7955 = vadd.f32 %v7942, %v7954
    %v7956 = vpop.f32.mrf.mxu0
    %7957 = vdwg.mxu0
    %7958 = vmatpush.bf16.msra.mxu0 %v6067
    %7959 = vmatpush.bf16.msra.mxu0 %v6063
    %7960 = vmatpush.bf16.msra.mxu0 %v6059
    %7961 = vmatpush.bf16.msra.mxu0 %v6055
    %7962 = vmatpush.bf16.msra.mxu0 %v6051
    %7963 = vmatpush.bf16.msra.mxu0 %v6047
    %7964 = vmatpush.bf16.msra.mxu0 %v6043
    %7965 = vmatpush.bf16.msra.mxu0 %v6039
    %7966 = vmatmul.bf16.gmra.mxu0 %v1634
    %v7967 = vpop.f32.mrf.mxu0
    %v7968 = vadd.f32 %v7955, %v7967
    %v7969 = vpop.f32.mrf.mxu0
    %7970 = vdwg.mxu0
    %7971 = vmatpush.bf16.msra.mxu0 %v6099
    %7972 = vmatpush.bf16.msra.mxu0 %v6095
    %7973 = vmatpush.bf16.msra.mxu0 %v6091
    %7974 = vmatpush.bf16.msra.mxu0 %v6087
    %7975 = vmatpush.bf16.msra.mxu0 %v6083
    %7976 = vmatpush.bf16.msra.mxu0 %v6079
    %7977 = vmatpush.bf16.msra.mxu0 %v6075
    %7978 = vmatpush.bf16.msra.mxu0 %v6071
    %7979 = vmatmul.bf16.gmra.mxu0 %v1635
    %v7980 = vpop.f32.mrf.mxu0
    %v7981 = vadd.f32 %v7968, %v7980
    %v7982 = vpop.f32.mrf.mxu0
    %7983 = vdwg.mxu0
    %7984 = vmatpush.bf16.msra.mxu0 %v6131
    %7985 = vmatpush.bf16.msra.mxu0 %v6127
    %7986 = vmatpush.bf16.msra.mxu0 %v6123
    %7987 = vmatpush.bf16.msra.mxu0 %v6119
    %7988 = vmatpush.bf16.msra.mxu0 %v6115
    %7989 = vmatpush.bf16.msra.mxu0 %v6111
    %7990 = vmatpush.bf16.msra.mxu0 %v6107
    %7991 = vmatpush.bf16.msra.mxu0 %v6103
    %7992 = vmatmul.bf16.gmra.mxu0 %v1636
    %v7993 = vpop.f32.mrf.mxu0
    %v7994 = vadd.f32 %v7981, %v7993
    %v7995 = vpop.f32.mrf.mxu0
    %7996 = vdwg.mxu0
    %7997 = vmatpush.bf16.msra.mxu0 %v6163
    %7998 = vmatpush.bf16.msra.mxu0 %v6159
    %7999 = vmatpush.bf16.msra.mxu0 %v6155
    %8000 = vmatpush.bf16.msra.mxu0 %v6151
    %8001 = vmatpush.bf16.msra.mxu0 %v6147
    %8002 = vmatpush.bf16.msra.mxu0 %v6143
    %8003 = vmatpush.bf16.msra.mxu0 %v6139
    %8004 = vmatpush.bf16.msra.mxu0 %v6135
    %8005 = vmatmul.bf16.gmra.mxu0 %v1637
    %v8006 = vpop.f32.mrf.mxu0
    %v8007 = vadd.f32 %v7994, %v8006
    %v8008 = vpop.f32.mrf.mxu0
    %8009 = vdwg.mxu0
    %8010 = vmatpush.bf16.msra.mxu0 %v6195
    %8011 = vmatpush.bf16.msra.mxu0 %v6191
    %8012 = vmatpush.bf16.msra.mxu0 %v6187
    %8013 = vmatpush.bf16.msra.mxu0 %v6183
    %8014 = vmatpush.bf16.msra.mxu0 %v6179
    %8015 = vmatpush.bf16.msra.mxu0 %v6175
    %8016 = vmatpush.bf16.msra.mxu0 %v6171
    %8017 = vmatpush.bf16.msra.mxu0 %v6167
    %8018 = vmatmul.bf16.gmra.mxu0 %v1638
    %v8019 = vpop.f32.mrf.mxu0
    %v8020 = vadd.f32 %v8007, %v8019
    %v8021 = vpop.f32.mrf.mxu0
    %8022 = vdwg.mxu0
    %8023 = vmatpush.bf16.msra.mxu0 %v6227
    %8024 = vmatpush.bf16.msra.mxu0 %v6223
    %8025 = vmatpush.bf16.msra.mxu0 %v6219
    %8026 = vmatpush.bf16.msra.mxu0 %v6215
    %8027 = vmatpush.bf16.msra.mxu0 %v6211
    %8028 = vmatpush.bf16.msra.mxu0 %v6207
    %8029 = vmatpush.bf16.msra.mxu0 %v6203
    %8030 = vmatpush.bf16.msra.mxu0 %v6199
    %8031 = vmatmul.bf16.gmra.mxu0 %v1639
    %v8032 = vpop.f32.mrf.mxu0
    %v8033 = vadd.f32 %v8020, %v8032
    %v8034 = vpop.f32.mrf.mxu0
    %8035 = vdwg.mxu0
    %8036 = vmatpush.bf16.msra.mxu0 %v6259
    %8037 = vmatpush.bf16.msra.mxu0 %v6255
    %8038 = vmatpush.bf16.msra.mxu0 %v6251
    %8039 = vmatpush.bf16.msra.mxu0 %v6247
    %8040 = vmatpush.bf16.msra.mxu0 %v6243
    %8041 = vmatpush.bf16.msra.mxu0 %v6239
    %8042 = vmatpush.bf16.msra.mxu0 %v6235
    %8043 = vmatpush.bf16.msra.mxu0 %v6231
    %8044 = vmatmul.bf16.gmra.mxu0 %v1640
    %v8045 = vpop.f32.mrf.mxu0
    %v8046 = vadd.f32 %v8033, %v8045
    %v8047 = vpop.f32.mrf.mxu0
    %8048 = vdwg.mxu0
    %8049 = vmatpush.bf16.msra.mxu0 %v6291
    %8050 = vmatpush.bf16.msra.mxu0 %v6287
    %8051 = vmatpush.bf16.msra.mxu0 %v6283
    %8052 = vmatpush.bf16.msra.mxu0 %v6279
    %8053 = vmatpush.bf16.msra.mxu0 %v6275
    %8054 = vmatpush.bf16.msra.mxu0 %v6271
    %8055 = vmatpush.bf16.msra.mxu0 %v6267
    %8056 = vmatpush.bf16.msra.mxu0 %v6263
    %8057 = vmatmul.bf16.gmra.mxu0 %v1641
    %v8058 = vpop.f32.mrf.mxu0
    %v8059 = vadd.f32 %v8046, %v8058
    %v8060 = vpop.f32.mrf.mxu0
    %8061 = vdwg.mxu0
    %8062 = vmatpush.bf16.msra.mxu0 %v6323
    %8063 = vmatpush.bf16.msra.mxu0 %v6319
    %8064 = vmatpush.bf16.msra.mxu0 %v6315
    %8065 = vmatpush.bf16.msra.mxu0 %v6311
    %8066 = vmatpush.bf16.msra.mxu0 %v6307
    %8067 = vmatpush.bf16.msra.mxu0 %v6303
    %8068 = vmatpush.bf16.msra.mxu0 %v6299
    %8069 = vmatpush.bf16.msra.mxu0 %v6295
    %8070 = vmatmul.bf16.gmra.mxu0 %v1642
    %v8071 = vpop.f32.mrf.mxu0
    %v8072 = vadd.f32 %v8059, %v8071
    %v8073 = vpop.f32.mrf.mxu0
    %8074 = vdwg.mxu0
    %8075 = vmatpush.bf16.msra.mxu0 %v6355
    %8076 = vmatpush.bf16.msra.mxu0 %v6351
    %8077 = vmatpush.bf16.msra.mxu0 %v6347
    %8078 = vmatpush.bf16.msra.mxu0 %v6343
    %8079 = vmatpush.bf16.msra.mxu0 %v6339
    %8080 = vmatpush.bf16.msra.mxu0 %v6335
    %8081 = vmatpush.bf16.msra.mxu0 %v6331
    %8082 = vmatpush.bf16.msra.mxu0 %v6327
    %8083 = vmatmul.bf16.gmra.mxu0 %v1643
    %v8084 = vpop.f32.mrf.mxu0
    %v8085 = vadd.f32 %v8072, %v8084
    %v8086 = vpop.f32.mrf.mxu0
    %8087 = vdwg.mxu0
    %8088 = vmatpush.bf16.msra.mxu0 0
    %8089 = vmatpush.bf16.msra.mxu0 0
    %8090 = vmatpush.bf16.msra.mxu0 0
    %8091 = vmatpush.bf16.msra.mxu0 0
    %8092 = vmatpush.bf16.msra.mxu0 %v6371
    %8093 = vmatpush.bf16.msra.mxu0 %v6367
    %8094 = vmatpush.bf16.msra.mxu0 %v6363
    %8095 = vmatpush.bf16.msra.mxu0 %v6359
    %8096 = vmatmul.bf16.gmra.mxu0 %v7319
    %v8097 = vpop.f32.mrf.mxu0
    %v8098 = vadd.f32 %v8085, %v8097
    %v8099 = vpop.f32.mrf.mxu0
    %8100 = vdwg.mxu0
    %8101 = vmatpush.bf16.msra.mxu0 %v5460
    %8102 = vmatpush.bf16.msra.mxu0 %v5456
    %8103 = vmatpush.bf16.msra.mxu0 %v5452
    %8104 = vmatpush.bf16.msra.mxu0 %v5448
    %8105 = vmatpush.bf16.msra.mxu0 %v5444
    %8106 = vmatpush.bf16.msra.mxu0 %v5440
    %8107 = vmatpush.bf16.msra.mxu0 %v5436
    %8108 = vmatpush.bf16.msra.mxu0 %v5432
    %8109 = vmatmul.bf16.gmra.mxu0 %v1615
    %v8110 = vpop.f32.mrf.mxu0
    %v8111 = vadd.f32 %v2592, %v8110
    %v8112 = vpop.f32.mrf.mxu0
    %8113 = vdwg.mxu0
    %8114 = vmatpush.bf16.msra.mxu0 %v5492
    %8115 = vmatpush.bf16.msra.mxu0 %v5488
    %8116 = vmatpush.bf16.msra.mxu0 %v5484
    %8117 = vmatpush.bf16.msra.mxu0 %v5480
    %8118 = vmatpush.bf16.msra.mxu0 %v5476
    %8119 = vmatpush.bf16.msra.mxu0 %v5472
    %8120 = vmatpush.bf16.msra.mxu0 %v5468
    %8121 = vmatpush.bf16.msra.mxu0 %v5464
    %8122 = vmatmul.bf16.gmra.mxu0 %v1616
    %v8123 = vpop.f32.mrf.mxu0
    %v8124 = vadd.f32 %v8111, %v8123
    %v8125 = vpop.f32.mrf.mxu0
    %8126 = vdwg.mxu0
    %8127 = vmatpush.bf16.msra.mxu0 %v5524
    %8128 = vmatpush.bf16.msra.mxu0 %v5520
    %8129 = vmatpush.bf16.msra.mxu0 %v5516
    %8130 = vmatpush.bf16.msra.mxu0 %v5512
    %8131 = vmatpush.bf16.msra.mxu0 %v5508
    %8132 = vmatpush.bf16.msra.mxu0 %v5504
    %8133 = vmatpush.bf16.msra.mxu0 %v5500
    %8134 = vmatpush.bf16.msra.mxu0 %v5496
    %8135 = vmatmul.bf16.gmra.mxu0 %v1617
    %v8136 = vpop.f32.mrf.mxu0
    %v8137 = vadd.f32 %v8124, %v8136
    %v8138 = vpop.f32.mrf.mxu0
    %8139 = vdwg.mxu0
    %8140 = vmatpush.bf16.msra.mxu0 %v5556
    %8141 = vmatpush.bf16.msra.mxu0 %v5552
    %8142 = vmatpush.bf16.msra.mxu0 %v5548
    %8143 = vmatpush.bf16.msra.mxu0 %v5544
    %8144 = vmatpush.bf16.msra.mxu0 %v5540
    %8145 = vmatpush.bf16.msra.mxu0 %v5536
    %8146 = vmatpush.bf16.msra.mxu0 %v5532
    %8147 = vmatpush.bf16.msra.mxu0 %v5528
    %8148 = vmatmul.bf16.gmra.mxu0 %v1618
    %v8149 = vpop.f32.mrf.mxu0
    %v8150 = vadd.f32 %v8137, %v8149
    %v8151 = vpop.f32.mrf.mxu0
    %8152 = vdwg.mxu0
    %8153 = vmatpush.bf16.msra.mxu0 %v5588
    %8154 = vmatpush.bf16.msra.mxu0 %v5584
    %8155 = vmatpush.bf16.msra.mxu0 %v5580
    %8156 = vmatpush.bf16.msra.mxu0 %v5576
    %8157 = vmatpush.bf16.msra.mxu0 %v5572
    %8158 = vmatpush.bf16.msra.mxu0 %v5568
    %8159 = vmatpush.bf16.msra.mxu0 %v5564
    %8160 = vmatpush.bf16.msra.mxu0 %v5560
    %8161 = vmatmul.bf16.gmra.mxu0 %v1619
    %v8162 = vpop.f32.mrf.mxu0
    %v8163 = vadd.f32 %v8150, %v8162
    %v8164 = vpop.f32.mrf.mxu0
    %8165 = vdwg.mxu0
    %8166 = vmatpush.bf16.msra.mxu0 %v5620
    %8167 = vmatpush.bf16.msra.mxu0 %v5616
    %8168 = vmatpush.bf16.msra.mxu0 %v5612
    %8169 = vmatpush.bf16.msra.mxu0 %v5608
    %8170 = vmatpush.bf16.msra.mxu0 %v5604
    %8171 = vmatpush.bf16.msra.mxu0 %v5600
    %8172 = vmatpush.bf16.msra.mxu0 %v5596
    %8173 = vmatpush.bf16.msra.mxu0 %v5592
    %8174 = vmatmul.bf16.gmra.mxu0 %v1620
    %v8175 = vpop.f32.mrf.mxu0
    %v8176 = vadd.f32 %v8163, %v8175
    %v8177 = vpop.f32.mrf.mxu0
    %8178 = vdwg.mxu0
    %8179 = vmatpush.bf16.msra.mxu0 %v5652
    %8180 = vmatpush.bf16.msra.mxu0 %v5648
    %8181 = vmatpush.bf16.msra.mxu0 %v5644
    %8182 = vmatpush.bf16.msra.mxu0 %v5640
    %8183 = vmatpush.bf16.msra.mxu0 %v5636
    %8184 = vmatpush.bf16.msra.mxu0 %v5632
    %8185 = vmatpush.bf16.msra.mxu0 %v5628
    %8186 = vmatpush.bf16.msra.mxu0 %v5624
    %8187 = vmatmul.bf16.gmra.mxu0 %v1621
    %v8188 = vpop.f32.mrf.mxu0
    %v8189 = vadd.f32 %v8176, %v8188
    %v8190 = vpop.f32.mrf.mxu0
    %8191 = vdwg.mxu0
    %8192 = vmatpush.bf16.msra.mxu0 %v5684
    %8193 = vmatpush.bf16.msra.mxu0 %v5680
    %8194 = vmatpush.bf16.msra.mxu0 %v5676
    %8195 = vmatpush.bf16.msra.mxu0 %v5672
    %8196 = vmatpush.bf16.msra.mxu0 %v5668
    %8197 = vmatpush.bf16.msra.mxu0 %v5664
    %8198 = vmatpush.bf16.msra.mxu0 %v5660
    %8199 = vmatpush.bf16.msra.mxu0 %v5656
    %8200 = vmatmul.bf16.gmra.mxu0 %v1622
    %v8201 = vpop.f32.mrf.mxu0
    %v8202 = vadd.f32 %v8189, %v8201
    %v8203 = vpop.f32.mrf.mxu0
    %8204 = vdwg.mxu0
    %8205 = vmatpush.bf16.msra.mxu0 %v5716
    %8206 = vmatpush.bf16.msra.mxu0 %v5712
    %8207 = vmatpush.bf16.msra.mxu0 %v5708
    %8208 = vmatpush.bf16.msra.mxu0 %v5704
    %8209 = vmatpush.bf16.msra.mxu0 %v5700
    %8210 = vmatpush.bf16.msra.mxu0 %v5696
    %8211 = vmatpush.bf16.msra.mxu0 %v5692
    %8212 = vmatpush.bf16.msra.mxu0 %v5688
    %8213 = vmatmul.bf16.gmra.mxu0 %v1623
    %v8214 = vpop.f32.mrf.mxu0
    %v8215 = vadd.f32 %v8202, %v8214
    %v8216 = vpop.f32.mrf.mxu0
    %8217 = vdwg.mxu0
    %8218 = vmatpush.bf16.msra.mxu0 %v5748
    %8219 = vmatpush.bf16.msra.mxu0 %v5744
    %8220 = vmatpush.bf16.msra.mxu0 %v5740
    %8221 = vmatpush.bf16.msra.mxu0 %v5736
    %8222 = vmatpush.bf16.msra.mxu0 %v5732
    %8223 = vmatpush.bf16.msra.mxu0 %v5728
    %8224 = vmatpush.bf16.msra.mxu0 %v5724
    %8225 = vmatpush.bf16.msra.mxu0 %v5720
    %8226 = vmatmul.bf16.gmra.mxu0 %v1624
    %v8227 = vpop.f32.mrf.mxu0
    %v8228 = vadd.f32 %v8215, %v8227
    %v8229 = vpop.f32.mrf.mxu0
    %8230 = vdwg.mxu0
    %8231 = vmatpush.bf16.msra.mxu0 %v5780
    %8232 = vmatpush.bf16.msra.mxu0 %v5776
    %8233 = vmatpush.bf16.msra.mxu0 %v5772
    %8234 = vmatpush.bf16.msra.mxu0 %v5768
    %8235 = vmatpush.bf16.msra.mxu0 %v5764
    %8236 = vmatpush.bf16.msra.mxu0 %v5760
    %8237 = vmatpush.bf16.msra.mxu0 %v5756
    %8238 = vmatpush.bf16.msra.mxu0 %v5752
    %8239 = vmatmul.bf16.gmra.mxu0 %v1625
    %v8240 = vpop.f32.mrf.mxu0
    %v8241 = vadd.f32 %v8228, %v8240
    %v8242 = vpop.f32.mrf.mxu0
    %8243 = vdwg.mxu0
    %8244 = vmatpush.bf16.msra.mxu0 %v5812
    %8245 = vmatpush.bf16.msra.mxu0 %v5808
    %8246 = vmatpush.bf16.msra.mxu0 %v5804
    %8247 = vmatpush.bf16.msra.mxu0 %v5800
    %8248 = vmatpush.bf16.msra.mxu0 %v5796
    %8249 = vmatpush.bf16.msra.mxu0 %v5792
    %8250 = vmatpush.bf16.msra.mxu0 %v5788
    %8251 = vmatpush.bf16.msra.mxu0 %v5784
    %8252 = vmatmul.bf16.gmra.mxu0 %v1626
    %v8253 = vpop.f32.mrf.mxu0
    %v8254 = vadd.f32 %v8241, %v8253
    %v8255 = vpop.f32.mrf.mxu0
    %8256 = vdwg.mxu0
    %8257 = vmatpush.bf16.msra.mxu0 %v5844
    %8258 = vmatpush.bf16.msra.mxu0 %v5840
    %8259 = vmatpush.bf16.msra.mxu0 %v5836
    %8260 = vmatpush.bf16.msra.mxu0 %v5832
    %8261 = vmatpush.bf16.msra.mxu0 %v5828
    %8262 = vmatpush.bf16.msra.mxu0 %v5824
    %8263 = vmatpush.bf16.msra.mxu0 %v5820
    %8264 = vmatpush.bf16.msra.mxu0 %v5816
    %8265 = vmatmul.bf16.gmra.mxu0 %v1627
    %v8266 = vpop.f32.mrf.mxu0
    %v8267 = vadd.f32 %v8254, %v8266
    %v8268 = vpop.f32.mrf.mxu0
    %8269 = vdwg.mxu0
    %8270 = vmatpush.bf16.msra.mxu0 %v5876
    %8271 = vmatpush.bf16.msra.mxu0 %v5872
    %8272 = vmatpush.bf16.msra.mxu0 %v5868
    %8273 = vmatpush.bf16.msra.mxu0 %v5864
    %8274 = vmatpush.bf16.msra.mxu0 %v5860
    %8275 = vmatpush.bf16.msra.mxu0 %v5856
    %8276 = vmatpush.bf16.msra.mxu0 %v5852
    %8277 = vmatpush.bf16.msra.mxu0 %v5848
    %8278 = vmatmul.bf16.gmra.mxu0 %v1628
    %v8279 = vpop.f32.mrf.mxu0
    %v8280 = vadd.f32 %v8267, %v8279
    %v8281 = vpop.f32.mrf.mxu0
    %8282 = vdwg.mxu0
    %8283 = vmatpush.bf16.msra.mxu0 %v5908
    %8284 = vmatpush.bf16.msra.mxu0 %v5904
    %8285 = vmatpush.bf16.msra.mxu0 %v5900
    %8286 = vmatpush.bf16.msra.mxu0 %v5896
    %8287 = vmatpush.bf16.msra.mxu0 %v5892
    %8288 = vmatpush.bf16.msra.mxu0 %v5888
    %8289 = vmatpush.bf16.msra.mxu0 %v5884
    %8290 = vmatpush.bf16.msra.mxu0 %v5880
    %8291 = vmatmul.bf16.gmra.mxu0 %v1629
    %v8292 = vpop.f32.mrf.mxu0
    %v8293 = vadd.f32 %v8280, %v8292
    %v8294 = vpop.f32.mrf.mxu0
    %8295 = vdwg.mxu0
    %8296 = vmatpush.bf16.msra.mxu0 %v5940
    %8297 = vmatpush.bf16.msra.mxu0 %v5936
    %8298 = vmatpush.bf16.msra.mxu0 %v5932
    %8299 = vmatpush.bf16.msra.mxu0 %v5928
    %8300 = vmatpush.bf16.msra.mxu0 %v5924
    %8301 = vmatpush.bf16.msra.mxu0 %v5920
    %8302 = vmatpush.bf16.msra.mxu0 %v5916
    %8303 = vmatpush.bf16.msra.mxu0 %v5912
    %8304 = vmatmul.bf16.gmra.mxu0 %v1630
    %v8305 = vpop.f32.mrf.mxu0
    %v8306 = vadd.f32 %v8293, %v8305
    %v8307 = vpop.f32.mrf.mxu0
    %8308 = vdwg.mxu0
    %8309 = vmatpush.bf16.msra.mxu0 %v5972
    %8310 = vmatpush.bf16.msra.mxu0 %v5968
    %8311 = vmatpush.bf16.msra.mxu0 %v5964
    %8312 = vmatpush.bf16.msra.mxu0 %v5960
    %8313 = vmatpush.bf16.msra.mxu0 %v5956
    %8314 = vmatpush.bf16.msra.mxu0 %v5952
    %8315 = vmatpush.bf16.msra.mxu0 %v5948
    %8316 = vmatpush.bf16.msra.mxu0 %v5944
    %8317 = vmatmul.bf16.gmra.mxu0 %v1631
    %v8318 = vpop.f32.mrf.mxu0
    %v8319 = vadd.f32 %v8306, %v8318
    %v8320 = vpop.f32.mrf.mxu0
    %8321 = vdwg.mxu0
    %8322 = vmatpush.bf16.msra.mxu0 %v6004
    %8323 = vmatpush.bf16.msra.mxu0 %v6000
    %8324 = vmatpush.bf16.msra.mxu0 %v5996
    %8325 = vmatpush.bf16.msra.mxu0 %v5992
    %8326 = vmatpush.bf16.msra.mxu0 %v5988
    %8327 = vmatpush.bf16.msra.mxu0 %v5984
    %8328 = vmatpush.bf16.msra.mxu0 %v5980
    %8329 = vmatpush.bf16.msra.mxu0 %v5976
    %8330 = vmatmul.bf16.gmra.mxu0 %v1632
    %v8331 = vpop.f32.mrf.mxu0
    %v8332 = vadd.f32 %v8319, %v8331
    %v8333 = vpop.f32.mrf.mxu0
    %8334 = vdwg.mxu0
    %8335 = vmatpush.bf16.msra.mxu0 %v6036
    %8336 = vmatpush.bf16.msra.mxu0 %v6032
    %8337 = vmatpush.bf16.msra.mxu0 %v6028
    %8338 = vmatpush.bf16.msra.mxu0 %v6024
    %8339 = vmatpush.bf16.msra.mxu0 %v6020
    %8340 = vmatpush.bf16.msra.mxu0 %v6016
    %8341 = vmatpush.bf16.msra.mxu0 %v6012
    %8342 = vmatpush.bf16.msra.mxu0 %v6008
    %8343 = vmatmul.bf16.gmra.mxu0 %v1633
    %v8344 = vpop.f32.mrf.mxu0
    %v8345 = vadd.f32 %v8332, %v8344
    %v8346 = vpop.f32.mrf.mxu0
    %8347 = vdwg.mxu0
    %8348 = vmatpush.bf16.msra.mxu0 %v6068
    %8349 = vmatpush.bf16.msra.mxu0 %v6064
    %8350 = vmatpush.bf16.msra.mxu0 %v6060
    %8351 = vmatpush.bf16.msra.mxu0 %v6056
    %8352 = vmatpush.bf16.msra.mxu0 %v6052
    %8353 = vmatpush.bf16.msra.mxu0 %v6048
    %8354 = vmatpush.bf16.msra.mxu0 %v6044
    %8355 = vmatpush.bf16.msra.mxu0 %v6040
    %8356 = vmatmul.bf16.gmra.mxu0 %v1634
    %v8357 = vpop.f32.mrf.mxu0
    %v8358 = vadd.f32 %v8345, %v8357
    %v8359 = vpop.f32.mrf.mxu0
    %8360 = vdwg.mxu0
    %8361 = vmatpush.bf16.msra.mxu0 %v6100
    %8362 = vmatpush.bf16.msra.mxu0 %v6096
    %8363 = vmatpush.bf16.msra.mxu0 %v6092
    %8364 = vmatpush.bf16.msra.mxu0 %v6088
    %8365 = vmatpush.bf16.msra.mxu0 %v6084
    %8366 = vmatpush.bf16.msra.mxu0 %v6080
    %8367 = vmatpush.bf16.msra.mxu0 %v6076
    %8368 = vmatpush.bf16.msra.mxu0 %v6072
    %8369 = vmatmul.bf16.gmra.mxu0 %v1635
    %v8370 = vpop.f32.mrf.mxu0
    %v8371 = vadd.f32 %v8358, %v8370
    %v8372 = vpop.f32.mrf.mxu0
    %8373 = vdwg.mxu0
    %8374 = vmatpush.bf16.msra.mxu0 %v6132
    %8375 = vmatpush.bf16.msra.mxu0 %v6128
    %8376 = vmatpush.bf16.msra.mxu0 %v6124
    %8377 = vmatpush.bf16.msra.mxu0 %v6120
    %8378 = vmatpush.bf16.msra.mxu0 %v6116
    %8379 = vmatpush.bf16.msra.mxu0 %v6112
    %8380 = vmatpush.bf16.msra.mxu0 %v6108
    %8381 = vmatpush.bf16.msra.mxu0 %v6104
    %8382 = vmatmul.bf16.gmra.mxu0 %v1636
    %v8383 = vpop.f32.mrf.mxu0
    %v8384 = vadd.f32 %v8371, %v8383
    %v8385 = vpop.f32.mrf.mxu0
    %8386 = vdwg.mxu0
    %8387 = vmatpush.bf16.msra.mxu0 %v6164
    %8388 = vmatpush.bf16.msra.mxu0 %v6160
    %8389 = vmatpush.bf16.msra.mxu0 %v6156
    %8390 = vmatpush.bf16.msra.mxu0 %v6152
    %8391 = vmatpush.bf16.msra.mxu0 %v6148
    %8392 = vmatpush.bf16.msra.mxu0 %v6144
    %8393 = vmatpush.bf16.msra.mxu0 %v6140
    %8394 = vmatpush.bf16.msra.mxu0 %v6136
    %8395 = vmatmul.bf16.gmra.mxu0 %v1637
    %v8396 = vpop.f32.mrf.mxu0
    %v8397 = vadd.f32 %v8384, %v8396
    %v8398 = vpop.f32.mrf.mxu0
    %8399 = vdwg.mxu0
    %8400 = vmatpush.bf16.msra.mxu0 %v6196
    %8401 = vmatpush.bf16.msra.mxu0 %v6192
    %8402 = vmatpush.bf16.msra.mxu0 %v6188
    %8403 = vmatpush.bf16.msra.mxu0 %v6184
    %8404 = vmatpush.bf16.msra.mxu0 %v6180
    %8405 = vmatpush.bf16.msra.mxu0 %v6176
    %8406 = vmatpush.bf16.msra.mxu0 %v6172
    %8407 = vmatpush.bf16.msra.mxu0 %v6168
    %8408 = vmatmul.bf16.gmra.mxu0 %v1638
    %v8409 = vpop.f32.mrf.mxu0
    %v8410 = vadd.f32 %v8397, %v8409
    %v8411 = vpop.f32.mrf.mxu0
    %8412 = vdwg.mxu0
    %8413 = vmatpush.bf16.msra.mxu0 %v6228
    %8414 = vmatpush.bf16.msra.mxu0 %v6224
    %8415 = vmatpush.bf16.msra.mxu0 %v6220
    %8416 = vmatpush.bf16.msra.mxu0 %v6216
    %8417 = vmatpush.bf16.msra.mxu0 %v6212
    %8418 = vmatpush.bf16.msra.mxu0 %v6208
    %8419 = vmatpush.bf16.msra.mxu0 %v6204
    %8420 = vmatpush.bf16.msra.mxu0 %v6200
    %8421 = vmatmul.bf16.gmra.mxu0 %v1639
    %v8422 = vpop.f32.mrf.mxu0
    %v8423 = vadd.f32 %v8410, %v8422
    %v8424 = vpop.f32.mrf.mxu0
    %8425 = vdwg.mxu0
    %8426 = vmatpush.bf16.msra.mxu0 %v6260
    %8427 = vmatpush.bf16.msra.mxu0 %v6256
    %8428 = vmatpush.bf16.msra.mxu0 %v6252
    %8429 = vmatpush.bf16.msra.mxu0 %v6248
    %8430 = vmatpush.bf16.msra.mxu0 %v6244
    %8431 = vmatpush.bf16.msra.mxu0 %v6240
    %8432 = vmatpush.bf16.msra.mxu0 %v6236
    %8433 = vmatpush.bf16.msra.mxu0 %v6232
    %8434 = vmatmul.bf16.gmra.mxu0 %v1640
    %v8435 = vpop.f32.mrf.mxu0
    %v8436 = vadd.f32 %v8423, %v8435
    %v8437 = vpop.f32.mrf.mxu0
    %8438 = vdwg.mxu0
    %8439 = vmatpush.bf16.msra.mxu0 %v6292
    %8440 = vmatpush.bf16.msra.mxu0 %v6288
    %8441 = vmatpush.bf16.msra.mxu0 %v6284
    %8442 = vmatpush.bf16.msra.mxu0 %v6280
    %8443 = vmatpush.bf16.msra.mxu0 %v6276
    %8444 = vmatpush.bf16.msra.mxu0 %v6272
    %8445 = vmatpush.bf16.msra.mxu0 %v6268
    %8446 = vmatpush.bf16.msra.mxu0 %v6264
    %8447 = vmatmul.bf16.gmra.mxu0 %v1641
    %v8448 = vpop.f32.mrf.mxu0
    %v8449 = vadd.f32 %v8436, %v8448
    %v8450 = vpop.f32.mrf.mxu0
    %8451 = vdwg.mxu0
    %8452 = vmatpush.bf16.msra.mxu0 %v6324
    %8453 = vmatpush.bf16.msra.mxu0 %v6320
    %8454 = vmatpush.bf16.msra.mxu0 %v6316
    %8455 = vmatpush.bf16.msra.mxu0 %v6312
    %8456 = vmatpush.bf16.msra.mxu0 %v6308
    %8457 = vmatpush.bf16.msra.mxu0 %v6304
    %8458 = vmatpush.bf16.msra.mxu0 %v6300
    %8459 = vmatpush.bf16.msra.mxu0 %v6296
    %8460 = vmatmul.bf16.gmra.mxu0 %v1642
    %v8461 = vpop.f32.mrf.mxu0
    %v8462 = vadd.f32 %v8449, %v8461
    %v8463 = vpop.f32.mrf.mxu0
    %8464 = vdwg.mxu0
    %8465 = vmatpush.bf16.msra.mxu0 %v6356
    %8466 = vmatpush.bf16.msra.mxu0 %v6352
    %8467 = vmatpush.bf16.msra.mxu0 %v6348
    %8468 = vmatpush.bf16.msra.mxu0 %v6344
    %8469 = vmatpush.bf16.msra.mxu0 %v6340
    %8470 = vmatpush.bf16.msra.mxu0 %v6336
    %8471 = vmatpush.bf16.msra.mxu0 %v6332
    %8472 = vmatpush.bf16.msra.mxu0 %v6328
    %8473 = vmatmul.bf16.gmra.mxu0 %v1643
    %v8474 = vpop.f32.mrf.mxu0
    %v8475 = vadd.f32 %v8462, %v8474
    %v8476 = vpop.f32.mrf.mxu0
    %8477 = vdwg.mxu0
    %8478 = vmatpush.bf16.msra.mxu0 0
    %8479 = vmatpush.bf16.msra.mxu0 0
    %8480 = vmatpush.bf16.msra.mxu0 0
    %8481 = vmatpush.bf16.msra.mxu0 0
    %8482 = vmatpush.bf16.msra.mxu0 %v6372
    %8483 = vmatpush.bf16.msra.mxu0 %v6368
    %8484 = vmatpush.bf16.msra.mxu0 %v6364
    %8485 = vmatpush.bf16.msra.mxu0 %v6360
    %8486 = vmatmul.bf16.gmra.mxu0 %v7319
    %v8487 = vpop.f32.mrf.mxu0
    %v8488 = vadd.f32 %v8475, %v8487
    %v8489 = vpop.f32.mrf.mxu0
    %8490 = vdwg.mxu0
    %8491 = vmatpush.bf16.msra.mxu0 %v5461
    %8492 = vmatpush.bf16.msra.mxu0 %v5457
    %8493 = vmatpush.bf16.msra.mxu0 %v5453
    %8494 = vmatpush.bf16.msra.mxu0 %v5449
    %8495 = vmatpush.bf16.msra.mxu0 %v5445
    %8496 = vmatpush.bf16.msra.mxu0 %v5441
    %8497 = vmatpush.bf16.msra.mxu0 %v5437
    %8498 = vmatpush.bf16.msra.mxu0 %v5433
    %8499 = vmatmul.bf16.gmra.mxu0 %v1615
    %v8500 = vpop.f32.mrf.mxu0
    %v8501 = vadd.f32 %v2593, %v8500
    %v8502 = vpop.f32.mrf.mxu0
    %8503 = vdwg.mxu0
    %8504 = vmatpush.bf16.msra.mxu0 %v5493
    %8505 = vmatpush.bf16.msra.mxu0 %v5489
    %8506 = vmatpush.bf16.msra.mxu0 %v5485
    %8507 = vmatpush.bf16.msra.mxu0 %v5481
    %8508 = vmatpush.bf16.msra.mxu0 %v5477
    %8509 = vmatpush.bf16.msra.mxu0 %v5473
    %8510 = vmatpush.bf16.msra.mxu0 %v5469
    %8511 = vmatpush.bf16.msra.mxu0 %v5465
    %8512 = vmatmul.bf16.gmra.mxu0 %v1616
    %v8513 = vpop.f32.mrf.mxu0
    %v8514 = vadd.f32 %v8501, %v8513
    %v8515 = vpop.f32.mrf.mxu0
    %8516 = vdwg.mxu0
    %8517 = vmatpush.bf16.msra.mxu0 %v5525
    %8518 = vmatpush.bf16.msra.mxu0 %v5521
    %8519 = vmatpush.bf16.msra.mxu0 %v5517
    %8520 = vmatpush.bf16.msra.mxu0 %v5513
    %8521 = vmatpush.bf16.msra.mxu0 %v5509
    %8522 = vmatpush.bf16.msra.mxu0 %v5505
    %8523 = vmatpush.bf16.msra.mxu0 %v5501
    %8524 = vmatpush.bf16.msra.mxu0 %v5497
    %8525 = vmatmul.bf16.gmra.mxu0 %v1617
    %v8526 = vpop.f32.mrf.mxu0
    %v8527 = vadd.f32 %v8514, %v8526
    %v8528 = vpop.f32.mrf.mxu0
    %8529 = vdwg.mxu0
    %8530 = vmatpush.bf16.msra.mxu0 %v5557
    %8531 = vmatpush.bf16.msra.mxu0 %v5553
    %8532 = vmatpush.bf16.msra.mxu0 %v5549
    %8533 = vmatpush.bf16.msra.mxu0 %v5545
    %8534 = vmatpush.bf16.msra.mxu0 %v5541
    %8535 = vmatpush.bf16.msra.mxu0 %v5537
    %8536 = vmatpush.bf16.msra.mxu0 %v5533
    %8537 = vmatpush.bf16.msra.mxu0 %v5529
    %8538 = vmatmul.bf16.gmra.mxu0 %v1618
    %v8539 = vpop.f32.mrf.mxu0
    %v8540 = vadd.f32 %v8527, %v8539
    %v8541 = vpop.f32.mrf.mxu0
    %8542 = vdwg.mxu0
    %8543 = vmatpush.bf16.msra.mxu0 %v5589
    %8544 = vmatpush.bf16.msra.mxu0 %v5585
    %8545 = vmatpush.bf16.msra.mxu0 %v5581
    %8546 = vmatpush.bf16.msra.mxu0 %v5577
    %8547 = vmatpush.bf16.msra.mxu0 %v5573
    %8548 = vmatpush.bf16.msra.mxu0 %v5569
    %8549 = vmatpush.bf16.msra.mxu0 %v5565
    %8550 = vmatpush.bf16.msra.mxu0 %v5561
    %8551 = vmatmul.bf16.gmra.mxu0 %v1619
    %v8552 = vpop.f32.mrf.mxu0
    %v8553 = vadd.f32 %v8540, %v8552
    %v8554 = vpop.f32.mrf.mxu0
    %8555 = vdwg.mxu0
    %8556 = vmatpush.bf16.msra.mxu0 %v5621
    %8557 = vmatpush.bf16.msra.mxu0 %v5617
    %8558 = vmatpush.bf16.msra.mxu0 %v5613
    %8559 = vmatpush.bf16.msra.mxu0 %v5609
    %8560 = vmatpush.bf16.msra.mxu0 %v5605
    %8561 = vmatpush.bf16.msra.mxu0 %v5601
    %8562 = vmatpush.bf16.msra.mxu0 %v5597
    %8563 = vmatpush.bf16.msra.mxu0 %v5593
    %8564 = vmatmul.bf16.gmra.mxu0 %v1620
    %v8565 = vpop.f32.mrf.mxu0
    %v8566 = vadd.f32 %v8553, %v8565
    %v8567 = vpop.f32.mrf.mxu0
    %8568 = vdwg.mxu0
    %8569 = vmatpush.bf16.msra.mxu0 %v5653
    %8570 = vmatpush.bf16.msra.mxu0 %v5649
    %8571 = vmatpush.bf16.msra.mxu0 %v5645
    %8572 = vmatpush.bf16.msra.mxu0 %v5641
    %8573 = vmatpush.bf16.msra.mxu0 %v5637
    %8574 = vmatpush.bf16.msra.mxu0 %v5633
    %8575 = vmatpush.bf16.msra.mxu0 %v5629
    %8576 = vmatpush.bf16.msra.mxu0 %v5625
    %8577 = vmatmul.bf16.gmra.mxu0 %v1621
    %v8578 = vpop.f32.mrf.mxu0
    %v8579 = vadd.f32 %v8566, %v8578
    %v8580 = vpop.f32.mrf.mxu0
    %8581 = vdwg.mxu0
    %8582 = vmatpush.bf16.msra.mxu0 %v5685
    %8583 = vmatpush.bf16.msra.mxu0 %v5681
    %8584 = vmatpush.bf16.msra.mxu0 %v5677
    %8585 = vmatpush.bf16.msra.mxu0 %v5673
    %8586 = vmatpush.bf16.msra.mxu0 %v5669
    %8587 = vmatpush.bf16.msra.mxu0 %v5665
    %8588 = vmatpush.bf16.msra.mxu0 %v5661
    %8589 = vmatpush.bf16.msra.mxu0 %v5657
    %8590 = vmatmul.bf16.gmra.mxu0 %v1622
    %v8591 = vpop.f32.mrf.mxu0
    %v8592 = vadd.f32 %v8579, %v8591
    %v8593 = vpop.f32.mrf.mxu0
    %8594 = vdwg.mxu0
    %8595 = vmatpush.bf16.msra.mxu0 %v5717
    %8596 = vmatpush.bf16.msra.mxu0 %v5713
    %8597 = vmatpush.bf16.msra.mxu0 %v5709
    %8598 = vmatpush.bf16.msra.mxu0 %v5705
    %8599 = vmatpush.bf16.msra.mxu0 %v5701
    %8600 = vmatpush.bf16.msra.mxu0 %v5697
    %8601 = vmatpush.bf16.msra.mxu0 %v5693
    %8602 = vmatpush.bf16.msra.mxu0 %v5689
    %8603 = vmatmul.bf16.gmra.mxu0 %v1623
    %v8604 = vpop.f32.mrf.mxu0
    %v8605 = vadd.f32 %v8592, %v8604
    %v8606 = vpop.f32.mrf.mxu0
    %8607 = vdwg.mxu0
    %8608 = vmatpush.bf16.msra.mxu0 %v5749
    %8609 = vmatpush.bf16.msra.mxu0 %v5745
    %8610 = vmatpush.bf16.msra.mxu0 %v5741
    %8611 = vmatpush.bf16.msra.mxu0 %v5737
    %8612 = vmatpush.bf16.msra.mxu0 %v5733
    %8613 = vmatpush.bf16.msra.mxu0 %v5729
    %8614 = vmatpush.bf16.msra.mxu0 %v5725
    %8615 = vmatpush.bf16.msra.mxu0 %v5721
    %8616 = vmatmul.bf16.gmra.mxu0 %v1624
    %v8617 = vpop.f32.mrf.mxu0
    %v8618 = vadd.f32 %v8605, %v8617
    %v8619 = vpop.f32.mrf.mxu0
    %8620 = vdwg.mxu0
    %8621 = vmatpush.bf16.msra.mxu0 %v5781
    %8622 = vmatpush.bf16.msra.mxu0 %v5777
    %8623 = vmatpush.bf16.msra.mxu0 %v5773
    %8624 = vmatpush.bf16.msra.mxu0 %v5769
    %8625 = vmatpush.bf16.msra.mxu0 %v5765
    %8626 = vmatpush.bf16.msra.mxu0 %v5761
    %8627 = vmatpush.bf16.msra.mxu0 %v5757
    %8628 = vmatpush.bf16.msra.mxu0 %v5753
    %8629 = vmatmul.bf16.gmra.mxu0 %v1625
    %v8630 = vpop.f32.mrf.mxu0
    %v8631 = vadd.f32 %v8618, %v8630
    %v8632 = vpop.f32.mrf.mxu0
    %8633 = vdwg.mxu0
    %8634 = vmatpush.bf16.msra.mxu0 %v5813
    %8635 = vmatpush.bf16.msra.mxu0 %v5809
    %8636 = vmatpush.bf16.msra.mxu0 %v5805
    %8637 = vmatpush.bf16.msra.mxu0 %v5801
    %8638 = vmatpush.bf16.msra.mxu0 %v5797
    %8639 = vmatpush.bf16.msra.mxu0 %v5793
    %8640 = vmatpush.bf16.msra.mxu0 %v5789
    %8641 = vmatpush.bf16.msra.mxu0 %v5785
    %8642 = vmatmul.bf16.gmra.mxu0 %v1626
    %v8643 = vpop.f32.mrf.mxu0
    %v8644 = vadd.f32 %v8631, %v8643
    %v8645 = vpop.f32.mrf.mxu0
    %8646 = vdwg.mxu0
    %8647 = vmatpush.bf16.msra.mxu0 %v5845
    %8648 = vmatpush.bf16.msra.mxu0 %v5841
    %8649 = vmatpush.bf16.msra.mxu0 %v5837
    %8650 = vmatpush.bf16.msra.mxu0 %v5833
    %8651 = vmatpush.bf16.msra.mxu0 %v5829
    %8652 = vmatpush.bf16.msra.mxu0 %v5825
    %8653 = vmatpush.bf16.msra.mxu0 %v5821
    %8654 = vmatpush.bf16.msra.mxu0 %v5817
    %8655 = vmatmul.bf16.gmra.mxu0 %v1627
    %v8656 = vpop.f32.mrf.mxu0
    %v8657 = vadd.f32 %v8644, %v8656
    %v8658 = vpop.f32.mrf.mxu0
    %8659 = vdwg.mxu0
    %8660 = vmatpush.bf16.msra.mxu0 %v5877
    %8661 = vmatpush.bf16.msra.mxu0 %v5873
    %8662 = vmatpush.bf16.msra.mxu0 %v5869
    %8663 = vmatpush.bf16.msra.mxu0 %v5865
    %8664 = vmatpush.bf16.msra.mxu0 %v5861
    %8665 = vmatpush.bf16.msra.mxu0 %v5857
    %8666 = vmatpush.bf16.msra.mxu0 %v5853
    %8667 = vmatpush.bf16.msra.mxu0 %v5849
    %8668 = vmatmul.bf16.gmra.mxu0 %v1628
    %v8669 = vpop.f32.mrf.mxu0
    %v8670 = vadd.f32 %v8657, %v8669
    %v8671 = vpop.f32.mrf.mxu0
    %8672 = vdwg.mxu0
    %8673 = vmatpush.bf16.msra.mxu0 %v5909
    %8674 = vmatpush.bf16.msra.mxu0 %v5905
    %8675 = vmatpush.bf16.msra.mxu0 %v5901
    %8676 = vmatpush.bf16.msra.mxu0 %v5897
    %8677 = vmatpush.bf16.msra.mxu0 %v5893
    %8678 = vmatpush.bf16.msra.mxu0 %v5889
    %8679 = vmatpush.bf16.msra.mxu0 %v5885
    %8680 = vmatpush.bf16.msra.mxu0 %v5881
    %8681 = vmatmul.bf16.gmra.mxu0 %v1629
    %v8682 = vpop.f32.mrf.mxu0
    %v8683 = vadd.f32 %v8670, %v8682
    %v8684 = vpop.f32.mrf.mxu0
    %8685 = vdwg.mxu0
    %8686 = vmatpush.bf16.msra.mxu0 %v5941
    %8687 = vmatpush.bf16.msra.mxu0 %v5937
    %8688 = vmatpush.bf16.msra.mxu0 %v5933
    %8689 = vmatpush.bf16.msra.mxu0 %v5929
    %8690 = vmatpush.bf16.msra.mxu0 %v5925
    %8691 = vmatpush.bf16.msra.mxu0 %v5921
    %8692 = vmatpush.bf16.msra.mxu0 %v5917
    %8693 = vmatpush.bf16.msra.mxu0 %v5913
    %8694 = vmatmul.bf16.gmra.mxu0 %v1630
    %v8695 = vpop.f32.mrf.mxu0
    %v8696 = vadd.f32 %v8683, %v8695
    %v8697 = vpop.f32.mrf.mxu0
    %8698 = vdwg.mxu0
    %8699 = vmatpush.bf16.msra.mxu0 %v5973
    %8700 = vmatpush.bf16.msra.mxu0 %v5969
    %8701 = vmatpush.bf16.msra.mxu0 %v5965
    %8702 = vmatpush.bf16.msra.mxu0 %v5961
    %8703 = vmatpush.bf16.msra.mxu0 %v5957
    %8704 = vmatpush.bf16.msra.mxu0 %v5953
    %8705 = vmatpush.bf16.msra.mxu0 %v5949
    %8706 = vmatpush.bf16.msra.mxu0 %v5945
    %8707 = vmatmul.bf16.gmra.mxu0 %v1631
    %v8708 = vpop.f32.mrf.mxu0
    %v8709 = vadd.f32 %v8696, %v8708
    %v8710 = vpop.f32.mrf.mxu0
    %8711 = vdwg.mxu0
    %8712 = vmatpush.bf16.msra.mxu0 %v6005
    %8713 = vmatpush.bf16.msra.mxu0 %v6001
    %8714 = vmatpush.bf16.msra.mxu0 %v5997
    %8715 = vmatpush.bf16.msra.mxu0 %v5993
    %8716 = vmatpush.bf16.msra.mxu0 %v5989
    %8717 = vmatpush.bf16.msra.mxu0 %v5985
    %8718 = vmatpush.bf16.msra.mxu0 %v5981
    %8719 = vmatpush.bf16.msra.mxu0 %v5977
    %8720 = vmatmul.bf16.gmra.mxu0 %v1632
    %v8721 = vpop.f32.mrf.mxu0
    %v8722 = vadd.f32 %v8709, %v8721
    %v8723 = vpop.f32.mrf.mxu0
    %8724 = vdwg.mxu0
    %8725 = vmatpush.bf16.msra.mxu0 %v6037
    %8726 = vmatpush.bf16.msra.mxu0 %v6033
    %8727 = vmatpush.bf16.msra.mxu0 %v6029
    %8728 = vmatpush.bf16.msra.mxu0 %v6025
    %8729 = vmatpush.bf16.msra.mxu0 %v6021
    %8730 = vmatpush.bf16.msra.mxu0 %v6017
    %8731 = vmatpush.bf16.msra.mxu0 %v6013
    %8732 = vmatpush.bf16.msra.mxu0 %v6009
    %8733 = vmatmul.bf16.gmra.mxu0 %v1633
    %v8734 = vpop.f32.mrf.mxu0
    %v8735 = vadd.f32 %v8722, %v8734
    %v8736 = vpop.f32.mrf.mxu0
    %8737 = vdwg.mxu0
    %8738 = vmatpush.bf16.msra.mxu0 %v6069
    %8739 = vmatpush.bf16.msra.mxu0 %v6065
    %8740 = vmatpush.bf16.msra.mxu0 %v6061
    %8741 = vmatpush.bf16.msra.mxu0 %v6057
    %8742 = vmatpush.bf16.msra.mxu0 %v6053
    %8743 = vmatpush.bf16.msra.mxu0 %v6049
    %8744 = vmatpush.bf16.msra.mxu0 %v6045
    %8745 = vmatpush.bf16.msra.mxu0 %v6041
    %8746 = vmatmul.bf16.gmra.mxu0 %v1634
    %v8747 = vpop.f32.mrf.mxu0
    %v8748 = vadd.f32 %v8735, %v8747
    %v8749 = vpop.f32.mrf.mxu0
    %8750 = vdwg.mxu0
    %8751 = vmatpush.bf16.msra.mxu0 %v6101
    %8752 = vmatpush.bf16.msra.mxu0 %v6097
    %8753 = vmatpush.bf16.msra.mxu0 %v6093
    %8754 = vmatpush.bf16.msra.mxu0 %v6089
    %8755 = vmatpush.bf16.msra.mxu0 %v6085
    %8756 = vmatpush.bf16.msra.mxu0 %v6081
    %8757 = vmatpush.bf16.msra.mxu0 %v6077
    %8758 = vmatpush.bf16.msra.mxu0 %v6073
    %8759 = vmatmul.bf16.gmra.mxu0 %v1635
    %v8760 = vpop.f32.mrf.mxu0
    %v8761 = vadd.f32 %v8748, %v8760
    %v8762 = vpop.f32.mrf.mxu0
    %8763 = vdwg.mxu0
    %8764 = vmatpush.bf16.msra.mxu0 %v6133
    %8765 = vmatpush.bf16.msra.mxu0 %v6129
    %8766 = vmatpush.bf16.msra.mxu0 %v6125
    %8767 = vmatpush.bf16.msra.mxu0 %v6121
    %8768 = vmatpush.bf16.msra.mxu0 %v6117
    %8769 = vmatpush.bf16.msra.mxu0 %v6113
    %8770 = vmatpush.bf16.msra.mxu0 %v6109
    %8771 = vmatpush.bf16.msra.mxu0 %v6105
    %8772 = vmatmul.bf16.gmra.mxu0 %v1636
    %v8773 = vpop.f32.mrf.mxu0
    %v8774 = vadd.f32 %v8761, %v8773
    %v8775 = vpop.f32.mrf.mxu0
    %8776 = vdwg.mxu0
    %8777 = vmatpush.bf16.msra.mxu0 %v6165
    %8778 = vmatpush.bf16.msra.mxu0 %v6161
    %8779 = vmatpush.bf16.msra.mxu0 %v6157
    %8780 = vmatpush.bf16.msra.mxu0 %v6153
    %8781 = vmatpush.bf16.msra.mxu0 %v6149
    %8782 = vmatpush.bf16.msra.mxu0 %v6145
    %8783 = vmatpush.bf16.msra.mxu0 %v6141
    %8784 = vmatpush.bf16.msra.mxu0 %v6137
    %8785 = vmatmul.bf16.gmra.mxu0 %v1637
    %v8786 = vpop.f32.mrf.mxu0
    %v8787 = vadd.f32 %v8774, %v8786
    %v8788 = vpop.f32.mrf.mxu0
    %8789 = vdwg.mxu0
    %8790 = vmatpush.bf16.msra.mxu0 %v6197
    %8791 = vmatpush.bf16.msra.mxu0 %v6193
    %8792 = vmatpush.bf16.msra.mxu0 %v6189
    %8793 = vmatpush.bf16.msra.mxu0 %v6185
    %8794 = vmatpush.bf16.msra.mxu0 %v6181
    %8795 = vmatpush.bf16.msra.mxu0 %v6177
    %8796 = vmatpush.bf16.msra.mxu0 %v6173
    %8797 = vmatpush.bf16.msra.mxu0 %v6169
    %8798 = vmatmul.bf16.gmra.mxu0 %v1638
    %v8799 = vpop.f32.mrf.mxu0
    %v8800 = vadd.f32 %v8787, %v8799
    %v8801 = vpop.f32.mrf.mxu0
    %8802 = vdwg.mxu0
    %8803 = vmatpush.bf16.msra.mxu0 %v6229
    %8804 = vmatpush.bf16.msra.mxu0 %v6225
    %8805 = vmatpush.bf16.msra.mxu0 %v6221
    %8806 = vmatpush.bf16.msra.mxu0 %v6217
    %8807 = vmatpush.bf16.msra.mxu0 %v6213
    %8808 = vmatpush.bf16.msra.mxu0 %v6209
    %8809 = vmatpush.bf16.msra.mxu0 %v6205
    %8810 = vmatpush.bf16.msra.mxu0 %v6201
    %8811 = vmatmul.bf16.gmra.mxu0 %v1639
    %v8812 = vpop.f32.mrf.mxu0
    %v8813 = vadd.f32 %v8800, %v8812
    %v8814 = vpop.f32.mrf.mxu0
    %8815 = vdwg.mxu0
    %8816 = vmatpush.bf16.msra.mxu0 %v6261
    %8817 = vmatpush.bf16.msra.mxu0 %v6257
    %8818 = vmatpush.bf16.msra.mxu0 %v6253
    %8819 = vmatpush.bf16.msra.mxu0 %v6249
    %8820 = vmatpush.bf16.msra.mxu0 %v6245
    %8821 = vmatpush.bf16.msra.mxu0 %v6241
    %8822 = vmatpush.bf16.msra.mxu0 %v6237
    %8823 = vmatpush.bf16.msra.mxu0 %v6233
    %8824 = vmatmul.bf16.gmra.mxu0 %v1640
    %v8825 = vpop.f32.mrf.mxu0
    %v8826 = vadd.f32 %v8813, %v8825
    %v8827 = vpop.f32.mrf.mxu0
    %8828 = vdwg.mxu0
    %8829 = vmatpush.bf16.msra.mxu0 %v6293
    %8830 = vmatpush.bf16.msra.mxu0 %v6289
    %8831 = vmatpush.bf16.msra.mxu0 %v6285
    %8832 = vmatpush.bf16.msra.mxu0 %v6281
    %8833 = vmatpush.bf16.msra.mxu0 %v6277
    %8834 = vmatpush.bf16.msra.mxu0 %v6273
    %8835 = vmatpush.bf16.msra.mxu0 %v6269
    %8836 = vmatpush.bf16.msra.mxu0 %v6265
    %8837 = vmatmul.bf16.gmra.mxu0 %v1641
    %v8838 = vpop.f32.mrf.mxu0
    %v8839 = vadd.f32 %v8826, %v8838
    %v8840 = vpop.f32.mrf.mxu0
    %8841 = vdwg.mxu0
    %8842 = vmatpush.bf16.msra.mxu0 %v6325
    %8843 = vmatpush.bf16.msra.mxu0 %v6321
    %8844 = vmatpush.bf16.msra.mxu0 %v6317
    %8845 = vmatpush.bf16.msra.mxu0 %v6313
    %8846 = vmatpush.bf16.msra.mxu0 %v6309
    %8847 = vmatpush.bf16.msra.mxu0 %v6305
    %8848 = vmatpush.bf16.msra.mxu0 %v6301
    %8849 = vmatpush.bf16.msra.mxu0 %v6297
    %8850 = vmatmul.bf16.gmra.mxu0 %v1642
    %v8851 = vpop.f32.mrf.mxu0
    %v8852 = vadd.f32 %v8839, %v8851
    %v8853 = vpop.f32.mrf.mxu0
    %8854 = vdwg.mxu0
    %8855 = vmatpush.bf16.msra.mxu0 %v6357
    %8856 = vmatpush.bf16.msra.mxu0 %v6353
    %8857 = vmatpush.bf16.msra.mxu0 %v6349
    %8858 = vmatpush.bf16.msra.mxu0 %v6345
    %8859 = vmatpush.bf16.msra.mxu0 %v6341
    %8860 = vmatpush.bf16.msra.mxu0 %v6337
    %8861 = vmatpush.bf16.msra.mxu0 %v6333
    %8862 = vmatpush.bf16.msra.mxu0 %v6329
    %8863 = vmatmul.bf16.gmra.mxu0 %v1643
    %v8864 = vpop.f32.mrf.mxu0
    %v8865 = vadd.f32 %v8852, %v8864
    %v8866 = vpop.f32.mrf.mxu0
    %8867 = vdwg.mxu0
    %8868 = vmatpush.bf16.msra.mxu0 0
    %8869 = vmatpush.bf16.msra.mxu0 0
    %8870 = vmatpush.bf16.msra.mxu0 0
    %8871 = vmatpush.bf16.msra.mxu0 0
    %8872 = vmatpush.bf16.msra.mxu0 %v6373
    %8873 = vmatpush.bf16.msra.mxu0 %v6369
    %8874 = vmatpush.bf16.msra.mxu0 %v6365
    %8875 = vmatpush.bf16.msra.mxu0 %v6361
    %8876 = vmatmul.bf16.gmra.mxu0 %v7319
    %v8877 = vpop.f32.mrf.mxu0
    %v8878 = vadd.f32 %v8865, %v8877
    %v8879 = vpop.f32.mrf.mxu0
    %8880 = vdwg.mxu0
    %v8881 = vmax.f32 %v7708, 0.0
    %v8882 = vmax.f32 %v8098, 0.0
    %v8883 = vmax.f32 %v8488, 0.0
    %v8884 = vmax.f32 %v8878, 0.0
    %v8885 = vld [vmem:[#allocation6] sm:$0xff]
    %v8886 = vld [vmem:[#allocation6 + $0x8] sm:$0xff]
    %v8887 = vld [vmem:[#allocation6 + $0x10] sm:$0xff]
    %v8888 = vld [vmem:[#allocation6 + $0x18] sm:$0xff]
    %v8889 = vld [vmem:[#allocation6 + $0x20] sm:$0xff]
    %v8890 = vld [vmem:[#allocation6 + $0x28] sm:$0xff]
    %v8891 = vld [vmem:[#allocation6 + $0x30] sm:$0xff]
    %v8892 = vld [vmem:[#allocation6 + $0x38] sm:$0xff]
    %v8893 = vld [vmem:[#allocation6 + $0x40] sm:$0xff]
    %v8894 = vld [vmem:[#allocation6 + $0x48] sm:$0xff]
    %v8895 = vld [vmem:[#allocation6 + $0x50] sm:$0xff]
    %v8896 = vld [vmem:[#allocation6 + $0x58] sm:$0xff]
    %v8897 = vld [vmem:[#allocation6 + $0x60] sm:$0xff]
    %v8898 = vld [vmem:[#allocation6 + $0x68] sm:$0xff]
    %v8899 = vld [vmem:[#allocation6 + $0x70] sm:$0xff]
    %v8900 = vld [vmem:[#allocation6 + $0x78] sm:$0xff]
    %v8901 = vld [vmem:[#allocation6 + $0x80] sm:$0xff]
    %v8902 = vld [vmem:[#allocation6 + $0x88] sm:$0xff]
    %v8903 = vld [vmem:[#allocation6 + $0x90] sm:$0xff]
    %v8904 = vld [vmem:[#allocation6 + $0x98] sm:$0xff]
    %v8905 = vld [vmem:[#allocation6 + $0xa0] sm:$0xff]
    %v8906 = vld [vmem:[#allocation6 + $0xa8] sm:$0xff]
    %v8907 = vld [vmem:[#allocation6 + $0xb0] sm:$0xff]
    %v8908 = vld [vmem:[#allocation6 + $0xb8] sm:$0xff]
    %v8909 = vld [vmem:[#allocation6 + $0xc0] sm:$0xff]
    %v8910 = vld [vmem:[#allocation6 + $0xc8] sm:$0xff]
    %v8911 = vld [vmem:[#allocation6 + $0xd0] sm:$0xff]
    %v8912 = vld [vmem:[#allocation6 + $0xd8] sm:$0xff]
    %v8913 = vld [vmem:[#allocation6 + $0xe0] sm:$0xff]
    %v8914 = vld [vmem:[#allocation6 + $0xe8] sm:$0xff]
    %v8915 = vld [vmem:[#allocation6 + $0xf0] sm:$0xff]
    %v8916 = vld [vmem:[#allocation6 + $0xf8] sm:$0xff]
    %v8917 = vld [vmem:[#allocation6 + $0x100] sm:$0xff]
    %v8918 = vld [vmem:[#allocation6 + $0x108] sm:$0xff]
    %v8919 = vld [vmem:[#allocation6 + $0x110] sm:$0xff]
    %v8920 = vld [vmem:[#allocation6 + $0x118] sm:$0xff]
    %v8921 = vld [vmem:[#allocation6 + $0x120] sm:$0xff]
    %v8922 = vld [vmem:[#allocation6 + $0x128] sm:$0xff]
    %v8923 = vld [vmem:[#allocation6 + $0x130] sm:$0xff]
    %v8924 = vld [vmem:[#allocation6 + $0x138] sm:$0xff]
    %v8925 = vld [vmem:[#allocation6 + $0x140] sm:$0xff]
    %v8926 = vld [vmem:[#allocation6 + $0x148] sm:$0xff]
    %v8927 = vld [vmem:[#allocation6 + $0x150] sm:$0xff]
    %v8928 = vld [vmem:[#allocation6 + $0x158] sm:$0xff]
    %v8929 = vld [vmem:[#allocation6 + $0x160] sm:$0xff]
    %v8930 = vld [vmem:[#allocation6 + $0x168] sm:$0xff]
    %v8931 = vld [vmem:[#allocation6 + $0x170] sm:$0xff]
    %v8932 = vld [vmem:[#allocation6 + $0x178] sm:$0xff]
    %v8933 = vld [vmem:[#allocation6 + $0x180] sm:$0xff]
    %v8934 = vld [vmem:[#allocation6 + $0x188] sm:$0xff]
    %v8935 = vld [vmem:[#allocation6 + $0x190] sm:$0xff]
    %v8936 = vld [vmem:[#allocation6 + $0x198] sm:$0xff]
    %v8937 = vld [vmem:[#allocation6 + $0x1a0] sm:$0xff]
    %v8938 = vld [vmem:[#allocation6 + $0x1a8] sm:$0xff]
    %v8939 = vld [vmem:[#allocation6 + $0x1b0] sm:$0xff]
    %v8940 = vld [vmem:[#allocation6 + $0x1b8] sm:$0xff]
    %v8941 = vld [vmem:[#allocation6 + $0x1c0] sm:$0xff]
    %v8942 = vld [vmem:[#allocation6 + $0x1c8] sm:$0xff]
    %v8943 = vld [vmem:[#allocation6 + $0x1d0] sm:$0xff]
    %v8944 = vld [vmem:[#allocation6 + $0x1d8] sm:$0xff]
    %v8945 = vld [vmem:[#allocation6 + $0x1e0] sm:$0xff]
    %v8946 = vld [vmem:[#allocation6 + $0x1e8] sm:$0xff]
    %v8947 = vld [vmem:[#allocation6 + $0x1f0] sm:$0xff]
    %v8948 = vld [vmem:[#allocation6 + $0x1f8] sm:$0xff]
    %v8949 = vld [vmem:[#allocation6 + $0x200] sm:$0xff]
    %v8950 = vld [vmem:[#allocation6 + $0x208] sm:$0xff]
    %v8951 = vld [vmem:[#allocation6 + $0x210] sm:$0xff]
    %v8952 = vld [vmem:[#allocation6 + $0x218] sm:$0xff]
    %v8953 = vld [vmem:[#allocation6 + $0x220] sm:$0xff]
    %v8954 = vld [vmem:[#allocation6 + $0x228] sm:$0xff]
    %v8955 = vld [vmem:[#allocation6 + $0x230] sm:$0xff]
    %v8956 = vld [vmem:[#allocation6 + $0x238] sm:$0xff]
    %v8957 = vld [vmem:[#allocation6 + $0x240] sm:$0xff]
    %v8958 = vld [vmem:[#allocation6 + $0x248] sm:$0xff]
    %v8959 = vld [vmem:[#allocation6 + $0x250] sm:$0xff]
    %v8960 = vld [vmem:[#allocation6 + $0x258] sm:$0xff]
    %v8961 = vld [vmem:[#allocation6 + $0x260] sm:$0xff]
    %v8962 = vld [vmem:[#allocation6 + $0x268] sm:$0xff]
    %v8963 = vld [vmem:[#allocation6 + $0x270] sm:$0xff]
    %v8964 = vld [vmem:[#allocation6 + $0x278] sm:$0xff]
    %v8965 = vld [vmem:[#allocation6 + $0x280] sm:$0xff]
    %v8966 = vld [vmem:[#allocation6 + $0x288] sm:$0xff]
    %v8967 = vld [vmem:[#allocation6 + $0x290] sm:$0xff]
    %v8968 = vld [vmem:[#allocation6 + $0x298] sm:$0xff]
    %v8969 = vld [vmem:[#allocation6 + $0x2a0] sm:$0xff]
    %v8970 = vld [vmem:[#allocation6 + $0x2a8] sm:$0xff]
    %v8971 = vld [vmem:[#allocation6 + $0x2b0] sm:$0xff]
    %v8972 = vld [vmem:[#allocation6 + $0x2b8] sm:$0xff]
    %v8973 = vld [vmem:[#allocation6 + $0x2c0] sm:$0xff]
    %v8974 = vld [vmem:[#allocation6 + $0x2c8] sm:$0xff]
    %v8975 = vld [vmem:[#allocation6 + $0x2d0] sm:$0xff]
    %v8976 = vld [vmem:[#allocation6 + $0x2d8] sm:$0xff]
    %v8977 = vld [vmem:[#allocation6 + $0x2e0] sm:$0xff]
    %v8978 = vld [vmem:[#allocation6 + $0x2e8] sm:$0xff]
    %v8979 = vld [vmem:[#allocation6 + $0x2f0] sm:$0xff]
    %v8980 = vld [vmem:[#allocation6 + $0x2f8] sm:$0xff]
    %v8981 = vld [vmem:[#allocation6 + $0x300] sm:$0xff]
    %v8982 = vld [vmem:[#allocation6 + $0x308] sm:$0xff]
    %v8983 = vld [vmem:[#allocation6 + $0x310] sm:$0xff]
    %v8984 = vld [vmem:[#allocation6 + $0x318] sm:$0xff]
    %v8985 = vld [vmem:[#allocation6 + $0x320] sm:$0xff]
    %v8986 = vld [vmem:[#allocation6 + $0x328] sm:$0xff]
    %v8987 = vld [vmem:[#allocation6 + $0x330] sm:$0xff]
    %v8988 = vld [vmem:[#allocation6 + $0x338] sm:$0xff]
    %v8989 = vld [vmem:[#allocation6 + $0x340] sm:$0xff]
    %v8990 = vld [vmem:[#allocation6 + $0x348] sm:$0xff]
    %v8991 = vld [vmem:[#allocation6 + $0x350] sm:$0xff]
    %v8992 = vld [vmem:[#allocation6 + $0x358] sm:$0xff]
    %v8993 = vld [vmem:[#allocation6 + $0x360] sm:$0xff]
    %v8994 = vld [vmem:[#allocation6 + $0x368] sm:$0xff]
    %v8995 = vld [vmem:[#allocation6 + $0x370] sm:$0xff]
    %v8996 = vld [vmem:[#allocation6 + $0x378] sm:$0xff]
    %v8997 = vld [vmem:[#allocation6 + $0x380] sm:$0xff]
    %v8998 = vld [vmem:[#allocation6 + $0x388] sm:$0xff]
    %v8999 = vld [vmem:[#allocation6 + $0x390] sm:$0xff]
    %v9000 = vld [vmem:[#allocation6 + $0x398] sm:$0xff]
    %v9001 = vld [vmem:[#allocation6 + $0x3a0] sm:$0xff]
    %v9002 = vld [vmem:[#allocation6 + $0x3a8] sm:$0xff]
    %v9003 = vld [vmem:[#allocation6 + $0x3b0] sm:$0xff]
    %v9004 = vld [vmem:[#allocation6 + $0x3b8] sm:$0xff]
    %v9005 = vld [vmem:[#allocation6 + $0x3c0] sm:$0xff]
    %v9006 = vld [vmem:[#allocation6 + $0x3c8] sm:$0xff]
    %v9007 = vld [vmem:[#allocation6 + $0x3d0] sm:$0xff]
    %v9008 = vld [vmem:[#allocation6 + $0x3d8] sm:$0xff]
    %v9009 = vld [vmem:[#allocation6 + $0x3e0] sm:$0xff]
    %v9010 = vld [vmem:[#allocation6 + $0x3e8] sm:$0xff]
    %v9011 = vld [vmem:[#allocation6 + $0x3f0] sm:$0xff]
    %v9012 = vld [vmem:[#allocation6 + $0x3f8] sm:$0xff]
    %v9013 = vld [vmem:[%s2] sm:$0x3]
    %v9014 = vld [vmem:[#allocation8] sm:$0xf]
    %9016 = vst [vmem:[#allocation1] ss:$4 sm:$0xff] %v9014
    %v9017 = vld.sshfl [vmem:[#allocation1] sm:$0xff pattern:$0x73625140]
    %v9018 = vld.sshfl [vmem:[#allocation1 + $0x8] sm:$0xff pattern:$0x73625140]
    %vm9019 = vcmask 15360
    %v9021 = vsel %vm9019, %v9013, 0
    %vm9023 = vcmask 1041408
    %v9024 = vsel %vm9023, %v9017, 0
    %v9026 = vsel %vm9023, %v9018, 0
    %9028 = vmatpush.msra.mxu0 0.0
    %9029 = vmatpush.msra.mxu0 0.0
    %9030 = vmatpush.msra.mxu0 0.0
    %9031 = vmatpush.msra.mxu0 0.0
    %9032 = vmatpush.msra.mxu0 0.0
    %9033 = vmatpush.msra.mxu0 0.0
    %9034 = vmatpush.msra.mxu0 0.0
    %9035 = vmatpush.msra.mxu0 0.0
    %9036 = vmatpush.msra.mxu0 0.0
    %9037 = vmatpush.msra.mxu0 0.0
    %9038 = vmatpush.msra.mxu0 0.0
    %9039 = vmatpush.msra.mxu0 0.0
    %9040 = vmatpush.msra.mxu0 0.0
    %9041 = vmatpush.msra.mxu0 0.0
    %9042 = vmatpush.msra.mxu0 0.0
    %9043 = vmatpush.msra.mxu0 %v9024
    %9044 = vmatmul.f32.gmra.mxu0 %v9021
    %v9045 = vpop.f32.mrf.mxu0
    %v9046 = vadd.f32 0.0, %v9045
    %9047 = vdwg.mxu0
    %9048 = vmatpush.msra.mxu0 0.0
    %9049 = vmatpush.msra.mxu0 0.0
    %9050 = vmatpush.msra.mxu0 0.0
    %9051 = vmatpush.msra.mxu0 0.0
    %9052 = vmatpush.msra.mxu0 0.0
    %9053 = vmatpush.msra.mxu0 0.0
    %9054 = vmatpush.msra.mxu0 0.0
    %9055 = vmatpush.msra.mxu0 0.0
    %9056 = vmatpush.msra.mxu0 0.0
    %9057 = vmatpush.msra.mxu0 0.0
    %9058 = vmatpush.msra.mxu0 0.0
    %9059 = vmatpush.msra.mxu0 0.0
    %9060 = vmatpush.msra.mxu0 0.0
    %9061 = vmatpush.msra.mxu0 0.0
    %9062 = vmatpush.msra.mxu0 0.0
    %9063 = vmatpush.msra.mxu0 %v9026
    %9064 = vmatmul.f32.gmra.mxu0 %v9021
    %v9065 = vpop.f32.mrf.mxu0
    %v9066 = vadd.f32 0.0, %v9065
    %9067 = vdwg.mxu0
    %9068 = vmatpush.msra.mxu0 %v8915
    %9069 = vmatpush.msra.mxu0 %v8913
    %9070 = vmatpush.msra.mxu0 %v8911
    %9071 = vmatpush.msra.mxu0 %v8909
    %9072 = vmatpush.msra.mxu0 %v8907
    %9073 = vmatpush.msra.mxu0 %v8905
    %9074 = vmatpush.msra.mxu0 %v8903
    %9075 = vmatpush.msra.mxu0 %v8901
    %9076 = vmatpush.msra.mxu0 %v8899
    %9077 = vmatpush.msra.mxu0 %v8897
    %9078 = vmatpush.msra.mxu0 %v8895
    %9079 = vmatpush.msra.mxu0 %v8893
    %9080 = vmatpush.msra.mxu0 %v8891
    %9081 = vmatpush.msra.mxu0 %v8889
    %9082 = vmatpush.msra.mxu0 %v8887
    %9083 = vmatpush.msra.mxu0 %v8885
    %9084 = vmatmul.f32.gmra.mxu0 %v8881
    %v9085 = vpop.f32.mrf.mxu0
    %v9086 = vadd.f32 %v9046, %v9085
    %9087 = vdwg.mxu0
    %9088 = vmatpush.msra.mxu0 %v8947
    %9089 = vmatpush.msra.mxu0 %v8945
    %9090 = vmatpush.msra.mxu0 %v8943
    %9091 = vmatpush.msra.mxu0 %v8941
    %9092 = vmatpush.msra.mxu0 %v8939
    %9093 = vmatpush.msra.mxu0 %v8937
    %9094 = vmatpush.msra.mxu0 %v8935
    %9095 = vmatpush.msra.mxu0 %v8933
    %9096 = vmatpush.msra.mxu0 %v8931
    %9097 = vmatpush.msra.mxu0 %v8929
    %9098 = vmatpush.msra.mxu0 %v8927
    %9099 = vmatpush.msra.mxu0 %v8925
    %9100 = vmatpush.msra.mxu0 %v8923
    %9101 = vmatpush.msra.mxu0 %v8921
    %9102 = vmatpush.msra.mxu0 %v8919
    %9103 = vmatpush.msra.mxu0 %v8917
    %9104 = vmatmul.f32.gmra.mxu0 %v8882
    %v9105 = vpop.f32.mrf.mxu0
    %v9106 = vadd.f32 %v9086, %v9105
    %9107 = vdwg.mxu0
    %9108 = vmatpush.msra.mxu0 %v8979
    %9109 = vmatpush.msra.mxu0 %v8977
    %9110 = vmatpush.msra.mxu0 %v8975
    %9111 = vmatpush.msra.mxu0 %v8973
    %9112 = vmatpush.msra.mxu0 %v8971
    %9113 = vmatpush.msra.mxu0 %v8969
    %9114 = vmatpush.msra.mxu0 %v8967
    %9115 = vmatpush.msra.mxu0 %v8965
    %9116 = vmatpush.msra.mxu0 %v8963
    %9117 = vmatpush.msra.mxu0 %v8961
    %9118 = vmatpush.msra.mxu0 %v8959
    %9119 = vmatpush.msra.mxu0 %v8957
    %9120 = vmatpush.msra.mxu0 %v8955
    %9121 = vmatpush.msra.mxu0 %v8953
    %9122 = vmatpush.msra.mxu0 %v8951
    %9123 = vmatpush.msra.mxu0 %v8949
    %9124 = vmatmul.f32.gmra.mxu0 %v8883
    %v9125 = vpop.f32.mrf.mxu0
    %v9126 = vadd.f32 %v9106, %v9125
    %9127 = vdwg.mxu0
    %9128 = vmatpush.msra.mxu0 %v9011
    %9129 = vmatpush.msra.mxu0 %v9009
    %9130 = vmatpush.msra.mxu0 %v9007
    %9131 = vmatpush.msra.mxu0 %v9005
    %9132 = vmatpush.msra.mxu0 %v9003
    %9133 = vmatpush.msra.mxu0 %v9001
    %9134 = vmatpush.msra.mxu0 %v8999
    %9135 = vmatpush.msra.mxu0 %v8997
    %9136 = vmatpush.msra.mxu0 %v8995
    %9137 = vmatpush.msra.mxu0 %v8993
    %9138 = vmatpush.msra.mxu0 %v8991
    %9139 = vmatpush.msra.mxu0 %v8989
    %9140 = vmatpush.msra.mxu0 %v8987
    %9141 = vmatpush.msra.mxu0 %v8985
    %9142 = vmatpush.msra.mxu0 %v8983
    %9143 = vmatpush.msra.mxu0 %v8981
    %9144 = vmatmul.f32.gmra.mxu0 %v8884
    %v9145 = vpop.f32.mrf.mxu0
    %v9146 = vadd.f32 %v9126, %v9145
    %9147 = vdwg.mxu0
    %9148 = vmatpush.msra.mxu0 %v8916
    %9149 = vmatpush.msra.mxu0 %v8914
    %9150 = vmatpush.msra.mxu0 %v8912
    %9151 = vmatpush.msra.mxu0 %v8910
    %9152 = vmatpush.msra.mxu0 %v8908
    %9153 = vmatpush.msra.mxu0 %v8906
    %9154 = vmatpush.msra.mxu0 %v8904
    %9155 = vmatpush.msra.mxu0 %v8902
    %9156 = vmatpush.msra.mxu0 %v8900
    %9157 = vmatpush.msra.mxu0 %v8898
    %9158 = vmatpush.msra.mxu0 %v8896
    %9159 = vmatpush.msra.mxu0 %v8894
    %9160 = vmatpush.msra.mxu0 %v8892
    %9161 = vmatpush.msra.mxu0 %v8890
    %9162 = vmatpush.msra.mxu0 %v8888
    %9163 = vmatpush.msra.mxu0 %v8886
    %9164 = vmatmul.f32.gmra.mxu0 %v8881
    %v9165 = vpop.f32.mrf.mxu0
    %v9166 = vadd.f32 %v9066, %v9165
    %9167 = vdwg.mxu0
    %9168 = vmatpush.msra.mxu0 %v8948
    %9169 = vmatpush.msra.mxu0 %v8946
    %9170 = vmatpush.msra.mxu0 %v8944
    %9171 = vmatpush.msra.mxu0 %v8942
    %9172 = vmatpush.msra.mxu0 %v8940
    %9173 = vmatpush.msra.mxu0 %v8938
    %9174 = vmatpush.msra.mxu0 %v8936
    %9175 = vmatpush.msra.mxu0 %v8934
    %9176 = vmatpush.msra.mxu0 %v8932
    %9177 = vmatpush.msra.mxu0 %v8930
    %9178 = vmatpush.msra.mxu0 %v8928
    %9179 = vmatpush.msra.mxu0 %v8926
    %9180 = vmatpush.msra.mxu0 %v8924
    %9181 = vmatpush.msra.mxu0 %v8922
    %9182 = vmatpush.msra.mxu0 %v8920
    %9183 = vmatpush.msra.mxu0 %v8918
    %9184 = vmatmul.f32.gmra.mxu0 %v8882
    %v9185 = vpop.f32.mrf.mxu0
    %v9186 = vadd.f32 %v9166, %v9185
    %9187 = vdwg.mxu0
    %9188 = vmatpush.msra.mxu0 %v8980
    %9189 = vmatpush.msra.mxu0 %v8978
    %9190 = vmatpush.msra.mxu0 %v8976
    %9191 = vmatpush.msra.mxu0 %v8974
    %9192 = vmatpush.msra.mxu0 %v8972
    %9193 = vmatpush.msra.mxu0 %v8970
    %9194 = vmatpush.msra.mxu0 %v8968
    %9195 = vmatpush.msra.mxu0 %v8966
    %9196 = vmatpush.msra.mxu0 %v8964
    %9197 = vmatpush.msra.mxu0 %v8962
    %9198 = vmatpush.msra.mxu0 %v8960
    %9199 = vmatpush.msra.mxu0 %v8958
    %9200 = vmatpush.msra.mxu0 %v8956
    %9201 = vmatpush.msra.mxu0 %v8954
    %9202 = vmatpush.msra.mxu0 %v8952
    %9203 = vmatpush.msra.mxu0 %v8950
    %9204 = vmatmul.f32.gmra.mxu0 %v8883
    %v9205 = vpop.f32.mrf.mxu0
    %v9206 = vadd.f32 %v9186, %v9205
    %9207 = vdwg.mxu0
    %9208 = vmatpush.msra.mxu0 %v9012
    %9209 = vmatpush.msra.mxu0 %v9010
    %9210 = vmatpush.msra.mxu0 %v9008
    %9211 = vmatpush.msra.mxu0 %v9006
    %9212 = vmatpush.msra.mxu0 %v9004
    %9213 = vmatpush.msra.mxu0 %v9002
    %9214 = vmatpush.msra.mxu0 %v9000
    %9215 = vmatpush.msra.mxu0 %v8998
    %9216 = vmatpush.msra.mxu0 %v8996
    %9217 = vmatpush.msra.mxu0 %v8994
    %9218 = vmatpush.msra.mxu0 %v8992
    %9219 = vmatpush.msra.mxu0 %v8990
    %9220 = vmatpush.msra.mxu0 %v8988
    %9221 = vmatpush.msra.mxu0 %v8986
    %9222 = vmatpush.msra.mxu0 %v8984
    %9223 = vmatpush.msra.mxu0 %v8982
    %9224 = vmatmul.f32.gmra.mxu0 %v8884
    %v9225 = vpop.f32.mrf.mxu0
    %v9226 = vadd.f32 %v9206, %v9225
    %9227 = vdwg.mxu0
    %v9229 = vperm.slane %v168, 0
    %v9230 = vperm.slane %v168, 1
    %v9233 = vadd.f32 %v9146, %v9229
    %v9234 = vadd.f32 %v9226, %v9230
    %v9235 = vmax.f32 %v9233, 0.0
    %v9236 = vmax.f32 %v9234, 0.0
    %v9237 = vld [vmem:[#allocation9] sm:$0xff]
    %v9238 = vld [vmem:[#allocation9 + $0x8] sm:$0xff]
    %v9239 = vld [vmem:[#allocation9 + $0x10] sm:$0xff]
    %v9240 = vld [vmem:[#allocation9 + $0x18] sm:$0xff]
    %v9241 = vld [vmem:[#allocation9 + $0x20] sm:$0xff]
    %v9242 = vld [vmem:[#allocation9 + $0x28] sm:$0xff]
    %v9243 = vld [vmem:[#allocation9 + $0x30] sm:$0xff]
    %v9244 = vld [vmem:[#allocation9 + $0x38] sm:$0xff]
    %v9245 = vld [vmem:[#allocation9 + $0x40] sm:$0xff]
    %v9246 = vld [vmem:[#allocation9 + $0x48] sm:$0xff]
    %v9247 = vld [vmem:[#allocation9 + $0x50] sm:$0xff]
    %v9248 = vld [vmem:[#allocation9 + $0x58] sm:$0xff]
    %v9249 = vld [vmem:[#allocation9 + $0x60] sm:$0xff]
    %v9250 = vld [vmem:[#allocation9 + $0x68] sm:$0xff]
    %v9251 = vld [vmem:[#allocation9 + $0x70] sm:$0xff]
    %v9252 = vld [vmem:[#allocation9 + $0x78] sm:$0xff]
    %v9253 = vld [vmem:[#allocation9 + $0x80] sm:$0xff]
    %v9254 = vld [vmem:[#allocation9 + $0x88] sm:$0xff]
    %v9255 = vld [vmem:[#allocation9 + $0x90] sm:$0xff]
    %v9256 = vld [vmem:[#allocation9 + $0x98] sm:$0xff]
    %v9257 = vld [vmem:[#allocation9 + $0xa0] sm:$0xff]
    %v9258 = vld [vmem:[#allocation9 + $0xa8] sm:$0xff]
    %v9259 = vld [vmem:[#allocation9 + $0xb0] sm:$0xff]
    %v9260 = vld [vmem:[#allocation9 + $0xb8] sm:$0xff]
    %v9261 = vld [vmem:[#allocation9 + $0xc0] sm:$0xff]
    %v9262 = vld [vmem:[#allocation9 + $0xc8] sm:$0xff]
    %v9263 = vld [vmem:[#allocation9 + $0xd0] sm:$0xff]
    %v9264 = vld [vmem:[#allocation9 + $0xd8] sm:$0xff]
    %v9265 = vld [vmem:[#allocation9 + $0xe0] sm:$0xff]
    %v9266 = vld [vmem:[#allocation9 + $0xe8] sm:$0xff]
    %v9267 = vld [vmem:[#allocation9 + $0xf0] sm:$0xff]
    %v9268 = vld [vmem:[#allocation9 + $0xf8] sm:$0xff]
    %v9270 = vperm.slane %v169, 0
    %9272 = vmatpush.msra.mxu0 %v9252
    %9273 = vmatpush.msra.mxu0 %v9251
    %9274 = vmatpush.msra.mxu0 %v9250
    %9275 = vmatpush.msra.mxu0 %v9249
    %9276 = vmatpush.msra.mxu0 %v9248
    %9277 = vmatpush.msra.mxu0 %v9247
    %9278 = vmatpush.msra.mxu0 %v9246
    %9279 = vmatpush.msra.mxu0 %v9245
    %9280 = vmatpush.msra.mxu0 %v9244
    %9281 = vmatpush.msra.mxu0 %v9243
    %9282 = vmatpush.msra.mxu0 %v9242
    %9283 = vmatpush.msra.mxu0 %v9241
    %9284 = vmatpush.msra.mxu0 %v9240
    %9285 = vmatpush.msra.mxu0 %v9239
    %9286 = vmatpush.msra.mxu0 %v9238
    %9287 = vmatpush.msra.mxu0 %v9237
    %9288 = vmatmul.f32.gmra.mxu0 %v9235
    %v9289 = vpop.f32.mrf.mxu0
    %v9290 = vadd.f32 %v9270, %v9289
    %9291 = vdwg.mxu0
    %9292 = vmatpush.msra.mxu0 %v9268
    %9293 = vmatpush.msra.mxu0 %v9267
    %9294 = vmatpush.msra.mxu0 %v9266
    %9295 = vmatpush.msra.mxu0 %v9265
    %9296 = vmatpush.msra.mxu0 %v9264
    %9297 = vmatpush.msra.mxu0 %v9263
    %9298 = vmatpush.msra.mxu0 %v9262
    %9299 = vmatpush.msra.mxu0 %v9261
    %9300 = vmatpush.msra.mxu0 %v9260
    %9301 = vmatpush.msra.mxu0 %v9259
    %9302 = vmatpush.msra.mxu0 %v9258
    %9303 = vmatpush.msra.mxu0 %v9257
    %9304 = vmatpush.msra.mxu0 %v9256
    %9305 = vmatpush.msra.mxu0 %v9255
    %9306 = vmatpush.msra.mxu0 %v9254
    %9307 = vmatpush.msra.mxu0 %v9253
    %9308 = vmatmul.f32.gmra.mxu0 %v9236
    %v9309 = vpop.f32.mrf.mxu0
    %v9310 = vadd.f32 %v9290, %v9309
    %9311 = vdwg.mxu0
    %v9312 = vmax.f32 %v9310, 0.0
    %v9313 = vld [vmem:[#allocation11] sm:$0xff]
    %v9314 = vld [vmem:[#allocation11 + $0x8] sm:$0xff]
    %v9315 = vld [vmem:[#allocation11 + $0x10] sm:$0xff]
    %v9316 = vld [vmem:[#allocation11 + $0x18] sm:$0xff]
    %v9317 = vld [vmem:[#allocation11 + $0x20] sm:$0xff]
    %v9318 = vld [vmem:[#allocation11 + $0x28] sm:$0xff]
    %v9319 = vld [vmem:[#allocation11 + $0x30] sm:$0xff]
    %v9320 = vld [vmem:[#allocation11 + $0x38] sm:$0xff]
    %v9321 = vld [vmem:[#allocation11 + $0x40] sm:$0xff]
    %v9322 = vld [vmem:[#allocation11 + $0x48] sm:$0xff]
    %v9323 = vld [vmem:[#allocation11 + $0x50] sm:$0xff]
    %v9324 = vld [vmem:[#allocation11 + $0x58] sm:$0xff]
    %v9325 = vld [vmem:[#allocation11 + $0x60] sm:$0xff]
    %v9326 = vld [vmem:[#allocation11 + $0x68] sm:$0xff]
    %v9327 = vld [vmem:[#allocation11 + $0x70] sm:$0xff]
    %v9328 = vld [vmem:[#allocation11 + $0x78] sm:$0xff]
    %v9329 = vld [vmem:[#allocation11 + $0x80] sm:$0xff]
    %v9330 = vld [vmem:[#allocation11 + $0x88] sm:$0xff]
    %v9331 = vld [vmem:[#allocation11 + $0x90] sm:$0xff]
    %v9332 = vld [vmem:[#allocation11 + $0x98] sm:$0xff]
    %v9333 = vld [vmem:[#allocation11 + $0xa0] sm:$0xff]
    %v9334 = vld [vmem:[#allocation11 + $0xa8] sm:$0xff]
    %v9335 = vld [vmem:[#allocation11 + $0xb0] sm:$0xff]
    %v9336 = vld [vmem:[#allocation11 + $0xb8] sm:$0xff]
    %v9337 = vld [vmem:[#allocation11 + $0xc0] sm:$0xff]
    %v9338 = vld [vmem:[#allocation11 + $0xc8] sm:$0xff]
    %v9339 = vld [vmem:[#allocation11 + $0xd0] sm:$0xff]
    %v9340 = vld [vmem:[#allocation11 + $0xd8] sm:$0xff]
    %v9341 = vld [vmem:[#allocation11 + $0xe0] sm:$0xff]
    %v9342 = vld [vmem:[#allocation11 + $0xe8] sm:$0xff]
    %v9343 = vld [vmem:[#allocation11 + $0xf0] sm:$0xff]
    %v9344 = vld [vmem:[#allocation11 + $0xf8] sm:$0xff]
    %v9345 = vld [vmem:[#allocation11 + $0x100] sm:$0xff]
    %v9346 = vld [vmem:[#allocation11 + $0x108] sm:$0xff]
    %v9347 = vld [vmem:[#allocation11 + $0x110] sm:$0xff]
    %v9348 = vld [vmem:[#allocation11 + $0x118] sm:$0xff]
    %v9349 = vld [vmem:[#allocation11 + $0x120] sm:$0xff]
    %v9350 = vld [vmem:[#allocation11 + $0x128] sm:$0xff]
    %v9351 = vld [vmem:[#allocation11 + $0x130] sm:$0xff]
    %v9352 = vld [vmem:[#allocation11 + $0x138] sm:$0xff]
    %v9353 = vld [vmem:[#allocation11 + $0x140] sm:$0xff]
    %v9354 = vld [vmem:[#allocation11 + $0x148] sm:$0xff]
    %v9355 = vld [vmem:[#allocation11 + $0x150] sm:$0xff]
    %v9356 = vld [vmem:[#allocation11 + $0x158] sm:$0xff]
    %v9357 = vld [vmem:[#allocation11 + $0x160] sm:$0xff]
    %v9358 = vld [vmem:[#allocation11 + $0x168] sm:$0xff]
    %v9359 = vld [vmem:[#allocation11 + $0x170] sm:$0xff]
    %v9360 = vld [vmem:[#allocation11 + $0x178] sm:$0xff]
    %v9361 = vld [vmem:[#allocation11 + $0x180] sm:$0xff]
    %v9362 = vld [vmem:[#allocation11 + $0x188] sm:$0xff]
    %v9363 = vld [vmem:[#allocation11 + $0x190] sm:$0xff]
    %v9364 = vld [vmem:[#allocation11 + $0x198] sm:$0xff]
    %v9365 = vld [vmem:[#allocation11 + $0x1a0] sm:$0xff]
    %v9366 = vld [vmem:[#allocation11 + $0x1a8] sm:$0xff]
    %v9367 = vld [vmem:[#allocation11 + $0x1b0] sm:$0xff]
    %v9368 = vld [vmem:[#allocation11 + $0x1b8] sm:$0xff]
    %v9369 = vld [vmem:[#allocation11 + $0x1c0] sm:$0xff]
    %v9370 = vld [vmem:[#allocation11 + $0x1c8] sm:$0xff]
    %v9371 = vld [vmem:[#allocation11 + $0x1d0] sm:$0xff]
    %v9372 = vld [vmem:[#allocation11 + $0x1d8] sm:$0xff]
    %v9373 = vld [vmem:[#allocation11 + $0x1e0] sm:$0xff]
    %v9374 = vld [vmem:[#allocation11 + $0x1e8] sm:$0xff]
    %v9375 = vld [vmem:[#allocation11 + $0x1f0] sm:$0xff]
    %v9376 = vld [vmem:[#allocation11 + $0x1f8] sm:$0xff]
    %v9377 = vld [vmem:[#allocation11 + $0x200] sm:$0xff]
    %v9378 = vld [vmem:[#allocation11 + $0x208] sm:$0xff]
    %v9379 = vld [vmem:[#allocation11 + $0x210] sm:$0xff]
    %v9380 = vld [vmem:[#allocation11 + $0x218] sm:$0xff]
    %v9381 = vld [vmem:[#allocation11 + $0x220] sm:$0xff]
    %v9382 = vld [vmem:[#allocation11 + $0x228] sm:$0xff]
    %v9383 = vld [vmem:[#allocation11 + $0x230] sm:$0xff]
    %v9384 = vld [vmem:[#allocation11 + $0x238] sm:$0xff]
    %v9385 = vld [vmem:[#allocation11 + $0x240] sm:$0xff]
    %v9386 = vld [vmem:[#allocation11 + $0x248] sm:$0xff]
    %v9387 = vld [vmem:[#allocation11 + $0x250] sm:$0xff]
    %v9388 = vld [vmem:[#allocation11 + $0x258] sm:$0xff]
    %v9389 = vld [vmem:[#allocation11 + $0x260] sm:$0xff]
    %v9390 = vld [vmem:[#allocation11 + $0x268] sm:$0xff]
    %v9391 = vld [vmem:[#allocation11 + $0x270] sm:$0xff]
    %v9392 = vld [vmem:[#allocation11 + $0x278] sm:$0xff]
    %v9393 = vld [vmem:[#allocation11 + $0x280] sm:$0xff]
    %v9394 = vld [vmem:[#allocation11 + $0x288] sm:$0xff]
    %v9395 = vld [vmem:[#allocation11 + $0x290] sm:$0xff]
    %v9396 = vld [vmem:[#allocation11 + $0x298] sm:$0xff]
    %v9397 = vld [vmem:[#allocation11 + $0x2a0] sm:$0xff]
    %v9398 = vld [vmem:[#allocation11 + $0x2a8] sm:$0xff]
    %v9399 = vld [vmem:[#allocation11 + $0x2b0] sm:$0xff]
    %v9400 = vld [vmem:[#allocation11 + $0x2b8] sm:$0xff]
    %v9401 = vld [vmem:[#allocation11 + $0x2c0] sm:$0xff]
    %v9402 = vld [vmem:[#allocation11 + $0x2c8] sm:$0xff]
    %v9403 = vld [vmem:[#allocation11 + $0x2d0] sm:$0xff]
    %v9404 = vld [vmem:[#allocation11 + $0x2d8] sm:$0xff]
    %v9405 = vld [vmem:[#allocation11 + $0x2e0] sm:$0xff]
    %v9406 = vld [vmem:[#allocation11 + $0x2e8] sm:$0xff]
    %v9407 = vld [vmem:[#allocation11 + $0x2f0] sm:$0xff]
    %v9408 = vld [vmem:[#allocation11 + $0x2f8] sm:$0xff]
    %v9409 = vld [vmem:[#allocation11 + $0x300] sm:$0xff]
    %v9410 = vld [vmem:[#allocation11 + $0x308] sm:$0xff]
    %v9411 = vld [vmem:[#allocation11 + $0x310] sm:$0xff]
    %v9412 = vld [vmem:[#allocation11 + $0x318] sm:$0xff]
    %v9413 = vld [vmem:[#allocation11 + $0x320] sm:$0xff]
    %v9414 = vld [vmem:[#allocation11 + $0x328] sm:$0xff]
    %v9415 = vld [vmem:[#allocation11 + $0x330] sm:$0xff]
    %v9416 = vld [vmem:[#allocation11 + $0x338] sm:$0xff]
    %v9417 = vld [vmem:[#allocation11 + $0x340] sm:$0xff]
    %v9418 = vld [vmem:[#allocation11 + $0x348] sm:$0xff]
    %v9419 = vld [vmem:[#allocation11 + $0x350] sm:$0xff]
    %v9420 = vld [vmem:[#allocation11 + $0x358] sm:$0xff]
    %v9421 = vld [vmem:[#allocation11 + $0x360] sm:$0xff]
    %v9422 = vld [vmem:[#allocation11 + $0x368] sm:$0xff]
    %v9423 = vld [vmem:[#allocation11 + $0x370] sm:$0xff]
    %v9424 = vld [vmem:[#allocation11 + $0x378] sm:$0xff]
    %v9425 = vld [vmem:[#allocation11 + $0x380] sm:$0xff]
    %v9426 = vld [vmem:[#allocation11 + $0x388] sm:$0xff]
    %v9427 = vld [vmem:[#allocation11 + $0x390] sm:$0xff]
    %v9428 = vld [vmem:[#allocation11 + $0x398] sm:$0xff]
    %v9429 = vld [vmem:[#allocation11 + $0x3a0] sm:$0xff]
    %v9430 = vld [vmem:[#allocation11 + $0x3a8] sm:$0xff]
    %v9431 = vld [vmem:[#allocation11 + $0x3b0] sm:$0xff]
    %v9432 = vld [vmem:[#allocation11 + $0x3b8] sm:$0xff]
    %v9433 = vld [vmem:[#allocation11 + $0x3c0] sm:$0xff]
    %v9434 = vld [vmem:[#allocation11 + $0x3c8] sm:$0xff]
    %v9435 = vld [vmem:[#allocation11 + $0x3d0] sm:$0xff]
    %v9436 = vld [vmem:[#allocation11 + $0x3d8] sm:$0xff]
    %v9437 = vld [vmem:[#allocation11 + $0x3e0] sm:$0xff]
    %v9438 = vld [vmem:[#allocation11 + $0x3e8] sm:$0xff]
    %v9439 = vld [vmem:[#allocation11 + $0x3f0] sm:$0xff]
    %v9440 = vld [vmem:[#allocation11 + $0x3f8] sm:$0xff]
    %v9441 = vld [vmem:[%s9] sm:$0xff]
    %v9442 = vld [vmem:[%s9 + $0x8] sm:$0xff]
    %v9443 = vld [vmem:[%s9 + $0x10] sm:$0xff]
    %v9444 = vld [vmem:[%s9 + $0x18] sm:$0xff]
    %v9445 = vld [vmem:[%s9 + $0x20] sm:$0xff]
    %v9446 = vld [vmem:[%s9 + $0x28] sm:$0xff]
    %v9447 = vld [vmem:[%s9 + $0x30] sm:$0xff]
    %v9448 = vld [vmem:[%s9 + $0x38] sm:$0xff]
    %v9449 = vld [vmem:[%s9 + $0x40] sm:$0xff]
    %v9450 = vld [vmem:[%s9 + $0x48] sm:$0xff]
    %v9451 = vld [vmem:[%s9 + $0x50] sm:$0xff]
    %v9452 = vld [vmem:[%s9 + $0x58] sm:$0xff]
    %v9453 = vld [vmem:[%s9 + $0x60] sm:$0xff]
    %v9454 = vld [vmem:[%s9 + $0x68] sm:$0xff]
    %v9455 = vld [vmem:[%s9 + $0x70] sm:$0xff]
    %v9456 = vld [vmem:[%s9 + $0x78] sm:$0xff]
    %v9457 = vlaneseq
    %v9458 = vand.u32 %v9457, 127
    %v9459 = vld [vmem:[#allocation14] sm:$0x1]
    %v9460 = vld [vmem:[#allocation15] sm:$0x1]
    %9461 = vmatpush.msra.mxu0 %v9437
    %9462 = vmatpush.msra.mxu0 %v9433
    %9463 = vmatpush.msra.mxu0 %v9429
    %9464 = vmatpush.msra.mxu0 %v9425
    %9465 = vmatpush.msra.mxu0 %v9421
    %9466 = vmatpush.msra.mxu0 %v9417
    %9467 = vmatpush.msra.mxu0 %v9413
    %9468 = vmatpush.msra.mxu0 %v9409
    %9469 = vmatpush.msra.mxu0 %v9405
    %9470 = vmatpush.msra.mxu0 %v9401
    %9471 = vmatpush.msra.mxu0 %v9397
    %9472 = vmatpush.msra.mxu0 %v9393
    %9473 = vmatpush.msra.mxu0 %v9389
    %9474 = vmatpush.msra.mxu0 %v9385
    %9475 = vmatpush.msra.mxu0 %v9381
    %9476 = vmatpush.msra.mxu0 %v9377
    %9477 = vmatmul.f32.gmra.mxu0 %v9459
    %v9478 = vpop.f32.mrf.mxu0
    %v9479 = vadd.f32 0.0, %v9478
    %9480 = vdwg.mxu0
    %9481 = vmatpush.msra.mxu0 %v9438
    %9482 = vmatpush.msra.mxu0 %v9434
    %9483 = vmatpush.msra.mxu0 %v9430
    %9484 = vmatpush.msra.mxu0 %v9426
    %9485 = vmatpush.msra.mxu0 %v9422
    %9486 = vmatpush.msra.mxu0 %v9418
    %9487 = vmatpush.msra.mxu0 %v9414
    %9488 = vmatpush.msra.mxu0 %v9410
    %9489 = vmatpush.msra.mxu0 %v9406
    %9490 = vmatpush.msra.mxu0 %v9402
    %9491 = vmatpush.msra.mxu0 %v9398
    %9492 = vmatpush.msra.mxu0 %v9394
    %9493 = vmatpush.msra.mxu0 %v9390
    %9494 = vmatpush.msra.mxu0 %v9386
    %9495 = vmatpush.msra.mxu0 %v9382
    %9496 = vmatpush.msra.mxu0 %v9378
    %9497 = vmatmul.f32.gmra.mxu0 %v9459
    %v9498 = vpop.f32.mrf.mxu0
    %v9499 = vadd.f32 0.0, %v9498
    %9500 = vdwg.mxu0
    %9501 = vmatpush.msra.mxu0 %v9439
    %9502 = vmatpush.msra.mxu0 %v9435
    %9503 = vmatpush.msra.mxu0 %v9431
    %9504 = vmatpush.msra.mxu0 %v9427
    %9505 = vmatpush.msra.mxu0 %v9423
    %9506 = vmatpush.msra.mxu0 %v9419
    %9507 = vmatpush.msra.mxu0 %v9415
    %9508 = vmatpush.msra.mxu0 %v9411
    %9509 = vmatpush.msra.mxu0 %v9407
    %9510 = vmatpush.msra.mxu0 %v9403
    %9511 = vmatpush.msra.mxu0 %v9399
    %9512 = vmatpush.msra.mxu0 %v9395
    %9513 = vmatpush.msra.mxu0 %v9391
    %9514 = vmatpush.msra.mxu0 %v9387
    %9515 = vmatpush.msra.mxu0 %v9383
    %9516 = vmatpush.msra.mxu0 %v9379
    %9517 = vmatmul.f32.gmra.mxu0 %v9459
    %v9518 = vpop.f32.mrf.mxu0
    %v9519 = vadd.f32 0.0, %v9518
    %9520 = vdwg.mxu0
    %9521 = vmatpush.msra.mxu0 %v9440
    %9522 = vmatpush.msra.mxu0 %v9436
    %9523 = vmatpush.msra.mxu0 %v9432
    %9524 = vmatpush.msra.mxu0 %v9428
    %9525 = vmatpush.msra.mxu0 %v9424
    %9526 = vmatpush.msra.mxu0 %v9420
    %9527 = vmatpush.msra.mxu0 %v9416
    %9528 = vmatpush.msra.mxu0 %v9412
    %9529 = vmatpush.msra.mxu0 %v9408
    %9530 = vmatpush.msra.mxu0 %v9404
    %9531 = vmatpush.msra.mxu0 %v9400
    %9532 = vmatpush.msra.mxu0 %v9396
    %9533 = vmatpush.msra.mxu0 %v9392
    %9534 = vmatpush.msra.mxu0 %v9388
    %9535 = vmatpush.msra.mxu0 %v9384
    %9536 = vmatpush.msra.mxu0 %v9380
    %9537 = vmatmul.f32.gmra.mxu0 %v9459
    %v9538 = vpop.f32.mrf.mxu0
    %v9539 = vadd.f32 0.0, %v9538
    %9540 = vdwg.mxu0
    %9541 = vmatpush.msra.mxu0 %v9373
    %9542 = vmatpush.msra.mxu0 %v9369
    %9543 = vmatpush.msra.mxu0 %v9365
    %9544 = vmatpush.msra.mxu0 %v9361
    %9545 = vmatpush.msra.mxu0 %v9357
    %9546 = vmatpush.msra.mxu0 %v9353
    %9547 = vmatpush.msra.mxu0 %v9349
    %9548 = vmatpush.msra.mxu0 %v9345
    %9549 = vmatpush.msra.mxu0 %v9341
    %9550 = vmatpush.msra.mxu0 %v9337
    %9551 = vmatpush.msra.mxu0 %v9333
    %9552 = vmatpush.msra.mxu0 %v9329
    %9553 = vmatpush.msra.mxu0 %v9325
    %9554 = vmatpush.msra.mxu0 %v9321
    %9555 = vmatpush.msra.mxu0 %v9317
    %9556 = vmatpush.msra.mxu0 %v9313
    %9557 = vmatmul.f32.gmra.mxu0 %v9312
    %v9558 = vpop.f32.mrf.mxu0
    %v9559 = vadd.f32 %v9479, %v9558
    %9560 = vdwg.mxu0
    %9561 = vmatpush.msra.mxu0 %v9374
    %9562 = vmatpush.msra.mxu0 %v9370
    %9563 = vmatpush.msra.mxu0 %v9366
    %9564 = vmatpush.msra.mxu0 %v9362
    %9565 = vmatpush.msra.mxu0 %v9358
    %9566 = vmatpush.msra.mxu0 %v9354
    %9567 = vmatpush.msra.mxu0 %v9350
    %9568 = vmatpush.msra.mxu0 %v9346
    %9569 = vmatpush.msra.mxu0 %v9342
    %9570 = vmatpush.msra.mxu0 %v9338
    %9571 = vmatpush.msra.mxu0 %v9334
    %9572 = vmatpush.msra.mxu0 %v9330
    %9573 = vmatpush.msra.mxu0 %v9326
    %9574 = vmatpush.msra.mxu0 %v9322
    %9575 = vmatpush.msra.mxu0 %v9318
    %9576 = vmatpush.msra.mxu0 %v9314
    %9577 = vmatmul.f32.gmra.mxu0 %v9312
    %v9578 = vpop.f32.mrf.mxu0
    %v9579 = vadd.f32 %v9499, %v9578
    %9580 = vdwg.mxu0
    %9581 = vmatpush.msra.mxu0 %v9375
    %9582 = vmatpush.msra.mxu0 %v9371
    %9583 = vmatpush.msra.mxu0 %v9367
    %9584 = vmatpush.msra.mxu0 %v9363
    %9585 = vmatpush.msra.mxu0 %v9359
    %9586 = vmatpush.msra.mxu0 %v9355
    %9587 = vmatpush.msra.mxu0 %v9351
    %9588 = vmatpush.msra.mxu0 %v9347
    %9589 = vmatpush.msra.mxu0 %v9343
    %9590 = vmatpush.msra.mxu0 %v9339
    %9591 = vmatpush.msra.mxu0 %v9335
    %9592 = vmatpush.msra.mxu0 %v9331
    %9593 = vmatpush.msra.mxu0 %v9327
    %9594 = vmatpush.msra.mxu0 %v9323
    %9595 = vmatpush.msra.mxu0 %v9319
    %9596 = vmatpush.msra.mxu0 %v9315
    %9597 = vmatmul.f32.gmra.mxu0 %v9312
    %v9598 = vpop.f32.mrf.mxu0
    %v9599 = vadd.f32 %v9519, %v9598
    %9600 = vdwg.mxu0
    %9601 = vmatpush.msra.mxu0 %v9376
    %9602 = vmatpush.msra.mxu0 %v9372
    %9603 = vmatpush.msra.mxu0 %v9368
    %9604 = vmatpush.msra.mxu0 %v9364
    %9605 = vmatpush.msra.mxu0 %v9360
    %9606 = vmatpush.msra.mxu0 %v9356
    %9607 = vmatpush.msra.mxu0 %v9352
    %9608 = vmatpush.msra.mxu0 %v9348
    %9609 = vmatpush.msra.mxu0 %v9344
    %9610 = vmatpush.msra.mxu0 %v9340
    %9611 = vmatpush.msra.mxu0 %v9336
    %9612 = vmatpush.msra.mxu0 %v9332
    %9613 = vmatpush.msra.mxu0 %v9328
    %9614 = vmatpush.msra.mxu0 %v9324
    %9615 = vmatpush.msra.mxu0 %v9320
    %9616 = vmatpush.msra.mxu0 %v9316
    %9617 = vmatmul.f32.gmra.mxu0 %v9312
    %v9618 = vpop.f32.mrf.mxu0
    %v9619 = vadd.f32 %v9539, %v9618
    %9620 = vdwg.mxu0
    %v9622 = vperm.slane %v170, 0
    %v9623 = vperm.slane %v170, 1
    %v9624 = vperm.slane %v170, 2
    %v9625 = vperm.slane %v170, 3
    %v9630 = vadd.f32 %v9559, %v9622
    %v9631 = vadd.f32 %v9579, %v9623
    %v9632 = vadd.f32 %v9599, %v9624
    %v9633 = vadd.f32 %v9619, %v9625
    %v9634 = vsub.f32 0.0, %v9630
    %v9635 = vmul.f32 %v9634, 1.442695
    %v9636 = vpow.pop %v9635
    %v9637 = vadd.f32 %v9636, 1.0
    %v9638 = vrcp.pop %v9637
    %v9639 = vsub.f32 0.0, %v9631
    %v9640 = vmul.f32 %v9639, 1.442695
    %v9641 = vpow.pop %v9640
    %v9642 = vadd.f32 %v9641, 1.0
    %v9643 = vrcp.pop %v9642
    %v9644 = vtanh.pop %v9632
    %v9645 = vsub.f32 0.0, %v9633
    %v9646 = vmul.f32 %v9645, 1.442695
    %v9647 = vpow.pop %v9646
    %v9648 = vadd.f32 %v9647, 1.0
    %v9649 = vrcp.pop %v9648
    %v9650 = vmul.f32 %v9643, %v9460
    %v9651 = vmul.f32 %v9638, %v9644
    %v9652 = vadd.f32 %v9650, %v9651
    %v9653 = vtanh.pop %v9652
    %v9654 = vmul.f32 %v9649, %v9653
    %9655 = vmatpush.msra.mxu0 %v9456
    %9656 = vmatpush.msra.mxu0 %v9455
    %9657 = vmatpush.msra.mxu0 %v9454
    %9658 = vmatpush.msra.mxu0 %v9453
    %9659 = vmatpush.msra.mxu0 %v9452
    %9660 = vmatpush.msra.mxu0 %v9451
    %9661 = vmatpush.msra.mxu0 %v9450
    %9662 = vmatpush.msra.mxu0 %v9449
    %9663 = vmatpush.msra.mxu0 %v9448
    %9664 = vmatpush.msra.mxu0 %v9447
    %9665 = vmatpush.msra.mxu0 %v9446
    %9666 = vmatpush.msra.mxu0 %v9445
    %9667 = vmatpush.msra.mxu0 %v9444
    %9668 = vmatpush.msra.mxu0 %v9443
    %9669 = vmatpush.msra.mxu0 %v9442
    %9670 = vmatpush.msra.mxu0 %v9441
    %9671 = vmatmul.f32.gmra.mxu0 %v9654
    %v9672 = vpop.f32.mrf.mxu0
    %v9673 = vadd.f32 %v173, %v9672
    %9674 = vdwg.mxu0
    %vm9675 = vcmp.eq.s32.totalorder %v9458, 0
    %v9676 = vsub.f32 0.0, %v9673
    %v9677 = vmul.f32 %v9676, 1.442695
    %v9678 = vpow.pop %v9677
    %v9679 = vadd.f32 %v9678, 1.0
    %v9680 = vrcp.pop %v9679
    %v9681 = vmul.f32 %v9679, %v9680
    %v9682 = vsub.f32 1.0, %v9681
    %v9683 = vmul.f32 %v9680, %v9682
    %v9684 = vadd.f32 %v9680, %v9683
    %vm9685 = vweird.f32 %v9679
    %vm9686 = vweird.f32 %v9680
    %vm9687 = vmor %vm9685, %vm9686
    %v9688 = vsel %vm9687, %v9680, %v9684
    %v9689 = vand.u32 2147483647, %v9679
    %vm9690 = vcmp.eq.f32.partialorder %v9689, 8.507059e+37
    %v9691 = vand.u32 %v9679, 2147483648
    %v9692 = vor.u32 1.1754944e-38, %v9691
    %v9693 = vsel %vm9690, %v9692, %v9688
    %v9694 = vmul.f32 1.0, %v9693
    %v9695 = vtanh.pop %v9673
    %v9696 = vsel %vm9675, %v9694, %v9695
    %vm9697 = vcmask 8192
    %9698 = vst.msk [vmem:[#allocation17] sm:$0x1] %vm9697, %v9696
    %9699 = vmatpush.msra.mxu0 %v9437
    %9700 = vmatpush.msra.mxu0 %v9433
    %9701 = vmatpush.msra.mxu0 %v9429
    %9702 = vmatpush.msra.mxu0 %v9425
    %9703 = vmatpush.msra.mxu0 %v9421
    %9704 = vmatpush.msra.mxu0 %v9417
    %9705 = vmatpush.msra.mxu0 %v9413
    %9706 = vmatpush.msra.mxu0 %v9409
    %9707 = vmatpush.msra.mxu0 %v9405
    %9708 = vmatpush.msra.mxu0 %v9401
    %9709 = vmatpush.msra.mxu0 %v9397
    %9710 = vmatpush.msra.mxu0 %v9393
    %9711 = vmatpush.msra.mxu0 %v9389
    %9712 = vmatpush.msra.mxu0 %v9385
    %9713 = vmatpush.msra.mxu0 %v9381
    %9714 = vmatpush.msra.mxu0 %v9377
    %9715 = vmatmul.f32.gmra.mxu0 %v9654
    %v9716 = vpop.f32.mrf.mxu0
    %v9717 = vadd.f32 0.0, %v9716
    %9718 = vdwg.mxu0
    %9719 = vmatpush.msra.mxu0 %v9438
    %9720 = vmatpush.msra.mxu0 %v9434
    %9721 = vmatpush.msra.mxu0 %v9430
    %9722 = vmatpush.msra.mxu0 %v9426
    %9723 = vmatpush.msra.mxu0 %v9422
    %9724 = vmatpush.msra.mxu0 %v9418
    %9725 = vmatpush.msra.mxu0 %v9414
    %9726 = vmatpush.msra.mxu0 %v9410
    %9727 = vmatpush.msra.mxu0 %v9406
    %9728 = vmatpush.msra.mxu0 %v9402
    %9729 = vmatpush.msra.mxu0 %v9398
    %9730 = vmatpush.msra.mxu0 %v9394
    %9731 = vmatpush.msra.mxu0 %v9390
    %9732 = vmatpush.msra.mxu0 %v9386
    %9733 = vmatpush.msra.mxu0 %v9382
    %9734 = vmatpush.msra.mxu0 %v9378
    %9735 = vmatmul.f32.gmra.mxu0 %v9654
    %v9736 = vpop.f32.mrf.mxu0
    %v9737 = vadd.f32 0.0, %v9736
    %9738 = vdwg.mxu0
    %9739 = vmatpush.msra.mxu0 %v9439
    %9740 = vmatpush.msra.mxu0 %v9435
    %9741 = vmatpush.msra.mxu0 %v9431
    %9742 = vmatpush.msra.mxu0 %v9427
    %9743 = vmatpush.msra.mxu0 %v9423
    %9744 = vmatpush.msra.mxu0 %v9419
    %9745 = vmatpush.msra.mxu0 %v9415
    %9746 = vmatpush.msra.mxu0 %v9411
    %9747 = vmatpush.msra.mxu0 %v9407
    %9748 = vmatpush.msra.mxu0 %v9403
    %9749 = vmatpush.msra.mxu0 %v9399
    %9750 = vmatpush.msra.mxu0 %v9395
    %9751 = vmatpush.msra.mxu0 %v9391
    %9752 = vmatpush.msra.mxu0 %v9387
    %9753 = vmatpush.msra.mxu0 %v9383
    %9754 = vmatpush.msra.mxu0 %v9379
    %9755 = vmatmul.f32.gmra.mxu0 %v9654
    %v9756 = vpop.f32.mrf.mxu0
    %v9757 = vadd.f32 0.0, %v9756
    %9758 = vdwg.mxu0
    %9759 = vmatpush.msra.mxu0 %v9440
    %9760 = vmatpush.msra.mxu0 %v9436
    %9761 = vmatpush.msra.mxu0 %v9432
    %9762 = vmatpush.msra.mxu0 %v9428
    %9763 = vmatpush.msra.mxu0 %v9424
    %9764 = vmatpush.msra.mxu0 %v9420
    %9765 = vmatpush.msra.mxu0 %v9416
    %9766 = vmatpush.msra.mxu0 %v9412
    %9767 = vmatpush.msra.mxu0 %v9408
    %9768 = vmatpush.msra.mxu0 %v9404
    %9769 = vmatpush.msra.mxu0 %v9400
    %9770 = vmatpush.msra.mxu0 %v9396
    %9771 = vmatpush.msra.mxu0 %v9392
    %9772 = vmatpush.msra.mxu0 %v9388
    %9773 = vmatpush.msra.mxu0 %v9384
    %9774 = vmatpush.msra.mxu0 %v9380
    %9775 = vmatmul.f32.gmra.mxu0 %v9654
    %v9776 = vpop.f32.mrf.mxu0
    %v9777 = vadd.f32 0.0, %v9776
    %9778 = vdwg.mxu0
    %v9780 = vrot.slane %v9312, 1
    %9782 = vmatpush.msra.mxu0 %v9373
    %9783 = vmatpush.msra.mxu0 %v9369
    %9784 = vmatpush.msra.mxu0 %v9365
    %9785 = vmatpush.msra.mxu0 %v9361
    %9786 = vmatpush.msra.mxu0 %v9357
    %9787 = vmatpush.msra.mxu0 %v9353
    %9788 = vmatpush.msra.mxu0 %v9349
    %9789 = vmatpush.msra.mxu0 %v9345
    %9790 = vmatpush.msra.mxu0 %v9341
    %9791 = vmatpush.msra.mxu0 %v9337
    %9792 = vmatpush.msra.mxu0 %v9333
    %9793 = vmatpush.msra.mxu0 %v9329
    %9794 = vmatpush.msra.mxu0 %v9325
    %9795 = vmatpush.msra.mxu0 %v9321
    %9796 = vmatpush.msra.mxu0 %v9317
    %9797 = vmatpush.msra.mxu0 %v9313
    %9798 = vmatmul.f32.gmra.mxu0 %v9780
    %v9799 = vpop.f32.mrf.mxu0
    %v9800 = vadd.f32 %v9717, %v9799
    %9801 = vdwg.mxu0
    %9802 = vmatpush.msra.mxu0 %v9374
    %9803 = vmatpush.msra.mxu0 %v9370
    %9804 = vmatpush.msra.mxu0 %v9366
    %9805 = vmatpush.msra.mxu0 %v9362
    %9806 = vmatpush.msra.mxu0 %v9358
    %9807 = vmatpush.msra.mxu0 %v9354
    %9808 = vmatpush.msra.mxu0 %v9350
    %9809 = vmatpush.msra.mxu0 %v9346
    %9810 = vmatpush.msra.mxu0 %v9342
    %9811 = vmatpush.msra.mxu0 %v9338
    %9812 = vmatpush.msra.mxu0 %v9334
    %9813 = vmatpush.msra.mxu0 %v9330
    %9814 = vmatpush.msra.mxu0 %v9326
    %9815 = vmatpush.msra.mxu0 %v9322
    %9816 = vmatpush.msra.mxu0 %v9318
    %9817 = vmatpush.msra.mxu0 %v9314
    %9818 = vmatmul.f32.gmra.mxu0 %v9780
    %v9819 = vpop.f32.mrf.mxu0
    %v9820 = vadd.f32 %v9737, %v9819
    %9821 = vdwg.mxu0
    %9822 = vmatpush.msra.mxu0 %v9375
    %9823 = vmatpush.msra.mxu0 %v9371
    %9824 = vmatpush.msra.mxu0 %v9367
    %9825 = vmatpush.msra.mxu0 %v9363
    %9826 = vmatpush.msra.mxu0 %v9359
    %9827 = vmatpush.msra.mxu0 %v9355
    %9828 = vmatpush.msra.mxu0 %v9351
    %9829 = vmatpush.msra.mxu0 %v9347
    %9830 = vmatpush.msra.mxu0 %v9343
    %9831 = vmatpush.msra.mxu0 %v9339
    %9832 = vmatpush.msra.mxu0 %v9335
    %9833 = vmatpush.msra.mxu0 %v9331
    %9834 = vmatpush.msra.mxu0 %v9327
    %9835 = vmatpush.msra.mxu0 %v9323
    %9836 = vmatpush.msra.mxu0 %v9319
    %9837 = vmatpush.msra.mxu0 %v9315
    %9838 = vmatmul.f32.gmra.mxu0 %v9780
    %v9839 = vpop.f32.mrf.mxu0
    %v9840 = vadd.f32 %v9757, %v9839
    %9841 = vdwg.mxu0
    %9842 = vmatpush.msra.mxu0 %v9376
    %9843 = vmatpush.msra.mxu0 %v9372
    %9844 = vmatpush.msra.mxu0 %v9368
    %9845 = vmatpush.msra.mxu0 %v9364
    %9846 = vmatpush.msra.mxu0 %v9360
    %9847 = vmatpush.msra.mxu0 %v9356
    %9848 = vmatpush.msra.mxu0 %v9352
    %9849 = vmatpush.msra.mxu0 %v9348
    %9850 = vmatpush.msra.mxu0 %v9344
    %9851 = vmatpush.msra.mxu0 %v9340
    %9852 = vmatpush.msra.mxu0 %v9336
    %9853 = vmatpush.msra.mxu0 %v9332
    %9854 = vmatpush.msra.mxu0 %v9328
    %9855 = vmatpush.msra.mxu0 %v9324
    %9856 = vmatpush.msra.mxu0 %v9320
    %9857 = vmatpush.msra.mxu0 %v9316
    %9858 = vmatmul.f32.gmra.mxu0 %v9780
    %v9859 = vpop.f32.mrf.mxu0
    %v9860 = vadd.f32 %v9777, %v9859
    %9861 = vdwg.mxu0
    %v9862 = vadd.f32 %v9800, %v9622
    %v9863 = vadd.f32 %v9820, %v9623
    %v9864 = vadd.f32 %v9840, %v9624
    %v9865 = vadd.f32 %v9860, %v9625
    %v9866 = vsub.f32 0.0, %v9862
    %v9867 = vmul.f32 %v9866, 1.442695
    %v9868 = vpow.pop %v9867
    %v9869 = vadd.f32 %v9868, 1.0
    %v9870 = vrcp.pop %v9869
    %v9871 = vsub.f32 0.0, %v9863
    %v9872 = vmul.f32 %v9871, 1.442695
    %v9873 = vpow.pop %v9872
    %v9874 = vadd.f32 %v9873, 1.0
    %v9875 = vrcp.pop %v9874
    %v9876 = vtanh.pop %v9864
    %v9877 = vsub.f32 0.0, %v9865
    %v9878 = vmul.f32 %v9877, 1.442695
    %v9879 = vpow.pop %v9878
    %v9880 = vadd.f32 %v9879, 1.0
    %v9881 = vrcp.pop %v9880
    %v9882 = vmul.f32 %v9875, %v9652
    %v9883 = vmul.f32 %v9870, %v9876
    %v9884 = vadd.f32 %v9882, %v9883
    %v9885 = vtanh.pop %v9884
    %v9886 = vmul.f32 %v9881, %v9885
    %9887 = vmatpush.msra.mxu0 %v9456
    %9888 = vmatpush.msra.mxu0 %v9455
    %9889 = vmatpush.msra.mxu0 %v9454
    %9890 = vmatpush.msra.mxu0 %v9453
    %9891 = vmatpush.msra.mxu0 %v9452
    %9892 = vmatpush.msra.mxu0 %v9451
    %9893 = vmatpush.msra.mxu0 %v9450
    %9894 = vmatpush.msra.mxu0 %v9449
    %9895 = vmatpush.msra.mxu0 %v9448
    %9896 = vmatpush.msra.mxu0 %v9447
    %9897 = vmatpush.msra.mxu0 %v9446
    %9898 = vmatpush.msra.mxu0 %v9445
    %9899 = vmatpush.msra.mxu0 %v9444
    %9900 = vmatpush.msra.mxu0 %v9443
    %9901 = vmatpush.msra.mxu0 %v9442
    %9902 = vmatpush.msra.mxu0 %v9441
    %9903 = vmatmul.f32.gmra.mxu0 %v9886
    %v9904 = vpop.f32.mrf.mxu0
    %v9905 = vadd.f32 %v173, %v9904
    %9906 = vdwg.mxu0
    %v9907 = vsub.f32 0.0, %v9905
    %v9908 = vmul.f32 %v9907, 1.442695
    %v9909 = vpow.pop %v9908
    %v9910 = vadd.f32 %v9909, 1.0
    %v9911 = vrcp.pop %v9910
    %v9912 = vmul.f32 %v9910, %v9911
    %v9913 = vsub.f32 1.0, %v9912
    %v9914 = vmul.f32 %v9911, %v9913
    %v9915 = vadd.f32 %v9911, %v9914
    %vm9916 = vweird.f32 %v9910
    %vm9917 = vweird.f32 %v9911
    %vm9918 = vmor %vm9916, %vm9917
    %v9919 = vsel %vm9918, %v9911, %v9915
    %v9920 = vand.u32 2147483647, %v9910
    %vm9921 = vcmp.eq.f32.partialorder %v9920, 8.507059e+37
    %v9922 = vand.u32 %v9910, 2147483648
    %v9923 = vor.u32 1.1754944e-38, %v9922
    %v9924 = vsel %vm9921, %v9923, %v9919
    %v9925 = vmul.f32 1.0, %v9924
    %v9926 = vtanh.pop %v9905
    %v9927 = vsel %vm9675, %v9925, %v9926
    %9928 = vst.msk [vmem:[#allocation17 + $0x1] sm:$0x1] %vm9697, %v9927
    %9929 = vst [vmem:[#allocation18] sm:$0x1] %v9886
    %9930 = vst [vmem:[#allocation20] sm:$0x1] %v9884
    // Predicated region
    $region86: #{_actor_forward.1} parent=1 // pred_check
      _
    $region87: #{_actor_forward.1} parent=1 // pred_check_branch
      %9932 = sbr.rel (0) target = $region89
    $region88: #{_actor_forward.1} parent=1 // pred_region
      %9934 = vsyncadd [#allocation5], 0
      %s9936 = sshll.u32 [#allocation17], 4
      %s9937 = int_to_ptr.vmem [resolvable:$true] %s9936
      %s9938 = sshll.u32 %s13, 4
      %s9939 = int_to_ptr.hbm [resolvable:$true] %s9938
      %9941 = dma.vmem_to_hbm [thread:$0]  %s9937, 32, %s9939, [#allocation5]
    $region89: #{_actor_forward.1} parent=1 // pred_fallthru
      _
    // Predicated region
    $region90: #{_actor_forward.1} parent=1 // pred_check
      _
    $region91: #{_actor_forward.1} parent=1 // pred_check_branch
      %9943 = sbr.rel (0) target = $region93
    $region92: #{_actor_forward.1} parent=1 // pred_region
      %9945 = vsyncadd [#allocation19], 0
      %s9947 = sshll.u32 [#allocation18], 4
      %s9948 = int_to_ptr.vmem [resolvable:$true] %s9947
      %s9949 = sshll.u32 %s14, 4
      %s9950 = int_to_ptr.hbm [resolvable:$true] %s9949
      %9952 = dma.vmem_to_hbm [thread:$0]  %s9948, 16, %s9950, [#allocation19]
    $region93: #{_actor_forward.1} parent=1 // pred_fallthru
      _
    // Predicated region
    $region94: #{_actor_forward.1} parent=1 // pred_check
      _
    $region95: #{_actor_forward.1} parent=1 // pred_check_branch
      %9954 = sbr.rel (0) target = $region97
    $region96: #{_actor_forward.1} parent=1 // pred_region
      %9956 = vsyncadd [#allocation19], 0
      %s9958 = sshll.u32 [#allocation20], 4
      %s9959 = int_to_ptr.vmem [resolvable:$true] %s9958
      %s9960 = sshll.u32 %s15, 4
      %s9961 = int_to_ptr.hbm [resolvable:$true] %s9960
      %9963 = dma.vmem_to_hbm [thread:$0]  %s9959, 16, %s9961, [#allocation19]
    $region97: #{_actor_forward.1} parent=1 // pred_fallthru
      _
    // Predicated region
    $region98: #{_actor_forward.1} parent=1 // pred_check
      _
    $region99: #{_actor_forward.1} parent=1 // pred_check_branch
      %9965 = sbr.rel (0) target = $region101
    $region100: #{_actor_forward.1} parent=1 // pred_region
      %9967 = dma.done [#allocation5], 32
    $region101: #{_actor_forward.1} parent=1 // pred_fallthru
      _
    // Predicated region
    $region102: #{_actor_forward.1} parent=1 // pred_check
      _
    $region103: #{_actor_forward.1} parent=1 // pred_check_branch
      %9969 = sbr.rel (0) target = $region105
    $region104: #{_actor_forward.1} parent=1 // pred_region
      %9971 = dma.done [#allocation19], 16
    $region105: #{_actor_forward.1} parent=1 // pred_fallthru
      _
    // Predicated region
    $region106: #{_actor_forward.1} parent=1 // pred_check
      _
    $region107: #{_actor_forward.1} parent=1 // pred_check_branch
      %9973 = sbr.rel (0) target = $region109
    $region108: #{_actor_forward.1} parent=1 // pred_region
      %9975 = dma.done [#allocation19], 16
    $region109: #{_actor_forward.1} parent=1 // pred_fallthru
      _
    %9976 = vsyncpa [#allocation4], 1
    %9977 = vsyncpa [#allocation7], 1
    %9978 = vsyncpa [#allocation10], 1
    %9979 = vsyncpa [#allocation13], 1
    %9980 = vsyncpa [#allocation16], 1
    %9981 = vsyncpa [#allocation5], 1
    %9982 = vsyncpa [#allocation19], 1

</llo_original>
